<compile_context>
chip_gen: v7x
topology: tpu7x:2x2x1
jax: 0.10.0
libtpu: 0.0.40
codegen_flags: <defaults>
</compile_context>

<pallas_src>
import jax
import jax.numpy as jnp
import numpy as np
from jax.experimental import pallas as pl
from jax.experimental.pallas import tpu as pltpu


def _ffnn_kernel(x_ref, *refs):
    """Fused MLP forward: straight-line chain of (matmul + bias [+ ReLU]) layers
    followed by a softmax epilogue, all in VMEM / vregs.

    refs = (w0, b0, w1, b1, ..., w{L-1}, b{L-1}, o_ref)
    """
    o_ref = refs[-1]
    wb_refs = refs[:-1]
    n_layers = len(wb_refs) // 2

    # Activation chain lives in bf16 between layers (halves VMEM temporaries
    # and vst/vld traffic on the wide intermediates); accumulation is f32.
    x = x_ref[...].astype(jnp.bfloat16)           # (m_tile, d_in)
    for i in range(n_layers):
        w = wb_refs[2 * i][...]                   # (d_in, d_out), bf16
        b = wb_refs[2 * i + 1][...]               # (1, d_out), f32
        y = jnp.dot(x, w, preferred_element_type=jnp.float32) + b
        if i < n_layers - 1:
            x = jnp.maximum(y, 0.0).astype(jnp.bfloat16)   # ReLU, back to bf16
        else:
            # Softmax(dim=-1) epilogue in f32 with an exact divide (the
            # denominator is an (m_tile, 1) column — exactness is free).
            m = jnp.max(y, axis=-1, keepdims=True)
            e = jnp.exp(y - m)
            s = jnp.sum(e, axis=-1, keepdims=True)
            o_ref[...] = (e / s).astype(o_ref.dtype)


def _round_up(x, m):
    return ((x + m - 1) // m) * m


def _pick_m_tile(m):
    """Batch tile size.

    * m <= 512: one tile, rounded up to the 8-sublane multiple (wrapper pads).
    * m  > 512: fixed 512-row tiles (multiple of both 128 and 256, so the MXU
      M dimension is full on v5e and v6e/v7x), which also guarantees >=2
      "parallel" grid steps so v7x's two TensorCores both get work.
    The (m_tile, 2048) intermediates at 512 rows are ~4 MB f32 / 2 MB bf16 —
    comfortable even on v7x's 64 MiB VMEM.
    """
    if m <= 512:
        return _round_up(m, 8)
    return 512


def ffnn_forward_pallas(x, params):
    """Run the fused MLP kernel.

    `params` = list of (w_bf16 (d_in, d_out), b_f32 (1, d_out)) per layer.
    """
    M, K = x.shape
    out_dim = params[-1][0].shape[1]

    m_tile = _pick_m_tile(M)
    steps = pl.cdiv(M, m_tile)
    m_pad = steps * m_tile
    if m_pad != M:
        # Pad ragged batches instead of swallowing them in one giant tile.
        x = jnp.pad(x, ((0, m_pad - M), (0, 0)))

    # Batch-tiled input; weights/biases are full-block, grid-invariant and
    # single-buffered (they are never re-fetched across grid steps).
    in_specs = [pl.BlockSpec((m_tile, K), lambda i: (i, 0))]
    flat_args = []
    for (w, b) in params:
        d_in, d_out = w.shape
        in_specs.append(
            pl.BlockSpec((d_in, d_out), lambda i: (0, 0),
                         pipeline_mode=pl.Buffered(1))
        )
        in_specs.append(
            pl.BlockSpec((1, d_out), lambda i: (0, 0),
                         pipeline_mode=pl.Buffered(1))
        )
        flat_args.extend((w, b))

    out_spec = pl.BlockSpec((m_tile, out_dim), lambda i: (i, 0))

    out = pl.pallas_call(
        _ffnn_kernel,
        out_shape=jax.ShapeDtypeStruct((m_pad, out_dim), jnp.float32),
        grid_spec=pltpu.PrefetchScalarGridSpec(
            num_scalar_prefetch=0,
            grid=(steps,),
            in_specs=in_specs,
            out_specs=out_spec,
        ),
        compiler_params=pltpu.CompilerParams(
            # Batch tiles are independent -> "parallel" lets v7x shard them
            # across its two TensorCores whenever the grid has >=2 steps.
            dimension_semantics=("parallel",),
            # Derivation at m_tile=512: ~5.7 MB bf16 weights (single-buffered)
            # + ~6 MB activation temps + <1 MB double-buffered x/out tiles.
            # 32 MiB gives ample headroom and is safe on v5e/v6e/v7x.
            vmem_limit_bytes=32 * 1024 * 1024,
        ),
    )(x, *flat_args)

    return out[:M] if m_pad != M else out


class FFNNPallas:
    """JAX/Pallas re-implementation of the PyTorch FFNN module (forward only)."""

    def __init__(self, input_shape, output_shape, key):
        self.dims = [input_shape, 2048, 1024, 512, 256, 128, 64, 32, 16, output_shape]
        self.params_f32 = []  # f32 master copy (matches PyTorch numerics)
        for i in range(len(self.dims) - 1):
            fan_in, fan_out = self.dims[i], self.dims[i + 1]
            key, wk, bk = jax.random.split(key, 3)
            bound = 1.0 / (fan_in ** 0.5)  # PyTorch nn.Linear default init range
            w = jax.random.uniform(wk, (fan_in, fan_out), jnp.float32, -bound, bound)
            b = jax.random.uniform(bk, (fan_out,), jnp.float32, -bound, bound)
            self.params_f32.append((w, b))
        # Kernel-side params: bf16 weights (half HBM/VMEM traffic, native MXU
        # rate), f32 (1, N) biases.
        self.params = [
            (w.astype(jnp.bfloat16), b.reshape(1, -1)) for (w, b) in self.params_f32
        ]

    def __call__(self, x):
        return ffnn_forward_pallas(x, self.params)


def reference_forward_f32(x, params_f32):
    """Pure-jnp f32 reference matching the PyTorch forward."""
    n = len(params_f32)
    for i, (w, b) in enumerate(params_f32):
        x = x @ w + b
        if i < n - 1:
            x = jnp.maximum(x, 0.0)
        else:
            x = jax.nn.softmax(x, axis=-1)
    return x


def reference_forward_bf16(x, params_bf16):
    """Reference emulating the kernel's numerics (bf16 activation chain,
    bf16 weights, f32 accumulation, f32 softmax)."""
    n = len(params_bf16)
    out = x.astype(jnp.bfloat16)
    for i, (w, b) in enumerate(params_bf16):
        y = jnp.dot(out, w, preferred_element_type=jnp.float32) + b
        if i < n - 1:
            out = jnp.maximum(y, 0.0).astype(jnp.bfloat16)
        else:
            out = jax.nn.softmax(y, axis=-1)
    return out


if __name__ == "__main__":
    key = jax.random.PRNGKey(0)
    batch, input_shape, output_shape = 8, 32, 16

    key, xk, pk = jax.random.split(key, 3)
    x = jax.random.normal(xk, (batch, input_shape), dtype=jnp.float32)

    model = FFNNPallas(input_shape, output_shape, pk)

    out = jax.block_until_ready(model(x))

    ref_bf16 = jax.block_until_ready(reference_forward_bf16(x, model.params))
    ref_f32 = jax.block_until_ready(reference_forward_f32(x, model.params_f32))

    assert out.shape == (batch, output_shape)
    # Tight check vs a reference using the same bf16-chain / f32-accumulate numerics.
    assert np.allclose(np.asarray(out), np.asarray(ref_bf16), rtol=1e-2, atol=2e-3)
    # Loose sanity check vs the full-f32 (PyTorch-equivalent) reference
    # (bf16 weights + bf16 activation chain drift slightly from f32).
    assert np.allclose(np.asarray(out), np.asarray(ref_f32), rtol=1e-1, atol=2e-2)
    # Exact-divide softmax: rows sum to 1.
    assert np.allclose(np.asarray(out).sum(axis=-1), 1.0, atol=1e-4)

    print("KERNEL_OK")
</pallas_src>

<mosaic_0001>
module attributes {stable_mosaic.version = 11 : i64} {
  func.func @_ffnn_kernel(%arg0: i32, %arg1: memref<8x32xf32, #tpu.memory_space<vmem>>, %arg2: memref<32x2048xbf16, #tpu.memory_space<vmem>>, %arg3: memref<1x2048xf32, #tpu.memory_space<vmem>>, %arg4: memref<2048x1024xbf16, #tpu.memory_space<vmem>>, %arg5: memref<1x1024xf32, #tpu.memory_space<vmem>>, %arg6: memref<1024x512xbf16, #tpu.memory_space<vmem>>, %arg7: memref<1x512xf32, #tpu.memory_space<vmem>>, %arg8: memref<512x256xbf16, #tpu.memory_space<vmem>>, %arg9: memref<1x256xf32, #tpu.memory_space<vmem>>, %arg10: memref<256x128xbf16, #tpu.memory_space<vmem>>, %arg11: memref<1x128xf32, #tpu.memory_space<vmem>>, %arg12: memref<128x64xbf16, #tpu.memory_space<vmem>>, %arg13: memref<1x64xf32, #tpu.memory_space<vmem>>, %arg14: memref<64x32xbf16, #tpu.memory_space<vmem>>, %arg15: memref<1x32xf32, #tpu.memory_space<vmem>>, %arg16: memref<32x16xbf16, #tpu.memory_space<vmem>>, %arg17: memref<1x16xf32, #tpu.memory_space<vmem>>, %arg18: memref<16x16xbf16, #tpu.memory_space<vmem>>, %arg19: memref<1x16xf32, #tpu.memory_space<vmem>>, %arg20: memref<8x16xf32, #tpu.memory_space<vmem>>) attributes {dimension_semantics = [#tpu.dimension_semantics<parallel>], iteration_bounds = array<i64: 1>, scalar_prefetch = 0 : i64, scratch_operands = 0 : i64, tpu.core_type = #tpu.core_type<tc>, window_params = [{transform_indices = @transform_0, window_bounds = array<i64: 8, 32>}, {pipeline_mode = #tpu.pipeline_mode<synchronous>, transform_indices = @transform_1, window_bounds = array<i64: 32, 2048>}, {pipeline_mode = #tpu.pipeline_mode<synchronous>, transform_indices = @transform_2, window_bounds = array<i64: 1, 2048>}, {pipeline_mode = #tpu.pipeline_mode<synchronous>, transform_indices = @transform_3, window_bounds = array<i64: 2048, 1024>}, {pipeline_mode = #tpu.pipeline_mode<synchronous>, transform_indices = @transform_4, window_bounds = array<i64: 1, 1024>}, {pipeline_mode = #tpu.pipeline_mode<synchronous>, transform_indices = @transform_5, window_bounds = array<i64: 1024, 512>}, {pipeline_mode = #tpu.pipeline_mode<synchronous>, transform_indices = @transform_6, window_bounds = array<i64: 1, 512>}, {pipeline_mode = #tpu.pipeline_mode<synchronous>, transform_indices = @transform_7, window_bounds = array<i64: 512, 256>}, {pipeline_mode = #tpu.pipeline_mode<synchronous>, transform_indices = @transform_8, window_bounds = array<i64: 1, 256>}, {pipeline_mode = #tpu.pipeline_mode<synchronous>, transform_indices = @transform_9, window_bounds = array<i64: 256, 128>}, {pipeline_mode = #tpu.pipeline_mode<synchronous>, transform_indices = @transform_10, window_bounds = array<i64: 1, 128>}, {pipeline_mode = #tpu.pipeline_mode<synchronous>, transform_indices = @transform_11, window_bounds = array<i64: 128, 64>}, {pipeline_mode = #tpu.pipeline_mode<synchronous>, transform_indices = @transform_12, window_bounds = array<i64: 1, 64>}, {pipeline_mode = #tpu.pipeline_mode<synchronous>, transform_indices = @transform_13, window_bounds = array<i64: 64, 32>}, {pipeline_mode = #tpu.pipeline_mode<synchronous>, transform_indices = @transform_14, window_bounds = array<i64: 1, 32>}, {pipeline_mode = #tpu.pipeline_mode<synchronous>, transform_indices = @transform_15, window_bounds = array<i64: 32, 16>}, {pipeline_mode = #tpu.pipeline_mode<synchronous>, transform_indices = @transform_16, window_bounds = array<i64: 1, 16>}, {pipeline_mode = #tpu.pipeline_mode<synchronous>, transform_indices = @transform_17, window_bounds = array<i64: 16, 16>}, {pipeline_mode = #tpu.pipeline_mode<synchronous>, transform_indices = @transform_18, window_bounds = array<i64: 1, 16>}, {transform_indices = @transform_19, window_bounds = array<i64: 8, 16>}]} {
    %c0 = arith.constant 0 : index
    %c0_0 = arith.constant 0 : index
    %0 = vector.load %arg1[%c0, %c0_0] : memref<8x32xf32, #tpu.memory_space<vmem>>, vector<8x32xf32>
    %1 = arith.truncf %0 : vector<8x32xf32> to vector<8x32xbf16>
    %c0_1 = arith.constant 0 : index
    %c0_2 = arith.constant 0 : index
    %2 = vector.load %arg2[%c0_1, %c0_2] : memref<32x2048xbf16, #tpu.memory_space<vmem>>, vector<32x2048xbf16>
    %c0_3 = arith.constant 0 : index
    %c0_4 = arith.constant 0 : index
    %3 = vector.load %arg3[%c0_3, %c0_4] : memref<1x2048xf32, #tpu.memory_space<vmem>>, vector<1x2048xf32>
    %cst = arith.constant dense<0.000000e+00> : vector<8x2048xf32>
    %4 = tpu.matmul %1, %2, %cst {dimension_numbers = #tpu.dot_dimension_numbers<[1], [0], [0], [1], [0, 0, 1, 1], [], []>} : vector<8x32xbf16>, vector<32x2048xbf16>, vector<8x2048xf32> -> vector<8x2048xf32>
    %5 = vector.broadcast %3 : vector<1x2048xf32> to vector<8x2048xf32>
    %6 = arith.addf %4, %5 : vector<8x2048xf32>
    %cst_5 = arith.constant 0.000000e+00 : f32
    %7 = vector.broadcast %cst_5 : f32 to vector<8x2048xf32>
    %8 = arith.maximumf %6, %7 : vector<8x2048xf32>
    %9 = arith.truncf %8 : vector<8x2048xf32> to vector<8x2048xbf16>
    %c0_6 = arith.constant 0 : index
    %c0_7 = arith.constant 0 : index
    %10 = vector.load %arg4[%c0_6, %c0_7] : memref<2048x1024xbf16, #tpu.memory_space<vmem>>, vector<2048x1024xbf16>
    %c0_8 = arith.constant 0 : index
    %c0_9 = arith.constant 0 : index
    %11 = vector.load %arg5[%c0_8, %c0_9] : memref<1x1024xf32, #tpu.memory_space<vmem>>, vector<1x1024xf32>
    %cst_10 = arith.constant dense<0.000000e+00> : vector<8x1024xf32>
    %12 = tpu.matmul %9, %10, %cst_10 {dimension_numbers = #tpu.dot_dimension_numbers<[1], [0], [0], [1], [0, 0, 1, 1], [], []>} : vector<8x2048xbf16>, vector<2048x1024xbf16>, vector<8x1024xf32> -> vector<8x1024xf32>
    %13 = vector.broadcast %11 : vector<1x1024xf32> to vector<8x1024xf32>
    %14 = arith.addf %12, %13 : vector<8x1024xf32>
    %cst_11 = arith.constant 0.000000e+00 : f32
    %15 = vector.broadcast %cst_11 : f32 to vector<8x1024xf32>
    %16 = arith.maximumf %14, %15 : vector<8x1024xf32>
    %17 = arith.truncf %16 : vector<8x1024xf32> to vector<8x1024xbf16>
    %c0_12 = arith.constant 0 : index
    %c0_13 = arith.constant 0 : index
    %18 = vector.load %arg6[%c0_12, %c0_13] : memref<1024x512xbf16, #tpu.memory_space<vmem>>, vector<1024x512xbf16>
    %c0_14 = arith.constant 0 : index
    %c0_15 = arith.constant 0 : index
    %19 = vector.load %arg7[%c0_14, %c0_15] : memref<1x512xf32, #tpu.memory_space<vmem>>, vector<1x512xf32>
    %cst_16 = arith.constant dense<0.000000e+00> : vector<8x512xf32>
    %20 = tpu.matmul %17, %18, %cst_16 {dimension_numbers = #tpu.dot_dimension_numbers<[1], [0], [0], [1], [0, 0, 1, 1], [], []>} : vector<8x1024xbf16>, vector<1024x512xbf16>, vector<8x512xf32> -> vector<8x512xf32>
    %21 = vector.broadcast %19 : vector<1x512xf32> to vector<8x512xf32>
    %22 = arith.addf %20, %21 : vector<8x512xf32>
    %cst_17 = arith.constant 0.000000e+00 : f32
    %23 = vector.broadcast %cst_17 : f32 to vector<8x512xf32>
    %24 = arith.maximumf %22, %23 : vector<8x512xf32>
    %25 = arith.truncf %24 : vector<8x512xf32> to vector<8x512xbf16>
    %c0_18 = arith.constant 0 : index
    %c0_19 = arith.constant 0 : index
    %26 = vector.load %arg8[%c0_18, %c0_19] : memref<512x256xbf16, #tpu.memory_space<vmem>>, vector<512x256xbf16>
    %c0_20 = arith.constant 0 : index
    %c0_21 = arith.constant 0 : index
    %27 = vector.load %arg9[%c0_20, %c0_21] : memref<1x256xf32, #tpu.memory_space<vmem>>, vector<1x256xf32>
    %cst_22 = arith.constant dense<0.000000e+00> : vector<8x256xf32>
    %28 = tpu.matmul %25, %26, %cst_22 {dimension_numbers = #tpu.dot_dimension_numbers<[1], [0], [0], [1], [0, 0, 1, 1], [], []>} : vector<8x512xbf16>, vector<512x256xbf16>, vector<8x256xf32> -> vector<8x256xf32>
    %29 = vector.broadcast %27 : vector<1x256xf32> to vector<8x256xf32>
    %30 = arith.addf %28, %29 : vector<8x256xf32>
    %cst_23 = arith.constant 0.000000e+00 : f32
    %31 = vector.broadcast %cst_23 : f32 to vector<8x256xf32>
    %32 = arith.maximumf %30, %31 : vector<8x256xf32>
    %33 = arith.truncf %32 : vector<8x256xf32> to vector<8x256xbf16>
    %c0_24 = arith.constant 0 : index
    %c0_25 = arith.constant 0 : index
    %34 = vector.load %arg10[%c0_24, %c0_25] : memref<256x128xbf16, #tpu.memory_space<vmem>>, vector<256x128xbf16>
    %c0_26 = arith.constant 0 : index
    %c0_27 = arith.constant 0 : index
    %35 = vector.load %arg11[%c0_26, %c0_27] : memref<1x128xf32, #tpu.memory_space<vmem>>, vector<1x128xf32>
    %cst_28 = arith.constant dense<0.000000e+00> : vector<8x128xf32>
    %36 = tpu.matmul %33, %34, %cst_28 {dimension_numbers = #tpu.dot_dimension_numbers<[1], [0], [0], [1], [0, 0, 1, 1], [], []>} : vector<8x256xbf16>, vector<256x128xbf16>, vector<8x128xf32> -> vector<8x128xf32>
    %37 = vector.broadcast %35 : vector<1x128xf32> to vector<8x128xf32>
    %38 = arith.addf %36, %37 : vector<8x128xf32>
    %cst_29 = arith.constant 0.000000e+00 : f32
    %39 = vector.broadcast %cst_29 : f32 to vector<8x128xf32>
    %40 = arith.maximumf %38, %39 : vector<8x128xf32>
    %41 = arith.truncf %40 : vector<8x128xf32> to vector<8x128xbf16>
    %c0_30 = arith.constant 0 : index
    %c0_31 = arith.constant 0 : index
    %42 = vector.load %arg12[%c0_30, %c0_31] : memref<128x64xbf16, #tpu.memory_space<vmem>>, vector<128x64xbf16>
    %c0_32 = arith.constant 0 : index
    %c0_33 = arith.constant 0 : index
    %43 = vector.load %arg13[%c0_32, %c0_33] : memref<1x64xf32, #tpu.memory_space<vmem>>, vector<1x64xf32>
    %cst_34 = arith.constant dense<0.000000e+00> : vector<8x64xf32>
    %44 = tpu.matmul %41, %42, %cst_34 {dimension_numbers = #tpu.dot_dimension_numbers<[1], [0], [0], [1], [0, 0, 1, 1], [], []>} : vector<8x128xbf16>, vector<128x64xbf16>, vector<8x64xf32> -> vector<8x64xf32>
    %45 = vector.broadcast %43 : vector<1x64xf32> to vector<8x64xf32>
    %46 = arith.addf %44, %45 : vector<8x64xf32>
    %cst_35 = arith.constant 0.000000e+00 : f32
    %47 = vector.broadcast %cst_35 : f32 to vector<8x64xf32>
    %48 = arith.maximumf %46, %47 : vector<8x64xf32>
    %49 = arith.truncf %48 : vector<8x64xf32> to vector<8x64xbf16>
    %c0_36 = arith.constant 0 : index
    %c0_37 = arith.constant 0 : index
    %50 = vector.load %arg14[%c0_36, %c0_37] : memref<64x32xbf16, #tpu.memory_space<vmem>>, vector<64x32xbf16>
    %c0_38 = arith.constant 0 : index
    %c0_39 = arith.constant 0 : index
    %51 = vector.load %arg15[%c0_38, %c0_39] : memref<1x32xf32, #tpu.memory_space<vmem>>, vector<1x32xf32>
    %cst_40 = arith.constant dense<0.000000e+00> : vector<8x32xf32>
    %52 = tpu.matmul %49, %50, %cst_40 {dimension_numbers = #tpu.dot_dimension_numbers<[1], [0], [0], [1], [0, 0, 1, 1], [], []>} : vector<8x64xbf16>, vector<64x32xbf16>, vector<8x32xf32> -> vector<8x32xf32>
    %53 = vector.broadcast %51 : vector<1x32xf32> to vector<8x32xf32>
    %54 = arith.addf %52, %53 : vector<8x32xf32>
    %cst_41 = arith.constant 0.000000e+00 : f32
    %55 = vector.broadcast %cst_41 : f32 to vector<8x32xf32>
    %56 = arith.maximumf %54, %55 : vector<8x32xf32>
    %57 = arith.truncf %56 : vector<8x32xf32> to vector<8x32xbf16>
    %c0_42 = arith.constant 0 : index
    %c0_43 = arith.constant 0 : index
    %58 = vector.load %arg16[%c0_42, %c0_43] : memref<32x16xbf16, #tpu.memory_space<vmem>>, vector<32x16xbf16>
    %c0_44 = arith.constant 0 : index
    %c0_45 = arith.constant 0 : index
    %59 = vector.load %arg17[%c0_44, %c0_45] : memref<1x16xf32, #tpu.memory_space<vmem>>, vector<1x16xf32>
    %cst_46 = arith.constant dense<0.000000e+00> : vector<8x16xf32>
    %60 = tpu.matmul %57, %58, %cst_46 {dimension_numbers = #tpu.dot_dimension_numbers<[1], [0], [0], [1], [0, 0, 1, 1], [], []>} : vector<8x32xbf16>, vector<32x16xbf16>, vector<8x16xf32> -> vector<8x16xf32>
    %61 = vector.broadcast %59 : vector<1x16xf32> to vector<8x16xf32>
    %62 = arith.addf %60, %61 : vector<8x16xf32>
    %cst_47 = arith.constant 0.000000e+00 : f32
    %63 = vector.broadcast %cst_47 : f32 to vector<8x16xf32>
    %64 = arith.maximumf %62, %63 : vector<8x16xf32>
    %65 = arith.truncf %64 : vector<8x16xf32> to vector<8x16xbf16>
    %c0_48 = arith.constant 0 : index
    %c0_49 = arith.constant 0 : index
    %66 = vector.load %arg18[%c0_48, %c0_49] : memref<16x16xbf16, #tpu.memory_space<vmem>>, vector<16x16xbf16>
    %c0_50 = arith.constant 0 : index
    %c0_51 = arith.constant 0 : index
    %67 = vector.load %arg19[%c0_50, %c0_51] : memref<1x16xf32, #tpu.memory_space<vmem>>, vector<1x16xf32>
    %cst_52 = arith.constant dense<0.000000e+00> : vector<8x16xf32>
    %68 = tpu.matmul %65, %66, %cst_52 {dimension_numbers = #tpu.dot_dimension_numbers<[1], [0], [0], [1], [0, 0, 1, 1], [], []>} : vector<8x16xbf16>, vector<16x16xbf16>, vector<8x16xf32> -> vector<8x16xf32>
    %69 = vector.broadcast %67 : vector<1x16xf32> to vector<8x16xf32>
    %70 = arith.addf %68, %69 : vector<8x16xf32>
    %cst_53 = arith.constant dense<0xFF800000> : vector<8xf32>
    %71 = vector.multi_reduction <maximumf>, %70, %cst_53 [1] : vector<8x16xf32> to vector<8xf32>
    %72 = vector.shape_cast %71 : vector<8xf32> to vector<8x1xf32>
    %73 = vector.broadcast %72 : vector<8x1xf32> to vector<8x16xf32>
    %74 = arith.subf %70, %73 : vector<8x16xf32>
    %75 = math.exp %74 : vector<8x16xf32>
    %cst_54 = arith.constant dense<0.000000e+00> : vector<8xf32>
    %76 = vector.multi_reduction <add>, %75, %cst_54 [1] : vector<8x16xf32> to vector<8xf32>
    %77 = vector.shape_cast %76 : vector<8xf32> to vector<8x1xf32>
    %78 = vector.broadcast %77 : vector<8x1xf32> to vector<8x16xf32>
    %79 = arith.divf %75, %78 : vector<8x16xf32>
    %c0_55 = arith.constant 0 : index
    %c0_56 = arith.constant 0 : index
    %80 = vector.load %arg20[%c0_55, %c0_56] : memref<8x16xf32, #tpu.memory_space<vmem>>, vector<8x16xf32>
    tpu.vector_store %arg20[%c0_55, %c0_56], %79 {strides = array<i32>} : memref<8x16xf32, #tpu.memory_space<vmem>>, vector<8x16xf32>,
    return
  }
  func.func @transform_0(%arg0: i32) -> (i32, i32) {
    %c0_i32 = arith.constant 0 : i32
    %c0_i32_0 = arith.constant 0 : i32
    return %arg0, %c0_i32 : i32, i32
  }
  func.func @transform_1(%arg0: i32) -> (i32, i32) {
    %c0_i32 = arith.constant 0 : i32
    %c0_i32_0 = arith.constant 0 : i32
    %c0_i32_1 = arith.constant 0 : i32
    return %c0_i32, %c0_i32_0 : i32, i32
  }
  func.func @transform_2(%arg0: i32) -> (i32, i32) {
    %c0_i32 = arith.constant 0 : i32
    %c0_i32_0 = arith.constant 0 : i32
    %c0_i32_1 = arith.constant 0 : i32
    return %c0_i32, %c0_i32_0 : i32, i32
  }
  func.func @transform_3(%arg0: i32) -> (i32, i32) {
    %c0_i32 = arith.constant 0 : i32
    %c0_i32_0 = arith.constant 0 : i32
    %c0_i32_1 = arith.constant 0 : i32
    return %c0_i32, %c0_i32_0 : i32, i32
  }
  func.func @transform_4(%arg0: i32) -> (i32, i32) {
    %c0_i32 = arith.constant 0 : i32
    %c0_i32_0 = arith.constant 0 : i32
    %c0_i32_1 = arith.constant 0 : i32
    return %c0_i32, %c0_i32_0 : i32, i32
  }
  func.func @transform_5(%arg0: i32) -> (i32, i32) {
    %c0_i32 = arith.constant 0 : i32
    %c0_i32_0 = arith.constant 0 : i32
    %c0_i32_1 = arith.constant 0 : i32
    return %c0_i32, %c0_i32_0 : i32, i32
  }
  func.func @transform_6(%arg0: i32) -> (i32, i32) {
    %c0_i32 = arith.constant 0 : i32
    %c0_i32_0 = arith.constant 0 : i32
    %c0_i32_1 = arith.constant 0 : i32
    return %c0_i32, %c0_i32_0 : i32, i32
  }
  func.func @transform_7(%arg0: i32) -> (i32, i32) {
    %c0_i32 = arith.constant 0 : i32
    %c0_i32_0 = arith.constant 0 : i32
    %c0_i32_1 = arith.constant 0 : i32
    return %c0_i32, %c0_i32_0 : i32, i32
  }
  func.func @transform_8(%arg0: i32) -> (i32, i32) {
    %c0_i32 = arith.constant 0 : i32
    %c0_i32_0 = arith.constant 0 : i32
    %c0_i32_1 = arith.constant 0 : i32
    return %c0_i32, %c0_i32_0 : i32, i32
  }
  func.func @transform_9(%arg0: i32) -> (i32, i32) {
    %c0_i32 = arith.constant 0 : i32
    %c0_i32_0 = arith.constant 0 : i32
    %c0_i32_1 = arith.constant 0 : i32
    return %c0_i32, %c0_i32_0 : i32, i32
  }
  func.func @transform_10(%arg0: i32) -> (i32, i32) {
    %c0_i32 = arith.constant 0 : i32
    %c0_i32_0 = arith.constant 0 : i32
    %c0_i32_1 = arith.constant 0 : i32
    return %c0_i32, %c0_i32_0 : i32, i32
  }
  func.func @transform_11(%arg0: i32) -> (i32, i32) {
    %c0_i32 = arith.constant 0 : i32
    %c0_i32_0 = arith.constant 0 : i32
    %c0_i32_1 = arith.constant 0 : i32
    return %c0_i32, %c0_i32_0 : i32, i32
  }
  func.func @transform_12(%arg0: i32) -> (i32, i32) {
    %c0_i32 = arith.constant 0 : i32
    %c0_i32_0 = arith.constant 0 : i32
    %c0_i32_1 = arith.constant 0 : i32
    return %c0_i32, %c0_i32_0 : i32, i32
  }
  func.func @transform_13(%arg0: i32) -> (i32, i32) {
    %c0_i32 = arith.constant 0 : i32
    %c0_i32_0 = arith.constant 0 : i32
    %c0_i32_1 = arith.constant 0 : i32
    return %c0_i32, %c0_i32_0 : i32, i32
  }
  func.func @transform_14(%arg0: i32) -> (i32, i32) {
    %c0_i32 = arith.constant 0 : i32
    %c0_i32_0 = arith.constant 0 : i32
    %c0_i32_1 = arith.constant 0 : i32
    return %c0_i32, %c0_i32_0 : i32, i32
  }
  func.func @transform_15(%arg0: i32) -> (i32, i32) {
    %c0_i32 = arith.constant 0 : i32
    %c0_i32_0 = arith.constant 0 : i32
    %c0_i32_1 = arith.constant 0 : i32
    return %c0_i32, %c0_i32_0 : i32, i32
  }
  func.func @transform_16(%arg0: i32) -> (i32, i32) {
    %c0_i32 = arith.constant 0 : i32
    %c0_i32_0 = arith.constant 0 : i32
    %c0_i32_1 = arith.constant 0 : i32
    return %c0_i32, %c0_i32_0 : i32, i32
  }
  func.func @transform_17(%arg0: i32) -> (i32, i32) {
    %c0_i32 = arith.constant 0 : i32
    %c0_i32_0 = arith.constant 0 : i32
    %c0_i32_1 = arith.constant 0 : i32
    return %c0_i32, %c0_i32_0 : i32, i32
  }
  func.func @transform_18(%arg0: i32) -> (i32, i32) {
    %c0_i32 = arith.constant 0 : i32
    %c0_i32_0 = arith.constant 0 : i32
    %c0_i32_1 = arith.constant 0 : i32
    return %c0_i32, %c0_i32_0 : i32, i32
  }
  func.func @transform_19(%arg0: i32) -> (i32, i32) {
    %c0_i32 = arith.constant 0 : i32
    %c0_i32_0 = arith.constant 0 : i32
    return %arg0, %c0_i32 : i32, i32
  }
}

</mosaic_0001>

<llo_original>
// kernel: tpu_custom_call.1
$region0: #{tpu_custom_call.1}
  #allocation0 [shape = 'u32[]', space=smem, size = 0x4, offset = 0x4, fixed_abs, tag = 'smem constant byte address 0x4 - core index']
  #allocation1 [shape = 'u32[144,128]{1,0:T(1,128)}', space=vmem, size = 0x12000, scoped, tag = 'internal scratch']
  %s0 = inlined_call_operand.hbm [shape: f32[8,32], index: 0, kind: input, shape index: {}]
  %s1 = inlined_call_operand.hbm [shape: bf16[32,2048], index: 1, kind: input, shape index: {}]
  %s2 = inlined_call_operand.hbm [shape: f32[1,2048], index: 2, kind: input, shape index: {}]
  %s3 = inlined_call_operand.hbm [shape: bf16[2048,1024], index: 3, kind: input, shape index: {}]
  %s4 = inlined_call_operand.hbm [shape: f32[1,1024], index: 4, kind: input, shape index: {}]
  %s5 = inlined_call_operand.hbm [shape: bf16[1024,512], index: 5, kind: input, shape index: {}]
  %s6 = inlined_call_operand.hbm [shape: f32[1,512], index: 6, kind: input, shape index: {}]
  %s7 = inlined_call_operand.hbm [shape: bf16[512,256], index: 7, kind: input, shape index: {}]
  %s8 = inlined_call_operand.hbm [shape: f32[1,256], index: 8, kind: input, shape index: {}]
  %s9 = inlined_call_operand.hbm [shape: bf16[256,128], index: 9, kind: input, shape index: {}]
  %s10 = inlined_call_operand.hbm [shape: f32[1,128], index: 10, kind: input, shape index: {}]
  %s11 = inlined_call_operand.vmem [shape: bf16[128,64], index: 11, kind: input, shape index: {}]
  %s12 = inlined_call_operand.hbm [shape: f32[1,64], index: 12, kind: input, shape index: {}]
  %s13 = inlined_call_operand.vmem [shape: bf16[64,32], index: 13, kind: input, shape index: {}]
  %s14 = inlined_call_operand.hbm [shape: f32[1,32], index: 14, kind: input, shape index: {}]
  %s15 = inlined_call_operand.vmem [shape: bf16[32,16], index: 15, kind: input, shape index: {}]
  %s16 = inlined_call_operand.hbm [shape: f32[1,16], index: 16, kind: input, shape index: {}]
  %s17 = inlined_call_operand.hbm [shape: bf16[16,16], index: 17, kind: input, shape index: {}]
  %s18 = inlined_call_operand.hbm [shape: f32[1,16], index: 18, kind: input, shape index: {}]
  %s19 = inlined_call_operand.hbm [shape: f32[8,16], index: 19, kind: output, shape index: {}]
  %s20 = sld [smem:[#allocation0]]
  $region150: #{tpu_custom_call.1} parent=0
    _
  %s22 = ssub.s32 1, %s20
  %s23 = scalar_select 0, %s22, %s20
  $region1: #{tpu_custom_call.1} parent=0
    #allocation2 [shape = 'u8[4096]{0}', space=vmem, size = 0x1000, scoped, tag = 'input window, operand 0, single buffered']
    #allocation3 [shape = 's32[1]{0}', space=sflag, size = 0x4, scoped, tag = 'scoped memory for tpu_custom_call.1']
    #allocation4 [shape = 's32[1]{0}', space=sflag, size = 0x4, scoped, tag = 'scoped memory for tpu_custom_call.1']
    #allocation5 [shape = 'u8[131072]{0}', space=vmem, size = 0x20000, scoped, tag = 'input window, operand 1, single buffered']
    #allocation6 [shape = 's32[1]{0}', space=sflag, size = 0x4, scoped, tag = 'scoped memory for tpu_custom_call.1']
    #allocation7 [shape = 'u8[8192]{0}', space=vmem, size = 0x2000, scoped, tag = 'input window, operand 2, single buffered']
    #allocation8 [shape = 'u8[4194304]{0}', space=vmem, size = 0x400000, scoped, tag = 'input window, operand 3, single buffered']
    #allocation9 [shape = 's32[1]{0}', space=sflag, size = 0x4, scoped, tag = 'scoped memory for tpu_custom_call.1']
    #allocation10 [shape = 'u8[4096]{0}', space=vmem, size = 0x1000, scoped, tag = 'input window, operand 4, single buffered']
    #allocation11 [shape = 'u8[1048576]{0}', space=vmem, size = 0x100000, scoped, tag = 'input window, operand 5, single buffered']
    #allocation12 [shape = 's32[1]{0}', space=sflag, size = 0x4, scoped, tag = 'scoped memory for tpu_custom_call.1']
    #allocation13 [shape = 'u8[2048]{0}', space=vmem, size = 0x800, scoped, tag = 'input window, operand 6, single buffered']
    #allocation14 [shape = 'u8[262144]{0}', space=vmem, size = 0x40000, scoped, tag = 'input window, operand 7, single buffered']
    #allocation15 [shape = 's32[1]{0}', space=sflag, size = 0x4, scoped, tag = 'scoped memory for tpu_custom_call.1']
    #allocation16 [shape = 'u8[1024]{0}', space=vmem, size = 0x400, scoped, tag = 'input window, operand 8, single buffered']
    #allocation17 [shape = 'u8[65536]{0}', space=vmem, size = 0x10000, scoped, tag = 'input window, operand 9, single buffered']
    #allocation18 [shape = 's32[1]{0}', space=sflag, size = 0x4, scoped, tag = 'scoped memory for tpu_custom_call.1']
    #allocation19 [shape = 'u8[512]{0}', space=vmem, size = 0x400, scoped, tag = 'input window, operand 10, single buffered']
    #allocation20 [shape = 'u8[512]{0}', space=vmem, size = 0x400, scoped, tag = 'input window, operand 12, single buffered']
    #allocation21 [shape = 's32[1]{0}', space=sflag, size = 0x4, scoped, tag = 'scoped memory for tpu_custom_call.1']
    #allocation22 [shape = 'u8[512]{0}', space=vmem, size = 0x400, scoped, tag = 'input window, operand 14, single buffered']
    #allocation23 [shape = 'u8[512]{0}', space=vmem, size = 0x400, scoped, tag = 'input window, operand 16, single buffered']
    #allocation24 [shape = 's32[1]{0}', space=sflag, size = 0x4, scoped, tag = 'scoped memory for tpu_custom_call.1']
    #allocation25 [shape = 'u8[4096]{0}', space=vmem, size = 0x1000, scoped, tag = 'input window, operand 17, single buffered']
    #allocation26 [shape = 'u8[512]{0}', space=vmem, size = 0x400, scoped, tag = 'input window, operand 18, single buffered']
    #allocation27 [shape = 's32[1]{0}', space=sflag, size = 0x4, scoped, tag = 'scoped memory for tpu_custom_call.1']
    #allocation28 [shape = 'u8[4096]{0}', space=vmem, size = 0x1000, scoped, tag = 'output window, operand 0, single buffered']
    %24 = vsyncpa [#allocation3], 0
    %25 = vsyncpa [#allocation6], 0
    %26 = vsyncpa [#allocation9], 0
    %27 = vsyncpa [#allocation12], 0
    %28 = vsyncpa [#allocation15], 0
    %29 = vsyncpa [#allocation18], 0
    %30 = vsyncpa [#allocation21], 0
    %31 = vsyncpa [#allocation24], 0
    %32 = vsyncpa [#allocation27], 0
    %33 = vsyncpa [#allocation4], 0
    // Predicated region
    $region2: #{tpu_custom_call.1} parent=1 // pred_check
      _
    $region3: #{tpu_custom_call.1} parent=1 // pred_check_branch
      %35 = sbr.rel (0) target = $region5
    $region4: #{tpu_custom_call.1} parent=1 // pred_region
      %s37 = ssub.s32 128, 128
      %38 = vsyncadd [#allocation3], %s37
      %s40 = sshll.u32 [#allocation2], 4
      %s41 = int_to_ptr.vmem [resolvable:$true] %s40
      %43 = dma.hbm_to_vmem [thread:$0]  %s0, 128, %s41, [#allocation3]
    $region5: #{tpu_custom_call.1} parent=1 // pred_fallthru
      _
    // Predicated region
    $region6: #{tpu_custom_call.1} parent=1 // pred_check
      _
    $region7: #{tpu_custom_call.1} parent=1 // pred_check_branch
      %45 = sbr.rel (0) target = $region9
    $region8: #{tpu_custom_call.1} parent=1 // pred_region
      %s47 = ssub.s32 4096, 4096
      %48 = vsyncadd [#allocation6], %s47
      %s49 = sshll.u32 [#allocation5], 4
      %s50 = int_to_ptr.vmem [resolvable:$true] %s49
      %55 = dma.hbm_to_vmem [thread:$0]  %s1, 4096, %s50, [#allocation6], 1024, 1024, 64
    $region9: #{tpu_custom_call.1} parent=1 // pred_fallthru
      _
    // Predicated region
    $region10: #{tpu_custom_call.1} parent=1 // pred_check
      _
    $region11: #{tpu_custom_call.1} parent=1 // pred_check_branch
      %57 = sbr.rel (0) target = $region13
    $region12: #{tpu_custom_call.1} parent=1 // pred_region
      %s59 = ssub.s32 256, 256
      %60 = vsyncadd [#allocation6], %s59
      %s62 = sshll.u32 [#allocation7], 4
      %s63 = int_to_ptr.vmem [resolvable:$true] %s62
      %65 = dma.hbm_to_vmem [thread:$0]  %s2, 256, %s63, [#allocation6]
    $region13: #{tpu_custom_call.1} parent=1 // pred_fallthru
      _
    // Predicated region
    $region14: #{tpu_custom_call.1} parent=1 // pred_check
      _
    $region15: #{tpu_custom_call.1} parent=1 // pred_check_branch
      %67 = sbr.rel (0) target = $region17
    $region16: #{tpu_custom_call.1} parent=1 // pred_region
      %s69 = ssub.s32 131072, 131072
      %70 = vsyncadd [#allocation9], %s69
      %s71 = sshll.u32 [#allocation8], 4
      %s72 = int_to_ptr.vmem [resolvable:$true] %s71
      %77 = dma.hbm_to_vmem [thread:$0]  %s3, 131072, %s72, [#allocation9], 512, 512, 32
    $region17: #{tpu_custom_call.1} parent=1 // pred_fallthru
      _
    // Predicated region
    $region18: #{tpu_custom_call.1} parent=1 // pred_check
      _
    $region19: #{tpu_custom_call.1} parent=1 // pred_check_branch
      %79 = sbr.rel (0) target = $region21
    $region20: #{tpu_custom_call.1} parent=1 // pred_region
      %s81 = ssub.s32 128, 128
      %82 = vsyncadd [#allocation9], %s81
      %s84 = sshll.u32 [#allocation10], 4
      %s85 = int_to_ptr.vmem [resolvable:$true] %s84
      %87 = dma.hbm_to_vmem [thread:$0]  %s4, 128, %s85, [#allocation9]
    $region21: #{tpu_custom_call.1} parent=1 // pred_fallthru
      _
    // Predicated region
    $region22: #{tpu_custom_call.1} parent=1 // pred_check
      _
    $region23: #{tpu_custom_call.1} parent=1 // pred_check_branch
      %89 = sbr.rel (0) target = $region25
    $region24: #{tpu_custom_call.1} parent=1 // pred_region
      %s91 = ssub.s32 32768, 32768
      %92 = vsyncadd [#allocation12], %s91
      %s93 = sshll.u32 [#allocation11], 4
      %s94 = int_to_ptr.vmem [resolvable:$true] %s93
      %99 = dma.hbm_to_vmem [thread:$0]  %s5, 32768, %s94, [#allocation12], 256, 256, 16
    $region25: #{tpu_custom_call.1} parent=1 // pred_fallthru
      _
    // Predicated region
    $region26: #{tpu_custom_call.1} parent=1 // pred_check
      _
    $region27: #{tpu_custom_call.1} parent=1 // pred_check_branch
      %101 = sbr.rel (0) target = $region29
    $region28: #{tpu_custom_call.1} parent=1 // pred_region
      %s103 = ssub.s32 64, 64
      %104 = vsyncadd [#allocation12], %s103
      %s106 = sshll.u32 [#allocation13], 4
      %s107 = int_to_ptr.vmem [resolvable:$true] %s106
      %109 = dma.hbm_to_vmem [thread:$0]  %s6, 64, %s107, [#allocation12]
    $region29: #{tpu_custom_call.1} parent=1 // pred_fallthru
      _
    // Predicated region
    $region30: #{tpu_custom_call.1} parent=1 // pred_check
      _
    $region31: #{tpu_custom_call.1} parent=1 // pred_check_branch
      %111 = sbr.rel (0) target = $region33
    $region32: #{tpu_custom_call.1} parent=1 // pred_region
      %s113 = ssub.s32 8192, 8192
      %114 = vsyncadd [#allocation15], %s113
      %s115 = sshll.u32 [#allocation14], 4
      %s116 = int_to_ptr.vmem [resolvable:$true] %s115
      %121 = dma.hbm_to_vmem [thread:$0]  %s7, 8192, %s116, [#allocation15], 128, 128, 8
    $region33: #{tpu_custom_call.1} parent=1 // pred_fallthru
      _
    // Predicated region
    $region34: #{tpu_custom_call.1} parent=1 // pred_check
      _
    $region35: #{tpu_custom_call.1} parent=1 // pred_check_branch
      %123 = sbr.rel (0) target = $region37
    $region36: #{tpu_custom_call.1} parent=1 // pred_region
      %s125 = ssub.s32 32, 32
      %126 = vsyncadd [#allocation15], %s125
      %s128 = sshll.u32 [#allocation16], 4
      %s129 = int_to_ptr.vmem [resolvable:$true] %s128
      %131 = dma.hbm_to_vmem [thread:$0]  %s8, 32, %s129, [#allocation15]
    $region37: #{tpu_custom_call.1} parent=1 // pred_fallthru
      _
    // Predicated region
    $region38: #{tpu_custom_call.1} parent=1 // pred_check
      _
    $region39: #{tpu_custom_call.1} parent=1 // pred_check_branch
      %133 = sbr.rel (0) target = $region41
    $region40: #{tpu_custom_call.1} parent=1 // pred_region
      %s135 = ssub.s32 2048, 2048
      %136 = vsyncadd [#allocation18], %s135
      %s137 = sshll.u32 [#allocation17], 4
      %s138 = int_to_ptr.vmem [resolvable:$true] %s137
      %143 = dma.hbm_to_vmem [thread:$0]  %s9, 2048, %s138, [#allocation18], 64, 64, 4
    $region41: #{tpu_custom_call.1} parent=1 // pred_fallthru
      _
    // Predicated region
    $region42: #{tpu_custom_call.1} parent=1 // pred_check
      _
    $region43: #{tpu_custom_call.1} parent=1 // pred_check_branch
      %145 = sbr.rel (0) target = $region45
    $region44: #{tpu_custom_call.1} parent=1 // pred_region
      %s147 = ssub.s32 16, 16
      %148 = vsyncadd [#allocation18], %s147
      %s150 = sshll.u32 [#allocation19], 4
      %s151 = int_to_ptr.vmem [resolvable:$true] %s150
      %153 = dma.hbm_to_vmem [thread:$0]  %s10, 16, %s151, [#allocation18]
    $region45: #{tpu_custom_call.1} parent=1 // pred_fallthru
      _
    // Predicated region
    $region46: #{tpu_custom_call.1} parent=1 // pred_check
      _
    $region47: #{tpu_custom_call.1} parent=1 // pred_check_branch
      %155 = sbr.rel (0) target = $region49
    $region48: #{tpu_custom_call.1} parent=1 // pred_region
      _
    $region49: #{tpu_custom_call.1} parent=1 // pred_fallthru
      _
    // Predicated region
    $region50: #{tpu_custom_call.1} parent=1 // pred_check
      _
    $region51: #{tpu_custom_call.1} parent=1 // pred_check_branch
      %157 = sbr.rel (0) target = $region53
    $region52: #{tpu_custom_call.1} parent=1 // pred_region
      %s159 = ssub.s32 16, 16
      %160 = vsyncadd [#allocation21], %s159
      %s162 = sshll.u32 [#allocation20], 4
      %s163 = int_to_ptr.vmem [resolvable:$true] %s162
      %165 = dma.hbm_to_vmem [thread:$0]  %s12, 16, %s163, [#allocation21]
    $region53: #{tpu_custom_call.1} parent=1 // pred_fallthru
      _
    // Predicated region
    $region54: #{tpu_custom_call.1} parent=1 // pred_check
      _
    $region55: #{tpu_custom_call.1} parent=1 // pred_check_branch
      %167 = sbr.rel (0) target = $region57
    $region56: #{tpu_custom_call.1} parent=1 // pred_region
      _
    $region57: #{tpu_custom_call.1} parent=1 // pred_fallthru
      _
    // Predicated region
    $region58: #{tpu_custom_call.1} parent=1 // pred_check
      _
    $region59: #{tpu_custom_call.1} parent=1 // pred_check_branch
      %169 = sbr.rel (0) target = $region61
    $region60: #{tpu_custom_call.1} parent=1 // pred_region
      %s171 = ssub.s32 16, 16
      %172 = vsyncadd [#allocation21], %s171
      %s174 = sshll.u32 [#allocation22], 4
      %s175 = int_to_ptr.vmem [resolvable:$true] %s174
      %177 = dma.hbm_to_vmem [thread:$0]  %s14, 16, %s175, [#allocation21]
    $region61: #{tpu_custom_call.1} parent=1 // pred_fallthru
      _
    // Predicated region
    $region62: #{tpu_custom_call.1} parent=1 // pred_check
      _
    $region63: #{tpu_custom_call.1} parent=1 // pred_check_branch
      %179 = sbr.rel (0) target = $region65
    $region64: #{tpu_custom_call.1} parent=1 // pred_region
      _
    $region65: #{tpu_custom_call.1} parent=1 // pred_fallthru
      _
    // Predicated region
    $region66: #{tpu_custom_call.1} parent=1 // pred_check
      _
    $region67: #{tpu_custom_call.1} parent=1 // pred_check_branch
      %181 = sbr.rel (0) target = $region69
    $region68: #{tpu_custom_call.1} parent=1 // pred_region
      %s183 = ssub.s32 16, 16
      %184 = vsyncadd [#allocation24], %s183
      %s186 = sshll.u32 [#allocation23], 4
      %s187 = int_to_ptr.vmem [resolvable:$true] %s186
      %189 = dma.hbm_to_vmem [thread:$0]  %s16, 16, %s187, [#allocation24]
    $region69: #{tpu_custom_call.1} parent=1 // pred_fallthru
      _
    // Predicated region
    $region70: #{tpu_custom_call.1} parent=1 // pred_check
      _
    $region71: #{tpu_custom_call.1} parent=1 // pred_check_branch
      %191 = sbr.rel (0) target = $region73
    $region72: #{tpu_custom_call.1} parent=1 // pred_region
      %s193 = ssub.s32 128, 128
      %194 = vsyncadd [#allocation24], %s193
      %s195 = sshll.u32 [#allocation25], 4
      %s196 = int_to_ptr.vmem [resolvable:$true] %s195
      %201 = dma.hbm_to_vmem [thread:$0]  %s17, 128, %s196, [#allocation24], 64, 64, 4
    $region73: #{tpu_custom_call.1} parent=1 // pred_fallthru
      _
    // Predicated region
    $region74: #{tpu_custom_call.1} parent=1 // pred_check
      _
    $region75: #{tpu_custom_call.1} parent=1 // pred_check_branch
      %203 = sbr.rel (0) target = $region77
    $region76: #{tpu_custom_call.1} parent=1 // pred_region
      %s205 = ssub.s32 16, 16
      %206 = vsyncadd [#allocation27], %s205
      %s208 = sshll.u32 [#allocation26], 4
      %s209 = int_to_ptr.vmem [resolvable:$true] %s208
      %211 = dma.hbm_to_vmem [thread:$0]  %s18, 16, %s209, [#allocation27]
    $region77: #{tpu_custom_call.1} parent=1 // pred_fallthru
      _
    // Predicated region
    $region78: #{tpu_custom_call.1} parent=1 // pred_check
      _
    $region79: #{tpu_custom_call.1} parent=1 // pred_check_branch
      %213 = sbr.rel (0) target = $region81
    $region80: #{tpu_custom_call.1} parent=1 // pred_region
      %214 = dma.done [#allocation3], 128
    $region81: #{tpu_custom_call.1} parent=1 // pred_fallthru
      _
    // Predicated region
    $region82: #{tpu_custom_call.1} parent=1 // pred_check
      _
    $region83: #{tpu_custom_call.1} parent=1 // pred_check_branch
      %216 = sbr.rel (0) target = $region85
    $region84: #{tpu_custom_call.1} parent=1 // pred_region
      %217 = dma.done [#allocation6], 4096
    $region85: #{tpu_custom_call.1} parent=1 // pred_fallthru
      _
    // Predicated region
    $region86: #{tpu_custom_call.1} parent=1 // pred_check
      _
    $region87: #{tpu_custom_call.1} parent=1 // pred_check_branch
      %219 = sbr.rel (0) target = $region89
    $region88: #{tpu_custom_call.1} parent=1 // pred_region
      %220 = dma.done [#allocation6], 256
    $region89: #{tpu_custom_call.1} parent=1 // pred_fallthru
      _
    // Predicated region
    $region90: #{tpu_custom_call.1} parent=1 // pred_check
      _
    $region91: #{tpu_custom_call.1} parent=1 // pred_check_branch
      %222 = sbr.rel (0) target = $region93
    $region92: #{tpu_custom_call.1} parent=1 // pred_region
      %223 = dma.done [#allocation9], 131072
    $region93: #{tpu_custom_call.1} parent=1 // pred_fallthru
      _
    // Predicated region
    $region94: #{tpu_custom_call.1} parent=1 // pred_check
      _
    $region95: #{tpu_custom_call.1} parent=1 // pred_check_branch
      %225 = sbr.rel (0) target = $region97
    $region96: #{tpu_custom_call.1} parent=1 // pred_region
      %226 = dma.done [#allocation9], 128
    $region97: #{tpu_custom_call.1} parent=1 // pred_fallthru
      _
    // Predicated region
    $region98: #{tpu_custom_call.1} parent=1 // pred_check
      _
    $region99: #{tpu_custom_call.1} parent=1 // pred_check_branch
      %228 = sbr.rel (0) target = $region101
    $region100: #{tpu_custom_call.1} parent=1 // pred_region
      %229 = dma.done [#allocation12], 32768
    $region101: #{tpu_custom_call.1} parent=1 // pred_fallthru
      _
    // Predicated region
    $region102: #{tpu_custom_call.1} parent=1 // pred_check
      _
    $region103: #{tpu_custom_call.1} parent=1 // pred_check_branch
      %231 = sbr.rel (0) target = $region105
    $region104: #{tpu_custom_call.1} parent=1 // pred_region
      %232 = dma.done [#allocation12], 64
    $region105: #{tpu_custom_call.1} parent=1 // pred_fallthru
      _
    // Predicated region
    $region106: #{tpu_custom_call.1} parent=1 // pred_check
      _
    $region107: #{tpu_custom_call.1} parent=1 // pred_check_branch
      %234 = sbr.rel (0) target = $region109
    $region108: #{tpu_custom_call.1} parent=1 // pred_region
      %235 = dma.done [#allocation15], 8192
    $region109: #{tpu_custom_call.1} parent=1 // pred_fallthru
      _
    // Predicated region
    $region110: #{tpu_custom_call.1} parent=1 // pred_check
      _
    $region111: #{tpu_custom_call.1} parent=1 // pred_check_branch
      %237 = sbr.rel (0) target = $region113
    $region112: #{tpu_custom_call.1} parent=1 // pred_region
      %238 = dma.done [#allocation15], 32
    $region113: #{tpu_custom_call.1} parent=1 // pred_fallthru
      _
    // Predicated region
    $region114: #{tpu_custom_call.1} parent=1 // pred_check
      _
    $region115: #{tpu_custom_call.1} parent=1 // pred_check_branch
      %240 = sbr.rel (0) target = $region117
    $region116: #{tpu_custom_call.1} parent=1 // pred_region
      %241 = dma.done [#allocation18], 2048
    $region117: #{tpu_custom_call.1} parent=1 // pred_fallthru
      _
    // Predicated region
    $region118: #{tpu_custom_call.1} parent=1 // pred_check
      _
    $region119: #{tpu_custom_call.1} parent=1 // pred_check_branch
      %243 = sbr.rel (0) target = $region121
    $region120: #{tpu_custom_call.1} parent=1 // pred_region
      %244 = dma.done [#allocation18], 16
    $region121: #{tpu_custom_call.1} parent=1 // pred_fallthru
      _
    // Predicated region
    $region122: #{tpu_custom_call.1} parent=1 // pred_check
      _
    $region123: #{tpu_custom_call.1} parent=1 // pred_check_branch
      %246 = sbr.rel (0) target = $region125
    $region124: #{tpu_custom_call.1} parent=1 // pred_region
      %247 = dma.done [#allocation21], 16
    $region125: #{tpu_custom_call.1} parent=1 // pred_fallthru
      _
    // Predicated region
    $region126: #{tpu_custom_call.1} parent=1 // pred_check
      _
    $region127: #{tpu_custom_call.1} parent=1 // pred_check_branch
      %249 = sbr.rel (0) target = $region129
    $region128: #{tpu_custom_call.1} parent=1 // pred_region
      %250 = dma.done [#allocation21], 16
    $region129: #{tpu_custom_call.1} parent=1 // pred_fallthru
      _
    // Predicated region
    $region130: #{tpu_custom_call.1} parent=1 // pred_check
      _
    $region131: #{tpu_custom_call.1} parent=1 // pred_check_branch
      %252 = sbr.rel (0) target = $region133
    $region132: #{tpu_custom_call.1} parent=1 // pred_region
      %253 = dma.done [#allocation24], 16
    $region133: #{tpu_custom_call.1} parent=1 // pred_fallthru
      _
    // Predicated region
    $region134: #{tpu_custom_call.1} parent=1 // pred_check
      _
    $region135: #{tpu_custom_call.1} parent=1 // pred_check_branch
      %255 = sbr.rel (0) target = $region137
    $region136: #{tpu_custom_call.1} parent=1 // pred_region
      %256 = dma.done [#allocation24], 128
    $region137: #{tpu_custom_call.1} parent=1 // pred_fallthru
      _
    // Predicated region
    $region138: #{tpu_custom_call.1} parent=1 // pred_check
      _
    $region139: #{tpu_custom_call.1} parent=1 // pred_check_branch
      %258 = sbr.rel (0) target = $region141
    $region140: #{tpu_custom_call.1} parent=1 // pred_region
      %259 = dma.done [#allocation27], 16
    $region141: #{tpu_custom_call.1} parent=1 // pred_fallthru
      _
    %v261 = vld [vmem:[#allocation2] sm:$0xff]
    %v262 = vpack.c.bf16 %v261, %v261
    %v263 = vld [vmem:[#allocation5] sm:$0xff]
    %v264 = vld [vmem:[#allocation5 + $0x8] sm:$0xff]
    %v265 = vld [vmem:[#allocation5 + $0x10] sm:$0xff]
    %v266 = vld [vmem:[#allocation5 + $0x18] sm:$0xff]
    %v267 = vld [vmem:[#allocation5 + $0x20] sm:$0xff]
    %v268 = vld [vmem:[#allocation5 + $0x28] sm:$0xff]
    %v269 = vld [vmem:[#allocation5 + $0x30] sm:$0xff]
    %v270 = vld [vmem:[#allocation5 + $0x38] sm:$0xff]
    %v271 = vld [vmem:[#allocation5 + $0x40] sm:$0xff]
    %v272 = vld [vmem:[#allocation5 + $0x48] sm:$0xff]
    %v273 = vld [vmem:[#allocation5 + $0x50] sm:$0xff]
    %v274 = vld [vmem:[#allocation5 + $0x58] sm:$0xff]
    %v275 = vld [vmem:[#allocation5 + $0x60] sm:$0xff]
    %v276 = vld [vmem:[#allocation5 + $0x68] sm:$0xff]
    %v277 = vld [vmem:[#allocation5 + $0x70] sm:$0xff]
    %v278 = vld [vmem:[#allocation5 + $0x78] sm:$0xff]
    %v279 = vld [vmem:[#allocation5 + $0x80] sm:$0xff]
    %v280 = vld [vmem:[#allocation5 + $0x88] sm:$0xff]
    %v281 = vld [vmem:[#allocation5 + $0x90] sm:$0xff]
    %v282 = vld [vmem:[#allocation5 + $0x98] sm:$0xff]
    %v283 = vld [vmem:[#allocation5 + $0xa0] sm:$0xff]
    %v284 = vld [vmem:[#allocation5 + $0xa8] sm:$0xff]
    %v285 = vld [vmem:[#allocation5 + $0xb0] sm:$0xff]
    %v286 = vld [vmem:[#allocation5 + $0xb8] sm:$0xff]
    %v287 = vld [vmem:[#allocation5 + $0xc0] sm:$0xff]
    %v288 = vld [vmem:[#allocation5 + $0xc8] sm:$0xff]
    %v289 = vld [vmem:[#allocation5 + $0xd0] sm:$0xff]
    %v290 = vld [vmem:[#allocation5 + $0xd8] sm:$0xff]
    %v291 = vld [vmem:[#allocation5 + $0xe0] sm:$0xff]
    %v292 = vld [vmem:[#allocation5 + $0xe8] sm:$0xff]
    %v293 = vld [vmem:[#allocation5 + $0xf0] sm:$0xff]
    %v294 = vld [vmem:[#allocation5 + $0xf8] sm:$0xff]
    %v295 = vld [vmem:[#allocation7] sm:$0xff]
    %v296 = vld [vmem:[#allocation7 + $0x8] sm:$0xff]
    %v299 = vlaneseq
    %v300 = vshrl.u32 %v299, 7
    %v301 = vsub.s32 0, %v300
    %v302 = vrot.slane %v295, %v301
    %v303 = vlaneseq
    %v304 = vshrl.u32 %v303, 7
    %v305 = vsub.s32 1, %v304
    %v306 = vrot.slane %v295, %v305
    %v307 = vlaneseq
    %v308 = vshrl.u32 %v307, 7
    %v309 = vsub.s32 2, %v308
    %v310 = vrot.slane %v295, %v309
    %v311 = vlaneseq
    %v312 = vshrl.u32 %v311, 7
    %v313 = vsub.s32 3, %v312
    %v314 = vrot.slane %v295, %v313
    %v315 = vlaneseq
    %v316 = vshrl.u32 %v315, 7
    %v317 = vsub.s32 4, %v316
    %v318 = vrot.slane %v295, %v317
    %v319 = vlaneseq
    %v320 = vshrl.u32 %v319, 7
    %v321 = vsub.s32 5, %v320
    %v322 = vrot.slane %v295, %v321
    %v323 = vlaneseq
    %v324 = vshrl.u32 %v323, 7
    %v325 = vsub.s32 6, %v324
    %v326 = vrot.slane %v295, %v325
    %v327 = vlaneseq
    %v328 = vshrl.u32 %v327, 7
    %v329 = vsub.s32 7, %v328
    %v330 = vrot.slane %v295, %v329
    %v331 = vlaneseq
    %v332 = vshrl.u32 %v331, 7
    %v333 = vsub.s32 0, %v332
    %v334 = vrot.slane %v296, %v333
    %v335 = vlaneseq
    %v336 = vshrl.u32 %v335, 7
    %v337 = vsub.s32 1, %v336
    %v338 = vrot.slane %v296, %v337
    %v339 = vlaneseq
    %v340 = vshrl.u32 %v339, 7
    %v341 = vsub.s32 2, %v340
    %v342 = vrot.slane %v296, %v341
    %v343 = vlaneseq
    %v344 = vshrl.u32 %v343, 7
    %v345 = vsub.s32 3, %v344
    %v346 = vrot.slane %v296, %v345
    %v347 = vlaneseq
    %v348 = vshrl.u32 %v347, 7
    %v349 = vsub.s32 4, %v348
    %v350 = vrot.slane %v296, %v349
    %v351 = vlaneseq
    %v352 = vshrl.u32 %v351, 7
    %v353 = vsub.s32 5, %v352
    %v354 = vrot.slane %v296, %v353
    %v355 = vlaneseq
    %v356 = vshrl.u32 %v355, 7
    %v357 = vsub.s32 6, %v356
    %v358 = vrot.slane %v296, %v357
    %v359 = vlaneseq
    %v360 = vshrl.u32 %v359, 7
    %v361 = vsub.s32 7, %v360
    %v362 = vrot.slane %v296, %v361
    %v411 = vunpack.c.l.b16 %v263
    %v412 = vunpack.c.h.b16 %v263
    %v413 = vunpack.c.l.b16 %v264
    %v414 = vunpack.c.h.b16 %v264
    %v415 = vunpack.c.l.b16 %v265
    %v416 = vunpack.c.h.b16 %v265
    %v417 = vunpack.c.l.b16 %v266
    %v418 = vunpack.c.h.b16 %v266
    %v419 = vunpack.c.l.b16 %v267
    %v420 = vunpack.c.h.b16 %v267
    %v421 = vunpack.c.l.b16 %v268
    %v422 = vunpack.c.h.b16 %v268
    %v423 = vunpack.c.l.b16 %v269
    %v424 = vunpack.c.h.b16 %v269
    %v425 = vunpack.c.l.b16 %v270
    %v426 = vunpack.c.h.b16 %v270
    %v427 = vunpack.c.l.b16 %v271
    %v428 = vunpack.c.h.b16 %v271
    %v429 = vunpack.c.l.b16 %v272
    %v430 = vunpack.c.h.b16 %v272
    %v431 = vunpack.c.l.b16 %v273
    %v432 = vunpack.c.h.b16 %v273
    %v433 = vunpack.c.l.b16 %v274
    %v434 = vunpack.c.h.b16 %v274
    %v435 = vunpack.c.l.b16 %v275
    %v436 = vunpack.c.h.b16 %v275
    %v437 = vunpack.c.l.b16 %v276
    %v438 = vunpack.c.h.b16 %v276
    %v439 = vunpack.c.l.b16 %v277
    %v440 = vunpack.c.h.b16 %v277
    %v441 = vunpack.c.l.b16 %v278
    %v442 = vunpack.c.h.b16 %v278
    %v443 = vunpack.c.l.b16 %v279
    %v444 = vunpack.c.h.b16 %v279
    %v445 = vunpack.c.l.b16 %v280
    %v446 = vunpack.c.h.b16 %v280
    %v447 = vunpack.c.l.b16 %v281
    %v448 = vunpack.c.h.b16 %v281
    %v449 = vunpack.c.l.b16 %v282
    %v450 = vunpack.c.h.b16 %v282
    %v451 = vunpack.c.l.b16 %v283
    %v452 = vunpack.c.h.b16 %v283
    %v453 = vunpack.c.l.b16 %v284
    %v454 = vunpack.c.h.b16 %v284
    %v455 = vunpack.c.l.b16 %v285
    %v456 = vunpack.c.h.b16 %v285
    %v457 = vunpack.c.l.b16 %v286
    %v458 = vunpack.c.h.b16 %v286
    %v459 = vunpack.c.l.b16 %v287
    %v460 = vunpack.c.h.b16 %v287
    %v461 = vunpack.c.l.b16 %v288
    %v462 = vunpack.c.h.b16 %v288
    %v463 = vunpack.c.l.b16 %v289
    %v464 = vunpack.c.h.b16 %v289
    %v465 = vunpack.c.l.b16 %v290
    %v466 = vunpack.c.h.b16 %v290
    %v467 = vunpack.c.l.b16 %v291
    %v468 = vunpack.c.h.b16 %v291
    %v469 = vunpack.c.l.b16 %v292
    %v470 = vunpack.c.h.b16 %v292
    %v471 = vunpack.c.l.b16 %v293
    %v472 = vunpack.c.h.b16 %v293
    %v473 = vunpack.c.l.b16 %v294
    %v474 = vunpack.c.h.b16 %v294
    %v475 = vpack.c.b16 %v427, %v411
    %v476 = vpack.c.b16 %v428, %v412
    %v477 = vpack.c.b16 %v429, %v413
    %v478 = vpack.c.b16 %v430, %v414
    %v479 = vpack.c.b16 %v431, %v415
    %v480 = vpack.c.b16 %v432, %v416
    %v481 = vpack.c.b16 %v433, %v417
    %v482 = vpack.c.b16 %v434, %v418
    %v483 = vpack.c.b16 %v435, %v419
    %v484 = vpack.c.b16 %v436, %v420
    %v485 = vpack.c.b16 %v437, %v421
    %v486 = vpack.c.b16 %v438, %v422
    %v487 = vpack.c.b16 %v439, %v423
    %v488 = vpack.c.b16 %v440, %v424
    %v489 = vpack.c.b16 %v441, %v425
    %v490 = vpack.c.b16 %v442, %v426
    %v491 = vpack.c.b16 %v459, %v443
    %v492 = vpack.c.b16 %v460, %v444
    %v493 = vpack.c.b16 %v461, %v445
    %v494 = vpack.c.b16 %v462, %v446
    %v495 = vpack.c.b16 %v463, %v447
    %v496 = vpack.c.b16 %v464, %v448
    %v497 = vpack.c.b16 %v465, %v449
    %v498 = vpack.c.b16 %v466, %v450
    %v499 = vpack.c.b16 %v467, %v451
    %v500 = vpack.c.b16 %v468, %v452
    %v501 = vpack.c.b16 %v469, %v453
    %v502 = vpack.c.b16 %v470, %v454
    %v503 = vpack.c.b16 %v471, %v455
    %v504 = vpack.c.b16 %v472, %v456
    %v505 = vpack.c.b16 %v473, %v457
    %v506 = vpack.c.b16 %v474, %v458
    %vm539 = vcmask 261120
    %v541 = vsel %vm539, %v262, 0
    %543 = vmatprep.subr.bf16.mxu0 %v476
    %544 = vmatpush1.bf16.msra.mxu0 %v475
    %545 = vmatprep.subr.bf16.mxu0 %v492
    %546 = vmatpush1.bf16.msra.mxu0 %v491
    %547 = vmatprep.subr.bf16.mxu0 0
    %548 = vmatpush1.bf16.msra.mxu0 0
    %549 = vmatprep.subr.bf16.mxu0 0
    %550 = vmatpush1.bf16.msra.mxu0 0
    %551 = vmatprep.subr.bf16.mxu0 0
    %552 = vmatpush1.bf16.msra.mxu0 0
    %553 = vmatprep.subr.bf16.mxu0 0
    %554 = vmatpush1.bf16.msra.mxu0 0
    %555 = vmatprep.subr.bf16.mxu0 0
    %556 = vmatpush1.bf16.msra.mxu0 0
    %557 = vmatprep.subr.bf16.mxu0 0
    %558 = vmatpush1.bf16.msra.mxu0 0
    %559 = vmatprep.subr.bf16.mxu0 0
    %560 = vmatpush1.bf16.msra.mxu0 0
    %561 = vmatprep.subr.bf16.mxu0 0
    %562 = vmatpush1.bf16.msra.mxu0 0
    %563 = vmatprep.subr.bf16.mxu0 0
    %564 = vmatpush1.bf16.msra.mxu0 0
    %565 = vmatprep.subr.bf16.mxu0 0
    %566 = vmatpush1.bf16.msra.mxu0 0
    %567 = vmatprep.subr.bf16.mxu0 0
    %568 = vmatpush1.bf16.msra.mxu0 0
    %569 = vmatprep.subr.bf16.mxu0 0
    %570 = vmatpush1.bf16.msra.mxu0 0
    %571 = vmatprep.subr.bf16.mxu0 0
    %572 = vmatpush1.bf16.msra.mxu0 0
    %573 = vmatprep.subr.bf16.mxu0 0
    %574 = vmatpush1.bf16.msra.mxu0 0
    %575 = vmatprep.mubr.bf16.mxu0 0
    %576 = vmatmul.mubr.bf16.gmra.mrb[0].mxu0 %v541
    %v577 = vpop.f32.mrb[0].mxu0
    %v578 = vadd.f32 %v302, %v577
    %v579 = vpop.f32.mrb[0].mxu0
    %v580 = vadd.f32 %v306, %v579
    %v581 = vpop.f32.mrb[0].mxu0
    %v582 = vpop.f32.mrb[0].mxu0
    %583 = vdwg.mxu0
    %584 = vmatprep.subr.bf16.mxu0 %v478
    %585 = vmatpush1.bf16.msra.mxu0 %v477
    %586 = vmatprep.subr.bf16.mxu0 %v494
    %587 = vmatpush1.bf16.msra.mxu0 %v493
    %588 = vmatprep.subr.bf16.mxu0 0
    %589 = vmatpush1.bf16.msra.mxu0 0
    %590 = vmatprep.subr.bf16.mxu0 0
    %591 = vmatpush1.bf16.msra.mxu0 0
    %592 = vmatprep.subr.bf16.mxu0 0
    %593 = vmatpush1.bf16.msra.mxu0 0
    %594 = vmatprep.subr.bf16.mxu0 0
    %595 = vmatpush1.bf16.msra.mxu0 0
    %596 = vmatprep.subr.bf16.mxu0 0
    %597 = vmatpush1.bf16.msra.mxu0 0
    %598 = vmatprep.subr.bf16.mxu0 0
    %599 = vmatpush1.bf16.msra.mxu0 0
    %600 = vmatprep.subr.bf16.mxu0 0
    %601 = vmatpush1.bf16.msra.mxu0 0
    %602 = vmatprep.subr.bf16.mxu0 0
    %603 = vmatpush1.bf16.msra.mxu0 0
    %604 = vmatprep.subr.bf16.mxu0 0
    %605 = vmatpush1.bf16.msra.mxu0 0
    %606 = vmatprep.subr.bf16.mxu0 0
    %607 = vmatpush1.bf16.msra.mxu0 0
    %608 = vmatprep.subr.bf16.mxu0 0
    %609 = vmatpush1.bf16.msra.mxu0 0
    %610 = vmatprep.subr.bf16.mxu0 0
    %611 = vmatpush1.bf16.msra.mxu0 0
    %612 = vmatprep.subr.bf16.mxu0 0
    %613 = vmatpush1.bf16.msra.mxu0 0
    %614 = vmatprep.subr.bf16.mxu0 0
    %615 = vmatpush1.bf16.msra.mxu0 0
    %616 = vmatprep.mubr.bf16.mxu0 0
    %617 = vmatmul.mubr.bf16.gmra.mrb[0].mxu0 %v541
    %v618 = vpop.f32.mrb[0].mxu0
    %v619 = vadd.f32 %v310, %v618
    %v620 = vpop.f32.mrb[0].mxu0
    %v621 = vadd.f32 %v314, %v620
    %v622 = vpop.f32.mrb[0].mxu0
    %v623 = vpop.f32.mrb[0].mxu0
    %624 = vdwg.mxu0
    %625 = vmatprep.subr.bf16.mxu0 %v480
    %626 = vmatpush1.bf16.msra.mxu0 %v479
    %627 = vmatprep.subr.bf16.mxu0 %v496
    %628 = vmatpush1.bf16.msra.mxu0 %v495
    %629 = vmatprep.subr.bf16.mxu0 0
    %630 = vmatpush1.bf16.msra.mxu0 0
    %631 = vmatprep.subr.bf16.mxu0 0
    %632 = vmatpush1.bf16.msra.mxu0 0
    %633 = vmatprep.subr.bf16.mxu0 0
    %634 = vmatpush1.bf16.msra.mxu0 0
    %635 = vmatprep.subr.bf16.mxu0 0
    %636 = vmatpush1.bf16.msra.mxu0 0
    %637 = vmatprep.subr.bf16.mxu0 0
    %638 = vmatpush1.bf16.msra.mxu0 0
    %639 = vmatprep.subr.bf16.mxu0 0
    %640 = vmatpush1.bf16.msra.mxu0 0
    %641 = vmatprep.subr.bf16.mxu0 0
    %642 = vmatpush1.bf16.msra.mxu0 0
    %643 = vmatprep.subr.bf16.mxu0 0
    %644 = vmatpush1.bf16.msra.mxu0 0
    %645 = vmatprep.subr.bf16.mxu0 0
    %646 = vmatpush1.bf16.msra.mxu0 0
    %647 = vmatprep.subr.bf16.mxu0 0
    %648 = vmatpush1.bf16.msra.mxu0 0
    %649 = vmatprep.subr.bf16.mxu0 0
    %650 = vmatpush1.bf16.msra.mxu0 0
    %651 = vmatprep.subr.bf16.mxu0 0
    %652 = vmatpush1.bf16.msra.mxu0 0
    %653 = vmatprep.subr.bf16.mxu0 0
    %654 = vmatpush1.bf16.msra.mxu0 0
    %655 = vmatprep.subr.bf16.mxu0 0
    %656 = vmatpush1.bf16.msra.mxu0 0
    %657 = vmatprep.mubr.bf16.mxu0 0
    %658 = vmatmul.mubr.bf16.gmra.mrb[0].mxu0 %v541
    %v659 = vpop.f32.mrb[0].mxu0
    %v660 = vadd.f32 %v318, %v659
    %v661 = vpop.f32.mrb[0].mxu0
    %v662 = vadd.f32 %v322, %v661
    %v663 = vpop.f32.mrb[0].mxu0
    %v664 = vpop.f32.mrb[0].mxu0
    %665 = vdwg.mxu0
    %666 = vmatprep.subr.bf16.mxu0 %v482
    %667 = vmatpush1.bf16.msra.mxu0 %v481
    %668 = vmatprep.subr.bf16.mxu0 %v498
    %669 = vmatpush1.bf16.msra.mxu0 %v497
    %670 = vmatprep.subr.bf16.mxu0 0
    %671 = vmatpush1.bf16.msra.mxu0 0
    %672 = vmatprep.subr.bf16.mxu0 0
    %673 = vmatpush1.bf16.msra.mxu0 0
    %674 = vmatprep.subr.bf16.mxu0 0
    %675 = vmatpush1.bf16.msra.mxu0 0
    %676 = vmatprep.subr.bf16.mxu0 0
    %677 = vmatpush1.bf16.msra.mxu0 0
    %678 = vmatprep.subr.bf16.mxu0 0
    %679 = vmatpush1.bf16.msra.mxu0 0
    %680 = vmatprep.subr.bf16.mxu0 0
    %681 = vmatpush1.bf16.msra.mxu0 0
    %682 = vmatprep.subr.bf16.mxu0 0
    %683 = vmatpush1.bf16.msra.mxu0 0
    %684 = vmatprep.subr.bf16.mxu0 0
    %685 = vmatpush1.bf16.msra.mxu0 0
    %686 = vmatprep.subr.bf16.mxu0 0
    %687 = vmatpush1.bf16.msra.mxu0 0
    %688 = vmatprep.subr.bf16.mxu0 0
    %689 = vmatpush1.bf16.msra.mxu0 0
    %690 = vmatprep.subr.bf16.mxu0 0
    %691 = vmatpush1.bf16.msra.mxu0 0
    %692 = vmatprep.subr.bf16.mxu0 0
    %693 = vmatpush1.bf16.msra.mxu0 0
    %694 = vmatprep.subr.bf16.mxu0 0
    %695 = vmatpush1.bf16.msra.mxu0 0
    %696 = vmatprep.subr.bf16.mxu0 0
    %697 = vmatpush1.bf16.msra.mxu0 0
    %698 = vmatprep.mubr.bf16.mxu0 0
    %699 = vmatmul.mubr.bf16.gmra.mrb[0].mxu0 %v541
    %v700 = vpop.f32.mrb[0].mxu0
    %v701 = vadd.f32 %v326, %v700
    %v702 = vpop.f32.mrb[0].mxu0
    %v703 = vadd.f32 %v330, %v702
    %v704 = vpop.f32.mrb[0].mxu0
    %v705 = vpop.f32.mrb[0].mxu0
    %706 = vdwg.mxu0
    %707 = vmatprep.subr.bf16.mxu0 %v484
    %708 = vmatpush1.bf16.msra.mxu0 %v483
    %709 = vmatprep.subr.bf16.mxu0 %v500
    %710 = vmatpush1.bf16.msra.mxu0 %v499
    %711 = vmatprep.subr.bf16.mxu0 0
    %712 = vmatpush1.bf16.msra.mxu0 0
    %713 = vmatprep.subr.bf16.mxu0 0
    %714 = vmatpush1.bf16.msra.mxu0 0
    %715 = vmatprep.subr.bf16.mxu0 0
    %716 = vmatpush1.bf16.msra.mxu0 0
    %717 = vmatprep.subr.bf16.mxu0 0
    %718 = vmatpush1.bf16.msra.mxu0 0
    %719 = vmatprep.subr.bf16.mxu0 0
    %720 = vmatpush1.bf16.msra.mxu0 0
    %721 = vmatprep.subr.bf16.mxu0 0
    %722 = vmatpush1.bf16.msra.mxu0 0
    %723 = vmatprep.subr.bf16.mxu0 0
    %724 = vmatpush1.bf16.msra.mxu0 0
    %725 = vmatprep.subr.bf16.mxu0 0
    %726 = vmatpush1.bf16.msra.mxu0 0
    %727 = vmatprep.subr.bf16.mxu0 0
    %728 = vmatpush1.bf16.msra.mxu0 0
    %729 = vmatprep.subr.bf16.mxu0 0
    %730 = vmatpush1.bf16.msra.mxu0 0
    %731 = vmatprep.subr.bf16.mxu0 0
    %732 = vmatpush1.bf16.msra.mxu0 0
    %733 = vmatprep.subr.bf16.mxu0 0
    %734 = vmatpush1.bf16.msra.mxu0 0
    %735 = vmatprep.subr.bf16.mxu0 0
    %736 = vmatpush1.bf16.msra.mxu0 0
    %737 = vmatprep.subr.bf16.mxu0 0
    %738 = vmatpush1.bf16.msra.mxu0 0
    %739 = vmatprep.mubr.bf16.mxu0 0
    %740 = vmatmul.mubr.bf16.gmra.mrb[0].mxu0 %v541
    %v741 = vpop.f32.mrb[0].mxu0
    %v742 = vadd.f32 %v334, %v741
    %v743 = vpop.f32.mrb[0].mxu0
    %v744 = vadd.f32 %v338, %v743
    %v745 = vpop.f32.mrb[0].mxu0
    %v746 = vpop.f32.mrb[0].mxu0
    %747 = vdwg.mxu0
    %748 = vmatprep.subr.bf16.mxu0 %v486
    %749 = vmatpush1.bf16.msra.mxu0 %v485
    %750 = vmatprep.subr.bf16.mxu0 %v502
    %751 = vmatpush1.bf16.msra.mxu0 %v501
    %752 = vmatprep.subr.bf16.mxu0 0
    %753 = vmatpush1.bf16.msra.mxu0 0
    %754 = vmatprep.subr.bf16.mxu0 0
    %755 = vmatpush1.bf16.msra.mxu0 0
    %756 = vmatprep.subr.bf16.mxu0 0
    %757 = vmatpush1.bf16.msra.mxu0 0
    %758 = vmatprep.subr.bf16.mxu0 0
    %759 = vmatpush1.bf16.msra.mxu0 0
    %760 = vmatprep.subr.bf16.mxu0 0
    %761 = vmatpush1.bf16.msra.mxu0 0
    %762 = vmatprep.subr.bf16.mxu0 0
    %763 = vmatpush1.bf16.msra.mxu0 0
    %764 = vmatprep.subr.bf16.mxu0 0
    %765 = vmatpush1.bf16.msra.mxu0 0
    %766 = vmatprep.subr.bf16.mxu0 0
    %767 = vmatpush1.bf16.msra.mxu0 0
    %768 = vmatprep.subr.bf16.mxu0 0
    %769 = vmatpush1.bf16.msra.mxu0 0
    %770 = vmatprep.subr.bf16.mxu0 0
    %771 = vmatpush1.bf16.msra.mxu0 0
    %772 = vmatprep.subr.bf16.mxu0 0
    %773 = vmatpush1.bf16.msra.mxu0 0
    %774 = vmatprep.subr.bf16.mxu0 0
    %775 = vmatpush1.bf16.msra.mxu0 0
    %776 = vmatprep.subr.bf16.mxu0 0
    %777 = vmatpush1.bf16.msra.mxu0 0
    %778 = vmatprep.subr.bf16.mxu0 0
    %779 = vmatpush1.bf16.msra.mxu0 0
    %780 = vmatprep.mubr.bf16.mxu0 0
    %781 = vmatmul.mubr.bf16.gmra.mrb[0].mxu0 %v541
    %v782 = vpop.f32.mrb[0].mxu0
    %v783 = vadd.f32 %v342, %v782
    %v784 = vpop.f32.mrb[0].mxu0
    %v785 = vadd.f32 %v346, %v784
    %v786 = vpop.f32.mrb[0].mxu0
    %v787 = vpop.f32.mrb[0].mxu0
    %788 = vdwg.mxu0
    %789 = vmatprep.subr.bf16.mxu0 %v488
    %790 = vmatpush1.bf16.msra.mxu0 %v487
    %791 = vmatprep.subr.bf16.mxu0 %v504
    %792 = vmatpush1.bf16.msra.mxu0 %v503
    %793 = vmatprep.subr.bf16.mxu0 0
    %794 = vmatpush1.bf16.msra.mxu0 0
    %795 = vmatprep.subr.bf16.mxu0 0
    %796 = vmatpush1.bf16.msra.mxu0 0
    %797 = vmatprep.subr.bf16.mxu0 0
    %798 = vmatpush1.bf16.msra.mxu0 0
    %799 = vmatprep.subr.bf16.mxu0 0
    %800 = vmatpush1.bf16.msra.mxu0 0
    %801 = vmatprep.subr.bf16.mxu0 0
    %802 = vmatpush1.bf16.msra.mxu0 0
    %803 = vmatprep.subr.bf16.mxu0 0
    %804 = vmatpush1.bf16.msra.mxu0 0
    %805 = vmatprep.subr.bf16.mxu0 0
    %806 = vmatpush1.bf16.msra.mxu0 0
    %807 = vmatprep.subr.bf16.mxu0 0
    %808 = vmatpush1.bf16.msra.mxu0 0
    %809 = vmatprep.subr.bf16.mxu0 0
    %810 = vmatpush1.bf16.msra.mxu0 0
    %811 = vmatprep.subr.bf16.mxu0 0
    %812 = vmatpush1.bf16.msra.mxu0 0
    %813 = vmatprep.subr.bf16.mxu0 0
    %814 = vmatpush1.bf16.msra.mxu0 0
    %815 = vmatprep.subr.bf16.mxu0 0
    %816 = vmatpush1.bf16.msra.mxu0 0
    %817 = vmatprep.subr.bf16.mxu0 0
    %818 = vmatpush1.bf16.msra.mxu0 0
    %819 = vmatprep.subr.bf16.mxu0 0
    %820 = vmatpush1.bf16.msra.mxu0 0
    %821 = vmatprep.mubr.bf16.mxu0 0
    %822 = vmatmul.mubr.bf16.gmra.mrb[0].mxu0 %v541
    %v823 = vpop.f32.mrb[0].mxu0
    %v824 = vadd.f32 %v350, %v823
    %v825 = vpop.f32.mrb[0].mxu0
    %v826 = vadd.f32 %v354, %v825
    %v827 = vpop.f32.mrb[0].mxu0
    %v828 = vpop.f32.mrb[0].mxu0
    %829 = vdwg.mxu0
    %830 = vmatprep.subr.bf16.mxu0 %v490
    %831 = vmatpush1.bf16.msra.mxu0 %v489
    %832 = vmatprep.subr.bf16.mxu0 %v506
    %833 = vmatpush1.bf16.msra.mxu0 %v505
    %834 = vmatprep.subr.bf16.mxu0 0
    %835 = vmatpush1.bf16.msra.mxu0 0
    %836 = vmatprep.subr.bf16.mxu0 0
    %837 = vmatpush1.bf16.msra.mxu0 0
    %838 = vmatprep.subr.bf16.mxu0 0
    %839 = vmatpush1.bf16.msra.mxu0 0
    %840 = vmatprep.subr.bf16.mxu0 0
    %841 = vmatpush1.bf16.msra.mxu0 0
    %842 = vmatprep.subr.bf16.mxu0 0
    %843 = vmatpush1.bf16.msra.mxu0 0
    %844 = vmatprep.subr.bf16.mxu0 0
    %845 = vmatpush1.bf16.msra.mxu0 0
    %846 = vmatprep.subr.bf16.mxu0 0
    %847 = vmatpush1.bf16.msra.mxu0 0
    %848 = vmatprep.subr.bf16.mxu0 0
    %849 = vmatpush1.bf16.msra.mxu0 0
    %850 = vmatprep.subr.bf16.mxu0 0
    %851 = vmatpush1.bf16.msra.mxu0 0
    %852 = vmatprep.subr.bf16.mxu0 0
    %853 = vmatpush1.bf16.msra.mxu0 0
    %854 = vmatprep.subr.bf16.mxu0 0
    %855 = vmatpush1.bf16.msra.mxu0 0
    %856 = vmatprep.subr.bf16.mxu0 0
    %857 = vmatpush1.bf16.msra.mxu0 0
    %858 = vmatprep.subr.bf16.mxu0 0
    %859 = vmatpush1.bf16.msra.mxu0 0
    %860 = vmatprep.subr.bf16.mxu0 0
    %861 = vmatpush1.bf16.msra.mxu0 0
    %862 = vmatprep.mubr.bf16.mxu0 0
    %863 = vmatmul.mubr.bf16.gmra.mrb[0].mxu0 %v541
    %v864 = vpop.f32.mrb[0].mxu0
    %v865 = vadd.f32 %v358, %v864
    %v866 = vpop.f32.mrb[0].mxu0
    %v867 = vadd.f32 %v362, %v866
    %v868 = vpop.f32.mrb[0].mxu0
    %v869 = vpop.f32.mrb[0].mxu0
    %870 = vdwg.mxu0
    %v871 = vmax.f32 %v578, 0.0
    %v872 = vmax.f32 %v580, 0.0
    %v873 = vmax.f32 %v619, 0.0
    %v874 = vmax.f32 %v621, 0.0
    %v875 = vmax.f32 %v660, 0.0
    %v876 = vmax.f32 %v662, 0.0
    %v877 = vmax.f32 %v701, 0.0
    %v878 = vmax.f32 %v703, 0.0
    %v879 = vmax.f32 %v742, 0.0
    %v880 = vmax.f32 %v744, 0.0
    %v881 = vmax.f32 %v783, 0.0
    %v882 = vmax.f32 %v785, 0.0
    %v883 = vmax.f32 %v824, 0.0
    %v884 = vmax.f32 %v826, 0.0
    %v885 = vmax.f32 %v865, 0.0
    %v886 = vmax.f32 %v867, 0.0
    %v887 = vpack.c.bf16 %v871, %v871
    %v888 = vpack.c.bf16 %v872, %v872
    %v889 = vpack.c.bf16 %v873, %v873
    %v890 = vpack.c.bf16 %v874, %v874
    %v891 = vpack.c.bf16 %v875, %v875
    %v892 = vpack.c.bf16 %v876, %v876
    %v893 = vpack.c.bf16 %v877, %v877
    %v894 = vpack.c.bf16 %v878, %v878
    %v895 = vpack.c.bf16 %v879, %v879
    %v896 = vpack.c.bf16 %v880, %v880
    %v897 = vpack.c.bf16 %v881, %v881
    %v898 = vpack.c.bf16 %v882, %v882
    %v899 = vpack.c.bf16 %v883, %v883
    %v900 = vpack.c.bf16 %v884, %v884
    %v901 = vpack.c.bf16 %v885, %v885
    %v902 = vpack.c.bf16 %v886, %v886
    %v903 = vld [vmem:[#allocation8] sm:$0xff]
    %v904 = vld [vmem:[#allocation8 + $0x8] sm:$0xff]
    %v905 = vld [vmem:[#allocation8 + $0x10] sm:$0xff]
    %v906 = vld [vmem:[#allocation8 + $0x18] sm:$0xff]
    %v907 = vld [vmem:[#allocation8 + $0x20] sm:$0xff]
    %v908 = vld [vmem:[#allocation8 + $0x28] sm:$0xff]
    %v909 = vld [vmem:[#allocation8 + $0x30] sm:$0xff]
    %v910 = vld [vmem:[#allocation8 + $0x38] sm:$0xff]
    %v911 = vld [vmem:[#allocation8 + $0x40] sm:$0xff]
    %v912 = vld [vmem:[#allocation8 + $0x48] sm:$0xff]
    %v913 = vld [vmem:[#allocation8 + $0x50] sm:$0xff]
    %v914 = vld [vmem:[#allocation8 + $0x58] sm:$0xff]
    %v915 = vld [vmem:[#allocation8 + $0x60] sm:$0xff]
    %v916 = vld [vmem:[#allocation8 + $0x68] sm:$0xff]
    %v917 = vld [vmem:[#allocation8 + $0x70] sm:$0xff]
    %v918 = vld [vmem:[#allocation8 + $0x78] sm:$0xff]
    %v919 = vld [vmem:[#allocation8 + $0x80] sm:$0xff]
    %v920 = vld [vmem:[#allocation8 + $0x88] sm:$0xff]
    %v921 = vld [vmem:[#allocation8 + $0x90] sm:$0xff]
    %v922 = vld [vmem:[#allocation8 + $0x98] sm:$0xff]
    %v923 = vld [vmem:[#allocation8 + $0xa0] sm:$0xff]
    %v924 = vld [vmem:[#allocation8 + $0xa8] sm:$0xff]
    %v925 = vld [vmem:[#allocation8 + $0xb0] sm:$0xff]
    %v926 = vld [vmem:[#allocation8 + $0xb8] sm:$0xff]
    %v927 = vld [vmem:[#allocation8 + $0xc0] sm:$0xff]
    %v928 = vld [vmem:[#allocation8 + $0xc8] sm:$0xff]
    %v929 = vld [vmem:[#allocation8 + $0xd0] sm:$0xff]
    %v930 = vld [vmem:[#allocation8 + $0xd8] sm:$0xff]
    %v931 = vld [vmem:[#allocation8 + $0xe0] sm:$0xff]
    %v932 = vld [vmem:[#allocation8 + $0xe8] sm:$0xff]
    %v933 = vld [vmem:[#allocation8 + $0xf0] sm:$0xff]
    %v934 = vld [vmem:[#allocation8 + $0xf8] sm:$0xff]
    %v935 = vld [vmem:[#allocation8 + $0x100] sm:$0xff]
    %v936 = vld [vmem:[#allocation8 + $0x108] sm:$0xff]
    %v937 = vld [vmem:[#allocation8 + $0x110] sm:$0xff]
    %v938 = vld [vmem:[#allocation8 + $0x118] sm:$0xff]
    %v939 = vld [vmem:[#allocation8 + $0x120] sm:$0xff]
    %v940 = vld [vmem:[#allocation8 + $0x128] sm:$0xff]
    %v941 = vld [vmem:[#allocation8 + $0x130] sm:$0xff]
    %v942 = vld [vmem:[#allocation8 + $0x138] sm:$0xff]
    %v943 = vld [vmem:[#allocation8 + $0x140] sm:$0xff]
    %v944 = vld [vmem:[#allocation8 + $0x148] sm:$0xff]
    %v945 = vld [vmem:[#allocation8 + $0x150] sm:$0xff]
    %v946 = vld [vmem:[#allocation8 + $0x158] sm:$0xff]
    %v947 = vld [vmem:[#allocation8 + $0x160] sm:$0xff]
    %v948 = vld [vmem:[#allocation8 + $0x168] sm:$0xff]
    %v949 = vld [vmem:[#allocation8 + $0x170] sm:$0xff]
    %v950 = vld [vmem:[#allocation8 + $0x178] sm:$0xff]
    %v951 = vld [vmem:[#allocation8 + $0x180] sm:$0xff]
    %v952 = vld [vmem:[#allocation8 + $0x188] sm:$0xff]
    %v953 = vld [vmem:[#allocation8 + $0x190] sm:$0xff]
    %v954 = vld [vmem:[#allocation8 + $0x198] sm:$0xff]
    %v955 = vld [vmem:[#allocation8 + $0x1a0] sm:$0xff]
    %v956 = vld [vmem:[#allocation8 + $0x1a8] sm:$0xff]
    %v957 = vld [vmem:[#allocation8 + $0x1b0] sm:$0xff]
    %v958 = vld [vmem:[#allocation8 + $0x1b8] sm:$0xff]
    %v959 = vld [vmem:[#allocation8 + $0x1c0] sm:$0xff]
    %v960 = vld [vmem:[#allocation8 + $0x1c8] sm:$0xff]
    %v961 = vld [vmem:[#allocation8 + $0x1d0] sm:$0xff]
    %v962 = vld [vmem:[#allocation8 + $0x1d8] sm:$0xff]
    %v963 = vld [vmem:[#allocation8 + $0x1e0] sm:$0xff]
    %v964 = vld [vmem:[#allocation8 + $0x1e8] sm:$0xff]
    %v965 = vld [vmem:[#allocation8 + $0x1f0] sm:$0xff]
    %v966 = vld [vmem:[#allocation8 + $0x1f8] sm:$0xff]
    %v967 = vld [vmem:[#allocation8 + $0x200] sm:$0xff]
    %v968 = vld [vmem:[#allocation8 + $0x208] sm:$0xff]
    %v969 = vld [vmem:[#allocation8 + $0x210] sm:$0xff]
    %v970 = vld [vmem:[#allocation8 + $0x218] sm:$0xff]
    %v971 = vld [vmem:[#allocation8 + $0x220] sm:$0xff]
    %v972 = vld [vmem:[#allocation8 + $0x228] sm:$0xff]
    %v973 = vld [vmem:[#allocation8 + $0x230] sm:$0xff]
    %v974 = vld [vmem:[#allocation8 + $0x238] sm:$0xff]
    %v975 = vld [vmem:[#allocation8 + $0x240] sm:$0xff]
    %v976 = vld [vmem:[#allocation8 + $0x248] sm:$0xff]
    %v977 = vld [vmem:[#allocation8 + $0x250] sm:$0xff]
    %v978 = vld [vmem:[#allocation8 + $0x258] sm:$0xff]
    %v979 = vld [vmem:[#allocation8 + $0x260] sm:$0xff]
    %v980 = vld [vmem:[#allocation8 + $0x268] sm:$0xff]
    %v981 = vld [vmem:[#allocation8 + $0x270] sm:$0xff]
    %v982 = vld [vmem:[#allocation8 + $0x278] sm:$0xff]
    %v983 = vld [vmem:[#allocation8 + $0x280] sm:$0xff]
    %v984 = vld [vmem:[#allocation8 + $0x288] sm:$0xff]
    %v985 = vld [vmem:[#allocation8 + $0x290] sm:$0xff]
    %v986 = vld [vmem:[#allocation8 + $0x298] sm:$0xff]
    %v987 = vld [vmem:[#allocation8 + $0x2a0] sm:$0xff]
    %v988 = vld [vmem:[#allocation8 + $0x2a8] sm:$0xff]
    %v989 = vld [vmem:[#allocation8 + $0x2b0] sm:$0xff]
    %v990 = vld [vmem:[#allocation8 + $0x2b8] sm:$0xff]
    %v991 = vld [vmem:[#allocation8 + $0x2c0] sm:$0xff]
    %v992 = vld [vmem:[#allocation8 + $0x2c8] sm:$0xff]
    %v993 = vld [vmem:[#allocation8 + $0x2d0] sm:$0xff]
    %v994 = vld [vmem:[#allocation8 + $0x2d8] sm:$0xff]
    %v995 = vld [vmem:[#allocation8 + $0x2e0] sm:$0xff]
    %v996 = vld [vmem:[#allocation8 + $0x2e8] sm:$0xff]
    %v997 = vld [vmem:[#allocation8 + $0x2f0] sm:$0xff]
    %v998 = vld [vmem:[#allocation8 + $0x2f8] sm:$0xff]
    %v999 = vld [vmem:[#allocation8 + $0x300] sm:$0xff]
    %v1000 = vld [vmem:[#allocation8 + $0x308] sm:$0xff]
    %v1001 = vld [vmem:[#allocation8 + $0x310] sm:$0xff]
    %v1002 = vld [vmem:[#allocation8 + $0x318] sm:$0xff]
    %v1003 = vld [vmem:[#allocation8 + $0x320] sm:$0xff]
    %v1004 = vld [vmem:[#allocation8 + $0x328] sm:$0xff]
    %v1005 = vld [vmem:[#allocation8 + $0x330] sm:$0xff]
    %v1006 = vld [vmem:[#allocation8 + $0x338] sm:$0xff]
    %v1007 = vld [vmem:[#allocation8 + $0x340] sm:$0xff]
    %v1008 = vld [vmem:[#allocation8 + $0x348] sm:$0xff]
    %v1009 = vld [vmem:[#allocation8 + $0x350] sm:$0xff]
    %v1010 = vld [vmem:[#allocation8 + $0x358] sm:$0xff]
    %v1011 = vld [vmem:[#allocation8 + $0x360] sm:$0xff]
    %v1012 = vld [vmem:[#allocation8 + $0x368] sm:$0xff]
    %v1013 = vld [vmem:[#allocation8 + $0x370] sm:$0xff]
    %v1014 = vld [vmem:[#allocation8 + $0x378] sm:$0xff]
    %v1015 = vld [vmem:[#allocation8 + $0x380] sm:$0xff]
    %v1016 = vld [vmem:[#allocation8 + $0x388] sm:$0xff]
    %v1017 = vld [vmem:[#allocation8 + $0x390] sm:$0xff]
    %v1018 = vld [vmem:[#allocation8 + $0x398] sm:$0xff]
    %v1019 = vld [vmem:[#allocation8 + $0x3a0] sm:$0xff]
    %v1020 = vld [vmem:[#allocation8 + $0x3a8] sm:$0xff]
    %v1021 = vld [vmem:[#allocation8 + $0x3b0] sm:$0xff]
    %v1022 = vld [vmem:[#allocation8 + $0x3b8] sm:$0xff]
    %v1023 = vld [vmem:[#allocation8 + $0x3c0] sm:$0xff]
    %v1024 = vld [vmem:[#allocation8 + $0x3c8] sm:$0xff]
    %v1025 = vld [vmem:[#allocation8 + $0x3d0] sm:$0xff]
    %v1026 = vld [vmem:[#allocation8 + $0x3d8] sm:$0xff]
    %v1027 = vld [vmem:[#allocation8 + $0x3e0] sm:$0xff]
    %v1028 = vld [vmem:[#allocation8 + $0x3e8] sm:$0xff]
    %v1029 = vld [vmem:[#allocation8 + $0x3f0] sm:$0xff]
    %v1030 = vld [vmem:[#allocation8 + $0x3f8] sm:$0xff]
    %v1031 = vld [vmem:[#allocation8 + $0x400] sm:$0xff]
    %v1032 = vld [vmem:[#allocation8 + $0x408] sm:$0xff]
    %v1033 = vld [vmem:[#allocation8 + $0x410] sm:$0xff]
    %v1034 = vld [vmem:[#allocation8 + $0x418] sm:$0xff]
    %v1035 = vld [vmem:[#allocation8 + $0x420] sm:$0xff]
    %v1036 = vld [vmem:[#allocation8 + $0x428] sm:$0xff]
    %v1037 = vld [vmem:[#allocation8 + $0x430] sm:$0xff]
    %v1038 = vld [vmem:[#allocation8 + $0x438] sm:$0xff]
    %v1039 = vld [vmem:[#allocation8 + $0x440] sm:$0xff]
    %v1040 = vld [vmem:[#allocation8 + $0x448] sm:$0xff]
    %v1041 = vld [vmem:[#allocation8 + $0x450] sm:$0xff]
    %v1042 = vld [vmem:[#allocation8 + $0x458] sm:$0xff]
    %v1043 = vld [vmem:[#allocation8 + $0x460] sm:$0xff]
    %v1044 = vld [vmem:[#allocation8 + $0x468] sm:$0xff]
    %v1045 = vld [vmem:[#allocation8 + $0x470] sm:$0xff]
    %v1046 = vld [vmem:[#allocation8 + $0x478] sm:$0xff]
    %v1047 = vld [vmem:[#allocation8 + $0x480] sm:$0xff]
    %v1048 = vld [vmem:[#allocation8 + $0x488] sm:$0xff]
    %v1049 = vld [vmem:[#allocation8 + $0x490] sm:$0xff]
    %v1050 = vld [vmem:[#allocation8 + $0x498] sm:$0xff]
    %v1051 = vld [vmem:[#allocation8 + $0x4a0] sm:$0xff]
    %v1052 = vld [vmem:[#allocation8 + $0x4a8] sm:$0xff]
    %v1053 = vld [vmem:[#allocation8 + $0x4b0] sm:$0xff]
    %v1054 = vld [vmem:[#allocation8 + $0x4b8] sm:$0xff]
    %v1055 = vld [vmem:[#allocation8 + $0x4c0] sm:$0xff]
    %v1056 = vld [vmem:[#allocation8 + $0x4c8] sm:$0xff]
    %v1057 = vld [vmem:[#allocation8 + $0x4d0] sm:$0xff]
    %v1058 = vld [vmem:[#allocation8 + $0x4d8] sm:$0xff]
    %v1059 = vld [vmem:[#allocation8 + $0x4e0] sm:$0xff]
    %v1060 = vld [vmem:[#allocation8 + $0x4e8] sm:$0xff]
    %v1061 = vld [vmem:[#allocation8 + $0x4f0] sm:$0xff]
    %v1062 = vld [vmem:[#allocation8 + $0x4f8] sm:$0xff]
    %v1063 = vld [vmem:[#allocation8 + $0x500] sm:$0xff]
    %v1064 = vld [vmem:[#allocation8 + $0x508] sm:$0xff]
    %v1065 = vld [vmem:[#allocation8 + $0x510] sm:$0xff]
    %v1066 = vld [vmem:[#allocation8 + $0x518] sm:$0xff]
    %v1067 = vld [vmem:[#allocation8 + $0x520] sm:$0xff]
    %v1068 = vld [vmem:[#allocation8 + $0x528] sm:$0xff]
    %v1069 = vld [vmem:[#allocation8 + $0x530] sm:$0xff]
    %v1070 = vld [vmem:[#allocation8 + $0x538] sm:$0xff]
    %v1071 = vld [vmem:[#allocation8 + $0x540] sm:$0xff]
    %v1072 = vld [vmem:[#allocation8 + $0x548] sm:$0xff]
    %v1073 = vld [vmem:[#allocation8 + $0x550] sm:$0xff]
    %v1074 = vld [vmem:[#allocation8 + $0x558] sm:$0xff]
    %v1075 = vld [vmem:[#allocation8 + $0x560] sm:$0xff]
    %v1076 = vld [vmem:[#allocation8 + $0x568] sm:$0xff]
    %v1077 = vld [vmem:[#allocation8 + $0x570] sm:$0xff]
    %v1078 = vld [vmem:[#allocation8 + $0x578] sm:$0xff]
    %v1079 = vld [vmem:[#allocation8 + $0x580] sm:$0xff]
    %v1080 = vld [vmem:[#allocation8 + $0x588] sm:$0xff]
    %v1081 = vld [vmem:[#allocation8 + $0x590] sm:$0xff]
    %v1082 = vld [vmem:[#allocation8 + $0x598] sm:$0xff]
    %v1083 = vld [vmem:[#allocation8 + $0x5a0] sm:$0xff]
    %v1084 = vld [vmem:[#allocation8 + $0x5a8] sm:$0xff]
    %v1085 = vld [vmem:[#allocation8 + $0x5b0] sm:$0xff]
    %v1086 = vld [vmem:[#allocation8 + $0x5b8] sm:$0xff]
    %v1087 = vld [vmem:[#allocation8 + $0x5c0] sm:$0xff]
    %v1088 = vld [vmem:[#allocation8 + $0x5c8] sm:$0xff]
    %v1089 = vld [vmem:[#allocation8 + $0x5d0] sm:$0xff]
    %v1090 = vld [vmem:[#allocation8 + $0x5d8] sm:$0xff]
    %v1091 = vld [vmem:[#allocation8 + $0x5e0] sm:$0xff]
    %v1092 = vld [vmem:[#allocation8 + $0x5e8] sm:$0xff]
    %v1093 = vld [vmem:[#allocation8 + $0x5f0] sm:$0xff]
    %v1094 = vld [vmem:[#allocation8 + $0x5f8] sm:$0xff]
    %v1095 = vld [vmem:[#allocation8 + $0x600] sm:$0xff]
    %v1096 = vld [vmem:[#allocation8 + $0x608] sm:$0xff]
    %v1097 = vld [vmem:[#allocation8 + $0x610] sm:$0xff]
    %v1098 = vld [vmem:[#allocation8 + $0x618] sm:$0xff]
    %v1099 = vld [vmem:[#allocation8 + $0x620] sm:$0xff]
    %v1100 = vld [vmem:[#allocation8 + $0x628] sm:$0xff]
    %v1101 = vld [vmem:[#allocation8 + $0x630] sm:$0xff]
    %v1102 = vld [vmem:[#allocation8 + $0x638] sm:$0xff]
    %v1103 = vld [vmem:[#allocation8 + $0x640] sm:$0xff]
    %v1104 = vld [vmem:[#allocation8 + $0x648] sm:$0xff]
    %v1105 = vld [vmem:[#allocation8 + $0x650] sm:$0xff]
    %v1106 = vld [vmem:[#allocation8 + $0x658] sm:$0xff]
    %v1107 = vld [vmem:[#allocation8 + $0x660] sm:$0xff]
    %v1108 = vld [vmem:[#allocation8 + $0x668] sm:$0xff]
    %v1109 = vld [vmem:[#allocation8 + $0x670] sm:$0xff]
    %v1110 = vld [vmem:[#allocation8 + $0x678] sm:$0xff]
    %v1111 = vld [vmem:[#allocation8 + $0x680] sm:$0xff]
    %v1112 = vld [vmem:[#allocation8 + $0x688] sm:$0xff]
    %v1113 = vld [vmem:[#allocation8 + $0x690] sm:$0xff]
    %v1114 = vld [vmem:[#allocation8 + $0x698] sm:$0xff]
    %v1115 = vld [vmem:[#allocation8 + $0x6a0] sm:$0xff]
    %v1116 = vld [vmem:[#allocation8 + $0x6a8] sm:$0xff]
    %v1117 = vld [vmem:[#allocation8 + $0x6b0] sm:$0xff]
    %v1118 = vld [vmem:[#allocation8 + $0x6b8] sm:$0xff]
    %v1119 = vld [vmem:[#allocation8 + $0x6c0] sm:$0xff]
    %v1120 = vld [vmem:[#allocation8 + $0x6c8] sm:$0xff]
    %v1121 = vld [vmem:[#allocation8 + $0x6d0] sm:$0xff]
    %v1122 = vld [vmem:[#allocation8 + $0x6d8] sm:$0xff]
    %v1123 = vld [vmem:[#allocation8 + $0x6e0] sm:$0xff]
    %v1124 = vld [vmem:[#allocation8 + $0x6e8] sm:$0xff]
    %v1125 = vld [vmem:[#allocation8 + $0x6f0] sm:$0xff]
    %v1126 = vld [vmem:[#allocation8 + $0x6f8] sm:$0xff]
    %v1127 = vld [vmem:[#allocation8 + $0x700] sm:$0xff]
    %v1128 = vld [vmem:[#allocation8 + $0x708] sm:$0xff]
    %v1129 = vld [vmem:[#allocation8 + $0x710] sm:$0xff]
    %v1130 = vld [vmem:[#allocation8 + $0x718] sm:$0xff]
    %v1131 = vld [vmem:[#allocation8 + $0x720] sm:$0xff]
    %v1132 = vld [vmem:[#allocation8 + $0x728] sm:$0xff]
    %v1133 = vld [vmem:[#allocation8 + $0x730] sm:$0xff]
    %v1134 = vld [vmem:[#allocation8 + $0x738] sm:$0xff]
    %v1135 = vld [vmem:[#allocation8 + $0x740] sm:$0xff]
    %v1136 = vld [vmem:[#allocation8 + $0x748] sm:$0xff]
    %v1137 = vld [vmem:[#allocation8 + $0x750] sm:$0xff]
    %v1138 = vld [vmem:[#allocation8 + $0x758] sm:$0xff]
    %v1139 = vld [vmem:[#allocation8 + $0x760] sm:$0xff]
    %v1140 = vld [vmem:[#allocation8 + $0x768] sm:$0xff]
    %v1141 = vld [vmem:[#allocation8 + $0x770] sm:$0xff]
    %v1142 = vld [vmem:[#allocation8 + $0x778] sm:$0xff]
    %v1143 = vld [vmem:[#allocation8 + $0x780] sm:$0xff]
    %v1144 = vld [vmem:[#allocation8 + $0x788] sm:$0xff]
    %v1145 = vld [vmem:[#allocation8 + $0x790] sm:$0xff]
    %v1146 = vld [vmem:[#allocation8 + $0x798] sm:$0xff]
    %v1147 = vld [vmem:[#allocation8 + $0x7a0] sm:$0xff]
    %v1148 = vld [vmem:[#allocation8 + $0x7a8] sm:$0xff]
    %v1149 = vld [vmem:[#allocation8 + $0x7b0] sm:$0xff]
    %v1150 = vld [vmem:[#allocation8 + $0x7b8] sm:$0xff]
    %v1151 = vld [vmem:[#allocation8 + $0x7c0] sm:$0xff]
    %v1152 = vld [vmem:[#allocation8 + $0x7c8] sm:$0xff]
    %v1153 = vld [vmem:[#allocation8 + $0x7d0] sm:$0xff]
    %v1154 = vld [vmem:[#allocation8 + $0x7d8] sm:$0xff]
    %v1155 = vld [vmem:[#allocation8 + $0x7e0] sm:$0xff]
    %v1156 = vld [vmem:[#allocation8 + $0x7e8] sm:$0xff]
    %v1157 = vld [vmem:[#allocation8 + $0x7f0] sm:$0xff]
    %v1158 = vld [vmem:[#allocation8 + $0x7f8] sm:$0xff]
    %v1159 = vld [vmem:[#allocation8 + $0x800] sm:$0xff]
    %v1160 = vld [vmem:[#allocation8 + $0x808] sm:$0xff]
    %v1161 = vld [vmem:[#allocation8 + $0x810] sm:$0xff]
    %v1162 = vld [vmem:[#allocation8 + $0x818] sm:$0xff]
    %v1163 = vld [vmem:[#allocation8 + $0x820] sm:$0xff]
    %v1164 = vld [vmem:[#allocation8 + $0x828] sm:$0xff]
    %v1165 = vld [vmem:[#allocation8 + $0x830] sm:$0xff]
    %v1166 = vld [vmem:[#allocation8 + $0x838] sm:$0xff]
    %v1167 = vld [vmem:[#allocation8 + $0x840] sm:$0xff]
    %v1168 = vld [vmem:[#allocation8 + $0x848] sm:$0xff]
    %v1169 = vld [vmem:[#allocation8 + $0x850] sm:$0xff]
    %v1170 = vld [vmem:[#allocation8 + $0x858] sm:$0xff]
    %v1171 = vld [vmem:[#allocation8 + $0x860] sm:$0xff]
    %v1172 = vld [vmem:[#allocation8 + $0x868] sm:$0xff]
    %v1173 = vld [vmem:[#allocation8 + $0x870] sm:$0xff]
    %v1174 = vld [vmem:[#allocation8 + $0x878] sm:$0xff]
    %v1175 = vld [vmem:[#allocation8 + $0x880] sm:$0xff]
    %v1176 = vld [vmem:[#allocation8 + $0x888] sm:$0xff]
    %v1177 = vld [vmem:[#allocation8 + $0x890] sm:$0xff]
    %v1178 = vld [vmem:[#allocation8 + $0x898] sm:$0xff]
    %v1179 = vld [vmem:[#allocation8 + $0x8a0] sm:$0xff]
    %v1180 = vld [vmem:[#allocation8 + $0x8a8] sm:$0xff]
    %v1181 = vld [vmem:[#allocation8 + $0x8b0] sm:$0xff]
    %v1182 = vld [vmem:[#allocation8 + $0x8b8] sm:$0xff]
    %v1183 = vld [vmem:[#allocation8 + $0x8c0] sm:$0xff]
    %v1184 = vld [vmem:[#allocation8 + $0x8c8] sm:$0xff]
    %v1185 = vld [vmem:[#allocation8 + $0x8d0] sm:$0xff]
    %v1186 = vld [vmem:[#allocation8 + $0x8d8] sm:$0xff]
    %v1187 = vld [vmem:[#allocation8 + $0x8e0] sm:$0xff]
    %v1188 = vld [vmem:[#allocation8 + $0x8e8] sm:$0xff]
    %v1189 = vld [vmem:[#allocation8 + $0x8f0] sm:$0xff]
    %v1190 = vld [vmem:[#allocation8 + $0x8f8] sm:$0xff]
    %v1191 = vld [vmem:[#allocation8 + $0x900] sm:$0xff]
    %v1192 = vld [vmem:[#allocation8 + $0x908] sm:$0xff]
    %v1193 = vld [vmem:[#allocation8 + $0x910] sm:$0xff]
    %v1194 = vld [vmem:[#allocation8 + $0x918] sm:$0xff]
    %v1195 = vld [vmem:[#allocation8 + $0x920] sm:$0xff]
    %v1196 = vld [vmem:[#allocation8 + $0x928] sm:$0xff]
    %v1197 = vld [vmem:[#allocation8 + $0x930] sm:$0xff]
    %v1198 = vld [vmem:[#allocation8 + $0x938] sm:$0xff]
    %v1199 = vld [vmem:[#allocation8 + $0x940] sm:$0xff]
    %v1200 = vld [vmem:[#allocation8 + $0x948] sm:$0xff]
    %v1201 = vld [vmem:[#allocation8 + $0x950] sm:$0xff]
    %v1202 = vld [vmem:[#allocation8 + $0x958] sm:$0xff]
    %v1203 = vld [vmem:[#allocation8 + $0x960] sm:$0xff]
    %v1204 = vld [vmem:[#allocation8 + $0x968] sm:$0xff]
    %v1205 = vld [vmem:[#allocation8 + $0x970] sm:$0xff]
    %v1206 = vld [vmem:[#allocation8 + $0x978] sm:$0xff]
    %v1207 = vld [vmem:[#allocation8 + $0x980] sm:$0xff]
    %v1208 = vld [vmem:[#allocation8 + $0x988] sm:$0xff]
    %v1209 = vld [vmem:[#allocation8 + $0x990] sm:$0xff]
    %v1210 = vld [vmem:[#allocation8 + $0x998] sm:$0xff]
    %v1211 = vld [vmem:[#allocation8 + $0x9a0] sm:$0xff]
    %v1212 = vld [vmem:[#allocation8 + $0x9a8] sm:$0xff]
    %v1213 = vld [vmem:[#allocation8 + $0x9b0] sm:$0xff]
    %v1214 = vld [vmem:[#allocation8 + $0x9b8] sm:$0xff]
    %v1215 = vld [vmem:[#allocation8 + $0x9c0] sm:$0xff]
    %v1216 = vld [vmem:[#allocation8 + $0x9c8] sm:$0xff]
    %v1217 = vld [vmem:[#allocation8 + $0x9d0] sm:$0xff]
    %v1218 = vld [vmem:[#allocation8 + $0x9d8] sm:$0xff]
    %v1219 = vld [vmem:[#allocation8 + $0x9e0] sm:$0xff]
    %v1220 = vld [vmem:[#allocation8 + $0x9e8] sm:$0xff]
    %v1221 = vld [vmem:[#allocation8 + $0x9f0] sm:$0xff]
    %v1222 = vld [vmem:[#allocation8 + $0x9f8] sm:$0xff]
    %v1223 = vld [vmem:[#allocation8 + $0xa00] sm:$0xff]
    %v1224 = vld [vmem:[#allocation8 + $0xa08] sm:$0xff]
    %v1225 = vld [vmem:[#allocation8 + $0xa10] sm:$0xff]
    %v1226 = vld [vmem:[#allocation8 + $0xa18] sm:$0xff]
    %v1227 = vld [vmem:[#allocation8 + $0xa20] sm:$0xff]
    %v1228 = vld [vmem:[#allocation8 + $0xa28] sm:$0xff]
    %v1229 = vld [vmem:[#allocation8 + $0xa30] sm:$0xff]
    %v1230 = vld [vmem:[#allocation8 + $0xa38] sm:$0xff]
    %v1231 = vld [vmem:[#allocation8 + $0xa40] sm:$0xff]
    %v1232 = vld [vmem:[#allocation8 + $0xa48] sm:$0xff]
    %v1233 = vld [vmem:[#allocation8 + $0xa50] sm:$0xff]
    %v1234 = vld [vmem:[#allocation8 + $0xa58] sm:$0xff]
    %v1235 = vld [vmem:[#allocation8 + $0xa60] sm:$0xff]
    %v1236 = vld [vmem:[#allocation8 + $0xa68] sm:$0xff]
    %v1237 = vld [vmem:[#allocation8 + $0xa70] sm:$0xff]
    %v1238 = vld [vmem:[#allocation8 + $0xa78] sm:$0xff]
    %v1239 = vld [vmem:[#allocation8 + $0xa80] sm:$0xff]
    %v1240 = vld [vmem:[#allocation8 + $0xa88] sm:$0xff]
    %v1241 = vld [vmem:[#allocation8 + $0xa90] sm:$0xff]
    %v1242 = vld [vmem:[#allocation8 + $0xa98] sm:$0xff]
    %v1243 = vld [vmem:[#allocation8 + $0xaa0] sm:$0xff]
    %v1244 = vld [vmem:[#allocation8 + $0xaa8] sm:$0xff]
    %v1245 = vld [vmem:[#allocation8 + $0xab0] sm:$0xff]
    %v1246 = vld [vmem:[#allocation8 + $0xab8] sm:$0xff]
    %v1247 = vld [vmem:[#allocation8 + $0xac0] sm:$0xff]
    %v1248 = vld [vmem:[#allocation8 + $0xac8] sm:$0xff]
    %v1249 = vld [vmem:[#allocation8 + $0xad0] sm:$0xff]
    %v1250 = vld [vmem:[#allocation8 + $0xad8] sm:$0xff]
    %v1251 = vld [vmem:[#allocation8 + $0xae0] sm:$0xff]
    %v1252 = vld [vmem:[#allocation8 + $0xae8] sm:$0xff]
    %v1253 = vld [vmem:[#allocation8 + $0xaf0] sm:$0xff]
    %v1254 = vld [vmem:[#allocation8 + $0xaf8] sm:$0xff]
    %v1255 = vld [vmem:[#allocation8 + $0xb00] sm:$0xff]
    %v1256 = vld [vmem:[#allocation8 + $0xb08] sm:$0xff]
    %v1257 = vld [vmem:[#allocation8 + $0xb10] sm:$0xff]
    %v1258 = vld [vmem:[#allocation8 + $0xb18] sm:$0xff]
    %v1259 = vld [vmem:[#allocation8 + $0xb20] sm:$0xff]
    %v1260 = vld [vmem:[#allocation8 + $0xb28] sm:$0xff]
    %v1261 = vld [vmem:[#allocation8 + $0xb30] sm:$0xff]
    %v1262 = vld [vmem:[#allocation8 + $0xb38] sm:$0xff]
    %v1263 = vld [vmem:[#allocation8 + $0xb40] sm:$0xff]
    %v1264 = vld [vmem:[#allocation8 + $0xb48] sm:$0xff]
    %v1265 = vld [vmem:[#allocation8 + $0xb50] sm:$0xff]
    %v1266 = vld [vmem:[#allocation8 + $0xb58] sm:$0xff]
    %v1267 = vld [vmem:[#allocation8 + $0xb60] sm:$0xff]
    %v1268 = vld [vmem:[#allocation8 + $0xb68] sm:$0xff]
    %v1269 = vld [vmem:[#allocation8 + $0xb70] sm:$0xff]
    %v1270 = vld [vmem:[#allocation8 + $0xb78] sm:$0xff]
    %v1271 = vld [vmem:[#allocation8 + $0xb80] sm:$0xff]
    %v1272 = vld [vmem:[#allocation8 + $0xb88] sm:$0xff]
    %v1273 = vld [vmem:[#allocation8 + $0xb90] sm:$0xff]
    %v1274 = vld [vmem:[#allocation8 + $0xb98] sm:$0xff]
    %v1275 = vld [vmem:[#allocation8 + $0xba0] sm:$0xff]
    %v1276 = vld [vmem:[#allocation8 + $0xba8] sm:$0xff]
    %v1277 = vld [vmem:[#allocation8 + $0xbb0] sm:$0xff]
    %v1278 = vld [vmem:[#allocation8 + $0xbb8] sm:$0xff]
    %v1279 = vld [vmem:[#allocation8 + $0xbc0] sm:$0xff]
    %v1280 = vld [vmem:[#allocation8 + $0xbc8] sm:$0xff]
    %v1281 = vld [vmem:[#allocation8 + $0xbd0] sm:$0xff]
    %v1282 = vld [vmem:[#allocation8 + $0xbd8] sm:$0xff]
    %v1283 = vld [vmem:[#allocation8 + $0xbe0] sm:$0xff]
    %v1284 = vld [vmem:[#allocation8 + $0xbe8] sm:$0xff]
    %v1285 = vld [vmem:[#allocation8 + $0xbf0] sm:$0xff]
    %v1286 = vld [vmem:[#allocation8 + $0xbf8] sm:$0xff]
    %v1287 = vld [vmem:[#allocation8 + $0xc00] sm:$0xff]
    %v1288 = vld [vmem:[#allocation8 + $0xc08] sm:$0xff]
    %v1289 = vld [vmem:[#allocation8 + $0xc10] sm:$0xff]
    %v1290 = vld [vmem:[#allocation8 + $0xc18] sm:$0xff]
    %v1291 = vld [vmem:[#allocation8 + $0xc20] sm:$0xff]
    %v1292 = vld [vmem:[#allocation8 + $0xc28] sm:$0xff]
    %v1293 = vld [vmem:[#allocation8 + $0xc30] sm:$0xff]
    %v1294 = vld [vmem:[#allocation8 + $0xc38] sm:$0xff]
    %v1295 = vld [vmem:[#allocation8 + $0xc40] sm:$0xff]
    %v1296 = vld [vmem:[#allocation8 + $0xc48] sm:$0xff]
    %v1297 = vld [vmem:[#allocation8 + $0xc50] sm:$0xff]
    %v1298 = vld [vmem:[#allocation8 + $0xc58] sm:$0xff]
    %v1299 = vld [vmem:[#allocation8 + $0xc60] sm:$0xff]
    %v1300 = vld [vmem:[#allocation8 + $0xc68] sm:$0xff]
    %v1301 = vld [vmem:[#allocation8 + $0xc70] sm:$0xff]
    %v1302 = vld [vmem:[#allocation8 + $0xc78] sm:$0xff]
    %v1303 = vld [vmem:[#allocation8 + $0xc80] sm:$0xff]
    %v1304 = vld [vmem:[#allocation8 + $0xc88] sm:$0xff]
    %v1305 = vld [vmem:[#allocation8 + $0xc90] sm:$0xff]
    %v1306 = vld [vmem:[#allocation8 + $0xc98] sm:$0xff]
    %v1307 = vld [vmem:[#allocation8 + $0xca0] sm:$0xff]
    %v1308 = vld [vmem:[#allocation8 + $0xca8] sm:$0xff]
    %v1309 = vld [vmem:[#allocation8 + $0xcb0] sm:$0xff]
    %v1310 = vld [vmem:[#allocation8 + $0xcb8] sm:$0xff]
    %v1311 = vld [vmem:[#allocation8 + $0xcc0] sm:$0xff]
    %v1312 = vld [vmem:[#allocation8 + $0xcc8] sm:$0xff]
    %v1313 = vld [vmem:[#allocation8 + $0xcd0] sm:$0xff]
    %v1314 = vld [vmem:[#allocation8 + $0xcd8] sm:$0xff]
    %v1315 = vld [vmem:[#allocation8 + $0xce0] sm:$0xff]
    %v1316 = vld [vmem:[#allocation8 + $0xce8] sm:$0xff]
    %v1317 = vld [vmem:[#allocation8 + $0xcf0] sm:$0xff]
    %v1318 = vld [vmem:[#allocation8 + $0xcf8] sm:$0xff]
    %v1319 = vld [vmem:[#allocation8 + $0xd00] sm:$0xff]
    %v1320 = vld [vmem:[#allocation8 + $0xd08] sm:$0xff]
    %v1321 = vld [vmem:[#allocation8 + $0xd10] sm:$0xff]
    %v1322 = vld [vmem:[#allocation8 + $0xd18] sm:$0xff]
    %v1323 = vld [vmem:[#allocation8 + $0xd20] sm:$0xff]
    %v1324 = vld [vmem:[#allocation8 + $0xd28] sm:$0xff]
    %v1325 = vld [vmem:[#allocation8 + $0xd30] sm:$0xff]
    %v1326 = vld [vmem:[#allocation8 + $0xd38] sm:$0xff]
    %v1327 = vld [vmem:[#allocation8 + $0xd40] sm:$0xff]
    %v1328 = vld [vmem:[#allocation8 + $0xd48] sm:$0xff]
    %v1329 = vld [vmem:[#allocation8 + $0xd50] sm:$0xff]
    %v1330 = vld [vmem:[#allocation8 + $0xd58] sm:$0xff]
    %v1331 = vld [vmem:[#allocation8 + $0xd60] sm:$0xff]
    %v1332 = vld [vmem:[#allocation8 + $0xd68] sm:$0xff]
    %v1333 = vld [vmem:[#allocation8 + $0xd70] sm:$0xff]
    %v1334 = vld [vmem:[#allocation8 + $0xd78] sm:$0xff]
    %v1335 = vld [vmem:[#allocation8 + $0xd80] sm:$0xff]
    %v1336 = vld [vmem:[#allocation8 + $0xd88] sm:$0xff]
    %v1337 = vld [vmem:[#allocation8 + $0xd90] sm:$0xff]
    %v1338 = vld [vmem:[#allocation8 + $0xd98] sm:$0xff]
    %v1339 = vld [vmem:[#allocation8 + $0xda0] sm:$0xff]
    %v1340 = vld [vmem:[#allocation8 + $0xda8] sm:$0xff]
    %v1341 = vld [vmem:[#allocation8 + $0xdb0] sm:$0xff]
    %v1342 = vld [vmem:[#allocation8 + $0xdb8] sm:$0xff]
    %v1343 = vld [vmem:[#allocation8 + $0xdc0] sm:$0xff]
    %v1344 = vld [vmem:[#allocation8 + $0xdc8] sm:$0xff]
    %v1345 = vld [vmem:[#allocation8 + $0xdd0] sm:$0xff]
    %v1346 = vld [vmem:[#allocation8 + $0xdd8] sm:$0xff]
    %v1347 = vld [vmem:[#allocation8 + $0xde0] sm:$0xff]
    %v1348 = vld [vmem:[#allocation8 + $0xde8] sm:$0xff]
    %v1349 = vld [vmem:[#allocation8 + $0xdf0] sm:$0xff]
    %v1350 = vld [vmem:[#allocation8 + $0xdf8] sm:$0xff]
    %v1351 = vld [vmem:[#allocation8 + $0xe00] sm:$0xff]
    %v1352 = vld [vmem:[#allocation8 + $0xe08] sm:$0xff]
    %v1353 = vld [vmem:[#allocation8 + $0xe10] sm:$0xff]
    %v1354 = vld [vmem:[#allocation8 + $0xe18] sm:$0xff]
    %v1355 = vld [vmem:[#allocation8 + $0xe20] sm:$0xff]
    %v1356 = vld [vmem:[#allocation8 + $0xe28] sm:$0xff]
    %v1357 = vld [vmem:[#allocation8 + $0xe30] sm:$0xff]
    %v1358 = vld [vmem:[#allocation8 + $0xe38] sm:$0xff]
    %v1359 = vld [vmem:[#allocation8 + $0xe40] sm:$0xff]
    %v1360 = vld [vmem:[#allocation8 + $0xe48] sm:$0xff]
    %v1361 = vld [vmem:[#allocation8 + $0xe50] sm:$0xff]
    %v1362 = vld [vmem:[#allocation8 + $0xe58] sm:$0xff]
    %v1363 = vld [vmem:[#allocation8 + $0xe60] sm:$0xff]
    %v1364 = vld [vmem:[#allocation8 + $0xe68] sm:$0xff]
    %v1365 = vld [vmem:[#allocation8 + $0xe70] sm:$0xff]
    %v1366 = vld [vmem:[#allocation8 + $0xe78] sm:$0xff]
    %v1367 = vld [vmem:[#allocation8 + $0xe80] sm:$0xff]
    %v1368 = vld [vmem:[#allocation8 + $0xe88] sm:$0xff]
    %v1369 = vld [vmem:[#allocation8 + $0xe90] sm:$0xff]
    %v1370 = vld [vmem:[#allocation8 + $0xe98] sm:$0xff]
    %v1371 = vld [vmem:[#allocation8 + $0xea0] sm:$0xff]
    %v1372 = vld [vmem:[#allocation8 + $0xea8] sm:$0xff]
    %v1373 = vld [vmem:[#allocation8 + $0xeb0] sm:$0xff]
    %v1374 = vld [vmem:[#allocation8 + $0xeb8] sm:$0xff]
    %v1375 = vld [vmem:[#allocation8 + $0xec0] sm:$0xff]
    %v1376 = vld [vmem:[#allocation8 + $0xec8] sm:$0xff]
    %v1377 = vld [vmem:[#allocation8 + $0xed0] sm:$0xff]
    %v1378 = vld [vmem:[#allocation8 + $0xed8] sm:$0xff]
    %v1379 = vld [vmem:[#allocation8 + $0xee0] sm:$0xff]
    %v1380 = vld [vmem:[#allocation8 + $0xee8] sm:$0xff]
    %v1381 = vld [vmem:[#allocation8 + $0xef0] sm:$0xff]
    %v1382 = vld [vmem:[#allocation8 + $0xef8] sm:$0xff]
    %v1383 = vld [vmem:[#allocation8 + $0xf00] sm:$0xff]
    %v1384 = vld [vmem:[#allocation8 + $0xf08] sm:$0xff]
    %v1385 = vld [vmem:[#allocation8 + $0xf10] sm:$0xff]
    %v1386 = vld [vmem:[#allocation8 + $0xf18] sm:$0xff]
    %v1387 = vld [vmem:[#allocation8 + $0xf20] sm:$0xff]
    %v1388 = vld [vmem:[#allocation8 + $0xf28] sm:$0xff]
    %v1389 = vld [vmem:[#allocation8 + $0xf30] sm:$0xff]
    %v1390 = vld [vmem:[#allocation8 + $0xf38] sm:$0xff]
    %v1391 = vld [vmem:[#allocation8 + $0xf40] sm:$0xff]
    %v1392 = vld [vmem:[#allocation8 + $0xf48] sm:$0xff]
    %v1393 = vld [vmem:[#allocation8 + $0xf50] sm:$0xff]
    %v1394 = vld [vmem:[#allocation8 + $0xf58] sm:$0xff]
    %v1395 = vld [vmem:[#allocation8 + $0xf60] sm:$0xff]
    %v1396 = vld [vmem:[#allocation8 + $0xf68] sm:$0xff]
    %v1397 = vld [vmem:[#allocation8 + $0xf70] sm:$0xff]
    %v1398 = vld [vmem:[#allocation8 + $0xf78] sm:$0xff]
    %v1399 = vld [vmem:[#allocation8 + $0xf80] sm:$0xff]
    %v1400 = vld [vmem:[#allocation8 + $0xf88] sm:$0xff]
    %v1401 = vld [vmem:[#allocation8 + $0xf90] sm:$0xff]
    %v1402 = vld [vmem:[#allocation8 + $0xf98] sm:$0xff]
    %v1403 = vld [vmem:[#allocation8 + $0xfa0] sm:$0xff]
    %v1404 = vld [vmem:[#allocation8 + $0xfa8] sm:$0xff]
    %v1405 = vld [vmem:[#allocation8 + $0xfb0] sm:$0xff]
    %v1406 = vld [vmem:[#allocation8 + $0xfb8] sm:$0xff]
    %v1407 = vld [vmem:[#allocation8 + $0xfc0] sm:$0xff]
    %v1408 = vld [vmem:[#allocation8 + $0xfc8] sm:$0xff]
    %v1409 = vld [vmem:[#allocation8 + $0xfd0] sm:$0xff]
    %v1410 = vld [vmem:[#allocation8 + $0xfd8] sm:$0xff]
    %v1411 = vld [vmem:[#allocation8 + $0xfe0] sm:$0xff]
    %v1412 = vld [vmem:[#allocation8 + $0xfe8] sm:$0xff]
    %v1413 = vld [vmem:[#allocation8 + $0xff0] sm:$0xff]
    %v1414 = vld [vmem:[#allocation8 + $0xff8] sm:$0xff]
    %v1415 = vld [vmem:[#allocation8 + $0x1000] sm:$0xff]
    %v1416 = vld [vmem:[#allocation8 + $0x1008] sm:$0xff]
    %v1417 = vld [vmem:[#allocation8 + $0x1010] sm:$0xff]
    %v1418 = vld [vmem:[#allocation8 + $0x1018] sm:$0xff]
    %v1419 = vld [vmem:[#allocation8 + $0x1020] sm:$0xff]
    %v1420 = vld [vmem:[#allocation8 + $0x1028] sm:$0xff]
    %v1421 = vld [vmem:[#allocation8 + $0x1030] sm:$0xff]
    %v1422 = vld [vmem:[#allocation8 + $0x1038] sm:$0xff]
    %v1423 = vld [vmem:[#allocation8 + $0x1040] sm:$0xff]
    %v1424 = vld [vmem:[#allocation8 + $0x1048] sm:$0xff]
    %v1425 = vld [vmem:[#allocation8 + $0x1050] sm:$0xff]
    %v1426 = vld [vmem:[#allocation8 + $0x1058] sm:$0xff]
    %v1427 = vld [vmem:[#allocation8 + $0x1060] sm:$0xff]
    %v1428 = vld [vmem:[#allocation8 + $0x1068] sm:$0xff]
    %v1429 = vld [vmem:[#allocation8 + $0x1070] sm:$0xff]
    %v1430 = vld [vmem:[#allocation8 + $0x1078] sm:$0xff]
    %v1431 = vld [vmem:[#allocation8 + $0x1080] sm:$0xff]
    %v1432 = vld [vmem:[#allocation8 + $0x1088] sm:$0xff]
    %v1433 = vld [vmem:[#allocation8 + $0x1090] sm:$0xff]
    %v1434 = vld [vmem:[#allocation8 + $0x1098] sm:$0xff]
    %v1435 = vld [vmem:[#allocation8 + $0x10a0] sm:$0xff]
    %v1436 = vld [vmem:[#allocation8 + $0x10a8] sm:$0xff]
    %v1437 = vld [vmem:[#allocation8 + $0x10b0] sm:$0xff]
    %v1438 = vld [vmem:[#allocation8 + $0x10b8] sm:$0xff]
    %v1439 = vld [vmem:[#allocation8 + $0x10c0] sm:$0xff]
    %v1440 = vld [vmem:[#allocation8 + $0x10c8] sm:$0xff]
    %v1441 = vld [vmem:[#allocation8 + $0x10d0] sm:$0xff]
    %v1442 = vld [vmem:[#allocation8 + $0x10d8] sm:$0xff]
    %v1443 = vld [vmem:[#allocation8 + $0x10e0] sm:$0xff]
    %v1444 = vld [vmem:[#allocation8 + $0x10e8] sm:$0xff]
    %v1445 = vld [vmem:[#allocation8 + $0x10f0] sm:$0xff]
    %v1446 = vld [vmem:[#allocation8 + $0x10f8] sm:$0xff]
    %v1447 = vld [vmem:[#allocation8 + $0x1100] sm:$0xff]
    %v1448 = vld [vmem:[#allocation8 + $0x1108] sm:$0xff]
    %v1449 = vld [vmem:[#allocation8 + $0x1110] sm:$0xff]
    %v1450 = vld [vmem:[#allocation8 + $0x1118] sm:$0xff]
    %v1451 = vld [vmem:[#allocation8 + $0x1120] sm:$0xff]
    %v1452 = vld [vmem:[#allocation8 + $0x1128] sm:$0xff]
    %v1453 = vld [vmem:[#allocation8 + $0x1130] sm:$0xff]
    %v1454 = vld [vmem:[#allocation8 + $0x1138] sm:$0xff]
    %v1455 = vld [vmem:[#allocation8 + $0x1140] sm:$0xff]
    %v1456 = vld [vmem:[#allocation8 + $0x1148] sm:$0xff]
    %v1457 = vld [vmem:[#allocation8 + $0x1150] sm:$0xff]
    %v1458 = vld [vmem:[#allocation8 + $0x1158] sm:$0xff]
    %v1459 = vld [vmem:[#allocation8 + $0x1160] sm:$0xff]
    %v1460 = vld [vmem:[#allocation8 + $0x1168] sm:$0xff]
    %v1461 = vld [vmem:[#allocation8 + $0x1170] sm:$0xff]
    %v1462 = vld [vmem:[#allocation8 + $0x1178] sm:$0xff]
    %v1463 = vld [vmem:[#allocation8 + $0x1180] sm:$0xff]
    %v1464 = vld [vmem:[#allocation8 + $0x1188] sm:$0xff]
    %v1465 = vld [vmem:[#allocation8 + $0x1190] sm:$0xff]
    %v1466 = vld [vmem:[#allocation8 + $0x1198] sm:$0xff]
    %v1467 = vld [vmem:[#allocation8 + $0x11a0] sm:$0xff]
    %v1468 = vld [vmem:[#allocation8 + $0x11a8] sm:$0xff]
    %v1469 = vld [vmem:[#allocation8 + $0x11b0] sm:$0xff]
    %v1470 = vld [vmem:[#allocation8 + $0x11b8] sm:$0xff]
    %v1471 = vld [vmem:[#allocation8 + $0x11c0] sm:$0xff]
    %v1472 = vld [vmem:[#allocation8 + $0x11c8] sm:$0xff]
    %v1473 = vld [vmem:[#allocation8 + $0x11d0] sm:$0xff]
    %v1474 = vld [vmem:[#allocation8 + $0x11d8] sm:$0xff]
    %v1475 = vld [vmem:[#allocation8 + $0x11e0] sm:$0xff]
    %v1476 = vld [vmem:[#allocation8 + $0x11e8] sm:$0xff]
    %v1477 = vld [vmem:[#allocation8 + $0x11f0] sm:$0xff]
    %v1478 = vld [vmem:[#allocation8 + $0x11f8] sm:$0xff]
    %v1479 = vld [vmem:[#allocation8 + $0x1200] sm:$0xff]
    %v1480 = vld [vmem:[#allocation8 + $0x1208] sm:$0xff]
    %v1481 = vld [vmem:[#allocation8 + $0x1210] sm:$0xff]
    %v1482 = vld [vmem:[#allocation8 + $0x1218] sm:$0xff]
    %v1483 = vld [vmem:[#allocation8 + $0x1220] sm:$0xff]
    %v1484 = vld [vmem:[#allocation8 + $0x1228] sm:$0xff]
    %v1485 = vld [vmem:[#allocation8 + $0x1230] sm:$0xff]
    %v1486 = vld [vmem:[#allocation8 + $0x1238] sm:$0xff]
    %v1487 = vld [vmem:[#allocation8 + $0x1240] sm:$0xff]
    %v1488 = vld [vmem:[#allocation8 + $0x1248] sm:$0xff]
    %v1489 = vld [vmem:[#allocation8 + $0x1250] sm:$0xff]
    %v1490 = vld [vmem:[#allocation8 + $0x1258] sm:$0xff]
    %v1491 = vld [vmem:[#allocation8 + $0x1260] sm:$0xff]
    %v1492 = vld [vmem:[#allocation8 + $0x1268] sm:$0xff]
    %v1493 = vld [vmem:[#allocation8 + $0x1270] sm:$0xff]
    %v1494 = vld [vmem:[#allocation8 + $0x1278] sm:$0xff]
    %v1495 = vld [vmem:[#allocation8 + $0x1280] sm:$0xff]
    %v1496 = vld [vmem:[#allocation8 + $0x1288] sm:$0xff]
    %v1497 = vld [vmem:[#allocation8 + $0x1290] sm:$0xff]
    %v1498 = vld [vmem:[#allocation8 + $0x1298] sm:$0xff]
    %v1499 = vld [vmem:[#allocation8 + $0x12a0] sm:$0xff]
    %v1500 = vld [vmem:[#allocation8 + $0x12a8] sm:$0xff]
    %v1501 = vld [vmem:[#allocation8 + $0x12b0] sm:$0xff]
    %v1502 = vld [vmem:[#allocation8 + $0x12b8] sm:$0xff]
    %v1503 = vld [vmem:[#allocation8 + $0x12c0] sm:$0xff]
    %v1504 = vld [vmem:[#allocation8 + $0x12c8] sm:$0xff]
    %v1505 = vld [vmem:[#allocation8 + $0x12d0] sm:$0xff]
    %v1506 = vld [vmem:[#allocation8 + $0x12d8] sm:$0xff]
    %v1507 = vld [vmem:[#allocation8 + $0x12e0] sm:$0xff]
    %v1508 = vld [vmem:[#allocation8 + $0x12e8] sm:$0xff]
    %v1509 = vld [vmem:[#allocation8 + $0x12f0] sm:$0xff]
    %v1510 = vld [vmem:[#allocation8 + $0x12f8] sm:$0xff]
    %v1511 = vld [vmem:[#allocation8 + $0x1300] sm:$0xff]
    %v1512 = vld [vmem:[#allocation8 + $0x1308] sm:$0xff]
    %v1513 = vld [vmem:[#allocation8 + $0x1310] sm:$0xff]
    %v1514 = vld [vmem:[#allocation8 + $0x1318] sm:$0xff]
    %v1515 = vld [vmem:[#allocation8 + $0x1320] sm:$0xff]
    %v1516 = vld [vmem:[#allocation8 + $0x1328] sm:$0xff]
    %v1517 = vld [vmem:[#allocation8 + $0x1330] sm:$0xff]
    %v1518 = vld [vmem:[#allocation8 + $0x1338] sm:$0xff]
    %v1519 = vld [vmem:[#allocation8 + $0x1340] sm:$0xff]
    %v1520 = vld [vmem:[#allocation8 + $0x1348] sm:$0xff]
    %v1521 = vld [vmem:[#allocation8 + $0x1350] sm:$0xff]
    %v1522 = vld [vmem:[#allocation8 + $0x1358] sm:$0xff]
    %v1523 = vld [vmem:[#allocation8 + $0x1360] sm:$0xff]
    %v1524 = vld [vmem:[#allocation8 + $0x1368] sm:$0xff]
    %v1525 = vld [vmem:[#allocation8 + $0x1370] sm:$0xff]
    %v1526 = vld [vmem:[#allocation8 + $0x1378] sm:$0xff]
    %v1527 = vld [vmem:[#allocation8 + $0x1380] sm:$0xff]
    %v1528 = vld [vmem:[#allocation8 + $0x1388] sm:$0xff]
    %v1529 = vld [vmem:[#allocation8 + $0x1390] sm:$0xff]
    %v1530 = vld [vmem:[#allocation8 + $0x1398] sm:$0xff]
    %v1531 = vld [vmem:[#allocation8 + $0x13a0] sm:$0xff]
    %v1532 = vld [vmem:[#allocation8 + $0x13a8] sm:$0xff]
    %v1533 = vld [vmem:[#allocation8 + $0x13b0] sm:$0xff]
    %v1534 = vld [vmem:[#allocation8 + $0x13b8] sm:$0xff]
    %v1535 = vld [vmem:[#allocation8 + $0x13c0] sm:$0xff]
    %v1536 = vld [vmem:[#allocation8 + $0x13c8] sm:$0xff]
    %v1537 = vld [vmem:[#allocation8 + $0x13d0] sm:$0xff]
    %v1538 = vld [vmem:[#allocation8 + $0x13d8] sm:$0xff]
    %v1539 = vld [vmem:[#allocation8 + $0x13e0] sm:$0xff]
    %v1540 = vld [vmem:[#allocation8 + $0x13e8] sm:$0xff]
    %v1541 = vld [vmem:[#allocation8 + $0x13f0] sm:$0xff]
    %v1542 = vld [vmem:[#allocation8 + $0x13f8] sm:$0xff]
    %v1543 = vld [vmem:[#allocation8 + $0x1400] sm:$0xff]
    %v1544 = vld [vmem:[#allocation8 + $0x1408] sm:$0xff]
    %v1545 = vld [vmem:[#allocation8 + $0x1410] sm:$0xff]
    %v1546 = vld [vmem:[#allocation8 + $0x1418] sm:$0xff]
    %v1547 = vld [vmem:[#allocation8 + $0x1420] sm:$0xff]
    %v1548 = vld [vmem:[#allocation8 + $0x1428] sm:$0xff]
    %v1549 = vld [vmem:[#allocation8 + $0x1430] sm:$0xff]
    %v1550 = vld [vmem:[#allocation8 + $0x1438] sm:$0xff]
    %v1551 = vld [vmem:[#allocation8 + $0x1440] sm:$0xff]
    %v1552 = vld [vmem:[#allocation8 + $0x1448] sm:$0xff]
    %v1553 = vld [vmem:[#allocation8 + $0x1450] sm:$0xff]
    %v1554 = vld [vmem:[#allocation8 + $0x1458] sm:$0xff]
    %v1555 = vld [vmem:[#allocation8 + $0x1460] sm:$0xff]
    %v1556 = vld [vmem:[#allocation8 + $0x1468] sm:$0xff]
    %v1557 = vld [vmem:[#allocation8 + $0x1470] sm:$0xff]
    %v1558 = vld [vmem:[#allocation8 + $0x1478] sm:$0xff]
    %v1559 = vld [vmem:[#allocation8 + $0x1480] sm:$0xff]
    %v1560 = vld [vmem:[#allocation8 + $0x1488] sm:$0xff]
    %v1561 = vld [vmem:[#allocation8 + $0x1490] sm:$0xff]
    %v1562 = vld [vmem:[#allocation8 + $0x1498] sm:$0xff]
    %v1563 = vld [vmem:[#allocation8 + $0x14a0] sm:$0xff]
    %v1564 = vld [vmem:[#allocation8 + $0x14a8] sm:$0xff]
    %v1565 = vld [vmem:[#allocation8 + $0x14b0] sm:$0xff]
    %v1566 = vld [vmem:[#allocation8 + $0x14b8] sm:$0xff]
    %v1567 = vld [vmem:[#allocation8 + $0x14c0] sm:$0xff]
    %v1568 = vld [vmem:[#allocation8 + $0x14c8] sm:$0xff]
    %v1569 = vld [vmem:[#allocation8 + $0x14d0] sm:$0xff]
    %v1570 = vld [vmem:[#allocation8 + $0x14d8] sm:$0xff]
    %v1571 = vld [vmem:[#allocation8 + $0x14e0] sm:$0xff]
    %v1572 = vld [vmem:[#allocation8 + $0x14e8] sm:$0xff]
    %v1573 = vld [vmem:[#allocation8 + $0x14f0] sm:$0xff]
    %v1574 = vld [vmem:[#allocation8 + $0x14f8] sm:$0xff]
    %v1575 = vld [vmem:[#allocation8 + $0x1500] sm:$0xff]
    %v1576 = vld [vmem:[#allocation8 + $0x1508] sm:$0xff]
    %v1577 = vld [vmem:[#allocation8 + $0x1510] sm:$0xff]
    %v1578 = vld [vmem:[#allocation8 + $0x1518] sm:$0xff]
    %v1579 = vld [vmem:[#allocation8 + $0x1520] sm:$0xff]
    %v1580 = vld [vmem:[#allocation8 + $0x1528] sm:$0xff]
    %v1581 = vld [vmem:[#allocation8 + $0x1530] sm:$0xff]
    %v1582 = vld [vmem:[#allocation8 + $0x1538] sm:$0xff]
    %v1583 = vld [vmem:[#allocation8 + $0x1540] sm:$0xff]
    %v1584 = vld [vmem:[#allocation8 + $0x1548] sm:$0xff]
    %v1585 = vld [vmem:[#allocation8 + $0x1550] sm:$0xff]
    %v1586 = vld [vmem:[#allocation8 + $0x1558] sm:$0xff]
    %v1587 = vld [vmem:[#allocation8 + $0x1560] sm:$0xff]
    %v1588 = vld [vmem:[#allocation8 + $0x1568] sm:$0xff]
    %v1589 = vld [vmem:[#allocation8 + $0x1570] sm:$0xff]
    %v1590 = vld [vmem:[#allocation8 + $0x1578] sm:$0xff]
    %v1591 = vld [vmem:[#allocation8 + $0x1580] sm:$0xff]
    %v1592 = vld [vmem:[#allocation8 + $0x1588] sm:$0xff]
    %v1593 = vld [vmem:[#allocation8 + $0x1590] sm:$0xff]
    %v1594 = vld [vmem:[#allocation8 + $0x1598] sm:$0xff]
    %v1595 = vld [vmem:[#allocation8 + $0x15a0] sm:$0xff]
    %v1596 = vld [vmem:[#allocation8 + $0x15a8] sm:$0xff]
    %v1597 = vld [vmem:[#allocation8 + $0x15b0] sm:$0xff]
    %v1598 = vld [vmem:[#allocation8 + $0x15b8] sm:$0xff]
    %v1599 = vld [vmem:[#allocation8 + $0x15c0] sm:$0xff]
    %v1600 = vld [vmem:[#allocation8 + $0x15c8] sm:$0xff]
    %v1601 = vld [vmem:[#allocation8 + $0x15d0] sm:$0xff]
    %v1602 = vld [vmem:[#allocation8 + $0x15d8] sm:$0xff]
    %v1603 = vld [vmem:[#allocation8 + $0x15e0] sm:$0xff]
    %v1604 = vld [vmem:[#allocation8 + $0x15e8] sm:$0xff]
    %v1605 = vld [vmem:[#allocation8 + $0x15f0] sm:$0xff]
    %v1606 = vld [vmem:[#allocation8 + $0x15f8] sm:$0xff]
    %v1607 = vld [vmem:[#allocation8 + $0x1600] sm:$0xff]
    %v1608 = vld [vmem:[#allocation8 + $0x1608] sm:$0xff]
    %v1609 = vld [vmem:[#allocation8 + $0x1610] sm:$0xff]
    %v1610 = vld [vmem:[#allocation8 + $0x1618] sm:$0xff]
    %v1611 = vld [vmem:[#allocation8 + $0x1620] sm:$0xff]
    %v1612 = vld [vmem:[#allocation8 + $0x1628] sm:$0xff]
    %v1613 = vld [vmem:[#allocation8 + $0x1630] sm:$0xff]
    %v1614 = vld [vmem:[#allocation8 + $0x1638] sm:$0xff]
    %v1615 = vld [vmem:[#allocation8 + $0x1640] sm:$0xff]
    %v1616 = vld [vmem:[#allocation8 + $0x1648] sm:$0xff]
    %v1617 = vld [vmem:[#allocation8 + $0x1650] sm:$0xff]
    %v1618 = vld [vmem:[#allocation8 + $0x1658] sm:$0xff]
    %v1619 = vld [vmem:[#allocation8 + $0x1660] sm:$0xff]
    %v1620 = vld [vmem:[#allocation8 + $0x1668] sm:$0xff]
    %v1621 = vld [vmem:[#allocation8 + $0x1670] sm:$0xff]
    %v1622 = vld [vmem:[#allocation8 + $0x1678] sm:$0xff]
    %v1623 = vld [vmem:[#allocation8 + $0x1680] sm:$0xff]
    %v1624 = vld [vmem:[#allocation8 + $0x1688] sm:$0xff]
    %v1625 = vld [vmem:[#allocation8 + $0x1690] sm:$0xff]
    %v1626 = vld [vmem:[#allocation8 + $0x1698] sm:$0xff]
    %v1627 = vld [vmem:[#allocation8 + $0x16a0] sm:$0xff]
    %v1628 = vld [vmem:[#allocation8 + $0x16a8] sm:$0xff]
    %v1629 = vld [vmem:[#allocation8 + $0x16b0] sm:$0xff]
    %v1630 = vld [vmem:[#allocation8 + $0x16b8] sm:$0xff]
    %v1631 = vld [vmem:[#allocation8 + $0x16c0] sm:$0xff]
    %v1632 = vld [vmem:[#allocation8 + $0x16c8] sm:$0xff]
    %v1633 = vld [vmem:[#allocation8 + $0x16d0] sm:$0xff]
    %v1634 = vld [vmem:[#allocation8 + $0x16d8] sm:$0xff]
    %v1635 = vld [vmem:[#allocation8 + $0x16e0] sm:$0xff]
    %v1636 = vld [vmem:[#allocation8 + $0x16e8] sm:$0xff]
    %v1637 = vld [vmem:[#allocation8 + $0x16f0] sm:$0xff]
    %v1638 = vld [vmem:[#allocation8 + $0x16f8] sm:$0xff]
    %v1639 = vld [vmem:[#allocation8 + $0x1700] sm:$0xff]
    %v1640 = vld [vmem:[#allocation8 + $0x1708] sm:$0xff]
    %v1641 = vld [vmem:[#allocation8 + $0x1710] sm:$0xff]
    %v1642 = vld [vmem:[#allocation8 + $0x1718] sm:$0xff]
    %v1643 = vld [vmem:[#allocation8 + $0x1720] sm:$0xff]
    %v1644 = vld [vmem:[#allocation8 + $0x1728] sm:$0xff]
    %v1645 = vld [vmem:[#allocation8 + $0x1730] sm:$0xff]
    %v1646 = vld [vmem:[#allocation8 + $0x1738] sm:$0xff]
    %v1647 = vld [vmem:[#allocation8 + $0x1740] sm:$0xff]
    %v1648 = vld [vmem:[#allocation8 + $0x1748] sm:$0xff]
    %v1649 = vld [vmem:[#allocation8 + $0x1750] sm:$0xff]
    %v1650 = vld [vmem:[#allocation8 + $0x1758] sm:$0xff]
    %v1651 = vld [vmem:[#allocation8 + $0x1760] sm:$0xff]
    %v1652 = vld [vmem:[#allocation8 + $0x1768] sm:$0xff]
    %v1653 = vld [vmem:[#allocation8 + $0x1770] sm:$0xff]
    %v1654 = vld [vmem:[#allocation8 + $0x1778] sm:$0xff]
    %v1655 = vld [vmem:[#allocation8 + $0x1780] sm:$0xff]
    %v1656 = vld [vmem:[#allocation8 + $0x1788] sm:$0xff]
    %v1657 = vld [vmem:[#allocation8 + $0x1790] sm:$0xff]
    %v1658 = vld [vmem:[#allocation8 + $0x1798] sm:$0xff]
    %v1659 = vld [vmem:[#allocation8 + $0x17a0] sm:$0xff]
    %v1660 = vld [vmem:[#allocation8 + $0x17a8] sm:$0xff]
    %v1661 = vld [vmem:[#allocation8 + $0x17b0] sm:$0xff]
    %v1662 = vld [vmem:[#allocation8 + $0x17b8] sm:$0xff]
    %v1663 = vld [vmem:[#allocation8 + $0x17c0] sm:$0xff]
    %v1664 = vld [vmem:[#allocation8 + $0x17c8] sm:$0xff]
    %v1665 = vld [vmem:[#allocation8 + $0x17d0] sm:$0xff]
    %v1666 = vld [vmem:[#allocation8 + $0x17d8] sm:$0xff]
    %v1667 = vld [vmem:[#allocation8 + $0x17e0] sm:$0xff]
    %v1668 = vld [vmem:[#allocation8 + $0x17e8] sm:$0xff]
    %v1669 = vld [vmem:[#allocation8 + $0x17f0] sm:$0xff]
    %v1670 = vld [vmem:[#allocation8 + $0x17f8] sm:$0xff]
    %v1671 = vld [vmem:[#allocation8 + $0x1800] sm:$0xff]
    %v1672 = vld [vmem:[#allocation8 + $0x1808] sm:$0xff]
    %v1673 = vld [vmem:[#allocation8 + $0x1810] sm:$0xff]
    %v1674 = vld [vmem:[#allocation8 + $0x1818] sm:$0xff]
    %v1675 = vld [vmem:[#allocation8 + $0x1820] sm:$0xff]
    %v1676 = vld [vmem:[#allocation8 + $0x1828] sm:$0xff]
    %v1677 = vld [vmem:[#allocation8 + $0x1830] sm:$0xff]
    %v1678 = vld [vmem:[#allocation8 + $0x1838] sm:$0xff]
    %v1679 = vld [vmem:[#allocation8 + $0x1840] sm:$0xff]
    %v1680 = vld [vmem:[#allocation8 + $0x1848] sm:$0xff]
    %v1681 = vld [vmem:[#allocation8 + $0x1850] sm:$0xff]
    %v1682 = vld [vmem:[#allocation8 + $0x1858] sm:$0xff]
    %v1683 = vld [vmem:[#allocation8 + $0x1860] sm:$0xff]
    %v1684 = vld [vmem:[#allocation8 + $0x1868] sm:$0xff]
    %v1685 = vld [vmem:[#allocation8 + $0x1870] sm:$0xff]
    %v1686 = vld [vmem:[#allocation8 + $0x1878] sm:$0xff]
    %v1687 = vld [vmem:[#allocation8 + $0x1880] sm:$0xff]
    %v1688 = vld [vmem:[#allocation8 + $0x1888] sm:$0xff]
    %v1689 = vld [vmem:[#allocation8 + $0x1890] sm:$0xff]
    %v1690 = vld [vmem:[#allocation8 + $0x1898] sm:$0xff]
    %v1691 = vld [vmem:[#allocation8 + $0x18a0] sm:$0xff]
    %v1692 = vld [vmem:[#allocation8 + $0x18a8] sm:$0xff]
    %v1693 = vld [vmem:[#allocation8 + $0x18b0] sm:$0xff]
    %v1694 = vld [vmem:[#allocation8 + $0x18b8] sm:$0xff]
    %v1695 = vld [vmem:[#allocation8 + $0x18c0] sm:$0xff]
    %v1696 = vld [vmem:[#allocation8 + $0x18c8] sm:$0xff]
    %v1697 = vld [vmem:[#allocation8 + $0x18d0] sm:$0xff]
    %v1698 = vld [vmem:[#allocation8 + $0x18d8] sm:$0xff]
    %v1699 = vld [vmem:[#allocation8 + $0x18e0] sm:$0xff]
    %v1700 = vld [vmem:[#allocation8 + $0x18e8] sm:$0xff]
    %v1701 = vld [vmem:[#allocation8 + $0x18f0] sm:$0xff]
    %v1702 = vld [vmem:[#allocation8 + $0x18f8] sm:$0xff]
    %v1703 = vld [vmem:[#allocation8 + $0x1900] sm:$0xff]
    %v1704 = vld [vmem:[#allocation8 + $0x1908] sm:$0xff]
    %v1705 = vld [vmem:[#allocation8 + $0x1910] sm:$0xff]
    %v1706 = vld [vmem:[#allocation8 + $0x1918] sm:$0xff]
    %v1707 = vld [vmem:[#allocation8 + $0x1920] sm:$0xff]
    %v1708 = vld [vmem:[#allocation8 + $0x1928] sm:$0xff]
    %v1709 = vld [vmem:[#allocation8 + $0x1930] sm:$0xff]
    %v1710 = vld [vmem:[#allocation8 + $0x1938] sm:$0xff]
    %v1711 = vld [vmem:[#allocation8 + $0x1940] sm:$0xff]
    %v1712 = vld [vmem:[#allocation8 + $0x1948] sm:$0xff]
    %v1713 = vld [vmem:[#allocation8 + $0x1950] sm:$0xff]
    %v1714 = vld [vmem:[#allocation8 + $0x1958] sm:$0xff]
    %v1715 = vld [vmem:[#allocation8 + $0x1960] sm:$0xff]
    %v1716 = vld [vmem:[#allocation8 + $0x1968] sm:$0xff]
    %v1717 = vld [vmem:[#allocation8 + $0x1970] sm:$0xff]
    %v1718 = vld [vmem:[#allocation8 + $0x1978] sm:$0xff]
    %v1719 = vld [vmem:[#allocation8 + $0x1980] sm:$0xff]
    %v1720 = vld [vmem:[#allocation8 + $0x1988] sm:$0xff]
    %v1721 = vld [vmem:[#allocation8 + $0x1990] sm:$0xff]
    %v1722 = vld [vmem:[#allocation8 + $0x1998] sm:$0xff]
    %v1723 = vld [vmem:[#allocation8 + $0x19a0] sm:$0xff]
    %v1724 = vld [vmem:[#allocation8 + $0x19a8] sm:$0xff]
    %v1725 = vld [vmem:[#allocation8 + $0x19b0] sm:$0xff]
    %v1726 = vld [vmem:[#allocation8 + $0x19b8] sm:$0xff]
    %v1727 = vld [vmem:[#allocation8 + $0x19c0] sm:$0xff]
    %v1728 = vld [vmem:[#allocation8 + $0x19c8] sm:$0xff]
    %v1729 = vld [vmem:[#allocation8 + $0x19d0] sm:$0xff]
    %v1730 = vld [vmem:[#allocation8 + $0x19d8] sm:$0xff]
    %v1731 = vld [vmem:[#allocation8 + $0x19e0] sm:$0xff]
    %v1732 = vld [vmem:[#allocation8 + $0x19e8] sm:$0xff]
    %v1733 = vld [vmem:[#allocation8 + $0x19f0] sm:$0xff]
    %v1734 = vld [vmem:[#allocation8 + $0x19f8] sm:$0xff]
    %v1735 = vld [vmem:[#allocation8 + $0x1a00] sm:$0xff]
    %v1736 = vld [vmem:[#allocation8 + $0x1a08] sm:$0xff]
    %v1737 = vld [vmem:[#allocation8 + $0x1a10] sm:$0xff]
    %v1738 = vld [vmem:[#allocation8 + $0x1a18] sm:$0xff]
    %v1739 = vld [vmem:[#allocation8 + $0x1a20] sm:$0xff]
    %v1740 = vld [vmem:[#allocation8 + $0x1a28] sm:$0xff]
    %v1741 = vld [vmem:[#allocation8 + $0x1a30] sm:$0xff]
    %v1742 = vld [vmem:[#allocation8 + $0x1a38] sm:$0xff]
    %v1743 = vld [vmem:[#allocation8 + $0x1a40] sm:$0xff]
    %v1744 = vld [vmem:[#allocation8 + $0x1a48] sm:$0xff]
    %v1745 = vld [vmem:[#allocation8 + $0x1a50] sm:$0xff]
    %v1746 = vld [vmem:[#allocation8 + $0x1a58] sm:$0xff]
    %v1747 = vld [vmem:[#allocation8 + $0x1a60] sm:$0xff]
    %v1748 = vld [vmem:[#allocation8 + $0x1a68] sm:$0xff]
    %v1749 = vld [vmem:[#allocation8 + $0x1a70] sm:$0xff]
    %v1750 = vld [vmem:[#allocation8 + $0x1a78] sm:$0xff]
    %v1751 = vld [vmem:[#allocation8 + $0x1a80] sm:$0xff]
    %v1752 = vld [vmem:[#allocation8 + $0x1a88] sm:$0xff]
    %v1753 = vld [vmem:[#allocation8 + $0x1a90] sm:$0xff]
    %v1754 = vld [vmem:[#allocation8 + $0x1a98] sm:$0xff]
    %v1755 = vld [vmem:[#allocation8 + $0x1aa0] sm:$0xff]
    %v1756 = vld [vmem:[#allocation8 + $0x1aa8] sm:$0xff]
    %v1757 = vld [vmem:[#allocation8 + $0x1ab0] sm:$0xff]
    %v1758 = vld [vmem:[#allocation8 + $0x1ab8] sm:$0xff]
    %v1759 = vld [vmem:[#allocation8 + $0x1ac0] sm:$0xff]
    %v1760 = vld [vmem:[#allocation8 + $0x1ac8] sm:$0xff]
    %v1761 = vld [vmem:[#allocation8 + $0x1ad0] sm:$0xff]
    %v1762 = vld [vmem:[#allocation8 + $0x1ad8] sm:$0xff]
    %v1763 = vld [vmem:[#allocation8 + $0x1ae0] sm:$0xff]
    %v1764 = vld [vmem:[#allocation8 + $0x1ae8] sm:$0xff]
    %v1765 = vld [vmem:[#allocation8 + $0x1af0] sm:$0xff]
    %v1766 = vld [vmem:[#allocation8 + $0x1af8] sm:$0xff]
    %v1767 = vld [vmem:[#allocation8 + $0x1b00] sm:$0xff]
    %v1768 = vld [vmem:[#allocation8 + $0x1b08] sm:$0xff]
    %v1769 = vld [vmem:[#allocation8 + $0x1b10] sm:$0xff]
    %v1770 = vld [vmem:[#allocation8 + $0x1b18] sm:$0xff]
    %v1771 = vld [vmem:[#allocation8 + $0x1b20] sm:$0xff]
    %v1772 = vld [vmem:[#allocation8 + $0x1b28] sm:$0xff]
    %v1773 = vld [vmem:[#allocation8 + $0x1b30] sm:$0xff]
    %v1774 = vld [vmem:[#allocation8 + $0x1b38] sm:$0xff]
    %v1775 = vld [vmem:[#allocation8 + $0x1b40] sm:$0xff]
    %v1776 = vld [vmem:[#allocation8 + $0x1b48] sm:$0xff]
    %v1777 = vld [vmem:[#allocation8 + $0x1b50] sm:$0xff]
    %v1778 = vld [vmem:[#allocation8 + $0x1b58] sm:$0xff]
    %v1779 = vld [vmem:[#allocation8 + $0x1b60] sm:$0xff]
    %v1780 = vld [vmem:[#allocation8 + $0x1b68] sm:$0xff]
    %v1781 = vld [vmem:[#allocation8 + $0x1b70] sm:$0xff]
    %v1782 = vld [vmem:[#allocation8 + $0x1b78] sm:$0xff]
    %v1783 = vld [vmem:[#allocation8 + $0x1b80] sm:$0xff]
    %v1784 = vld [vmem:[#allocation8 + $0x1b88] sm:$0xff]
    %v1785 = vld [vmem:[#allocation8 + $0x1b90] sm:$0xff]
    %v1786 = vld [vmem:[#allocation8 + $0x1b98] sm:$0xff]
    %v1787 = vld [vmem:[#allocation8 + $0x1ba0] sm:$0xff]
    %v1788 = vld [vmem:[#allocation8 + $0x1ba8] sm:$0xff]
    %v1789 = vld [vmem:[#allocation8 + $0x1bb0] sm:$0xff]
    %v1790 = vld [vmem:[#allocation8 + $0x1bb8] sm:$0xff]
    %v1791 = vld [vmem:[#allocation8 + $0x1bc0] sm:$0xff]
    %v1792 = vld [vmem:[#allocation8 + $0x1bc8] sm:$0xff]
    %v1793 = vld [vmem:[#allocation8 + $0x1bd0] sm:$0xff]
    %v1794 = vld [vmem:[#allocation8 + $0x1bd8] sm:$0xff]
    %v1795 = vld [vmem:[#allocation8 + $0x1be0] sm:$0xff]
    %v1796 = vld [vmem:[#allocation8 + $0x1be8] sm:$0xff]
    %v1797 = vld [vmem:[#allocation8 + $0x1bf0] sm:$0xff]
    %v1798 = vld [vmem:[#allocation8 + $0x1bf8] sm:$0xff]
    %v1799 = vld [vmem:[#allocation8 + $0x1c00] sm:$0xff]
    %v1800 = vld [vmem:[#allocation8 + $0x1c08] sm:$0xff]
    %v1801 = vld [vmem:[#allocation8 + $0x1c10] sm:$0xff]
    %v1802 = vld [vmem:[#allocation8 + $0x1c18] sm:$0xff]
    %v1803 = vld [vmem:[#allocation8 + $0x1c20] sm:$0xff]
    %v1804 = vld [vmem:[#allocation8 + $0x1c28] sm:$0xff]
    %v1805 = vld [vmem:[#allocation8 + $0x1c30] sm:$0xff]
    %v1806 = vld [vmem:[#allocation8 + $0x1c38] sm:$0xff]
    %v1807 = vld [vmem:[#allocation8 + $0x1c40] sm:$0xff]
    %v1808 = vld [vmem:[#allocation8 + $0x1c48] sm:$0xff]
    %v1809 = vld [vmem:[#allocation8 + $0x1c50] sm:$0xff]
    %v1810 = vld [vmem:[#allocation8 + $0x1c58] sm:$0xff]
    %v1811 = vld [vmem:[#allocation8 + $0x1c60] sm:$0xff]
    %v1812 = vld [vmem:[#allocation8 + $0x1c68] sm:$0xff]
    %v1813 = vld [vmem:[#allocation8 + $0x1c70] sm:$0xff]
    %v1814 = vld [vmem:[#allocation8 + $0x1c78] sm:$0xff]
    %v1815 = vld [vmem:[#allocation8 + $0x1c80] sm:$0xff]
    %v1816 = vld [vmem:[#allocation8 + $0x1c88] sm:$0xff]
    %v1817 = vld [vmem:[#allocation8 + $0x1c90] sm:$0xff]
    %v1818 = vld [vmem:[#allocation8 + $0x1c98] sm:$0xff]
    %v1819 = vld [vmem:[#allocation8 + $0x1ca0] sm:$0xff]
    %v1820 = vld [vmem:[#allocation8 + $0x1ca8] sm:$0xff]
    %v1821 = vld [vmem:[#allocation8 + $0x1cb0] sm:$0xff]
    %v1822 = vld [vmem:[#allocation8 + $0x1cb8] sm:$0xff]
    %v1823 = vld [vmem:[#allocation8 + $0x1cc0] sm:$0xff]
    %v1824 = vld [vmem:[#allocation8 + $0x1cc8] sm:$0xff]
    %v1825 = vld [vmem:[#allocation8 + $0x1cd0] sm:$0xff]
    %v1826 = vld [vmem:[#allocation8 + $0x1cd8] sm:$0xff]
    %v1827 = vld [vmem:[#allocation8 + $0x1ce0] sm:$0xff]
    %v1828 = vld [vmem:[#allocation8 + $0x1ce8] sm:$0xff]
    %v1829 = vld [vmem:[#allocation8 + $0x1cf0] sm:$0xff]
    %v1830 = vld [vmem:[#allocation8 + $0x1cf8] sm:$0xff]
    %v1831 = vld [vmem:[#allocation8 + $0x1d00] sm:$0xff]
    %v1832 = vld [vmem:[#allocation8 + $0x1d08] sm:$0xff]
    %v1833 = vld [vmem:[#allocation8 + $0x1d10] sm:$0xff]
    %v1834 = vld [vmem:[#allocation8 + $0x1d18] sm:$0xff]
    %v1835 = vld [vmem:[#allocation8 + $0x1d20] sm:$0xff]
    %v1836 = vld [vmem:[#allocation8 + $0x1d28] sm:$0xff]
    %v1837 = vld [vmem:[#allocation8 + $0x1d30] sm:$0xff]
    %v1838 = vld [vmem:[#allocation8 + $0x1d38] sm:$0xff]
    %v1839 = vld [vmem:[#allocation8 + $0x1d40] sm:$0xff]
    %v1840 = vld [vmem:[#allocation8 + $0x1d48] sm:$0xff]
    %v1841 = vld [vmem:[#allocation8 + $0x1d50] sm:$0xff]
    %v1842 = vld [vmem:[#allocation8 + $0x1d58] sm:$0xff]
    %v1843 = vld [vmem:[#allocation8 + $0x1d60] sm:$0xff]
    %v1844 = vld [vmem:[#allocation8 + $0x1d68] sm:$0xff]
    %v1845 = vld [vmem:[#allocation8 + $0x1d70] sm:$0xff]
    %v1846 = vld [vmem:[#allocation8 + $0x1d78] sm:$0xff]
    %v1847 = vld [vmem:[#allocation8 + $0x1d80] sm:$0xff]
    %v1848 = vld [vmem:[#allocation8 + $0x1d88] sm:$0xff]
    %v1849 = vld [vmem:[#allocation8 + $0x1d90] sm:$0xff]
    %v1850 = vld [vmem:[#allocation8 + $0x1d98] sm:$0xff]
    %v1851 = vld [vmem:[#allocation8 + $0x1da0] sm:$0xff]
    %v1852 = vld [vmem:[#allocation8 + $0x1da8] sm:$0xff]
    %v1853 = vld [vmem:[#allocation8 + $0x1db0] sm:$0xff]
    %v1854 = vld [vmem:[#allocation8 + $0x1db8] sm:$0xff]
    %v1855 = vld [vmem:[#allocation8 + $0x1dc0] sm:$0xff]
    %v1856 = vld [vmem:[#allocation8 + $0x1dc8] sm:$0xff]
    %v1857 = vld [vmem:[#allocation8 + $0x1dd0] sm:$0xff]
    %v1858 = vld [vmem:[#allocation8 + $0x1dd8] sm:$0xff]
    %v1859 = vld [vmem:[#allocation8 + $0x1de0] sm:$0xff]
    %v1860 = vld [vmem:[#allocation8 + $0x1de8] sm:$0xff]
    %v1861 = vld [vmem:[#allocation8 + $0x1df0] sm:$0xff]
    %v1862 = vld [vmem:[#allocation8 + $0x1df8] sm:$0xff]
    %v1863 = vld [vmem:[#allocation8 + $0x1e00] sm:$0xff]
    %v1864 = vld [vmem:[#allocation8 + $0x1e08] sm:$0xff]
    %v1865 = vld [vmem:[#allocation8 + $0x1e10] sm:$0xff]
    %v1866 = vld [vmem:[#allocation8 + $0x1e18] sm:$0xff]
    %v1867 = vld [vmem:[#allocation8 + $0x1e20] sm:$0xff]
    %v1868 = vld [vmem:[#allocation8 + $0x1e28] sm:$0xff]
    %v1869 = vld [vmem:[#allocation8 + $0x1e30] sm:$0xff]
    %v1870 = vld [vmem:[#allocation8 + $0x1e38] sm:$0xff]
    %v1871 = vld [vmem:[#allocation8 + $0x1e40] sm:$0xff]
    %v1872 = vld [vmem:[#allocation8 + $0x1e48] sm:$0xff]
    %v1873 = vld [vmem:[#allocation8 + $0x1e50] sm:$0xff]
    %v1874 = vld [vmem:[#allocation8 + $0x1e58] sm:$0xff]
    %v1875 = vld [vmem:[#allocation8 + $0x1e60] sm:$0xff]
    %v1876 = vld [vmem:[#allocation8 + $0x1e68] sm:$0xff]
    %v1877 = vld [vmem:[#allocation8 + $0x1e70] sm:$0xff]
    %v1878 = vld [vmem:[#allocation8 + $0x1e78] sm:$0xff]
    %v1879 = vld [vmem:[#allocation8 + $0x1e80] sm:$0xff]
    %v1880 = vld [vmem:[#allocation8 + $0x1e88] sm:$0xff]
    %v1881 = vld [vmem:[#allocation8 + $0x1e90] sm:$0xff]
    %v1882 = vld [vmem:[#allocation8 + $0x1e98] sm:$0xff]
    %v1883 = vld [vmem:[#allocation8 + $0x1ea0] sm:$0xff]
    %v1884 = vld [vmem:[#allocation8 + $0x1ea8] sm:$0xff]
    %v1885 = vld [vmem:[#allocation8 + $0x1eb0] sm:$0xff]
    %v1886 = vld [vmem:[#allocation8 + $0x1eb8] sm:$0xff]
    %v1887 = vld [vmem:[#allocation8 + $0x1ec0] sm:$0xff]
    %v1888 = vld [vmem:[#allocation8 + $0x1ec8] sm:$0xff]
    %v1889 = vld [vmem:[#allocation8 + $0x1ed0] sm:$0xff]
    %v1890 = vld [vmem:[#allocation8 + $0x1ed8] sm:$0xff]
    %v1891 = vld [vmem:[#allocation8 + $0x1ee0] sm:$0xff]
    %v1892 = vld [vmem:[#allocation8 + $0x1ee8] sm:$0xff]
    %v1893 = vld [vmem:[#allocation8 + $0x1ef0] sm:$0xff]
    %v1894 = vld [vmem:[#allocation8 + $0x1ef8] sm:$0xff]
    %v1895 = vld [vmem:[#allocation8 + $0x1f00] sm:$0xff]
    %v1896 = vld [vmem:[#allocation8 + $0x1f08] sm:$0xff]
    %v1897 = vld [vmem:[#allocation8 + $0x1f10] sm:$0xff]
    %v1898 = vld [vmem:[#allocation8 + $0x1f18] sm:$0xff]
    %v1899 = vld [vmem:[#allocation8 + $0x1f20] sm:$0xff]
    %v1900 = vld [vmem:[#allocation8 + $0x1f28] sm:$0xff]
    %v1901 = vld [vmem:[#allocation8 + $0x1f30] sm:$0xff]
    %v1902 = vld [vmem:[#allocation8 + $0x1f38] sm:$0xff]
    %v1903 = vld [vmem:[#allocation8 + $0x1f40] sm:$0xff]
    %v1904 = vld [vmem:[#allocation8 + $0x1f48] sm:$0xff]
    %v1905 = vld [vmem:[#allocation8 + $0x1f50] sm:$0xff]
    %v1906 = vld [vmem:[#allocation8 + $0x1f58] sm:$0xff]
    %v1907 = vld [vmem:[#allocation8 + $0x1f60] sm:$0xff]
    %v1908 = vld [vmem:[#allocation8 + $0x1f68] sm:$0xff]
    %v1909 = vld [vmem:[#allocation8 + $0x1f70] sm:$0xff]
    %v1910 = vld [vmem:[#allocation8 + $0x1f78] sm:$0xff]
    %v1911 = vld [vmem:[#allocation8 + $0x1f80] sm:$0xff]
    %v1912 = vld [vmem:[#allocation8 + $0x1f88] sm:$0xff]
    %v1913 = vld [vmem:[#allocation8 + $0x1f90] sm:$0xff]
    %v1914 = vld [vmem:[#allocation8 + $0x1f98] sm:$0xff]
    %v1915 = vld [vmem:[#allocation8 + $0x1fa0] sm:$0xff]
    %v1916 = vld [vmem:[#allocation8 + $0x1fa8] sm:$0xff]
    %v1917 = vld [vmem:[#allocation8 + $0x1fb0] sm:$0xff]
    %v1918 = vld [vmem:[#allocation8 + $0x1fb8] sm:$0xff]
    %v1919 = vld [vmem:[#allocation8 + $0x1fc0] sm:$0xff]
    %v1920 = vld [vmem:[#allocation8 + $0x1fc8] sm:$0xff]
    %v1921 = vld [vmem:[#allocation8 + $0x1fd0] sm:$0xff]
    %v1922 = vld [vmem:[#allocation8 + $0x1fd8] sm:$0xff]
    %v1923 = vld [vmem:[#allocation8 + $0x1fe0] sm:$0xff]
    %v1924 = vld [vmem:[#allocation8 + $0x1fe8] sm:$0xff]
    %v1925 = vld [vmem:[#allocation8 + $0x1ff0] sm:$0xff]
    %v1926 = vld [vmem:[#allocation8 + $0x1ff8] sm:$0xff]
    %v1927 = vld [vmem:[#allocation10] sm:$0xff]
    %v1929 = vlaneseq
    %v1930 = vshrl.u32 %v1929, 7
    %v1931 = vsub.s32 0, %v1930
    %v1932 = vrot.slane %v1927, %v1931
    %v1933 = vlaneseq
    %v1934 = vshrl.u32 %v1933, 7
    %v1935 = vsub.s32 1, %v1934
    %v1936 = vrot.slane %v1927, %v1935
    %v1937 = vlaneseq
    %v1938 = vshrl.u32 %v1937, 7
    %v1939 = vsub.s32 2, %v1938
    %v1940 = vrot.slane %v1927, %v1939
    %v1941 = vlaneseq
    %v1942 = vshrl.u32 %v1941, 7
    %v1943 = vsub.s32 3, %v1942
    %v1944 = vrot.slane %v1927, %v1943
    %v1945 = vlaneseq
    %v1946 = vshrl.u32 %v1945, 7
    %v1947 = vsub.s32 4, %v1946
    %v1948 = vrot.slane %v1927, %v1947
    %v1949 = vlaneseq
    %v1950 = vshrl.u32 %v1949, 7
    %v1951 = vsub.s32 5, %v1950
    %v1952 = vrot.slane %v1927, %v1951
    %v1953 = vlaneseq
    %v1954 = vshrl.u32 %v1953, 7
    %v1955 = vsub.s32 6, %v1954
    %v1956 = vrot.slane %v1927, %v1955
    %v1957 = vlaneseq
    %v1958 = vshrl.u32 %v1957, 7
    %v1959 = vsub.s32 7, %v1958
    %v1960 = vrot.slane %v1927, %v1959
    %v2993 = vunpack.c.l.b16 %v903
    %v2994 = vunpack.c.h.b16 %v903
    %v2995 = vunpack.c.l.b16 %v904
    %v2996 = vunpack.c.h.b16 %v904
    %v2997 = vunpack.c.l.b16 %v905
    %v2998 = vunpack.c.h.b16 %v905
    %v2999 = vunpack.c.l.b16 %v906
    %v3000 = vunpack.c.h.b16 %v906
    %v3001 = vunpack.c.l.b16 %v907
    %v3002 = vunpack.c.h.b16 %v907
    %v3003 = vunpack.c.l.b16 %v908
    %v3004 = vunpack.c.h.b16 %v908
    %v3005 = vunpack.c.l.b16 %v909
    %v3006 = vunpack.c.h.b16 %v909
    %v3007 = vunpack.c.l.b16 %v910
    %v3008 = vunpack.c.h.b16 %v910
    %v3009 = vunpack.c.l.b16 %v911
    %v3010 = vunpack.c.h.b16 %v911
    %v3011 = vunpack.c.l.b16 %v912
    %v3012 = vunpack.c.h.b16 %v912
    %v3013 = vunpack.c.l.b16 %v913
    %v3014 = vunpack.c.h.b16 %v913
    %v3015 = vunpack.c.l.b16 %v914
    %v3016 = vunpack.c.h.b16 %v914
    %v3017 = vunpack.c.l.b16 %v915
    %v3018 = vunpack.c.h.b16 %v915
    %v3019 = vunpack.c.l.b16 %v916
    %v3020 = vunpack.c.h.b16 %v916
    %v3021 = vunpack.c.l.b16 %v917
    %v3022 = vunpack.c.h.b16 %v917
    %v3023 = vunpack.c.l.b16 %v918
    %v3024 = vunpack.c.h.b16 %v918
    %v3025 = vunpack.c.l.b16 %v919
    %v3026 = vunpack.c.h.b16 %v919
    %v3027 = vunpack.c.l.b16 %v920
    %v3028 = vunpack.c.h.b16 %v920
    %v3029 = vunpack.c.l.b16 %v921
    %v3030 = vunpack.c.h.b16 %v921
    %v3031 = vunpack.c.l.b16 %v922
    %v3032 = vunpack.c.h.b16 %v922
    %v3033 = vunpack.c.l.b16 %v923
    %v3034 = vunpack.c.h.b16 %v923
    %v3035 = vunpack.c.l.b16 %v924
    %v3036 = vunpack.c.h.b16 %v924
    %v3037 = vunpack.c.l.b16 %v925
    %v3038 = vunpack.c.h.b16 %v925
    %v3039 = vunpack.c.l.b16 %v926
    %v3040 = vunpack.c.h.b16 %v926
    %v3041 = vunpack.c.l.b16 %v927
    %v3042 = vunpack.c.h.b16 %v927
    %v3043 = vunpack.c.l.b16 %v928
    %v3044 = vunpack.c.h.b16 %v928
    %v3045 = vunpack.c.l.b16 %v929
    %v3046 = vunpack.c.h.b16 %v929
    %v3047 = vunpack.c.l.b16 %v930
    %v3048 = vunpack.c.h.b16 %v930
    %v3049 = vunpack.c.l.b16 %v931
    %v3050 = vunpack.c.h.b16 %v931
    %v3051 = vunpack.c.l.b16 %v932
    %v3052 = vunpack.c.h.b16 %v932
    %v3053 = vunpack.c.l.b16 %v933
    %v3054 = vunpack.c.h.b16 %v933
    %v3055 = vunpack.c.l.b16 %v934
    %v3056 = vunpack.c.h.b16 %v934
    %v3057 = vunpack.c.l.b16 %v935
    %v3058 = vunpack.c.h.b16 %v935
    %v3059 = vunpack.c.l.b16 %v936
    %v3060 = vunpack.c.h.b16 %v936
    %v3061 = vunpack.c.l.b16 %v937
    %v3062 = vunpack.c.h.b16 %v937
    %v3063 = vunpack.c.l.b16 %v938
    %v3064 = vunpack.c.h.b16 %v938
    %v3065 = vunpack.c.l.b16 %v939
    %v3066 = vunpack.c.h.b16 %v939
    %v3067 = vunpack.c.l.b16 %v940
    %v3068 = vunpack.c.h.b16 %v940
    %v3069 = vunpack.c.l.b16 %v941
    %v3070 = vunpack.c.h.b16 %v941
    %v3071 = vunpack.c.l.b16 %v942
    %v3072 = vunpack.c.h.b16 %v942
    %v3073 = vunpack.c.l.b16 %v943
    %v3074 = vunpack.c.h.b16 %v943
    %v3075 = vunpack.c.l.b16 %v944
    %v3076 = vunpack.c.h.b16 %v944
    %v3077 = vunpack.c.l.b16 %v945
    %v3078 = vunpack.c.h.b16 %v945
    %v3079 = vunpack.c.l.b16 %v946
    %v3080 = vunpack.c.h.b16 %v946
    %v3081 = vunpack.c.l.b16 %v947
    %v3082 = vunpack.c.h.b16 %v947
    %v3083 = vunpack.c.l.b16 %v948
    %v3084 = vunpack.c.h.b16 %v948
    %v3085 = vunpack.c.l.b16 %v949
    %v3086 = vunpack.c.h.b16 %v949
    %v3087 = vunpack.c.l.b16 %v950
    %v3088 = vunpack.c.h.b16 %v950
    %v3089 = vunpack.c.l.b16 %v951
    %v3090 = vunpack.c.h.b16 %v951
    %v3091 = vunpack.c.l.b16 %v952
    %v3092 = vunpack.c.h.b16 %v952
    %v3093 = vunpack.c.l.b16 %v953
    %v3094 = vunpack.c.h.b16 %v953
    %v3095 = vunpack.c.l.b16 %v954
    %v3096 = vunpack.c.h.b16 %v954
    %v3097 = vunpack.c.l.b16 %v955
    %v3098 = vunpack.c.h.b16 %v955
    %v3099 = vunpack.c.l.b16 %v956
    %v3100 = vunpack.c.h.b16 %v956
    %v3101 = vunpack.c.l.b16 %v957
    %v3102 = vunpack.c.h.b16 %v957
    %v3103 = vunpack.c.l.b16 %v958
    %v3104 = vunpack.c.h.b16 %v958
    %v3105 = vunpack.c.l.b16 %v959
    %v3106 = vunpack.c.h.b16 %v959
    %v3107 = vunpack.c.l.b16 %v960
    %v3108 = vunpack.c.h.b16 %v960
    %v3109 = vunpack.c.l.b16 %v961
    %v3110 = vunpack.c.h.b16 %v961
    %v3111 = vunpack.c.l.b16 %v962
    %v3112 = vunpack.c.h.b16 %v962
    %v3113 = vunpack.c.l.b16 %v963
    %v3114 = vunpack.c.h.b16 %v963
    %v3115 = vunpack.c.l.b16 %v964
    %v3116 = vunpack.c.h.b16 %v964
    %v3117 = vunpack.c.l.b16 %v965
    %v3118 = vunpack.c.h.b16 %v965
    %v3119 = vunpack.c.l.b16 %v966
    %v3120 = vunpack.c.h.b16 %v966
    %v3121 = vunpack.c.l.b16 %v967
    %v3122 = vunpack.c.h.b16 %v967
    %v3123 = vunpack.c.l.b16 %v968
    %v3124 = vunpack.c.h.b16 %v968
    %v3125 = vunpack.c.l.b16 %v969
    %v3126 = vunpack.c.h.b16 %v969
    %v3127 = vunpack.c.l.b16 %v970
    %v3128 = vunpack.c.h.b16 %v970
    %v3129 = vunpack.c.l.b16 %v971
    %v3130 = vunpack.c.h.b16 %v971
    %v3131 = vunpack.c.l.b16 %v972
    %v3132 = vunpack.c.h.b16 %v972
    %v3133 = vunpack.c.l.b16 %v973
    %v3134 = vunpack.c.h.b16 %v973
    %v3135 = vunpack.c.l.b16 %v974
    %v3136 = vunpack.c.h.b16 %v974
    %v3137 = vunpack.c.l.b16 %v975
    %v3138 = vunpack.c.h.b16 %v975
    %v3139 = vunpack.c.l.b16 %v976
    %v3140 = vunpack.c.h.b16 %v976
    %v3141 = vunpack.c.l.b16 %v977
    %v3142 = vunpack.c.h.b16 %v977
    %v3143 = vunpack.c.l.b16 %v978
    %v3144 = vunpack.c.h.b16 %v978
    %v3145 = vunpack.c.l.b16 %v979
    %v3146 = vunpack.c.h.b16 %v979
    %v3147 = vunpack.c.l.b16 %v980
    %v3148 = vunpack.c.h.b16 %v980
    %v3149 = vunpack.c.l.b16 %v981
    %v3150 = vunpack.c.h.b16 %v981
    %v3151 = vunpack.c.l.b16 %v982
    %v3152 = vunpack.c.h.b16 %v982
    %v3153 = vunpack.c.l.b16 %v983
    %v3154 = vunpack.c.h.b16 %v983
    %v3155 = vunpack.c.l.b16 %v984
    %v3156 = vunpack.c.h.b16 %v984
    %v3157 = vunpack.c.l.b16 %v985
    %v3158 = vunpack.c.h.b16 %v985
    %v3159 = vunpack.c.l.b16 %v986
    %v3160 = vunpack.c.h.b16 %v986
    %v3161 = vunpack.c.l.b16 %v987
    %v3162 = vunpack.c.h.b16 %v987
    %v3163 = vunpack.c.l.b16 %v988
    %v3164 = vunpack.c.h.b16 %v988
    %v3165 = vunpack.c.l.b16 %v989
    %v3166 = vunpack.c.h.b16 %v989
    %v3167 = vunpack.c.l.b16 %v990
    %v3168 = vunpack.c.h.b16 %v990
    %v3169 = vunpack.c.l.b16 %v991
    %v3170 = vunpack.c.h.b16 %v991
    %v3171 = vunpack.c.l.b16 %v992
    %v3172 = vunpack.c.h.b16 %v992
    %v3173 = vunpack.c.l.b16 %v993
    %v3174 = vunpack.c.h.b16 %v993
    %v3175 = vunpack.c.l.b16 %v994
    %v3176 = vunpack.c.h.b16 %v994
    %v3177 = vunpack.c.l.b16 %v995
    %v3178 = vunpack.c.h.b16 %v995
    %v3179 = vunpack.c.l.b16 %v996
    %v3180 = vunpack.c.h.b16 %v996
    %v3181 = vunpack.c.l.b16 %v997
    %v3182 = vunpack.c.h.b16 %v997
    %v3183 = vunpack.c.l.b16 %v998
    %v3184 = vunpack.c.h.b16 %v998
    %v3185 = vunpack.c.l.b16 %v999
    %v3186 = vunpack.c.h.b16 %v999
    %v3187 = vunpack.c.l.b16 %v1000
    %v3188 = vunpack.c.h.b16 %v1000
    %v3189 = vunpack.c.l.b16 %v1001
    %v3190 = vunpack.c.h.b16 %v1001
    %v3191 = vunpack.c.l.b16 %v1002
    %v3192 = vunpack.c.h.b16 %v1002
    %v3193 = vunpack.c.l.b16 %v1003
    %v3194 = vunpack.c.h.b16 %v1003
    %v3195 = vunpack.c.l.b16 %v1004
    %v3196 = vunpack.c.h.b16 %v1004
    %v3197 = vunpack.c.l.b16 %v1005
    %v3198 = vunpack.c.h.b16 %v1005
    %v3199 = vunpack.c.l.b16 %v1006
    %v3200 = vunpack.c.h.b16 %v1006
    %v3201 = vunpack.c.l.b16 %v1007
    %v3202 = vunpack.c.h.b16 %v1007
    %v3203 = vunpack.c.l.b16 %v1008
    %v3204 = vunpack.c.h.b16 %v1008
    %v3205 = vunpack.c.l.b16 %v1009
    %v3206 = vunpack.c.h.b16 %v1009
    %v3207 = vunpack.c.l.b16 %v1010
    %v3208 = vunpack.c.h.b16 %v1010
    %v3209 = vunpack.c.l.b16 %v1011
    %v3210 = vunpack.c.h.b16 %v1011
    %v3211 = vunpack.c.l.b16 %v1012
    %v3212 = vunpack.c.h.b16 %v1012
    %v3213 = vunpack.c.l.b16 %v1013
    %v3214 = vunpack.c.h.b16 %v1013
    %v3215 = vunpack.c.l.b16 %v1014
    %v3216 = vunpack.c.h.b16 %v1014
    %v3217 = vunpack.c.l.b16 %v1015
    %v3218 = vunpack.c.h.b16 %v1015
    %v3219 = vunpack.c.l.b16 %v1016
    %v3220 = vunpack.c.h.b16 %v1016
    %v3221 = vunpack.c.l.b16 %v1017
    %v3222 = vunpack.c.h.b16 %v1017
    %v3223 = vunpack.c.l.b16 %v1018
    %v3224 = vunpack.c.h.b16 %v1018
    %v3225 = vunpack.c.l.b16 %v1019
    %v3226 = vunpack.c.h.b16 %v1019
    %v3227 = vunpack.c.l.b16 %v1020
    %v3228 = vunpack.c.h.b16 %v1020
    %v3229 = vunpack.c.l.b16 %v1021
    %v3230 = vunpack.c.h.b16 %v1021
    %v3231 = vunpack.c.l.b16 %v1022
    %v3232 = vunpack.c.h.b16 %v1022
    %v3233 = vunpack.c.l.b16 %v1023
    %v3234 = vunpack.c.h.b16 %v1023
    %v3235 = vunpack.c.l.b16 %v1024
    %v3236 = vunpack.c.h.b16 %v1024
    %v3237 = vunpack.c.l.b16 %v1025
    %v3238 = vunpack.c.h.b16 %v1025
    %v3239 = vunpack.c.l.b16 %v1026
    %v3240 = vunpack.c.h.b16 %v1026
    %v3241 = vunpack.c.l.b16 %v1027
    %v3242 = vunpack.c.h.b16 %v1027
    %v3243 = vunpack.c.l.b16 %v1028
    %v3244 = vunpack.c.h.b16 %v1028
    %v3245 = vunpack.c.l.b16 %v1029
    %v3246 = vunpack.c.h.b16 %v1029
    %v3247 = vunpack.c.l.b16 %v1030
    %v3248 = vunpack.c.h.b16 %v1030
    %v3249 = vunpack.c.l.b16 %v1031
    %v3250 = vunpack.c.h.b16 %v1031
    %v3251 = vunpack.c.l.b16 %v1032
    %v3252 = vunpack.c.h.b16 %v1032
    %v3253 = vunpack.c.l.b16 %v1033
    %v3254 = vunpack.c.h.b16 %v1033
    %v3255 = vunpack.c.l.b16 %v1034
    %v3256 = vunpack.c.h.b16 %v1034
    %v3257 = vunpack.c.l.b16 %v1035
    %v3258 = vunpack.c.h.b16 %v1035
    %v3259 = vunpack.c.l.b16 %v1036
    %v3260 = vunpack.c.h.b16 %v1036
    %v3261 = vunpack.c.l.b16 %v1037
    %v3262 = vunpack.c.h.b16 %v1037
    %v3263 = vunpack.c.l.b16 %v1038
    %v3264 = vunpack.c.h.b16 %v1038
    %v3265 = vunpack.c.l.b16 %v1039
    %v3266 = vunpack.c.h.b16 %v1039
    %v3267 = vunpack.c.l.b16 %v1040
    %v3268 = vunpack.c.h.b16 %v1040
    %v3269 = vunpack.c.l.b16 %v1041
    %v3270 = vunpack.c.h.b16 %v1041
    %v3271 = vunpack.c.l.b16 %v1042
    %v3272 = vunpack.c.h.b16 %v1042
    %v3273 = vunpack.c.l.b16 %v1043
    %v3274 = vunpack.c.h.b16 %v1043
    %v3275 = vunpack.c.l.b16 %v1044
    %v3276 = vunpack.c.h.b16 %v1044
    %v3277 = vunpack.c.l.b16 %v1045
    %v3278 = vunpack.c.h.b16 %v1045
    %v3279 = vunpack.c.l.b16 %v1046
    %v3280 = vunpack.c.h.b16 %v1046
    %v3281 = vunpack.c.l.b16 %v1047
    %v3282 = vunpack.c.h.b16 %v1047
    %v3283 = vunpack.c.l.b16 %v1048
    %v3284 = vunpack.c.h.b16 %v1048
    %v3285 = vunpack.c.l.b16 %v1049
    %v3286 = vunpack.c.h.b16 %v1049
    %v3287 = vunpack.c.l.b16 %v1050
    %v3288 = vunpack.c.h.b16 %v1050
    %v3289 = vunpack.c.l.b16 %v1051
    %v3290 = vunpack.c.h.b16 %v1051
    %v3291 = vunpack.c.l.b16 %v1052
    %v3292 = vunpack.c.h.b16 %v1052
    %v3293 = vunpack.c.l.b16 %v1053
    %v3294 = vunpack.c.h.b16 %v1053
    %v3295 = vunpack.c.l.b16 %v1054
    %v3296 = vunpack.c.h.b16 %v1054
    %v3297 = vunpack.c.l.b16 %v1055
    %v3298 = vunpack.c.h.b16 %v1055
    %v3299 = vunpack.c.l.b16 %v1056
    %v3300 = vunpack.c.h.b16 %v1056
    %v3301 = vunpack.c.l.b16 %v1057
    %v3302 = vunpack.c.h.b16 %v1057
    %v3303 = vunpack.c.l.b16 %v1058
    %v3304 = vunpack.c.h.b16 %v1058
    %v3305 = vunpack.c.l.b16 %v1059
    %v3306 = vunpack.c.h.b16 %v1059
    %v3307 = vunpack.c.l.b16 %v1060
    %v3308 = vunpack.c.h.b16 %v1060
    %v3309 = vunpack.c.l.b16 %v1061
    %v3310 = vunpack.c.h.b16 %v1061
    %v3311 = vunpack.c.l.b16 %v1062
    %v3312 = vunpack.c.h.b16 %v1062
    %v3313 = vunpack.c.l.b16 %v1063
    %v3314 = vunpack.c.h.b16 %v1063
    %v3315 = vunpack.c.l.b16 %v1064
    %v3316 = vunpack.c.h.b16 %v1064
    %v3317 = vunpack.c.l.b16 %v1065
    %v3318 = vunpack.c.h.b16 %v1065
    %v3319 = vunpack.c.l.b16 %v1066
    %v3320 = vunpack.c.h.b16 %v1066
    %v3321 = vunpack.c.l.b16 %v1067
    %v3322 = vunpack.c.h.b16 %v1067
    %v3323 = vunpack.c.l.b16 %v1068
    %v3324 = vunpack.c.h.b16 %v1068
    %v3325 = vunpack.c.l.b16 %v1069
    %v3326 = vunpack.c.h.b16 %v1069
    %v3327 = vunpack.c.l.b16 %v1070
    %v3328 = vunpack.c.h.b16 %v1070
    %v3329 = vunpack.c.l.b16 %v1071
    %v3330 = vunpack.c.h.b16 %v1071
    %v3331 = vunpack.c.l.b16 %v1072
    %v3332 = vunpack.c.h.b16 %v1072
    %v3333 = vunpack.c.l.b16 %v1073
    %v3334 = vunpack.c.h.b16 %v1073
    %v3335 = vunpack.c.l.b16 %v1074
    %v3336 = vunpack.c.h.b16 %v1074
    %v3337 = vunpack.c.l.b16 %v1075
    %v3338 = vunpack.c.h.b16 %v1075
    %v3339 = vunpack.c.l.b16 %v1076
    %v3340 = vunpack.c.h.b16 %v1076
    %v3341 = vunpack.c.l.b16 %v1077
    %v3342 = vunpack.c.h.b16 %v1077
    %v3343 = vunpack.c.l.b16 %v1078
    %v3344 = vunpack.c.h.b16 %v1078
    %v3345 = vunpack.c.l.b16 %v1079
    %v3346 = vunpack.c.h.b16 %v1079
    %v3347 = vunpack.c.l.b16 %v1080
    %v3348 = vunpack.c.h.b16 %v1080
    %v3349 = vunpack.c.l.b16 %v1081
    %v3350 = vunpack.c.h.b16 %v1081
    %v3351 = vunpack.c.l.b16 %v1082
    %v3352 = vunpack.c.h.b16 %v1082
    %v3353 = vunpack.c.l.b16 %v1083
    %v3354 = vunpack.c.h.b16 %v1083
    %v3355 = vunpack.c.l.b16 %v1084
    %v3356 = vunpack.c.h.b16 %v1084
    %v3357 = vunpack.c.l.b16 %v1085
    %v3358 = vunpack.c.h.b16 %v1085
    %v3359 = vunpack.c.l.b16 %v1086
    %v3360 = vunpack.c.h.b16 %v1086
    %v3361 = vunpack.c.l.b16 %v1087
    %v3362 = vunpack.c.h.b16 %v1087
    %v3363 = vunpack.c.l.b16 %v1088
    %v3364 = vunpack.c.h.b16 %v1088
    %v3365 = vunpack.c.l.b16 %v1089
    %v3366 = vunpack.c.h.b16 %v1089
    %v3367 = vunpack.c.l.b16 %v1090
    %v3368 = vunpack.c.h.b16 %v1090
    %v3369 = vunpack.c.l.b16 %v1091
    %v3370 = vunpack.c.h.b16 %v1091
    %v3371 = vunpack.c.l.b16 %v1092
    %v3372 = vunpack.c.h.b16 %v1092
    %v3373 = vunpack.c.l.b16 %v1093
    %v3374 = vunpack.c.h.b16 %v1093
    %v3375 = vunpack.c.l.b16 %v1094
    %v3376 = vunpack.c.h.b16 %v1094
    %v3377 = vunpack.c.l.b16 %v1095
    %v3378 = vunpack.c.h.b16 %v1095
    %v3379 = vunpack.c.l.b16 %v1096
    %v3380 = vunpack.c.h.b16 %v1096
    %v3381 = vunpack.c.l.b16 %v1097
    %v3382 = vunpack.c.h.b16 %v1097
    %v3383 = vunpack.c.l.b16 %v1098
    %v3384 = vunpack.c.h.b16 %v1098
    %v3385 = vunpack.c.l.b16 %v1099
    %v3386 = vunpack.c.h.b16 %v1099
    %v3387 = vunpack.c.l.b16 %v1100
    %v3388 = vunpack.c.h.b16 %v1100
    %v3389 = vunpack.c.l.b16 %v1101
    %v3390 = vunpack.c.h.b16 %v1101
    %v3391 = vunpack.c.l.b16 %v1102
    %v3392 = vunpack.c.h.b16 %v1102
    %v3393 = vunpack.c.l.b16 %v1103
    %v3394 = vunpack.c.h.b16 %v1103
    %v3395 = vunpack.c.l.b16 %v1104
    %v3396 = vunpack.c.h.b16 %v1104
    %v3397 = vunpack.c.l.b16 %v1105
    %v3398 = vunpack.c.h.b16 %v1105
    %v3399 = vunpack.c.l.b16 %v1106
    %v3400 = vunpack.c.h.b16 %v1106
    %v3401 = vunpack.c.l.b16 %v1107
    %v3402 = vunpack.c.h.b16 %v1107
    %v3403 = vunpack.c.l.b16 %v1108
    %v3404 = vunpack.c.h.b16 %v1108
    %v3405 = vunpack.c.l.b16 %v1109
    %v3406 = vunpack.c.h.b16 %v1109
    %v3407 = vunpack.c.l.b16 %v1110
    %v3408 = vunpack.c.h.b16 %v1110
    %v3409 = vunpack.c.l.b16 %v1111
    %v3410 = vunpack.c.h.b16 %v1111
    %v3411 = vunpack.c.l.b16 %v1112
    %v3412 = vunpack.c.h.b16 %v1112
    %v3413 = vunpack.c.l.b16 %v1113
    %v3414 = vunpack.c.h.b16 %v1113
    %v3415 = vunpack.c.l.b16 %v1114
    %v3416 = vunpack.c.h.b16 %v1114
    %v3417 = vunpack.c.l.b16 %v1115
    %v3418 = vunpack.c.h.b16 %v1115
    %v3419 = vunpack.c.l.b16 %v1116
    %v3420 = vunpack.c.h.b16 %v1116
    %v3421 = vunpack.c.l.b16 %v1117
    %v3422 = vunpack.c.h.b16 %v1117
    %v3423 = vunpack.c.l.b16 %v1118
    %v3424 = vunpack.c.h.b16 %v1118
    %v3425 = vunpack.c.l.b16 %v1119
    %v3426 = vunpack.c.h.b16 %v1119
    %v3427 = vunpack.c.l.b16 %v1120
    %v3428 = vunpack.c.h.b16 %v1120
    %v3429 = vunpack.c.l.b16 %v1121
    %v3430 = vunpack.c.h.b16 %v1121
    %v3431 = vunpack.c.l.b16 %v1122
    %v3432 = vunpack.c.h.b16 %v1122
    %v3433 = vunpack.c.l.b16 %v1123
    %v3434 = vunpack.c.h.b16 %v1123
    %v3435 = vunpack.c.l.b16 %v1124
    %v3436 = vunpack.c.h.b16 %v1124
    %v3437 = vunpack.c.l.b16 %v1125
    %v3438 = vunpack.c.h.b16 %v1125
    %v3439 = vunpack.c.l.b16 %v1126
    %v3440 = vunpack.c.h.b16 %v1126
    %v3441 = vunpack.c.l.b16 %v1127
    %v3442 = vunpack.c.h.b16 %v1127
    %v3443 = vunpack.c.l.b16 %v1128
    %v3444 = vunpack.c.h.b16 %v1128
    %v3445 = vunpack.c.l.b16 %v1129
    %v3446 = vunpack.c.h.b16 %v1129
    %v3447 = vunpack.c.l.b16 %v1130
    %v3448 = vunpack.c.h.b16 %v1130
    %v3449 = vunpack.c.l.b16 %v1131
    %v3450 = vunpack.c.h.b16 %v1131
    %v3451 = vunpack.c.l.b16 %v1132
    %v3452 = vunpack.c.h.b16 %v1132
    %v3453 = vunpack.c.l.b16 %v1133
    %v3454 = vunpack.c.h.b16 %v1133
    %v3455 = vunpack.c.l.b16 %v1134
    %v3456 = vunpack.c.h.b16 %v1134
    %v3457 = vunpack.c.l.b16 %v1135
    %v3458 = vunpack.c.h.b16 %v1135
    %v3459 = vunpack.c.l.b16 %v1136
    %v3460 = vunpack.c.h.b16 %v1136
    %v3461 = vunpack.c.l.b16 %v1137
    %v3462 = vunpack.c.h.b16 %v1137
    %v3463 = vunpack.c.l.b16 %v1138
    %v3464 = vunpack.c.h.b16 %v1138
    %v3465 = vunpack.c.l.b16 %v1139
    %v3466 = vunpack.c.h.b16 %v1139
    %v3467 = vunpack.c.l.b16 %v1140
    %v3468 = vunpack.c.h.b16 %v1140
    %v3469 = vunpack.c.l.b16 %v1141
    %v3470 = vunpack.c.h.b16 %v1141
    %v3471 = vunpack.c.l.b16 %v1142
    %v3472 = vunpack.c.h.b16 %v1142
    %v3473 = vunpack.c.l.b16 %v1143
    %v3474 = vunpack.c.h.b16 %v1143
    %v3475 = vunpack.c.l.b16 %v1144
    %v3476 = vunpack.c.h.b16 %v1144
    %v3477 = vunpack.c.l.b16 %v1145
    %v3478 = vunpack.c.h.b16 %v1145
    %v3479 = vunpack.c.l.b16 %v1146
    %v3480 = vunpack.c.h.b16 %v1146
    %v3481 = vunpack.c.l.b16 %v1147
    %v3482 = vunpack.c.h.b16 %v1147
    %v3483 = vunpack.c.l.b16 %v1148
    %v3484 = vunpack.c.h.b16 %v1148
    %v3485 = vunpack.c.l.b16 %v1149
    %v3486 = vunpack.c.h.b16 %v1149
    %v3487 = vunpack.c.l.b16 %v1150
    %v3488 = vunpack.c.h.b16 %v1150
    %v3489 = vunpack.c.l.b16 %v1151
    %v3490 = vunpack.c.h.b16 %v1151
    %v3491 = vunpack.c.l.b16 %v1152
    %v3492 = vunpack.c.h.b16 %v1152
    %v3493 = vunpack.c.l.b16 %v1153
    %v3494 = vunpack.c.h.b16 %v1153
    %v3495 = vunpack.c.l.b16 %v1154
    %v3496 = vunpack.c.h.b16 %v1154
    %v3497 = vunpack.c.l.b16 %v1155
    %v3498 = vunpack.c.h.b16 %v1155
    %v3499 = vunpack.c.l.b16 %v1156
    %v3500 = vunpack.c.h.b16 %v1156
    %v3501 = vunpack.c.l.b16 %v1157
    %v3502 = vunpack.c.h.b16 %v1157
    %v3503 = vunpack.c.l.b16 %v1158
    %v3504 = vunpack.c.h.b16 %v1158
    %v3505 = vunpack.c.l.b16 %v1159
    %v3506 = vunpack.c.h.b16 %v1159
    %v3507 = vunpack.c.l.b16 %v1160
    %v3508 = vunpack.c.h.b16 %v1160
    %v3509 = vunpack.c.l.b16 %v1161
    %v3510 = vunpack.c.h.b16 %v1161
    %v3511 = vunpack.c.l.b16 %v1162
    %v3512 = vunpack.c.h.b16 %v1162
    %v3513 = vunpack.c.l.b16 %v1163
    %v3514 = vunpack.c.h.b16 %v1163
    %v3515 = vunpack.c.l.b16 %v1164
    %v3516 = vunpack.c.h.b16 %v1164
    %v3517 = vunpack.c.l.b16 %v1165
    %v3518 = vunpack.c.h.b16 %v1165
    %v3519 = vunpack.c.l.b16 %v1166
    %v3520 = vunpack.c.h.b16 %v1166
    %v3521 = vunpack.c.l.b16 %v1167
    %v3522 = vunpack.c.h.b16 %v1167
    %v3523 = vunpack.c.l.b16 %v1168
    %v3524 = vunpack.c.h.b16 %v1168
    %v3525 = vunpack.c.l.b16 %v1169
    %v3526 = vunpack.c.h.b16 %v1169
    %v3527 = vunpack.c.l.b16 %v1170
    %v3528 = vunpack.c.h.b16 %v1170
    %v3529 = vunpack.c.l.b16 %v1171
    %v3530 = vunpack.c.h.b16 %v1171
    %v3531 = vunpack.c.l.b16 %v1172
    %v3532 = vunpack.c.h.b16 %v1172
    %v3533 = vunpack.c.l.b16 %v1173
    %v3534 = vunpack.c.h.b16 %v1173
    %v3535 = vunpack.c.l.b16 %v1174
    %v3536 = vunpack.c.h.b16 %v1174
    %v3537 = vunpack.c.l.b16 %v1175
    %v3538 = vunpack.c.h.b16 %v1175
    %v3539 = vunpack.c.l.b16 %v1176
    %v3540 = vunpack.c.h.b16 %v1176
    %v3541 = vunpack.c.l.b16 %v1177
    %v3542 = vunpack.c.h.b16 %v1177
    %v3543 = vunpack.c.l.b16 %v1178
    %v3544 = vunpack.c.h.b16 %v1178
    %v3545 = vunpack.c.l.b16 %v1179
    %v3546 = vunpack.c.h.b16 %v1179
    %v3547 = vunpack.c.l.b16 %v1180
    %v3548 = vunpack.c.h.b16 %v1180
    %v3549 = vunpack.c.l.b16 %v1181
    %v3550 = vunpack.c.h.b16 %v1181
    %v3551 = vunpack.c.l.b16 %v1182
    %v3552 = vunpack.c.h.b16 %v1182
    %v3553 = vunpack.c.l.b16 %v1183
    %v3554 = vunpack.c.h.b16 %v1183
    %v3555 = vunpack.c.l.b16 %v1184
    %v3556 = vunpack.c.h.b16 %v1184
    %v3557 = vunpack.c.l.b16 %v1185
    %v3558 = vunpack.c.h.b16 %v1185
    %v3559 = vunpack.c.l.b16 %v1186
    %v3560 = vunpack.c.h.b16 %v1186
    %v3561 = vunpack.c.l.b16 %v1187
    %v3562 = vunpack.c.h.b16 %v1187
    %v3563 = vunpack.c.l.b16 %v1188
    %v3564 = vunpack.c.h.b16 %v1188
    %v3565 = vunpack.c.l.b16 %v1189
    %v3566 = vunpack.c.h.b16 %v1189
    %v3567 = vunpack.c.l.b16 %v1190
    %v3568 = vunpack.c.h.b16 %v1190
    %v3569 = vunpack.c.l.b16 %v1191
    %v3570 = vunpack.c.h.b16 %v1191
    %v3571 = vunpack.c.l.b16 %v1192
    %v3572 = vunpack.c.h.b16 %v1192
    %v3573 = vunpack.c.l.b16 %v1193
    %v3574 = vunpack.c.h.b16 %v1193
    %v3575 = vunpack.c.l.b16 %v1194
    %v3576 = vunpack.c.h.b16 %v1194
    %v3577 = vunpack.c.l.b16 %v1195
    %v3578 = vunpack.c.h.b16 %v1195
    %v3579 = vunpack.c.l.b16 %v1196
    %v3580 = vunpack.c.h.b16 %v1196
    %v3581 = vunpack.c.l.b16 %v1197
    %v3582 = vunpack.c.h.b16 %v1197
    %v3583 = vunpack.c.l.b16 %v1198
    %v3584 = vunpack.c.h.b16 %v1198
    %v3585 = vunpack.c.l.b16 %v1199
    %v3586 = vunpack.c.h.b16 %v1199
    %v3587 = vunpack.c.l.b16 %v1200
    %v3588 = vunpack.c.h.b16 %v1200
    %v3589 = vunpack.c.l.b16 %v1201
    %v3590 = vunpack.c.h.b16 %v1201
    %v3591 = vunpack.c.l.b16 %v1202
    %v3592 = vunpack.c.h.b16 %v1202
    %v3593 = vunpack.c.l.b16 %v1203
    %v3594 = vunpack.c.h.b16 %v1203
    %v3595 = vunpack.c.l.b16 %v1204
    %v3596 = vunpack.c.h.b16 %v1204
    %v3597 = vunpack.c.l.b16 %v1205
    %v3598 = vunpack.c.h.b16 %v1205
    %v3599 = vunpack.c.l.b16 %v1206
    %v3600 = vunpack.c.h.b16 %v1206
    %v3601 = vunpack.c.l.b16 %v1207
    %v3602 = vunpack.c.h.b16 %v1207
    %v3603 = vunpack.c.l.b16 %v1208
    %v3604 = vunpack.c.h.b16 %v1208
    %v3605 = vunpack.c.l.b16 %v1209
    %v3606 = vunpack.c.h.b16 %v1209
    %v3607 = vunpack.c.l.b16 %v1210
    %v3608 = vunpack.c.h.b16 %v1210
    %v3609 = vunpack.c.l.b16 %v1211
    %v3610 = vunpack.c.h.b16 %v1211
    %v3611 = vunpack.c.l.b16 %v1212
    %v3612 = vunpack.c.h.b16 %v1212
    %v3613 = vunpack.c.l.b16 %v1213
    %v3614 = vunpack.c.h.b16 %v1213
    %v3615 = vunpack.c.l.b16 %v1214
    %v3616 = vunpack.c.h.b16 %v1214
    %v3617 = vunpack.c.l.b16 %v1215
    %v3618 = vunpack.c.h.b16 %v1215
    %v3619 = vunpack.c.l.b16 %v1216
    %v3620 = vunpack.c.h.b16 %v1216
    %v3621 = vunpack.c.l.b16 %v1217
    %v3622 = vunpack.c.h.b16 %v1217
    %v3623 = vunpack.c.l.b16 %v1218
    %v3624 = vunpack.c.h.b16 %v1218
    %v3625 = vunpack.c.l.b16 %v1219
    %v3626 = vunpack.c.h.b16 %v1219
    %v3627 = vunpack.c.l.b16 %v1220
    %v3628 = vunpack.c.h.b16 %v1220
    %v3629 = vunpack.c.l.b16 %v1221
    %v3630 = vunpack.c.h.b16 %v1221
    %v3631 = vunpack.c.l.b16 %v1222
    %v3632 = vunpack.c.h.b16 %v1222
    %v3633 = vunpack.c.l.b16 %v1223
    %v3634 = vunpack.c.h.b16 %v1223
    %v3635 = vunpack.c.l.b16 %v1224
    %v3636 = vunpack.c.h.b16 %v1224
    %v3637 = vunpack.c.l.b16 %v1225
    %v3638 = vunpack.c.h.b16 %v1225
    %v3639 = vunpack.c.l.b16 %v1226
    %v3640 = vunpack.c.h.b16 %v1226
    %v3641 = vunpack.c.l.b16 %v1227
    %v3642 = vunpack.c.h.b16 %v1227
    %v3643 = vunpack.c.l.b16 %v1228
    %v3644 = vunpack.c.h.b16 %v1228
    %v3645 = vunpack.c.l.b16 %v1229
    %v3646 = vunpack.c.h.b16 %v1229
    %v3647 = vunpack.c.l.b16 %v1230
    %v3648 = vunpack.c.h.b16 %v1230
    %v3649 = vunpack.c.l.b16 %v1231
    %v3650 = vunpack.c.h.b16 %v1231
    %v3651 = vunpack.c.l.b16 %v1232
    %v3652 = vunpack.c.h.b16 %v1232
    %v3653 = vunpack.c.l.b16 %v1233
    %v3654 = vunpack.c.h.b16 %v1233
    %v3655 = vunpack.c.l.b16 %v1234
    %v3656 = vunpack.c.h.b16 %v1234
    %v3657 = vunpack.c.l.b16 %v1235
    %v3658 = vunpack.c.h.b16 %v1235
    %v3659 = vunpack.c.l.b16 %v1236
    %v3660 = vunpack.c.h.b16 %v1236
    %v3661 = vunpack.c.l.b16 %v1237
    %v3662 = vunpack.c.h.b16 %v1237
    %v3663 = vunpack.c.l.b16 %v1238
    %v3664 = vunpack.c.h.b16 %v1238
    %v3665 = vunpack.c.l.b16 %v1239
    %v3666 = vunpack.c.h.b16 %v1239
    %v3667 = vunpack.c.l.b16 %v1240
    %v3668 = vunpack.c.h.b16 %v1240
    %v3669 = vunpack.c.l.b16 %v1241
    %v3670 = vunpack.c.h.b16 %v1241
    %v3671 = vunpack.c.l.b16 %v1242
    %v3672 = vunpack.c.h.b16 %v1242
    %v3673 = vunpack.c.l.b16 %v1243
    %v3674 = vunpack.c.h.b16 %v1243
    %v3675 = vunpack.c.l.b16 %v1244
    %v3676 = vunpack.c.h.b16 %v1244
    %v3677 = vunpack.c.l.b16 %v1245
    %v3678 = vunpack.c.h.b16 %v1245
    %v3679 = vunpack.c.l.b16 %v1246
    %v3680 = vunpack.c.h.b16 %v1246
    %v3681 = vunpack.c.l.b16 %v1247
    %v3682 = vunpack.c.h.b16 %v1247
    %v3683 = vunpack.c.l.b16 %v1248
    %v3684 = vunpack.c.h.b16 %v1248
    %v3685 = vunpack.c.l.b16 %v1249
    %v3686 = vunpack.c.h.b16 %v1249
    %v3687 = vunpack.c.l.b16 %v1250
    %v3688 = vunpack.c.h.b16 %v1250
    %v3689 = vunpack.c.l.b16 %v1251
    %v3690 = vunpack.c.h.b16 %v1251
    %v3691 = vunpack.c.l.b16 %v1252
    %v3692 = vunpack.c.h.b16 %v1252
    %v3693 = vunpack.c.l.b16 %v1253
    %v3694 = vunpack.c.h.b16 %v1253
    %v3695 = vunpack.c.l.b16 %v1254
    %v3696 = vunpack.c.h.b16 %v1254
    %v3697 = vunpack.c.l.b16 %v1255
    %v3698 = vunpack.c.h.b16 %v1255
    %v3699 = vunpack.c.l.b16 %v1256
    %v3700 = vunpack.c.h.b16 %v1256
    %v3701 = vunpack.c.l.b16 %v1257
    %v3702 = vunpack.c.h.b16 %v1257
    %v3703 = vunpack.c.l.b16 %v1258
    %v3704 = vunpack.c.h.b16 %v1258
    %v3705 = vunpack.c.l.b16 %v1259
    %v3706 = vunpack.c.h.b16 %v1259
    %v3707 = vunpack.c.l.b16 %v1260
    %v3708 = vunpack.c.h.b16 %v1260
    %v3709 = vunpack.c.l.b16 %v1261
    %v3710 = vunpack.c.h.b16 %v1261
    %v3711 = vunpack.c.l.b16 %v1262
    %v3712 = vunpack.c.h.b16 %v1262
    %v3713 = vunpack.c.l.b16 %v1263
    %v3714 = vunpack.c.h.b16 %v1263
    %v3715 = vunpack.c.l.b16 %v1264
    %v3716 = vunpack.c.h.b16 %v1264
    %v3717 = vunpack.c.l.b16 %v1265
    %v3718 = vunpack.c.h.b16 %v1265
    %v3719 = vunpack.c.l.b16 %v1266
    %v3720 = vunpack.c.h.b16 %v1266
    %v3721 = vunpack.c.l.b16 %v1267
    %v3722 = vunpack.c.h.b16 %v1267
    %v3723 = vunpack.c.l.b16 %v1268
    %v3724 = vunpack.c.h.b16 %v1268
    %v3725 = vunpack.c.l.b16 %v1269
    %v3726 = vunpack.c.h.b16 %v1269
    %v3727 = vunpack.c.l.b16 %v1270
    %v3728 = vunpack.c.h.b16 %v1270
    %v3729 = vunpack.c.l.b16 %v1271
    %v3730 = vunpack.c.h.b16 %v1271
    %v3731 = vunpack.c.l.b16 %v1272
    %v3732 = vunpack.c.h.b16 %v1272
    %v3733 = vunpack.c.l.b16 %v1273
    %v3734 = vunpack.c.h.b16 %v1273
    %v3735 = vunpack.c.l.b16 %v1274
    %v3736 = vunpack.c.h.b16 %v1274
    %v3737 = vunpack.c.l.b16 %v1275
    %v3738 = vunpack.c.h.b16 %v1275
    %v3739 = vunpack.c.l.b16 %v1276
    %v3740 = vunpack.c.h.b16 %v1276
    %v3741 = vunpack.c.l.b16 %v1277
    %v3742 = vunpack.c.h.b16 %v1277
    %v3743 = vunpack.c.l.b16 %v1278
    %v3744 = vunpack.c.h.b16 %v1278
    %v3745 = vunpack.c.l.b16 %v1279
    %v3746 = vunpack.c.h.b16 %v1279
    %v3747 = vunpack.c.l.b16 %v1280
    %v3748 = vunpack.c.h.b16 %v1280
    %v3749 = vunpack.c.l.b16 %v1281
    %v3750 = vunpack.c.h.b16 %v1281
    %v3751 = vunpack.c.l.b16 %v1282
    %v3752 = vunpack.c.h.b16 %v1282
    %v3753 = vunpack.c.l.b16 %v1283
    %v3754 = vunpack.c.h.b16 %v1283
    %v3755 = vunpack.c.l.b16 %v1284
    %v3756 = vunpack.c.h.b16 %v1284
    %v3757 = vunpack.c.l.b16 %v1285
    %v3758 = vunpack.c.h.b16 %v1285
    %v3759 = vunpack.c.l.b16 %v1286
    %v3760 = vunpack.c.h.b16 %v1286
    %v3761 = vunpack.c.l.b16 %v1287
    %v3762 = vunpack.c.h.b16 %v1287
    %v3763 = vunpack.c.l.b16 %v1288
    %v3764 = vunpack.c.h.b16 %v1288
    %v3765 = vunpack.c.l.b16 %v1289
    %v3766 = vunpack.c.h.b16 %v1289
    %v3767 = vunpack.c.l.b16 %v1290
    %v3768 = vunpack.c.h.b16 %v1290
    %v3769 = vunpack.c.l.b16 %v1291
    %v3770 = vunpack.c.h.b16 %v1291
    %v3771 = vunpack.c.l.b16 %v1292
    %v3772 = vunpack.c.h.b16 %v1292
    %v3773 = vunpack.c.l.b16 %v1293
    %v3774 = vunpack.c.h.b16 %v1293
    %v3775 = vunpack.c.l.b16 %v1294
    %v3776 = vunpack.c.h.b16 %v1294
    %v3777 = vunpack.c.l.b16 %v1295
    %v3778 = vunpack.c.h.b16 %v1295
    %v3779 = vunpack.c.l.b16 %v1296
    %v3780 = vunpack.c.h.b16 %v1296
    %v3781 = vunpack.c.l.b16 %v1297
    %v3782 = vunpack.c.h.b16 %v1297
    %v3783 = vunpack.c.l.b16 %v1298
    %v3784 = vunpack.c.h.b16 %v1298
    %v3785 = vunpack.c.l.b16 %v1299
    %v3786 = vunpack.c.h.b16 %v1299
    %v3787 = vunpack.c.l.b16 %v1300
    %v3788 = vunpack.c.h.b16 %v1300
    %v3789 = vunpack.c.l.b16 %v1301
    %v3790 = vunpack.c.h.b16 %v1301
    %v3791 = vunpack.c.l.b16 %v1302
    %v3792 = vunpack.c.h.b16 %v1302
    %v3793 = vunpack.c.l.b16 %v1303
    %v3794 = vunpack.c.h.b16 %v1303
    %v3795 = vunpack.c.l.b16 %v1304
    %v3796 = vunpack.c.h.b16 %v1304
    %v3797 = vunpack.c.l.b16 %v1305
    %v3798 = vunpack.c.h.b16 %v1305
    %v3799 = vunpack.c.l.b16 %v1306
    %v3800 = vunpack.c.h.b16 %v1306
    %v3801 = vunpack.c.l.b16 %v1307
    %v3802 = vunpack.c.h.b16 %v1307
    %v3803 = vunpack.c.l.b16 %v1308
    %v3804 = vunpack.c.h.b16 %v1308
    %v3805 = vunpack.c.l.b16 %v1309
    %v3806 = vunpack.c.h.b16 %v1309
    %v3807 = vunpack.c.l.b16 %v1310
    %v3808 = vunpack.c.h.b16 %v1310
    %v3809 = vunpack.c.l.b16 %v1311
    %v3810 = vunpack.c.h.b16 %v1311
    %v3811 = vunpack.c.l.b16 %v1312
    %v3812 = vunpack.c.h.b16 %v1312
    %v3813 = vunpack.c.l.b16 %v1313
    %v3814 = vunpack.c.h.b16 %v1313
    %v3815 = vunpack.c.l.b16 %v1314
    %v3816 = vunpack.c.h.b16 %v1314
    %v3817 = vunpack.c.l.b16 %v1315
    %v3818 = vunpack.c.h.b16 %v1315
    %v3819 = vunpack.c.l.b16 %v1316
    %v3820 = vunpack.c.h.b16 %v1316
    %v3821 = vunpack.c.l.b16 %v1317
    %v3822 = vunpack.c.h.b16 %v1317
    %v3823 = vunpack.c.l.b16 %v1318
    %v3824 = vunpack.c.h.b16 %v1318
    %v3825 = vunpack.c.l.b16 %v1319
    %v3826 = vunpack.c.h.b16 %v1319
    %v3827 = vunpack.c.l.b16 %v1320
    %v3828 = vunpack.c.h.b16 %v1320
    %v3829 = vunpack.c.l.b16 %v1321
    %v3830 = vunpack.c.h.b16 %v1321
    %v3831 = vunpack.c.l.b16 %v1322
    %v3832 = vunpack.c.h.b16 %v1322
    %v3833 = vunpack.c.l.b16 %v1323
    %v3834 = vunpack.c.h.b16 %v1323
    %v3835 = vunpack.c.l.b16 %v1324
    %v3836 = vunpack.c.h.b16 %v1324
    %v3837 = vunpack.c.l.b16 %v1325
    %v3838 = vunpack.c.h.b16 %v1325
    %v3839 = vunpack.c.l.b16 %v1326
    %v3840 = vunpack.c.h.b16 %v1326
    %v3841 = vunpack.c.l.b16 %v1327
    %v3842 = vunpack.c.h.b16 %v1327
    %v3843 = vunpack.c.l.b16 %v1328
    %v3844 = vunpack.c.h.b16 %v1328
    %v3845 = vunpack.c.l.b16 %v1329
    %v3846 = vunpack.c.h.b16 %v1329
    %v3847 = vunpack.c.l.b16 %v1330
    %v3848 = vunpack.c.h.b16 %v1330
    %v3849 = vunpack.c.l.b16 %v1331
    %v3850 = vunpack.c.h.b16 %v1331
    %v3851 = vunpack.c.l.b16 %v1332
    %v3852 = vunpack.c.h.b16 %v1332
    %v3853 = vunpack.c.l.b16 %v1333
    %v3854 = vunpack.c.h.b16 %v1333
    %v3855 = vunpack.c.l.b16 %v1334
    %v3856 = vunpack.c.h.b16 %v1334
    %v3857 = vunpack.c.l.b16 %v1335
    %v3858 = vunpack.c.h.b16 %v1335
    %v3859 = vunpack.c.l.b16 %v1336
    %v3860 = vunpack.c.h.b16 %v1336
    %v3861 = vunpack.c.l.b16 %v1337
    %v3862 = vunpack.c.h.b16 %v1337
    %v3863 = vunpack.c.l.b16 %v1338
    %v3864 = vunpack.c.h.b16 %v1338
    %v3865 = vunpack.c.l.b16 %v1339
    %v3866 = vunpack.c.h.b16 %v1339
    %v3867 = vunpack.c.l.b16 %v1340
    %v3868 = vunpack.c.h.b16 %v1340
    %v3869 = vunpack.c.l.b16 %v1341
    %v3870 = vunpack.c.h.b16 %v1341
    %v3871 = vunpack.c.l.b16 %v1342
    %v3872 = vunpack.c.h.b16 %v1342
    %v3873 = vunpack.c.l.b16 %v1343
    %v3874 = vunpack.c.h.b16 %v1343
    %v3875 = vunpack.c.l.b16 %v1344
    %v3876 = vunpack.c.h.b16 %v1344
    %v3877 = vunpack.c.l.b16 %v1345
    %v3878 = vunpack.c.h.b16 %v1345
    %v3879 = vunpack.c.l.b16 %v1346
    %v3880 = vunpack.c.h.b16 %v1346
    %v3881 = vunpack.c.l.b16 %v1347
    %v3882 = vunpack.c.h.b16 %v1347
    %v3883 = vunpack.c.l.b16 %v1348
    %v3884 = vunpack.c.h.b16 %v1348
    %v3885 = vunpack.c.l.b16 %v1349
    %v3886 = vunpack.c.h.b16 %v1349
    %v3887 = vunpack.c.l.b16 %v1350
    %v3888 = vunpack.c.h.b16 %v1350
    %v3889 = vunpack.c.l.b16 %v1351
    %v3890 = vunpack.c.h.b16 %v1351
    %v3891 = vunpack.c.l.b16 %v1352
    %v3892 = vunpack.c.h.b16 %v1352
    %v3893 = vunpack.c.l.b16 %v1353
    %v3894 = vunpack.c.h.b16 %v1353
    %v3895 = vunpack.c.l.b16 %v1354
    %v3896 = vunpack.c.h.b16 %v1354
    %v3897 = vunpack.c.l.b16 %v1355
    %v3898 = vunpack.c.h.b16 %v1355
    %v3899 = vunpack.c.l.b16 %v1356
    %v3900 = vunpack.c.h.b16 %v1356
    %v3901 = vunpack.c.l.b16 %v1357
    %v3902 = vunpack.c.h.b16 %v1357
    %v3903 = vunpack.c.l.b16 %v1358
    %v3904 = vunpack.c.h.b16 %v1358
    %v3905 = vunpack.c.l.b16 %v1359
    %v3906 = vunpack.c.h.b16 %v1359
    %v3907 = vunpack.c.l.b16 %v1360
    %v3908 = vunpack.c.h.b16 %v1360
    %v3909 = vunpack.c.l.b16 %v1361
    %v3910 = vunpack.c.h.b16 %v1361
    %v3911 = vunpack.c.l.b16 %v1362
    %v3912 = vunpack.c.h.b16 %v1362
    %v3913 = vunpack.c.l.b16 %v1363
    %v3914 = vunpack.c.h.b16 %v1363
    %v3915 = vunpack.c.l.b16 %v1364
    %v3916 = vunpack.c.h.b16 %v1364
    %v3917 = vunpack.c.l.b16 %v1365
    %v3918 = vunpack.c.h.b16 %v1365
    %v3919 = vunpack.c.l.b16 %v1366
    %v3920 = vunpack.c.h.b16 %v1366
    %v3921 = vunpack.c.l.b16 %v1367
    %v3922 = vunpack.c.h.b16 %v1367
    %v3923 = vunpack.c.l.b16 %v1368
    %v3924 = vunpack.c.h.b16 %v1368
    %v3925 = vunpack.c.l.b16 %v1369
    %v3926 = vunpack.c.h.b16 %v1369
    %v3927 = vunpack.c.l.b16 %v1370
    %v3928 = vunpack.c.h.b16 %v1370
    %v3929 = vunpack.c.l.b16 %v1371
    %v3930 = vunpack.c.h.b16 %v1371
    %v3931 = vunpack.c.l.b16 %v1372
    %v3932 = vunpack.c.h.b16 %v1372
    %v3933 = vunpack.c.l.b16 %v1373
    %v3934 = vunpack.c.h.b16 %v1373
    %v3935 = vunpack.c.l.b16 %v1374
    %v3936 = vunpack.c.h.b16 %v1374
    %v3937 = vunpack.c.l.b16 %v1375
    %v3938 = vunpack.c.h.b16 %v1375
    %v3939 = vunpack.c.l.b16 %v1376
    %v3940 = vunpack.c.h.b16 %v1376
    %v3941 = vunpack.c.l.b16 %v1377
    %v3942 = vunpack.c.h.b16 %v1377
    %v3943 = vunpack.c.l.b16 %v1378
    %v3944 = vunpack.c.h.b16 %v1378
    %v3945 = vunpack.c.l.b16 %v1379
    %v3946 = vunpack.c.h.b16 %v1379
    %v3947 = vunpack.c.l.b16 %v1380
    %v3948 = vunpack.c.h.b16 %v1380
    %v3949 = vunpack.c.l.b16 %v1381
    %v3950 = vunpack.c.h.b16 %v1381
    %v3951 = vunpack.c.l.b16 %v1382
    %v3952 = vunpack.c.h.b16 %v1382
    %v3953 = vunpack.c.l.b16 %v1383
    %v3954 = vunpack.c.h.b16 %v1383
    %v3955 = vunpack.c.l.b16 %v1384
    %v3956 = vunpack.c.h.b16 %v1384
    %v3957 = vunpack.c.l.b16 %v1385
    %v3958 = vunpack.c.h.b16 %v1385
    %v3959 = vunpack.c.l.b16 %v1386
    %v3960 = vunpack.c.h.b16 %v1386
    %v3961 = vunpack.c.l.b16 %v1387
    %v3962 = vunpack.c.h.b16 %v1387
    %v3963 = vunpack.c.l.b16 %v1388
    %v3964 = vunpack.c.h.b16 %v1388
    %v3965 = vunpack.c.l.b16 %v1389
    %v3966 = vunpack.c.h.b16 %v1389
    %v3967 = vunpack.c.l.b16 %v1390
    %v3968 = vunpack.c.h.b16 %v1390
    %v3969 = vunpack.c.l.b16 %v1391
    %v3970 = vunpack.c.h.b16 %v1391
    %v3971 = vunpack.c.l.b16 %v1392
    %v3972 = vunpack.c.h.b16 %v1392
    %v3973 = vunpack.c.l.b16 %v1393
    %v3974 = vunpack.c.h.b16 %v1393
    %v3975 = vunpack.c.l.b16 %v1394
    %v3976 = vunpack.c.h.b16 %v1394
    %v3977 = vunpack.c.l.b16 %v1395
    %v3978 = vunpack.c.h.b16 %v1395
    %v3979 = vunpack.c.l.b16 %v1396
    %v3980 = vunpack.c.h.b16 %v1396
    %v3981 = vunpack.c.l.b16 %v1397
    %v3982 = vunpack.c.h.b16 %v1397
    %v3983 = vunpack.c.l.b16 %v1398
    %v3984 = vunpack.c.h.b16 %v1398
    %v3985 = vunpack.c.l.b16 %v1399
    %v3986 = vunpack.c.h.b16 %v1399
    %v3987 = vunpack.c.l.b16 %v1400
    %v3988 = vunpack.c.h.b16 %v1400
    %v3989 = vunpack.c.l.b16 %v1401
    %v3990 = vunpack.c.h.b16 %v1401
    %v3991 = vunpack.c.l.b16 %v1402
    %v3992 = vunpack.c.h.b16 %v1402
    %v3993 = vunpack.c.l.b16 %v1403
    %v3994 = vunpack.c.h.b16 %v1403
    %v3995 = vunpack.c.l.b16 %v1404
    %v3996 = vunpack.c.h.b16 %v1404
    %v3997 = vunpack.c.l.b16 %v1405
    %v3998 = vunpack.c.h.b16 %v1405
    %v3999 = vunpack.c.l.b16 %v1406
    %v4000 = vunpack.c.h.b16 %v1406
    %v4001 = vunpack.c.l.b16 %v1407
    %v4002 = vunpack.c.h.b16 %v1407
    %v4003 = vunpack.c.l.b16 %v1408
    %v4004 = vunpack.c.h.b16 %v1408
    %v4005 = vunpack.c.l.b16 %v1409
    %v4006 = vunpack.c.h.b16 %v1409
    %v4007 = vunpack.c.l.b16 %v1410
    %v4008 = vunpack.c.h.b16 %v1410
    %v4009 = vunpack.c.l.b16 %v1411
    %v4010 = vunpack.c.h.b16 %v1411
    %v4011 = vunpack.c.l.b16 %v1412
    %v4012 = vunpack.c.h.b16 %v1412
    %v4013 = vunpack.c.l.b16 %v1413
    %v4014 = vunpack.c.h.b16 %v1413
    %v4015 = vunpack.c.l.b16 %v1414
    %v4016 = vunpack.c.h.b16 %v1414
    %v4017 = vunpack.c.l.b16 %v1415
    %v4018 = vunpack.c.h.b16 %v1415
    %v4019 = vunpack.c.l.b16 %v1416
    %v4020 = vunpack.c.h.b16 %v1416
    %v4021 = vunpack.c.l.b16 %v1417
    %v4022 = vunpack.c.h.b16 %v1417
    %v4023 = vunpack.c.l.b16 %v1418
    %v4024 = vunpack.c.h.b16 %v1418
    %v4025 = vunpack.c.l.b16 %v1419
    %v4026 = vunpack.c.h.b16 %v1419
    %v4027 = vunpack.c.l.b16 %v1420
    %v4028 = vunpack.c.h.b16 %v1420
    %v4029 = vunpack.c.l.b16 %v1421
    %v4030 = vunpack.c.h.b16 %v1421
    %v4031 = vunpack.c.l.b16 %v1422
    %v4032 = vunpack.c.h.b16 %v1422
    %v4033 = vunpack.c.l.b16 %v1423
    %v4034 = vunpack.c.h.b16 %v1423
    %v4035 = vunpack.c.l.b16 %v1424
    %v4036 = vunpack.c.h.b16 %v1424
    %v4037 = vunpack.c.l.b16 %v1425
    %v4038 = vunpack.c.h.b16 %v1425
    %v4039 = vunpack.c.l.b16 %v1426
    %v4040 = vunpack.c.h.b16 %v1426
    %v4041 = vunpack.c.l.b16 %v1427
    %v4042 = vunpack.c.h.b16 %v1427
    %v4043 = vunpack.c.l.b16 %v1428
    %v4044 = vunpack.c.h.b16 %v1428
    %v4045 = vunpack.c.l.b16 %v1429
    %v4046 = vunpack.c.h.b16 %v1429
    %v4047 = vunpack.c.l.b16 %v1430
    %v4048 = vunpack.c.h.b16 %v1430
    %v4049 = vunpack.c.l.b16 %v1431
    %v4050 = vunpack.c.h.b16 %v1431
    %v4051 = vunpack.c.l.b16 %v1432
    %v4052 = vunpack.c.h.b16 %v1432
    %v4053 = vunpack.c.l.b16 %v1433
    %v4054 = vunpack.c.h.b16 %v1433
    %v4055 = vunpack.c.l.b16 %v1434
    %v4056 = vunpack.c.h.b16 %v1434
    %v4057 = vunpack.c.l.b16 %v1435
    %v4058 = vunpack.c.h.b16 %v1435
    %v4059 = vunpack.c.l.b16 %v1436
    %v4060 = vunpack.c.h.b16 %v1436
    %v4061 = vunpack.c.l.b16 %v1437
    %v4062 = vunpack.c.h.b16 %v1437
    %v4063 = vunpack.c.l.b16 %v1438
    %v4064 = vunpack.c.h.b16 %v1438
    %v4065 = vunpack.c.l.b16 %v1439
    %v4066 = vunpack.c.h.b16 %v1439
    %v4067 = vunpack.c.l.b16 %v1440
    %v4068 = vunpack.c.h.b16 %v1440
    %v4069 = vunpack.c.l.b16 %v1441
    %v4070 = vunpack.c.h.b16 %v1441
    %v4071 = vunpack.c.l.b16 %v1442
    %v4072 = vunpack.c.h.b16 %v1442
    %v4073 = vunpack.c.l.b16 %v1443
    %v4074 = vunpack.c.h.b16 %v1443
    %v4075 = vunpack.c.l.b16 %v1444
    %v4076 = vunpack.c.h.b16 %v1444
    %v4077 = vunpack.c.l.b16 %v1445
    %v4078 = vunpack.c.h.b16 %v1445
    %v4079 = vunpack.c.l.b16 %v1446
    %v4080 = vunpack.c.h.b16 %v1446
    %v4081 = vunpack.c.l.b16 %v1447
    %v4082 = vunpack.c.h.b16 %v1447
    %v4083 = vunpack.c.l.b16 %v1448
    %v4084 = vunpack.c.h.b16 %v1448
    %v4085 = vunpack.c.l.b16 %v1449
    %v4086 = vunpack.c.h.b16 %v1449
    %v4087 = vunpack.c.l.b16 %v1450
    %v4088 = vunpack.c.h.b16 %v1450
    %v4089 = vunpack.c.l.b16 %v1451
    %v4090 = vunpack.c.h.b16 %v1451
    %v4091 = vunpack.c.l.b16 %v1452
    %v4092 = vunpack.c.h.b16 %v1452
    %v4093 = vunpack.c.l.b16 %v1453
    %v4094 = vunpack.c.h.b16 %v1453
    %v4095 = vunpack.c.l.b16 %v1454
    %v4096 = vunpack.c.h.b16 %v1454
    %v4097 = vunpack.c.l.b16 %v1455
    %v4098 = vunpack.c.h.b16 %v1455
    %v4099 = vunpack.c.l.b16 %v1456
    %v4100 = vunpack.c.h.b16 %v1456
    %v4101 = vunpack.c.l.b16 %v1457
    %v4102 = vunpack.c.h.b16 %v1457
    %v4103 = vunpack.c.l.b16 %v1458
    %v4104 = vunpack.c.h.b16 %v1458
    %v4105 = vunpack.c.l.b16 %v1459
    %v4106 = vunpack.c.h.b16 %v1459
    %v4107 = vunpack.c.l.b16 %v1460
    %v4108 = vunpack.c.h.b16 %v1460
    %v4109 = vunpack.c.l.b16 %v1461
    %v4110 = vunpack.c.h.b16 %v1461
    %v4111 = vunpack.c.l.b16 %v1462
    %v4112 = vunpack.c.h.b16 %v1462
    %v4113 = vunpack.c.l.b16 %v1463
    %v4114 = vunpack.c.h.b16 %v1463
    %v4115 = vunpack.c.l.b16 %v1464
    %v4116 = vunpack.c.h.b16 %v1464
    %v4117 = vunpack.c.l.b16 %v1465
    %v4118 = vunpack.c.h.b16 %v1465
    %v4119 = vunpack.c.l.b16 %v1466
    %v4120 = vunpack.c.h.b16 %v1466
    %v4121 = vunpack.c.l.b16 %v1467
    %v4122 = vunpack.c.h.b16 %v1467
    %v4123 = vunpack.c.l.b16 %v1468
    %v4124 = vunpack.c.h.b16 %v1468
    %v4125 = vunpack.c.l.b16 %v1469
    %v4126 = vunpack.c.h.b16 %v1469
    %v4127 = vunpack.c.l.b16 %v1470
    %v4128 = vunpack.c.h.b16 %v1470
    %v4129 = vunpack.c.l.b16 %v1471
    %v4130 = vunpack.c.h.b16 %v1471
    %v4131 = vunpack.c.l.b16 %v1472
    %v4132 = vunpack.c.h.b16 %v1472
    %v4133 = vunpack.c.l.b16 %v1473
    %v4134 = vunpack.c.h.b16 %v1473
    %v4135 = vunpack.c.l.b16 %v1474
    %v4136 = vunpack.c.h.b16 %v1474
    %v4137 = vunpack.c.l.b16 %v1475
    %v4138 = vunpack.c.h.b16 %v1475
    %v4139 = vunpack.c.l.b16 %v1476
    %v4140 = vunpack.c.h.b16 %v1476
    %v4141 = vunpack.c.l.b16 %v1477
    %v4142 = vunpack.c.h.b16 %v1477
    %v4143 = vunpack.c.l.b16 %v1478
    %v4144 = vunpack.c.h.b16 %v1478
    %v4145 = vunpack.c.l.b16 %v1479
    %v4146 = vunpack.c.h.b16 %v1479
    %v4147 = vunpack.c.l.b16 %v1480
    %v4148 = vunpack.c.h.b16 %v1480
    %v4149 = vunpack.c.l.b16 %v1481
    %v4150 = vunpack.c.h.b16 %v1481
    %v4151 = vunpack.c.l.b16 %v1482
    %v4152 = vunpack.c.h.b16 %v1482
    %v4153 = vunpack.c.l.b16 %v1483
    %v4154 = vunpack.c.h.b16 %v1483
    %v4155 = vunpack.c.l.b16 %v1484
    %v4156 = vunpack.c.h.b16 %v1484
    %v4157 = vunpack.c.l.b16 %v1485
    %v4158 = vunpack.c.h.b16 %v1485
    %v4159 = vunpack.c.l.b16 %v1486
    %v4160 = vunpack.c.h.b16 %v1486
    %v4161 = vunpack.c.l.b16 %v1487
    %v4162 = vunpack.c.h.b16 %v1487
    %v4163 = vunpack.c.l.b16 %v1488
    %v4164 = vunpack.c.h.b16 %v1488
    %v4165 = vunpack.c.l.b16 %v1489
    %v4166 = vunpack.c.h.b16 %v1489
    %v4167 = vunpack.c.l.b16 %v1490
    %v4168 = vunpack.c.h.b16 %v1490
    %v4169 = vunpack.c.l.b16 %v1491
    %v4170 = vunpack.c.h.b16 %v1491
    %v4171 = vunpack.c.l.b16 %v1492
    %v4172 = vunpack.c.h.b16 %v1492
    %v4173 = vunpack.c.l.b16 %v1493
    %v4174 = vunpack.c.h.b16 %v1493
    %v4175 = vunpack.c.l.b16 %v1494
    %v4176 = vunpack.c.h.b16 %v1494
    %v4177 = vunpack.c.l.b16 %v1495
    %v4178 = vunpack.c.h.b16 %v1495
    %v4179 = vunpack.c.l.b16 %v1496
    %v4180 = vunpack.c.h.b16 %v1496
    %v4181 = vunpack.c.l.b16 %v1497
    %v4182 = vunpack.c.h.b16 %v1497
    %v4183 = vunpack.c.l.b16 %v1498
    %v4184 = vunpack.c.h.b16 %v1498
    %v4185 = vunpack.c.l.b16 %v1499
    %v4186 = vunpack.c.h.b16 %v1499
    %v4187 = vunpack.c.l.b16 %v1500
    %v4188 = vunpack.c.h.b16 %v1500
    %v4189 = vunpack.c.l.b16 %v1501
    %v4190 = vunpack.c.h.b16 %v1501
    %v4191 = vunpack.c.l.b16 %v1502
    %v4192 = vunpack.c.h.b16 %v1502
    %v4193 = vunpack.c.l.b16 %v1503
    %v4194 = vunpack.c.h.b16 %v1503
    %v4195 = vunpack.c.l.b16 %v1504
    %v4196 = vunpack.c.h.b16 %v1504
    %v4197 = vunpack.c.l.b16 %v1505
    %v4198 = vunpack.c.h.b16 %v1505
    %v4199 = vunpack.c.l.b16 %v1506
    %v4200 = vunpack.c.h.b16 %v1506
    %v4201 = vunpack.c.l.b16 %v1507
    %v4202 = vunpack.c.h.b16 %v1507
    %v4203 = vunpack.c.l.b16 %v1508
    %v4204 = vunpack.c.h.b16 %v1508
    %v4205 = vunpack.c.l.b16 %v1509
    %v4206 = vunpack.c.h.b16 %v1509
    %v4207 = vunpack.c.l.b16 %v1510
    %v4208 = vunpack.c.h.b16 %v1510
    %v4209 = vunpack.c.l.b16 %v1511
    %v4210 = vunpack.c.h.b16 %v1511
    %v4211 = vunpack.c.l.b16 %v1512
    %v4212 = vunpack.c.h.b16 %v1512
    %v4213 = vunpack.c.l.b16 %v1513
    %v4214 = vunpack.c.h.b16 %v1513
    %v4215 = vunpack.c.l.b16 %v1514
    %v4216 = vunpack.c.h.b16 %v1514
    %v4217 = vunpack.c.l.b16 %v1515
    %v4218 = vunpack.c.h.b16 %v1515
    %v4219 = vunpack.c.l.b16 %v1516
    %v4220 = vunpack.c.h.b16 %v1516
    %v4221 = vunpack.c.l.b16 %v1517
    %v4222 = vunpack.c.h.b16 %v1517
    %v4223 = vunpack.c.l.b16 %v1518
    %v4224 = vunpack.c.h.b16 %v1518
    %v4225 = vunpack.c.l.b16 %v1519
    %v4226 = vunpack.c.h.b16 %v1519
    %v4227 = vunpack.c.l.b16 %v1520
    %v4228 = vunpack.c.h.b16 %v1520
    %v4229 = vunpack.c.l.b16 %v1521
    %v4230 = vunpack.c.h.b16 %v1521
    %v4231 = vunpack.c.l.b16 %v1522
    %v4232 = vunpack.c.h.b16 %v1522
    %v4233 = vunpack.c.l.b16 %v1523
    %v4234 = vunpack.c.h.b16 %v1523
    %v4235 = vunpack.c.l.b16 %v1524
    %v4236 = vunpack.c.h.b16 %v1524
    %v4237 = vunpack.c.l.b16 %v1525
    %v4238 = vunpack.c.h.b16 %v1525
    %v4239 = vunpack.c.l.b16 %v1526
    %v4240 = vunpack.c.h.b16 %v1526
    %v4241 = vunpack.c.l.b16 %v1527
    %v4242 = vunpack.c.h.b16 %v1527
    %v4243 = vunpack.c.l.b16 %v1528
    %v4244 = vunpack.c.h.b16 %v1528
    %v4245 = vunpack.c.l.b16 %v1529
    %v4246 = vunpack.c.h.b16 %v1529
    %v4247 = vunpack.c.l.b16 %v1530
    %v4248 = vunpack.c.h.b16 %v1530
    %v4249 = vunpack.c.l.b16 %v1531
    %v4250 = vunpack.c.h.b16 %v1531
    %v4251 = vunpack.c.l.b16 %v1532
    %v4252 = vunpack.c.h.b16 %v1532
    %v4253 = vunpack.c.l.b16 %v1533
    %v4254 = vunpack.c.h.b16 %v1533
    %v4255 = vunpack.c.l.b16 %v1534
    %v4256 = vunpack.c.h.b16 %v1534
    %v4257 = vunpack.c.l.b16 %v1535
    %v4258 = vunpack.c.h.b16 %v1535
    %v4259 = vunpack.c.l.b16 %v1536
    %v4260 = vunpack.c.h.b16 %v1536
    %v4261 = vunpack.c.l.b16 %v1537
    %v4262 = vunpack.c.h.b16 %v1537
    %v4263 = vunpack.c.l.b16 %v1538
    %v4264 = vunpack.c.h.b16 %v1538
    %v4265 = vunpack.c.l.b16 %v1539
    %v4266 = vunpack.c.h.b16 %v1539
    %v4267 = vunpack.c.l.b16 %v1540
    %v4268 = vunpack.c.h.b16 %v1540
    %v4269 = vunpack.c.l.b16 %v1541
    %v4270 = vunpack.c.h.b16 %v1541
    %v4271 = vunpack.c.l.b16 %v1542
    %v4272 = vunpack.c.h.b16 %v1542
    %v4273 = vunpack.c.l.b16 %v1543
    %v4274 = vunpack.c.h.b16 %v1543
    %v4275 = vunpack.c.l.b16 %v1544
    %v4276 = vunpack.c.h.b16 %v1544
    %v4277 = vunpack.c.l.b16 %v1545
    %v4278 = vunpack.c.h.b16 %v1545
    %v4279 = vunpack.c.l.b16 %v1546
    %v4280 = vunpack.c.h.b16 %v1546
    %v4281 = vunpack.c.l.b16 %v1547
    %v4282 = vunpack.c.h.b16 %v1547
    %v4283 = vunpack.c.l.b16 %v1548
    %v4284 = vunpack.c.h.b16 %v1548
    %v4285 = vunpack.c.l.b16 %v1549
    %v4286 = vunpack.c.h.b16 %v1549
    %v4287 = vunpack.c.l.b16 %v1550
    %v4288 = vunpack.c.h.b16 %v1550
    %v4289 = vunpack.c.l.b16 %v1551
    %v4290 = vunpack.c.h.b16 %v1551
    %v4291 = vunpack.c.l.b16 %v1552
    %v4292 = vunpack.c.h.b16 %v1552
    %v4293 = vunpack.c.l.b16 %v1553
    %v4294 = vunpack.c.h.b16 %v1553
    %v4295 = vunpack.c.l.b16 %v1554
    %v4296 = vunpack.c.h.b16 %v1554
    %v4297 = vunpack.c.l.b16 %v1555
    %v4298 = vunpack.c.h.b16 %v1555
    %v4299 = vunpack.c.l.b16 %v1556
    %v4300 = vunpack.c.h.b16 %v1556
    %v4301 = vunpack.c.l.b16 %v1557
    %v4302 = vunpack.c.h.b16 %v1557
    %v4303 = vunpack.c.l.b16 %v1558
    %v4304 = vunpack.c.h.b16 %v1558
    %v4305 = vunpack.c.l.b16 %v1559
    %v4306 = vunpack.c.h.b16 %v1559
    %v4307 = vunpack.c.l.b16 %v1560
    %v4308 = vunpack.c.h.b16 %v1560
    %v4309 = vunpack.c.l.b16 %v1561
    %v4310 = vunpack.c.h.b16 %v1561
    %v4311 = vunpack.c.l.b16 %v1562
    %v4312 = vunpack.c.h.b16 %v1562
    %v4313 = vunpack.c.l.b16 %v1563
    %v4314 = vunpack.c.h.b16 %v1563
    %v4315 = vunpack.c.l.b16 %v1564
    %v4316 = vunpack.c.h.b16 %v1564
    %v4317 = vunpack.c.l.b16 %v1565
    %v4318 = vunpack.c.h.b16 %v1565
    %v4319 = vunpack.c.l.b16 %v1566
    %v4320 = vunpack.c.h.b16 %v1566
    %v4321 = vunpack.c.l.b16 %v1567
    %v4322 = vunpack.c.h.b16 %v1567
    %v4323 = vunpack.c.l.b16 %v1568
    %v4324 = vunpack.c.h.b16 %v1568
    %v4325 = vunpack.c.l.b16 %v1569
    %v4326 = vunpack.c.h.b16 %v1569
    %v4327 = vunpack.c.l.b16 %v1570
    %v4328 = vunpack.c.h.b16 %v1570
    %v4329 = vunpack.c.l.b16 %v1571
    %v4330 = vunpack.c.h.b16 %v1571
    %v4331 = vunpack.c.l.b16 %v1572
    %v4332 = vunpack.c.h.b16 %v1572
    %v4333 = vunpack.c.l.b16 %v1573
    %v4334 = vunpack.c.h.b16 %v1573
    %v4335 = vunpack.c.l.b16 %v1574
    %v4336 = vunpack.c.h.b16 %v1574
    %v4337 = vunpack.c.l.b16 %v1575
    %v4338 = vunpack.c.h.b16 %v1575
    %v4339 = vunpack.c.l.b16 %v1576
    %v4340 = vunpack.c.h.b16 %v1576
    %v4341 = vunpack.c.l.b16 %v1577
    %v4342 = vunpack.c.h.b16 %v1577
    %v4343 = vunpack.c.l.b16 %v1578
    %v4344 = vunpack.c.h.b16 %v1578
    %v4345 = vunpack.c.l.b16 %v1579
    %v4346 = vunpack.c.h.b16 %v1579
    %v4347 = vunpack.c.l.b16 %v1580
    %v4348 = vunpack.c.h.b16 %v1580
    %v4349 = vunpack.c.l.b16 %v1581
    %v4350 = vunpack.c.h.b16 %v1581
    %v4351 = vunpack.c.l.b16 %v1582
    %v4352 = vunpack.c.h.b16 %v1582
    %v4353 = vunpack.c.l.b16 %v1583
    %v4354 = vunpack.c.h.b16 %v1583
    %v4355 = vunpack.c.l.b16 %v1584
    %v4356 = vunpack.c.h.b16 %v1584
    %v4357 = vunpack.c.l.b16 %v1585
    %v4358 = vunpack.c.h.b16 %v1585
    %v4359 = vunpack.c.l.b16 %v1586
    %v4360 = vunpack.c.h.b16 %v1586
    %v4361 = vunpack.c.l.b16 %v1587
    %v4362 = vunpack.c.h.b16 %v1587
    %v4363 = vunpack.c.l.b16 %v1588
    %v4364 = vunpack.c.h.b16 %v1588
    %v4365 = vunpack.c.l.b16 %v1589
    %v4366 = vunpack.c.h.b16 %v1589
    %v4367 = vunpack.c.l.b16 %v1590
    %v4368 = vunpack.c.h.b16 %v1590
    %v4369 = vunpack.c.l.b16 %v1591
    %v4370 = vunpack.c.h.b16 %v1591
    %v4371 = vunpack.c.l.b16 %v1592
    %v4372 = vunpack.c.h.b16 %v1592
    %v4373 = vunpack.c.l.b16 %v1593
    %v4374 = vunpack.c.h.b16 %v1593
    %v4375 = vunpack.c.l.b16 %v1594
    %v4376 = vunpack.c.h.b16 %v1594
    %v4377 = vunpack.c.l.b16 %v1595
    %v4378 = vunpack.c.h.b16 %v1595
    %v4379 = vunpack.c.l.b16 %v1596
    %v4380 = vunpack.c.h.b16 %v1596
    %v4381 = vunpack.c.l.b16 %v1597
    %v4382 = vunpack.c.h.b16 %v1597
    %v4383 = vunpack.c.l.b16 %v1598
    %v4384 = vunpack.c.h.b16 %v1598
    %v4385 = vunpack.c.l.b16 %v1599
    %v4386 = vunpack.c.h.b16 %v1599
    %v4387 = vunpack.c.l.b16 %v1600
    %v4388 = vunpack.c.h.b16 %v1600
    %v4389 = vunpack.c.l.b16 %v1601
    %v4390 = vunpack.c.h.b16 %v1601
    %v4391 = vunpack.c.l.b16 %v1602
    %v4392 = vunpack.c.h.b16 %v1602
    %v4393 = vunpack.c.l.b16 %v1603
    %v4394 = vunpack.c.h.b16 %v1603
    %v4395 = vunpack.c.l.b16 %v1604
    %v4396 = vunpack.c.h.b16 %v1604
    %v4397 = vunpack.c.l.b16 %v1605
    %v4398 = vunpack.c.h.b16 %v1605
    %v4399 = vunpack.c.l.b16 %v1606
    %v4400 = vunpack.c.h.b16 %v1606
    %v4401 = vunpack.c.l.b16 %v1607
    %v4402 = vunpack.c.h.b16 %v1607
    %v4403 = vunpack.c.l.b16 %v1608
    %v4404 = vunpack.c.h.b16 %v1608
    %v4405 = vunpack.c.l.b16 %v1609
    %v4406 = vunpack.c.h.b16 %v1609
    %v4407 = vunpack.c.l.b16 %v1610
    %v4408 = vunpack.c.h.b16 %v1610
    %v4409 = vunpack.c.l.b16 %v1611
    %v4410 = vunpack.c.h.b16 %v1611
    %v4411 = vunpack.c.l.b16 %v1612
    %v4412 = vunpack.c.h.b16 %v1612
    %v4413 = vunpack.c.l.b16 %v1613
    %v4414 = vunpack.c.h.b16 %v1613
    %v4415 = vunpack.c.l.b16 %v1614
    %v4416 = vunpack.c.h.b16 %v1614
    %v4417 = vunpack.c.l.b16 %v1615
    %v4418 = vunpack.c.h.b16 %v1615
    %v4419 = vunpack.c.l.b16 %v1616
    %v4420 = vunpack.c.h.b16 %v1616
    %v4421 = vunpack.c.l.b16 %v1617
    %v4422 = vunpack.c.h.b16 %v1617
    %v4423 = vunpack.c.l.b16 %v1618
    %v4424 = vunpack.c.h.b16 %v1618
    %v4425 = vunpack.c.l.b16 %v1619
    %v4426 = vunpack.c.h.b16 %v1619
    %v4427 = vunpack.c.l.b16 %v1620
    %v4428 = vunpack.c.h.b16 %v1620
    %v4429 = vunpack.c.l.b16 %v1621
    %v4430 = vunpack.c.h.b16 %v1621
    %v4431 = vunpack.c.l.b16 %v1622
    %v4432 = vunpack.c.h.b16 %v1622
    %v4433 = vunpack.c.l.b16 %v1623
    %v4434 = vunpack.c.h.b16 %v1623
    %v4435 = vunpack.c.l.b16 %v1624
    %v4436 = vunpack.c.h.b16 %v1624
    %v4437 = vunpack.c.l.b16 %v1625
    %v4438 = vunpack.c.h.b16 %v1625
    %v4439 = vunpack.c.l.b16 %v1626
    %v4440 = vunpack.c.h.b16 %v1626
    %v4441 = vunpack.c.l.b16 %v1627
    %v4442 = vunpack.c.h.b16 %v1627
    %v4443 = vunpack.c.l.b16 %v1628
    %v4444 = vunpack.c.h.b16 %v1628
    %v4445 = vunpack.c.l.b16 %v1629
    %v4446 = vunpack.c.h.b16 %v1629
    %v4447 = vunpack.c.l.b16 %v1630
    %v4448 = vunpack.c.h.b16 %v1630
    %v4449 = vunpack.c.l.b16 %v1631
    %v4450 = vunpack.c.h.b16 %v1631
    %v4451 = vunpack.c.l.b16 %v1632
    %v4452 = vunpack.c.h.b16 %v1632
    %v4453 = vunpack.c.l.b16 %v1633
    %v4454 = vunpack.c.h.b16 %v1633
    %v4455 = vunpack.c.l.b16 %v1634
    %v4456 = vunpack.c.h.b16 %v1634
    %v4457 = vunpack.c.l.b16 %v1635
    %v4458 = vunpack.c.h.b16 %v1635
    %v4459 = vunpack.c.l.b16 %v1636
    %v4460 = vunpack.c.h.b16 %v1636
    %v4461 = vunpack.c.l.b16 %v1637
    %v4462 = vunpack.c.h.b16 %v1637
    %v4463 = vunpack.c.l.b16 %v1638
    %v4464 = vunpack.c.h.b16 %v1638
    %v4465 = vunpack.c.l.b16 %v1639
    %v4466 = vunpack.c.h.b16 %v1639
    %v4467 = vunpack.c.l.b16 %v1640
    %v4468 = vunpack.c.h.b16 %v1640
    %v4469 = vunpack.c.l.b16 %v1641
    %v4470 = vunpack.c.h.b16 %v1641
    %v4471 = vunpack.c.l.b16 %v1642
    %v4472 = vunpack.c.h.b16 %v1642
    %v4473 = vunpack.c.l.b16 %v1643
    %v4474 = vunpack.c.h.b16 %v1643
    %v4475 = vunpack.c.l.b16 %v1644
    %v4476 = vunpack.c.h.b16 %v1644
    %v4477 = vunpack.c.l.b16 %v1645
    %v4478 = vunpack.c.h.b16 %v1645
    %v4479 = vunpack.c.l.b16 %v1646
    %v4480 = vunpack.c.h.b16 %v1646
    %v4481 = vunpack.c.l.b16 %v1647
    %v4482 = vunpack.c.h.b16 %v1647
    %v4483 = vunpack.c.l.b16 %v1648
    %v4484 = vunpack.c.h.b16 %v1648
    %v4485 = vunpack.c.l.b16 %v1649
    %v4486 = vunpack.c.h.b16 %v1649
    %v4487 = vunpack.c.l.b16 %v1650
    %v4488 = vunpack.c.h.b16 %v1650
    %v4489 = vunpack.c.l.b16 %v1651
    %v4490 = vunpack.c.h.b16 %v1651
    %v4491 = vunpack.c.l.b16 %v1652
    %v4492 = vunpack.c.h.b16 %v1652
    %v4493 = vunpack.c.l.b16 %v1653
    %v4494 = vunpack.c.h.b16 %v1653
    %v4495 = vunpack.c.l.b16 %v1654
    %v4496 = vunpack.c.h.b16 %v1654
    %v4497 = vunpack.c.l.b16 %v1655
    %v4498 = vunpack.c.h.b16 %v1655
    %v4499 = vunpack.c.l.b16 %v1656
    %v4500 = vunpack.c.h.b16 %v1656
    %v4501 = vunpack.c.l.b16 %v1657
    %v4502 = vunpack.c.h.b16 %v1657
    %v4503 = vunpack.c.l.b16 %v1658
    %v4504 = vunpack.c.h.b16 %v1658
    %v4505 = vunpack.c.l.b16 %v1659
    %v4506 = vunpack.c.h.b16 %v1659
    %v4507 = vunpack.c.l.b16 %v1660
    %v4508 = vunpack.c.h.b16 %v1660
    %v4509 = vunpack.c.l.b16 %v1661
    %v4510 = vunpack.c.h.b16 %v1661
    %v4511 = vunpack.c.l.b16 %v1662
    %v4512 = vunpack.c.h.b16 %v1662
    %v4513 = vunpack.c.l.b16 %v1663
    %v4514 = vunpack.c.h.b16 %v1663
    %v4515 = vunpack.c.l.b16 %v1664
    %v4516 = vunpack.c.h.b16 %v1664
    %v4517 = vunpack.c.l.b16 %v1665
    %v4518 = vunpack.c.h.b16 %v1665
    %v4519 = vunpack.c.l.b16 %v1666
    %v4520 = vunpack.c.h.b16 %v1666
    %v4521 = vunpack.c.l.b16 %v1667
    %v4522 = vunpack.c.h.b16 %v1667
    %v4523 = vunpack.c.l.b16 %v1668
    %v4524 = vunpack.c.h.b16 %v1668
    %v4525 = vunpack.c.l.b16 %v1669
    %v4526 = vunpack.c.h.b16 %v1669
    %v4527 = vunpack.c.l.b16 %v1670
    %v4528 = vunpack.c.h.b16 %v1670
    %v4529 = vunpack.c.l.b16 %v1671
    %v4530 = vunpack.c.h.b16 %v1671
    %v4531 = vunpack.c.l.b16 %v1672
    %v4532 = vunpack.c.h.b16 %v1672
    %v4533 = vunpack.c.l.b16 %v1673
    %v4534 = vunpack.c.h.b16 %v1673
    %v4535 = vunpack.c.l.b16 %v1674
    %v4536 = vunpack.c.h.b16 %v1674
    %v4537 = vunpack.c.l.b16 %v1675
    %v4538 = vunpack.c.h.b16 %v1675
    %v4539 = vunpack.c.l.b16 %v1676
    %v4540 = vunpack.c.h.b16 %v1676
    %v4541 = vunpack.c.l.b16 %v1677
    %v4542 = vunpack.c.h.b16 %v1677
    %v4543 = vunpack.c.l.b16 %v1678
    %v4544 = vunpack.c.h.b16 %v1678
    %v4545 = vunpack.c.l.b16 %v1679
    %v4546 = vunpack.c.h.b16 %v1679
    %v4547 = vunpack.c.l.b16 %v1680
    %v4548 = vunpack.c.h.b16 %v1680
    %v4549 = vunpack.c.l.b16 %v1681
    %v4550 = vunpack.c.h.b16 %v1681
    %v4551 = vunpack.c.l.b16 %v1682
    %v4552 = vunpack.c.h.b16 %v1682
    %v4553 = vunpack.c.l.b16 %v1683
    %v4554 = vunpack.c.h.b16 %v1683
    %v4555 = vunpack.c.l.b16 %v1684
    %v4556 = vunpack.c.h.b16 %v1684
    %v4557 = vunpack.c.l.b16 %v1685
    %v4558 = vunpack.c.h.b16 %v1685
    %v4559 = vunpack.c.l.b16 %v1686
    %v4560 = vunpack.c.h.b16 %v1686
    %v4561 = vunpack.c.l.b16 %v1687
    %v4562 = vunpack.c.h.b16 %v1687
    %v4563 = vunpack.c.l.b16 %v1688
    %v4564 = vunpack.c.h.b16 %v1688
    %v4565 = vunpack.c.l.b16 %v1689
    %v4566 = vunpack.c.h.b16 %v1689
    %v4567 = vunpack.c.l.b16 %v1690
    %v4568 = vunpack.c.h.b16 %v1690
    %v4569 = vunpack.c.l.b16 %v1691
    %v4570 = vunpack.c.h.b16 %v1691
    %v4571 = vunpack.c.l.b16 %v1692
    %v4572 = vunpack.c.h.b16 %v1692
    %v4573 = vunpack.c.l.b16 %v1693
    %v4574 = vunpack.c.h.b16 %v1693
    %v4575 = vunpack.c.l.b16 %v1694
    %v4576 = vunpack.c.h.b16 %v1694
    %v4577 = vunpack.c.l.b16 %v1695
    %v4578 = vunpack.c.h.b16 %v1695
    %v4579 = vunpack.c.l.b16 %v1696
    %v4580 = vunpack.c.h.b16 %v1696
    %v4581 = vunpack.c.l.b16 %v1697
    %v4582 = vunpack.c.h.b16 %v1697
    %v4583 = vunpack.c.l.b16 %v1698
    %v4584 = vunpack.c.h.b16 %v1698
    %v4585 = vunpack.c.l.b16 %v1699
    %v4586 = vunpack.c.h.b16 %v1699
    %v4587 = vunpack.c.l.b16 %v1700
    %v4588 = vunpack.c.h.b16 %v1700
    %v4589 = vunpack.c.l.b16 %v1701
    %v4590 = vunpack.c.h.b16 %v1701
    %v4591 = vunpack.c.l.b16 %v1702
    %v4592 = vunpack.c.h.b16 %v1702
    %v4593 = vunpack.c.l.b16 %v1703
    %v4594 = vunpack.c.h.b16 %v1703
    %v4595 = vunpack.c.l.b16 %v1704
    %v4596 = vunpack.c.h.b16 %v1704
    %v4597 = vunpack.c.l.b16 %v1705
    %v4598 = vunpack.c.h.b16 %v1705
    %v4599 = vunpack.c.l.b16 %v1706
    %v4600 = vunpack.c.h.b16 %v1706
    %v4601 = vunpack.c.l.b16 %v1707
    %v4602 = vunpack.c.h.b16 %v1707
    %v4603 = vunpack.c.l.b16 %v1708
    %v4604 = vunpack.c.h.b16 %v1708
    %v4605 = vunpack.c.l.b16 %v1709
    %v4606 = vunpack.c.h.b16 %v1709
    %v4607 = vunpack.c.l.b16 %v1710
    %v4608 = vunpack.c.h.b16 %v1710
    %v4609 = vunpack.c.l.b16 %v1711
    %v4610 = vunpack.c.h.b16 %v1711
    %v4611 = vunpack.c.l.b16 %v1712
    %v4612 = vunpack.c.h.b16 %v1712
    %v4613 = vunpack.c.l.b16 %v1713
    %v4614 = vunpack.c.h.b16 %v1713
    %v4615 = vunpack.c.l.b16 %v1714
    %v4616 = vunpack.c.h.b16 %v1714
    %v4617 = vunpack.c.l.b16 %v1715
    %v4618 = vunpack.c.h.b16 %v1715
    %v4619 = vunpack.c.l.b16 %v1716
    %v4620 = vunpack.c.h.b16 %v1716
    %v4621 = vunpack.c.l.b16 %v1717
    %v4622 = vunpack.c.h.b16 %v1717
    %v4623 = vunpack.c.l.b16 %v1718
    %v4624 = vunpack.c.h.b16 %v1718
    %v4625 = vunpack.c.l.b16 %v1719
    %v4626 = vunpack.c.h.b16 %v1719
    %v4627 = vunpack.c.l.b16 %v1720
    %v4628 = vunpack.c.h.b16 %v1720
    %v4629 = vunpack.c.l.b16 %v1721
    %v4630 = vunpack.c.h.b16 %v1721
    %v4631 = vunpack.c.l.b16 %v1722
    %v4632 = vunpack.c.h.b16 %v1722
    %v4633 = vunpack.c.l.b16 %v1723
    %v4634 = vunpack.c.h.b16 %v1723
    %v4635 = vunpack.c.l.b16 %v1724
    %v4636 = vunpack.c.h.b16 %v1724
    %v4637 = vunpack.c.l.b16 %v1725
    %v4638 = vunpack.c.h.b16 %v1725
    %v4639 = vunpack.c.l.b16 %v1726
    %v4640 = vunpack.c.h.b16 %v1726
    %v4641 = vunpack.c.l.b16 %v1727
    %v4642 = vunpack.c.h.b16 %v1727
    %v4643 = vunpack.c.l.b16 %v1728
    %v4644 = vunpack.c.h.b16 %v1728
    %v4645 = vunpack.c.l.b16 %v1729
    %v4646 = vunpack.c.h.b16 %v1729
    %v4647 = vunpack.c.l.b16 %v1730
    %v4648 = vunpack.c.h.b16 %v1730
    %v4649 = vunpack.c.l.b16 %v1731
    %v4650 = vunpack.c.h.b16 %v1731
    %v4651 = vunpack.c.l.b16 %v1732
    %v4652 = vunpack.c.h.b16 %v1732
    %v4653 = vunpack.c.l.b16 %v1733
    %v4654 = vunpack.c.h.b16 %v1733
    %v4655 = vunpack.c.l.b16 %v1734
    %v4656 = vunpack.c.h.b16 %v1734
    %v4657 = vunpack.c.l.b16 %v1735
    %v4658 = vunpack.c.h.b16 %v1735
    %v4659 = vunpack.c.l.b16 %v1736
    %v4660 = vunpack.c.h.b16 %v1736
    %v4661 = vunpack.c.l.b16 %v1737
    %v4662 = vunpack.c.h.b16 %v1737
    %v4663 = vunpack.c.l.b16 %v1738
    %v4664 = vunpack.c.h.b16 %v1738
    %v4665 = vunpack.c.l.b16 %v1739
    %v4666 = vunpack.c.h.b16 %v1739
    %v4667 = vunpack.c.l.b16 %v1740
    %v4668 = vunpack.c.h.b16 %v1740
    %v4669 = vunpack.c.l.b16 %v1741
    %v4670 = vunpack.c.h.b16 %v1741
    %v4671 = vunpack.c.l.b16 %v1742
    %v4672 = vunpack.c.h.b16 %v1742
    %v4673 = vunpack.c.l.b16 %v1743
    %v4674 = vunpack.c.h.b16 %v1743
    %v4675 = vunpack.c.l.b16 %v1744
    %v4676 = vunpack.c.h.b16 %v1744
    %v4677 = vunpack.c.l.b16 %v1745
    %v4678 = vunpack.c.h.b16 %v1745
    %v4679 = vunpack.c.l.b16 %v1746
    %v4680 = vunpack.c.h.b16 %v1746
    %v4681 = vunpack.c.l.b16 %v1747
    %v4682 = vunpack.c.h.b16 %v1747
    %v4683 = vunpack.c.l.b16 %v1748
    %v4684 = vunpack.c.h.b16 %v1748
    %v4685 = vunpack.c.l.b16 %v1749
    %v4686 = vunpack.c.h.b16 %v1749
    %v4687 = vunpack.c.l.b16 %v1750
    %v4688 = vunpack.c.h.b16 %v1750
    %v4689 = vunpack.c.l.b16 %v1751
    %v4690 = vunpack.c.h.b16 %v1751
    %v4691 = vunpack.c.l.b16 %v1752
    %v4692 = vunpack.c.h.b16 %v1752
    %v4693 = vunpack.c.l.b16 %v1753
    %v4694 = vunpack.c.h.b16 %v1753
    %v4695 = vunpack.c.l.b16 %v1754
    %v4696 = vunpack.c.h.b16 %v1754
    %v4697 = vunpack.c.l.b16 %v1755
    %v4698 = vunpack.c.h.b16 %v1755
    %v4699 = vunpack.c.l.b16 %v1756
    %v4700 = vunpack.c.h.b16 %v1756
    %v4701 = vunpack.c.l.b16 %v1757
    %v4702 = vunpack.c.h.b16 %v1757
    %v4703 = vunpack.c.l.b16 %v1758
    %v4704 = vunpack.c.h.b16 %v1758
    %v4705 = vunpack.c.l.b16 %v1759
    %v4706 = vunpack.c.h.b16 %v1759
    %v4707 = vunpack.c.l.b16 %v1760
    %v4708 = vunpack.c.h.b16 %v1760
    %v4709 = vunpack.c.l.b16 %v1761
    %v4710 = vunpack.c.h.b16 %v1761
    %v4711 = vunpack.c.l.b16 %v1762
    %v4712 = vunpack.c.h.b16 %v1762
    %v4713 = vunpack.c.l.b16 %v1763
    %v4714 = vunpack.c.h.b16 %v1763
    %v4715 = vunpack.c.l.b16 %v1764
    %v4716 = vunpack.c.h.b16 %v1764
    %v4717 = vunpack.c.l.b16 %v1765
    %v4718 = vunpack.c.h.b16 %v1765
    %v4719 = vunpack.c.l.b16 %v1766
    %v4720 = vunpack.c.h.b16 %v1766
    %v4721 = vunpack.c.l.b16 %v1767
    %v4722 = vunpack.c.h.b16 %v1767
    %v4723 = vunpack.c.l.b16 %v1768
    %v4724 = vunpack.c.h.b16 %v1768
    %v4725 = vunpack.c.l.b16 %v1769
    %v4726 = vunpack.c.h.b16 %v1769
    %v4727 = vunpack.c.l.b16 %v1770
    %v4728 = vunpack.c.h.b16 %v1770
    %v4729 = vunpack.c.l.b16 %v1771
    %v4730 = vunpack.c.h.b16 %v1771
    %v4731 = vunpack.c.l.b16 %v1772
    %v4732 = vunpack.c.h.b16 %v1772
    %v4733 = vunpack.c.l.b16 %v1773
    %v4734 = vunpack.c.h.b16 %v1773
    %v4735 = vunpack.c.l.b16 %v1774
    %v4736 = vunpack.c.h.b16 %v1774
    %v4737 = vunpack.c.l.b16 %v1775
    %v4738 = vunpack.c.h.b16 %v1775
    %v4739 = vunpack.c.l.b16 %v1776
    %v4740 = vunpack.c.h.b16 %v1776
    %v4741 = vunpack.c.l.b16 %v1777
    %v4742 = vunpack.c.h.b16 %v1777
    %v4743 = vunpack.c.l.b16 %v1778
    %v4744 = vunpack.c.h.b16 %v1778
    %v4745 = vunpack.c.l.b16 %v1779
    %v4746 = vunpack.c.h.b16 %v1779
    %v4747 = vunpack.c.l.b16 %v1780
    %v4748 = vunpack.c.h.b16 %v1780
    %v4749 = vunpack.c.l.b16 %v1781
    %v4750 = vunpack.c.h.b16 %v1781
    %v4751 = vunpack.c.l.b16 %v1782
    %v4752 = vunpack.c.h.b16 %v1782
    %v4753 = vunpack.c.l.b16 %v1783
    %v4754 = vunpack.c.h.b16 %v1783
    %v4755 = vunpack.c.l.b16 %v1784
    %v4756 = vunpack.c.h.b16 %v1784
    %v4757 = vunpack.c.l.b16 %v1785
    %v4758 = vunpack.c.h.b16 %v1785
    %v4759 = vunpack.c.l.b16 %v1786
    %v4760 = vunpack.c.h.b16 %v1786
    %v4761 = vunpack.c.l.b16 %v1787
    %v4762 = vunpack.c.h.b16 %v1787
    %v4763 = vunpack.c.l.b16 %v1788
    %v4764 = vunpack.c.h.b16 %v1788
    %v4765 = vunpack.c.l.b16 %v1789
    %v4766 = vunpack.c.h.b16 %v1789
    %v4767 = vunpack.c.l.b16 %v1790
    %v4768 = vunpack.c.h.b16 %v1790
    %v4769 = vunpack.c.l.b16 %v1791
    %v4770 = vunpack.c.h.b16 %v1791
    %v4771 = vunpack.c.l.b16 %v1792
    %v4772 = vunpack.c.h.b16 %v1792
    %v4773 = vunpack.c.l.b16 %v1793
    %v4774 = vunpack.c.h.b16 %v1793
    %v4775 = vunpack.c.l.b16 %v1794
    %v4776 = vunpack.c.h.b16 %v1794
    %v4777 = vunpack.c.l.b16 %v1795
    %v4778 = vunpack.c.h.b16 %v1795
    %v4779 = vunpack.c.l.b16 %v1796
    %v4780 = vunpack.c.h.b16 %v1796
    %v4781 = vunpack.c.l.b16 %v1797
    %v4782 = vunpack.c.h.b16 %v1797
    %v4783 = vunpack.c.l.b16 %v1798
    %v4784 = vunpack.c.h.b16 %v1798
    %v4785 = vunpack.c.l.b16 %v1799
    %v4786 = vunpack.c.h.b16 %v1799
    %v4787 = vunpack.c.l.b16 %v1800
    %v4788 = vunpack.c.h.b16 %v1800
    %v4789 = vunpack.c.l.b16 %v1801
    %v4790 = vunpack.c.h.b16 %v1801
    %v4791 = vunpack.c.l.b16 %v1802
    %v4792 = vunpack.c.h.b16 %v1802
    %v4793 = vunpack.c.l.b16 %v1803
    %v4794 = vunpack.c.h.b16 %v1803
    %v4795 = vunpack.c.l.b16 %v1804
    %v4796 = vunpack.c.h.b16 %v1804
    %v4797 = vunpack.c.l.b16 %v1805
    %v4798 = vunpack.c.h.b16 %v1805
    %v4799 = vunpack.c.l.b16 %v1806
    %v4800 = vunpack.c.h.b16 %v1806
    %v4801 = vunpack.c.l.b16 %v1807
    %v4802 = vunpack.c.h.b16 %v1807
    %v4803 = vunpack.c.l.b16 %v1808
    %v4804 = vunpack.c.h.b16 %v1808
    %v4805 = vunpack.c.l.b16 %v1809
    %v4806 = vunpack.c.h.b16 %v1809
    %v4807 = vunpack.c.l.b16 %v1810
    %v4808 = vunpack.c.h.b16 %v1810
    %v4809 = vunpack.c.l.b16 %v1811
    %v4810 = vunpack.c.h.b16 %v1811
    %v4811 = vunpack.c.l.b16 %v1812
    %v4812 = vunpack.c.h.b16 %v1812
    %v4813 = vunpack.c.l.b16 %v1813
    %v4814 = vunpack.c.h.b16 %v1813
    %v4815 = vunpack.c.l.b16 %v1814
    %v4816 = vunpack.c.h.b16 %v1814
    %v4817 = vunpack.c.l.b16 %v1815
    %v4818 = vunpack.c.h.b16 %v1815
    %v4819 = vunpack.c.l.b16 %v1816
    %v4820 = vunpack.c.h.b16 %v1816
    %v4821 = vunpack.c.l.b16 %v1817
    %v4822 = vunpack.c.h.b16 %v1817
    %v4823 = vunpack.c.l.b16 %v1818
    %v4824 = vunpack.c.h.b16 %v1818
    %v4825 = vunpack.c.l.b16 %v1819
    %v4826 = vunpack.c.h.b16 %v1819
    %v4827 = vunpack.c.l.b16 %v1820
    %v4828 = vunpack.c.h.b16 %v1820
    %v4829 = vunpack.c.l.b16 %v1821
    %v4830 = vunpack.c.h.b16 %v1821
    %v4831 = vunpack.c.l.b16 %v1822
    %v4832 = vunpack.c.h.b16 %v1822
    %v4833 = vunpack.c.l.b16 %v1823
    %v4834 = vunpack.c.h.b16 %v1823
    %v4835 = vunpack.c.l.b16 %v1824
    %v4836 = vunpack.c.h.b16 %v1824
    %v4837 = vunpack.c.l.b16 %v1825
    %v4838 = vunpack.c.h.b16 %v1825
    %v4839 = vunpack.c.l.b16 %v1826
    %v4840 = vunpack.c.h.b16 %v1826
    %v4841 = vunpack.c.l.b16 %v1827
    %v4842 = vunpack.c.h.b16 %v1827
    %v4843 = vunpack.c.l.b16 %v1828
    %v4844 = vunpack.c.h.b16 %v1828
    %v4845 = vunpack.c.l.b16 %v1829
    %v4846 = vunpack.c.h.b16 %v1829
    %v4847 = vunpack.c.l.b16 %v1830
    %v4848 = vunpack.c.h.b16 %v1830
    %v4849 = vunpack.c.l.b16 %v1831
    %v4850 = vunpack.c.h.b16 %v1831
    %v4851 = vunpack.c.l.b16 %v1832
    %v4852 = vunpack.c.h.b16 %v1832
    %v4853 = vunpack.c.l.b16 %v1833
    %v4854 = vunpack.c.h.b16 %v1833
    %v4855 = vunpack.c.l.b16 %v1834
    %v4856 = vunpack.c.h.b16 %v1834
    %v4857 = vunpack.c.l.b16 %v1835
    %v4858 = vunpack.c.h.b16 %v1835
    %v4859 = vunpack.c.l.b16 %v1836
    %v4860 = vunpack.c.h.b16 %v1836
    %v4861 = vunpack.c.l.b16 %v1837
    %v4862 = vunpack.c.h.b16 %v1837
    %v4863 = vunpack.c.l.b16 %v1838
    %v4864 = vunpack.c.h.b16 %v1838
    %v4865 = vunpack.c.l.b16 %v1839
    %v4866 = vunpack.c.h.b16 %v1839
    %v4867 = vunpack.c.l.b16 %v1840
    %v4868 = vunpack.c.h.b16 %v1840
    %v4869 = vunpack.c.l.b16 %v1841
    %v4870 = vunpack.c.h.b16 %v1841
    %v4871 = vunpack.c.l.b16 %v1842
    %v4872 = vunpack.c.h.b16 %v1842
    %v4873 = vunpack.c.l.b16 %v1843
    %v4874 = vunpack.c.h.b16 %v1843
    %v4875 = vunpack.c.l.b16 %v1844
    %v4876 = vunpack.c.h.b16 %v1844
    %v4877 = vunpack.c.l.b16 %v1845
    %v4878 = vunpack.c.h.b16 %v1845
    %v4879 = vunpack.c.l.b16 %v1846
    %v4880 = vunpack.c.h.b16 %v1846
    %v4881 = vunpack.c.l.b16 %v1847
    %v4882 = vunpack.c.h.b16 %v1847
    %v4883 = vunpack.c.l.b16 %v1848
    %v4884 = vunpack.c.h.b16 %v1848
    %v4885 = vunpack.c.l.b16 %v1849
    %v4886 = vunpack.c.h.b16 %v1849
    %v4887 = vunpack.c.l.b16 %v1850
    %v4888 = vunpack.c.h.b16 %v1850
    %v4889 = vunpack.c.l.b16 %v1851
    %v4890 = vunpack.c.h.b16 %v1851
    %v4891 = vunpack.c.l.b16 %v1852
    %v4892 = vunpack.c.h.b16 %v1852
    %v4893 = vunpack.c.l.b16 %v1853
    %v4894 = vunpack.c.h.b16 %v1853
    %v4895 = vunpack.c.l.b16 %v1854
    %v4896 = vunpack.c.h.b16 %v1854
    %v4897 = vunpack.c.l.b16 %v1855
    %v4898 = vunpack.c.h.b16 %v1855
    %v4899 = vunpack.c.l.b16 %v1856
    %v4900 = vunpack.c.h.b16 %v1856
    %v4901 = vunpack.c.l.b16 %v1857
    %v4902 = vunpack.c.h.b16 %v1857
    %v4903 = vunpack.c.l.b16 %v1858
    %v4904 = vunpack.c.h.b16 %v1858
    %v4905 = vunpack.c.l.b16 %v1859
    %v4906 = vunpack.c.h.b16 %v1859
    %v4907 = vunpack.c.l.b16 %v1860
    %v4908 = vunpack.c.h.b16 %v1860
    %v4909 = vunpack.c.l.b16 %v1861
    %v4910 = vunpack.c.h.b16 %v1861
    %v4911 = vunpack.c.l.b16 %v1862
    %v4912 = vunpack.c.h.b16 %v1862
    %v4913 = vunpack.c.l.b16 %v1863
    %v4914 = vunpack.c.h.b16 %v1863
    %v4915 = vunpack.c.l.b16 %v1864
    %v4916 = vunpack.c.h.b16 %v1864
    %v4917 = vunpack.c.l.b16 %v1865
    %v4918 = vunpack.c.h.b16 %v1865
    %v4919 = vunpack.c.l.b16 %v1866
    %v4920 = vunpack.c.h.b16 %v1866
    %v4921 = vunpack.c.l.b16 %v1867
    %v4922 = vunpack.c.h.b16 %v1867
    %v4923 = vunpack.c.l.b16 %v1868
    %v4924 = vunpack.c.h.b16 %v1868
    %v4925 = vunpack.c.l.b16 %v1869
    %v4926 = vunpack.c.h.b16 %v1869
    %v4927 = vunpack.c.l.b16 %v1870
    %v4928 = vunpack.c.h.b16 %v1870
    %v4929 = vunpack.c.l.b16 %v1871
    %v4930 = vunpack.c.h.b16 %v1871
    %v4931 = vunpack.c.l.b16 %v1872
    %v4932 = vunpack.c.h.b16 %v1872
    %v4933 = vunpack.c.l.b16 %v1873
    %v4934 = vunpack.c.h.b16 %v1873
    %v4935 = vunpack.c.l.b16 %v1874
    %v4936 = vunpack.c.h.b16 %v1874
    %v4937 = vunpack.c.l.b16 %v1875
    %v4938 = vunpack.c.h.b16 %v1875
    %v4939 = vunpack.c.l.b16 %v1876
    %v4940 = vunpack.c.h.b16 %v1876
    %v4941 = vunpack.c.l.b16 %v1877
    %v4942 = vunpack.c.h.b16 %v1877
    %v4943 = vunpack.c.l.b16 %v1878
    %v4944 = vunpack.c.h.b16 %v1878
    %v4945 = vunpack.c.l.b16 %v1879
    %v4946 = vunpack.c.h.b16 %v1879
    %v4947 = vunpack.c.l.b16 %v1880
    %v4948 = vunpack.c.h.b16 %v1880
    %v4949 = vunpack.c.l.b16 %v1881
    %v4950 = vunpack.c.h.b16 %v1881
    %v4951 = vunpack.c.l.b16 %v1882
    %v4952 = vunpack.c.h.b16 %v1882
    %v4953 = vunpack.c.l.b16 %v1883
    %v4954 = vunpack.c.h.b16 %v1883
    %v4955 = vunpack.c.l.b16 %v1884
    %v4956 = vunpack.c.h.b16 %v1884
    %v4957 = vunpack.c.l.b16 %v1885
    %v4958 = vunpack.c.h.b16 %v1885
    %v4959 = vunpack.c.l.b16 %v1886
    %v4960 = vunpack.c.h.b16 %v1886
    %v4961 = vunpack.c.l.b16 %v1887
    %v4962 = vunpack.c.h.b16 %v1887
    %v4963 = vunpack.c.l.b16 %v1888
    %v4964 = vunpack.c.h.b16 %v1888
    %v4965 = vunpack.c.l.b16 %v1889
    %v4966 = vunpack.c.h.b16 %v1889
    %v4967 = vunpack.c.l.b16 %v1890
    %v4968 = vunpack.c.h.b16 %v1890
    %v4969 = vunpack.c.l.b16 %v1891
    %v4970 = vunpack.c.h.b16 %v1891
    %v4971 = vunpack.c.l.b16 %v1892
    %v4972 = vunpack.c.h.b16 %v1892
    %v4973 = vunpack.c.l.b16 %v1893
    %v4974 = vunpack.c.h.b16 %v1893
    %v4975 = vunpack.c.l.b16 %v1894
    %v4976 = vunpack.c.h.b16 %v1894
    %v4977 = vunpack.c.l.b16 %v1895
    %v4978 = vunpack.c.h.b16 %v1895
    %v4979 = vunpack.c.l.b16 %v1896
    %v4980 = vunpack.c.h.b16 %v1896
    %v4981 = vunpack.c.l.b16 %v1897
    %v4982 = vunpack.c.h.b16 %v1897
    %v4983 = vunpack.c.l.b16 %v1898
    %v4984 = vunpack.c.h.b16 %v1898
    %v4985 = vunpack.c.l.b16 %v1899
    %v4986 = vunpack.c.h.b16 %v1899
    %v4987 = vunpack.c.l.b16 %v1900
    %v4988 = vunpack.c.h.b16 %v1900
    %v4989 = vunpack.c.l.b16 %v1901
    %v4990 = vunpack.c.h.b16 %v1901
    %v4991 = vunpack.c.l.b16 %v1902
    %v4992 = vunpack.c.h.b16 %v1902
    %v4993 = vunpack.c.l.b16 %v1903
    %v4994 = vunpack.c.h.b16 %v1903
    %v4995 = vunpack.c.l.b16 %v1904
    %v4996 = vunpack.c.h.b16 %v1904
    %v4997 = vunpack.c.l.b16 %v1905
    %v4998 = vunpack.c.h.b16 %v1905
    %v4999 = vunpack.c.l.b16 %v1906
    %v5000 = vunpack.c.h.b16 %v1906
    %v5001 = vunpack.c.l.b16 %v1907
    %v5002 = vunpack.c.h.b16 %v1907
    %v5003 = vunpack.c.l.b16 %v1908
    %v5004 = vunpack.c.h.b16 %v1908
    %v5005 = vunpack.c.l.b16 %v1909
    %v5006 = vunpack.c.h.b16 %v1909
    %v5007 = vunpack.c.l.b16 %v1910
    %v5008 = vunpack.c.h.b16 %v1910
    %v5009 = vunpack.c.l.b16 %v1911
    %v5010 = vunpack.c.h.b16 %v1911
    %v5011 = vunpack.c.l.b16 %v1912
    %v5012 = vunpack.c.h.b16 %v1912
    %v5013 = vunpack.c.l.b16 %v1913
    %v5014 = vunpack.c.h.b16 %v1913
    %v5015 = vunpack.c.l.b16 %v1914
    %v5016 = vunpack.c.h.b16 %v1914
    %v5017 = vunpack.c.l.b16 %v1915
    %v5018 = vunpack.c.h.b16 %v1915
    %v5019 = vunpack.c.l.b16 %v1916
    %v5020 = vunpack.c.h.b16 %v1916
    %v5021 = vunpack.c.l.b16 %v1917
    %v5022 = vunpack.c.h.b16 %v1917
    %v5023 = vunpack.c.l.b16 %v1918
    %v5024 = vunpack.c.h.b16 %v1918
    %v5025 = vunpack.c.l.b16 %v1919
    %v5026 = vunpack.c.h.b16 %v1919
    %v5027 = vunpack.c.l.b16 %v1920
    %v5028 = vunpack.c.h.b16 %v1920
    %v5029 = vunpack.c.l.b16 %v1921
    %v5030 = vunpack.c.h.b16 %v1921
    %v5031 = vunpack.c.l.b16 %v1922
    %v5032 = vunpack.c.h.b16 %v1922
    %v5033 = vunpack.c.l.b16 %v1923
    %v5034 = vunpack.c.h.b16 %v1923
    %v5035 = vunpack.c.l.b16 %v1924
    %v5036 = vunpack.c.h.b16 %v1924
    %v5037 = vunpack.c.l.b16 %v1925
    %v5038 = vunpack.c.h.b16 %v1925
    %v5039 = vunpack.c.l.b16 %v1926
    %v5040 = vunpack.c.h.b16 %v1926
    %v5041 = vpack.c.b16 %v3001, %v2993
    %v5042 = vpack.c.b16 %v3002, %v2994
    %v5043 = vpack.c.b16 %v3003, %v2995
    %v5044 = vpack.c.b16 %v3004, %v2996
    %v5045 = vpack.c.b16 %v3005, %v2997
    %v5046 = vpack.c.b16 %v3006, %v2998
    %v5047 = vpack.c.b16 %v3007, %v2999
    %v5048 = vpack.c.b16 %v3008, %v3000
    %v5049 = vpack.c.b16 %v3017, %v3009
    %v5050 = vpack.c.b16 %v3018, %v3010
    %v5051 = vpack.c.b16 %v3019, %v3011
    %v5052 = vpack.c.b16 %v3020, %v3012
    %v5053 = vpack.c.b16 %v3021, %v3013
    %v5054 = vpack.c.b16 %v3022, %v3014
    %v5055 = vpack.c.b16 %v3023, %v3015
    %v5056 = vpack.c.b16 %v3024, %v3016
    %v5057 = vpack.c.b16 %v3033, %v3025
    %v5058 = vpack.c.b16 %v3034, %v3026
    %v5059 = vpack.c.b16 %v3035, %v3027
    %v5060 = vpack.c.b16 %v3036, %v3028
    %v5061 = vpack.c.b16 %v3037, %v3029
    %v5062 = vpack.c.b16 %v3038, %v3030
    %v5063 = vpack.c.b16 %v3039, %v3031
    %v5064 = vpack.c.b16 %v3040, %v3032
    %v5065 = vpack.c.b16 %v3049, %v3041
    %v5066 = vpack.c.b16 %v3050, %v3042
    %v5067 = vpack.c.b16 %v3051, %v3043
    %v5068 = vpack.c.b16 %v3052, %v3044
    %v5069 = vpack.c.b16 %v3053, %v3045
    %v5070 = vpack.c.b16 %v3054, %v3046
    %v5071 = vpack.c.b16 %v3055, %v3047
    %v5072 = vpack.c.b16 %v3056, %v3048
    %v5073 = vpack.c.b16 %v3065, %v3057
    %v5074 = vpack.c.b16 %v3066, %v3058
    %v5075 = vpack.c.b16 %v3067, %v3059
    %v5076 = vpack.c.b16 %v3068, %v3060
    %v5077 = vpack.c.b16 %v3069, %v3061
    %v5078 = vpack.c.b16 %v3070, %v3062
    %v5079 = vpack.c.b16 %v3071, %v3063
    %v5080 = vpack.c.b16 %v3072, %v3064
    %v5081 = vpack.c.b16 %v3081, %v3073
    %v5082 = vpack.c.b16 %v3082, %v3074
    %v5083 = vpack.c.b16 %v3083, %v3075
    %v5084 = vpack.c.b16 %v3084, %v3076
    %v5085 = vpack.c.b16 %v3085, %v3077
    %v5086 = vpack.c.b16 %v3086, %v3078
    %v5087 = vpack.c.b16 %v3087, %v3079
    %v5088 = vpack.c.b16 %v3088, %v3080
    %v5089 = vpack.c.b16 %v3097, %v3089
    %v5090 = vpack.c.b16 %v3098, %v3090
    %v5091 = vpack.c.b16 %v3099, %v3091
    %v5092 = vpack.c.b16 %v3100, %v3092
    %v5093 = vpack.c.b16 %v3101, %v3093
    %v5094 = vpack.c.b16 %v3102, %v3094
    %v5095 = vpack.c.b16 %v3103, %v3095
    %v5096 = vpack.c.b16 %v3104, %v3096
    %v5097 = vpack.c.b16 %v3113, %v3105
    %v5098 = vpack.c.b16 %v3114, %v3106
    %v5099 = vpack.c.b16 %v3115, %v3107
    %v5100 = vpack.c.b16 %v3116, %v3108
    %v5101 = vpack.c.b16 %v3117, %v3109
    %v5102 = vpack.c.b16 %v3118, %v3110
    %v5103 = vpack.c.b16 %v3119, %v3111
    %v5104 = vpack.c.b16 %v3120, %v3112
    %v5105 = vpack.c.b16 %v3129, %v3121
    %v5106 = vpack.c.b16 %v3130, %v3122
    %v5107 = vpack.c.b16 %v3131, %v3123
    %v5108 = vpack.c.b16 %v3132, %v3124
    %v5109 = vpack.c.b16 %v3133, %v3125
    %v5110 = vpack.c.b16 %v3134, %v3126
    %v5111 = vpack.c.b16 %v3135, %v3127
    %v5112 = vpack.c.b16 %v3136, %v3128
    %v5113 = vpack.c.b16 %v3145, %v3137
    %v5114 = vpack.c.b16 %v3146, %v3138
    %v5115 = vpack.c.b16 %v3147, %v3139
    %v5116 = vpack.c.b16 %v3148, %v3140
    %v5117 = vpack.c.b16 %v3149, %v3141
    %v5118 = vpack.c.b16 %v3150, %v3142
    %v5119 = vpack.c.b16 %v3151, %v3143
    %v5120 = vpack.c.b16 %v3152, %v3144
    %v5121 = vpack.c.b16 %v3161, %v3153
    %v5122 = vpack.c.b16 %v3162, %v3154
    %v5123 = vpack.c.b16 %v3163, %v3155
    %v5124 = vpack.c.b16 %v3164, %v3156
    %v5125 = vpack.c.b16 %v3165, %v3157
    %v5126 = vpack.c.b16 %v3166, %v3158
    %v5127 = vpack.c.b16 %v3167, %v3159
    %v5128 = vpack.c.b16 %v3168, %v3160
    %v5129 = vpack.c.b16 %v3177, %v3169
    %v5130 = vpack.c.b16 %v3178, %v3170
    %v5131 = vpack.c.b16 %v3179, %v3171
    %v5132 = vpack.c.b16 %v3180, %v3172
    %v5133 = vpack.c.b16 %v3181, %v3173
    %v5134 = vpack.c.b16 %v3182, %v3174
    %v5135 = vpack.c.b16 %v3183, %v3175
    %v5136 = vpack.c.b16 %v3184, %v3176
    %v5137 = vpack.c.b16 %v3193, %v3185
    %v5138 = vpack.c.b16 %v3194, %v3186
    %v5139 = vpack.c.b16 %v3195, %v3187
    %v5140 = vpack.c.b16 %v3196, %v3188
    %v5141 = vpack.c.b16 %v3197, %v3189
    %v5142 = vpack.c.b16 %v3198, %v3190
    %v5143 = vpack.c.b16 %v3199, %v3191
    %v5144 = vpack.c.b16 %v3200, %v3192
    %v5145 = vpack.c.b16 %v3209, %v3201
    %v5146 = vpack.c.b16 %v3210, %v3202
    %v5147 = vpack.c.b16 %v3211, %v3203
    %v5148 = vpack.c.b16 %v3212, %v3204
    %v5149 = vpack.c.b16 %v3213, %v3205
    %v5150 = vpack.c.b16 %v3214, %v3206
    %v5151 = vpack.c.b16 %v3215, %v3207
    %v5152 = vpack.c.b16 %v3216, %v3208
    %v5153 = vpack.c.b16 %v3225, %v3217
    %v5154 = vpack.c.b16 %v3226, %v3218
    %v5155 = vpack.c.b16 %v3227, %v3219
    %v5156 = vpack.c.b16 %v3228, %v3220
    %v5157 = vpack.c.b16 %v3229, %v3221
    %v5158 = vpack.c.b16 %v3230, %v3222
    %v5159 = vpack.c.b16 %v3231, %v3223
    %v5160 = vpack.c.b16 %v3232, %v3224
    %v5161 = vpack.c.b16 %v3241, %v3233
    %v5162 = vpack.c.b16 %v3242, %v3234
    %v5163 = vpack.c.b16 %v3243, %v3235
    %v5164 = vpack.c.b16 %v3244, %v3236
    %v5165 = vpack.c.b16 %v3245, %v3237
    %v5166 = vpack.c.b16 %v3246, %v3238
    %v5167 = vpack.c.b16 %v3247, %v3239
    %v5168 = vpack.c.b16 %v3248, %v3240
    %v5169 = vpack.c.b16 %v3257, %v3249
    %v5170 = vpack.c.b16 %v3258, %v3250
    %v5171 = vpack.c.b16 %v3259, %v3251
    %v5172 = vpack.c.b16 %v3260, %v3252
    %v5173 = vpack.c.b16 %v3261, %v3253
    %v5174 = vpack.c.b16 %v3262, %v3254
    %v5175 = vpack.c.b16 %v3263, %v3255
    %v5176 = vpack.c.b16 %v3264, %v3256
    %v5177 = vpack.c.b16 %v3273, %v3265
    %v5178 = vpack.c.b16 %v3274, %v3266
    %v5179 = vpack.c.b16 %v3275, %v3267
    %v5180 = vpack.c.b16 %v3276, %v3268
    %v5181 = vpack.c.b16 %v3277, %v3269
    %v5182 = vpack.c.b16 %v3278, %v3270
    %v5183 = vpack.c.b16 %v3279, %v3271
    %v5184 = vpack.c.b16 %v3280, %v3272
    %v5185 = vpack.c.b16 %v3289, %v3281
    %v5186 = vpack.c.b16 %v3290, %v3282
    %v5187 = vpack.c.b16 %v3291, %v3283
    %v5188 = vpack.c.b16 %v3292, %v3284
    %v5189 = vpack.c.b16 %v3293, %v3285
    %v5190 = vpack.c.b16 %v3294, %v3286
    %v5191 = vpack.c.b16 %v3295, %v3287
    %v5192 = vpack.c.b16 %v3296, %v3288
    %v5193 = vpack.c.b16 %v3305, %v3297
    %v5194 = vpack.c.b16 %v3306, %v3298
    %v5195 = vpack.c.b16 %v3307, %v3299
    %v5196 = vpack.c.b16 %v3308, %v3300
    %v5197 = vpack.c.b16 %v3309, %v3301
    %v5198 = vpack.c.b16 %v3310, %v3302
    %v5199 = vpack.c.b16 %v3311, %v3303
    %v5200 = vpack.c.b16 %v3312, %v3304
    %v5201 = vpack.c.b16 %v3321, %v3313
    %v5202 = vpack.c.b16 %v3322, %v3314
    %v5203 = vpack.c.b16 %v3323, %v3315
    %v5204 = vpack.c.b16 %v3324, %v3316
    %v5205 = vpack.c.b16 %v3325, %v3317
    %v5206 = vpack.c.b16 %v3326, %v3318
    %v5207 = vpack.c.b16 %v3327, %v3319
    %v5208 = vpack.c.b16 %v3328, %v3320
    %v5209 = vpack.c.b16 %v3337, %v3329
    %v5210 = vpack.c.b16 %v3338, %v3330
    %v5211 = vpack.c.b16 %v3339, %v3331
    %v5212 = vpack.c.b16 %v3340, %v3332
    %v5213 = vpack.c.b16 %v3341, %v3333
    %v5214 = vpack.c.b16 %v3342, %v3334
    %v5215 = vpack.c.b16 %v3343, %v3335
    %v5216 = vpack.c.b16 %v3344, %v3336
    %v5217 = vpack.c.b16 %v3353, %v3345
    %v5218 = vpack.c.b16 %v3354, %v3346
    %v5219 = vpack.c.b16 %v3355, %v3347
    %v5220 = vpack.c.b16 %v3356, %v3348
    %v5221 = vpack.c.b16 %v3357, %v3349
    %v5222 = vpack.c.b16 %v3358, %v3350
    %v5223 = vpack.c.b16 %v3359, %v3351
    %v5224 = vpack.c.b16 %v3360, %v3352
    %v5225 = vpack.c.b16 %v3369, %v3361
    %v5226 = vpack.c.b16 %v3370, %v3362
    %v5227 = vpack.c.b16 %v3371, %v3363
    %v5228 = vpack.c.b16 %v3372, %v3364
    %v5229 = vpack.c.b16 %v3373, %v3365
    %v5230 = vpack.c.b16 %v3374, %v3366
    %v5231 = vpack.c.b16 %v3375, %v3367
    %v5232 = vpack.c.b16 %v3376, %v3368
    %v5233 = vpack.c.b16 %v3385, %v3377
    %v5234 = vpack.c.b16 %v3386, %v3378
    %v5235 = vpack.c.b16 %v3387, %v3379
    %v5236 = vpack.c.b16 %v3388, %v3380
    %v5237 = vpack.c.b16 %v3389, %v3381
    %v5238 = vpack.c.b16 %v3390, %v3382
    %v5239 = vpack.c.b16 %v3391, %v3383
    %v5240 = vpack.c.b16 %v3392, %v3384
    %v5241 = vpack.c.b16 %v3401, %v3393
    %v5242 = vpack.c.b16 %v3402, %v3394
    %v5243 = vpack.c.b16 %v3403, %v3395
    %v5244 = vpack.c.b16 %v3404, %v3396
    %v5245 = vpack.c.b16 %v3405, %v3397
    %v5246 = vpack.c.b16 %v3406, %v3398
    %v5247 = vpack.c.b16 %v3407, %v3399
    %v5248 = vpack.c.b16 %v3408, %v3400
    %v5249 = vpack.c.b16 %v3417, %v3409
    %v5250 = vpack.c.b16 %v3418, %v3410
    %v5251 = vpack.c.b16 %v3419, %v3411
    %v5252 = vpack.c.b16 %v3420, %v3412
    %v5253 = vpack.c.b16 %v3421, %v3413
    %v5254 = vpack.c.b16 %v3422, %v3414
    %v5255 = vpack.c.b16 %v3423, %v3415
    %v5256 = vpack.c.b16 %v3424, %v3416
    %v5257 = vpack.c.b16 %v3433, %v3425
    %v5258 = vpack.c.b16 %v3434, %v3426
    %v5259 = vpack.c.b16 %v3435, %v3427
    %v5260 = vpack.c.b16 %v3436, %v3428
    %v5261 = vpack.c.b16 %v3437, %v3429
    %v5262 = vpack.c.b16 %v3438, %v3430
    %v5263 = vpack.c.b16 %v3439, %v3431
    %v5264 = vpack.c.b16 %v3440, %v3432
    %v5265 = vpack.c.b16 %v3449, %v3441
    %v5266 = vpack.c.b16 %v3450, %v3442
    %v5267 = vpack.c.b16 %v3451, %v3443
    %v5268 = vpack.c.b16 %v3452, %v3444
    %v5269 = vpack.c.b16 %v3453, %v3445
    %v5270 = vpack.c.b16 %v3454, %v3446
    %v5271 = vpack.c.b16 %v3455, %v3447
    %v5272 = vpack.c.b16 %v3456, %v3448
    %v5273 = vpack.c.b16 %v3465, %v3457
    %v5274 = vpack.c.b16 %v3466, %v3458
    %v5275 = vpack.c.b16 %v3467, %v3459
    %v5276 = vpack.c.b16 %v3468, %v3460
    %v5277 = vpack.c.b16 %v3469, %v3461
    %v5278 = vpack.c.b16 %v3470, %v3462
    %v5279 = vpack.c.b16 %v3471, %v3463
    %v5280 = vpack.c.b16 %v3472, %v3464
    %v5281 = vpack.c.b16 %v3481, %v3473
    %v5282 = vpack.c.b16 %v3482, %v3474
    %v5283 = vpack.c.b16 %v3483, %v3475
    %v5284 = vpack.c.b16 %v3484, %v3476
    %v5285 = vpack.c.b16 %v3485, %v3477
    %v5286 = vpack.c.b16 %v3486, %v3478
    %v5287 = vpack.c.b16 %v3487, %v3479
    %v5288 = vpack.c.b16 %v3488, %v3480
    %v5289 = vpack.c.b16 %v3497, %v3489
    %v5290 = vpack.c.b16 %v3498, %v3490
    %v5291 = vpack.c.b16 %v3499, %v3491
    %v5292 = vpack.c.b16 %v3500, %v3492
    %v5293 = vpack.c.b16 %v3501, %v3493
    %v5294 = vpack.c.b16 %v3502, %v3494
    %v5295 = vpack.c.b16 %v3503, %v3495
    %v5296 = vpack.c.b16 %v3504, %v3496
    %v5297 = vpack.c.b16 %v3513, %v3505
    %v5298 = vpack.c.b16 %v3514, %v3506
    %v5299 = vpack.c.b16 %v3515, %v3507
    %v5300 = vpack.c.b16 %v3516, %v3508
    %v5301 = vpack.c.b16 %v3517, %v3509
    %v5302 = vpack.c.b16 %v3518, %v3510
    %v5303 = vpack.c.b16 %v3519, %v3511
    %v5304 = vpack.c.b16 %v3520, %v3512
    %v5305 = vpack.c.b16 %v3529, %v3521
    %v5306 = vpack.c.b16 %v3530, %v3522
    %v5307 = vpack.c.b16 %v3531, %v3523
    %v5308 = vpack.c.b16 %v3532, %v3524
    %v5309 = vpack.c.b16 %v3533, %v3525
    %v5310 = vpack.c.b16 %v3534, %v3526
    %v5311 = vpack.c.b16 %v3535, %v3527
    %v5312 = vpack.c.b16 %v3536, %v3528
    %v5313 = vpack.c.b16 %v3545, %v3537
    %v5314 = vpack.c.b16 %v3546, %v3538
    %v5315 = vpack.c.b16 %v3547, %v3539
    %v5316 = vpack.c.b16 %v3548, %v3540
    %v5317 = vpack.c.b16 %v3549, %v3541
    %v5318 = vpack.c.b16 %v3550, %v3542
    %v5319 = vpack.c.b16 %v3551, %v3543
    %v5320 = vpack.c.b16 %v3552, %v3544
    %v5321 = vpack.c.b16 %v3561, %v3553
    %v5322 = vpack.c.b16 %v3562, %v3554
    %v5323 = vpack.c.b16 %v3563, %v3555
    %v5324 = vpack.c.b16 %v3564, %v3556
    %v5325 = vpack.c.b16 %v3565, %v3557
    %v5326 = vpack.c.b16 %v3566, %v3558
    %v5327 = vpack.c.b16 %v3567, %v3559
    %v5328 = vpack.c.b16 %v3568, %v3560
    %v5329 = vpack.c.b16 %v3577, %v3569
    %v5330 = vpack.c.b16 %v3578, %v3570
    %v5331 = vpack.c.b16 %v3579, %v3571
    %v5332 = vpack.c.b16 %v3580, %v3572
    %v5333 = vpack.c.b16 %v3581, %v3573
    %v5334 = vpack.c.b16 %v3582, %v3574
    %v5335 = vpack.c.b16 %v3583, %v3575
    %v5336 = vpack.c.b16 %v3584, %v3576
    %v5337 = vpack.c.b16 %v3593, %v3585
    %v5338 = vpack.c.b16 %v3594, %v3586
    %v5339 = vpack.c.b16 %v3595, %v3587
    %v5340 = vpack.c.b16 %v3596, %v3588
    %v5341 = vpack.c.b16 %v3597, %v3589
    %v5342 = vpack.c.b16 %v3598, %v3590
    %v5343 = vpack.c.b16 %v3599, %v3591
    %v5344 = vpack.c.b16 %v3600, %v3592
    %v5345 = vpack.c.b16 %v3609, %v3601
    %v5346 = vpack.c.b16 %v3610, %v3602
    %v5347 = vpack.c.b16 %v3611, %v3603
    %v5348 = vpack.c.b16 %v3612, %v3604
    %v5349 = vpack.c.b16 %v3613, %v3605
    %v5350 = vpack.c.b16 %v3614, %v3606
    %v5351 = vpack.c.b16 %v3615, %v3607
    %v5352 = vpack.c.b16 %v3616, %v3608
    %v5353 = vpack.c.b16 %v3625, %v3617
    %v5354 = vpack.c.b16 %v3626, %v3618
    %v5355 = vpack.c.b16 %v3627, %v3619
    %v5356 = vpack.c.b16 %v3628, %v3620
    %v5357 = vpack.c.b16 %v3629, %v3621
    %v5358 = vpack.c.b16 %v3630, %v3622
    %v5359 = vpack.c.b16 %v3631, %v3623
    %v5360 = vpack.c.b16 %v3632, %v3624
    %v5361 = vpack.c.b16 %v3641, %v3633
    %v5362 = vpack.c.b16 %v3642, %v3634
    %v5363 = vpack.c.b16 %v3643, %v3635
    %v5364 = vpack.c.b16 %v3644, %v3636
    %v5365 = vpack.c.b16 %v3645, %v3637
    %v5366 = vpack.c.b16 %v3646, %v3638
    %v5367 = vpack.c.b16 %v3647, %v3639
    %v5368 = vpack.c.b16 %v3648, %v3640
    %v5369 = vpack.c.b16 %v3657, %v3649
    %v5370 = vpack.c.b16 %v3658, %v3650
    %v5371 = vpack.c.b16 %v3659, %v3651
    %v5372 = vpack.c.b16 %v3660, %v3652
    %v5373 = vpack.c.b16 %v3661, %v3653
    %v5374 = vpack.c.b16 %v3662, %v3654
    %v5375 = vpack.c.b16 %v3663, %v3655
    %v5376 = vpack.c.b16 %v3664, %v3656
    %v5377 = vpack.c.b16 %v3673, %v3665
    %v5378 = vpack.c.b16 %v3674, %v3666
    %v5379 = vpack.c.b16 %v3675, %v3667
    %v5380 = vpack.c.b16 %v3676, %v3668
    %v5381 = vpack.c.b16 %v3677, %v3669
    %v5382 = vpack.c.b16 %v3678, %v3670
    %v5383 = vpack.c.b16 %v3679, %v3671
    %v5384 = vpack.c.b16 %v3680, %v3672
    %v5385 = vpack.c.b16 %v3689, %v3681
    %v5386 = vpack.c.b16 %v3690, %v3682
    %v5387 = vpack.c.b16 %v3691, %v3683
    %v5388 = vpack.c.b16 %v3692, %v3684
    %v5389 = vpack.c.b16 %v3693, %v3685
    %v5390 = vpack.c.b16 %v3694, %v3686
    %v5391 = vpack.c.b16 %v3695, %v3687
    %v5392 = vpack.c.b16 %v3696, %v3688
    %v5393 = vpack.c.b16 %v3705, %v3697
    %v5394 = vpack.c.b16 %v3706, %v3698
    %v5395 = vpack.c.b16 %v3707, %v3699
    %v5396 = vpack.c.b16 %v3708, %v3700
    %v5397 = vpack.c.b16 %v3709, %v3701
    %v5398 = vpack.c.b16 %v3710, %v3702
    %v5399 = vpack.c.b16 %v3711, %v3703
    %v5400 = vpack.c.b16 %v3712, %v3704
    %v5401 = vpack.c.b16 %v3721, %v3713
    %v5402 = vpack.c.b16 %v3722, %v3714
    %v5403 = vpack.c.b16 %v3723, %v3715
    %v5404 = vpack.c.b16 %v3724, %v3716
    %v5405 = vpack.c.b16 %v3725, %v3717
    %v5406 = vpack.c.b16 %v3726, %v3718
    %v5407 = vpack.c.b16 %v3727, %v3719
    %v5408 = vpack.c.b16 %v3728, %v3720
    %v5409 = vpack.c.b16 %v3737, %v3729
    %v5410 = vpack.c.b16 %v3738, %v3730
    %v5411 = vpack.c.b16 %v3739, %v3731
    %v5412 = vpack.c.b16 %v3740, %v3732
    %v5413 = vpack.c.b16 %v3741, %v3733
    %v5414 = vpack.c.b16 %v3742, %v3734
    %v5415 = vpack.c.b16 %v3743, %v3735
    %v5416 = vpack.c.b16 %v3744, %v3736
    %v5417 = vpack.c.b16 %v3753, %v3745
    %v5418 = vpack.c.b16 %v3754, %v3746
    %v5419 = vpack.c.b16 %v3755, %v3747
    %v5420 = vpack.c.b16 %v3756, %v3748
    %v5421 = vpack.c.b16 %v3757, %v3749
    %v5422 = vpack.c.b16 %v3758, %v3750
    %v5423 = vpack.c.b16 %v3759, %v3751
    %v5424 = vpack.c.b16 %v3760, %v3752
    %v5425 = vpack.c.b16 %v3769, %v3761
    %v5426 = vpack.c.b16 %v3770, %v3762
    %v5427 = vpack.c.b16 %v3771, %v3763
    %v5428 = vpack.c.b16 %v3772, %v3764
    %v5429 = vpack.c.b16 %v3773, %v3765
    %v5430 = vpack.c.b16 %v3774, %v3766
    %v5431 = vpack.c.b16 %v3775, %v3767
    %v5432 = vpack.c.b16 %v3776, %v3768
    %v5433 = vpack.c.b16 %v3785, %v3777
    %v5434 = vpack.c.b16 %v3786, %v3778
    %v5435 = vpack.c.b16 %v3787, %v3779
    %v5436 = vpack.c.b16 %v3788, %v3780
    %v5437 = vpack.c.b16 %v3789, %v3781
    %v5438 = vpack.c.b16 %v3790, %v3782
    %v5439 = vpack.c.b16 %v3791, %v3783
    %v5440 = vpack.c.b16 %v3792, %v3784
    %v5441 = vpack.c.b16 %v3801, %v3793
    %v5442 = vpack.c.b16 %v3802, %v3794
    %v5443 = vpack.c.b16 %v3803, %v3795
    %v5444 = vpack.c.b16 %v3804, %v3796
    %v5445 = vpack.c.b16 %v3805, %v3797
    %v5446 = vpack.c.b16 %v3806, %v3798
    %v5447 = vpack.c.b16 %v3807, %v3799
    %v5448 = vpack.c.b16 %v3808, %v3800
    %v5449 = vpack.c.b16 %v3817, %v3809
    %v5450 = vpack.c.b16 %v3818, %v3810
    %v5451 = vpack.c.b16 %v3819, %v3811
    %v5452 = vpack.c.b16 %v3820, %v3812
    %v5453 = vpack.c.b16 %v3821, %v3813
    %v5454 = vpack.c.b16 %v3822, %v3814
    %v5455 = vpack.c.b16 %v3823, %v3815
    %v5456 = vpack.c.b16 %v3824, %v3816
    %v5457 = vpack.c.b16 %v3833, %v3825
    %v5458 = vpack.c.b16 %v3834, %v3826
    %v5459 = vpack.c.b16 %v3835, %v3827
    %v5460 = vpack.c.b16 %v3836, %v3828
    %v5461 = vpack.c.b16 %v3837, %v3829
    %v5462 = vpack.c.b16 %v3838, %v3830
    %v5463 = vpack.c.b16 %v3839, %v3831
    %v5464 = vpack.c.b16 %v3840, %v3832
    %v5465 = vpack.c.b16 %v3849, %v3841
    %v5466 = vpack.c.b16 %v3850, %v3842
    %v5467 = vpack.c.b16 %v3851, %v3843
    %v5468 = vpack.c.b16 %v3852, %v3844
    %v5469 = vpack.c.b16 %v3853, %v3845
    %v5470 = vpack.c.b16 %v3854, %v3846
    %v5471 = vpack.c.b16 %v3855, %v3847
    %v5472 = vpack.c.b16 %v3856, %v3848
    %v5473 = vpack.c.b16 %v3865, %v3857
    %v5474 = vpack.c.b16 %v3866, %v3858
    %v5475 = vpack.c.b16 %v3867, %v3859
    %v5476 = vpack.c.b16 %v3868, %v3860
    %v5477 = vpack.c.b16 %v3869, %v3861
    %v5478 = vpack.c.b16 %v3870, %v3862
    %v5479 = vpack.c.b16 %v3871, %v3863
    %v5480 = vpack.c.b16 %v3872, %v3864
    %v5481 = vpack.c.b16 %v3881, %v3873
    %v5482 = vpack.c.b16 %v3882, %v3874
    %v5483 = vpack.c.b16 %v3883, %v3875
    %v5484 = vpack.c.b16 %v3884, %v3876
    %v5485 = vpack.c.b16 %v3885, %v3877
    %v5486 = vpack.c.b16 %v3886, %v3878
    %v5487 = vpack.c.b16 %v3887, %v3879
    %v5488 = vpack.c.b16 %v3888, %v3880
    %v5489 = vpack.c.b16 %v3897, %v3889
    %v5490 = vpack.c.b16 %v3898, %v3890
    %v5491 = vpack.c.b16 %v3899, %v3891
    %v5492 = vpack.c.b16 %v3900, %v3892
    %v5493 = vpack.c.b16 %v3901, %v3893
    %v5494 = vpack.c.b16 %v3902, %v3894
    %v5495 = vpack.c.b16 %v3903, %v3895
    %v5496 = vpack.c.b16 %v3904, %v3896
    %v5497 = vpack.c.b16 %v3913, %v3905
    %v5498 = vpack.c.b16 %v3914, %v3906
    %v5499 = vpack.c.b16 %v3915, %v3907
    %v5500 = vpack.c.b16 %v3916, %v3908
    %v5501 = vpack.c.b16 %v3917, %v3909
    %v5502 = vpack.c.b16 %v3918, %v3910
    %v5503 = vpack.c.b16 %v3919, %v3911
    %v5504 = vpack.c.b16 %v3920, %v3912
    %v5505 = vpack.c.b16 %v3929, %v3921
    %v5506 = vpack.c.b16 %v3930, %v3922
    %v5507 = vpack.c.b16 %v3931, %v3923
    %v5508 = vpack.c.b16 %v3932, %v3924
    %v5509 = vpack.c.b16 %v3933, %v3925
    %v5510 = vpack.c.b16 %v3934, %v3926
    %v5511 = vpack.c.b16 %v3935, %v3927
    %v5512 = vpack.c.b16 %v3936, %v3928
    %v5513 = vpack.c.b16 %v3945, %v3937
    %v5514 = vpack.c.b16 %v3946, %v3938
    %v5515 = vpack.c.b16 %v3947, %v3939
    %v5516 = vpack.c.b16 %v3948, %v3940
    %v5517 = vpack.c.b16 %v3949, %v3941
    %v5518 = vpack.c.b16 %v3950, %v3942
    %v5519 = vpack.c.b16 %v3951, %v3943
    %v5520 = vpack.c.b16 %v3952, %v3944
    %v5521 = vpack.c.b16 %v3961, %v3953
    %v5522 = vpack.c.b16 %v3962, %v3954
    %v5523 = vpack.c.b16 %v3963, %v3955
    %v5524 = vpack.c.b16 %v3964, %v3956
    %v5525 = vpack.c.b16 %v3965, %v3957
    %v5526 = vpack.c.b16 %v3966, %v3958
    %v5527 = vpack.c.b16 %v3967, %v3959
    %v5528 = vpack.c.b16 %v3968, %v3960
    %v5529 = vpack.c.b16 %v3977, %v3969
    %v5530 = vpack.c.b16 %v3978, %v3970
    %v5531 = vpack.c.b16 %v3979, %v3971
    %v5532 = vpack.c.b16 %v3980, %v3972
    %v5533 = vpack.c.b16 %v3981, %v3973
    %v5534 = vpack.c.b16 %v3982, %v3974
    %v5535 = vpack.c.b16 %v3983, %v3975
    %v5536 = vpack.c.b16 %v3984, %v3976
    %v5537 = vpack.c.b16 %v3993, %v3985
    %v5538 = vpack.c.b16 %v3994, %v3986
    %v5539 = vpack.c.b16 %v3995, %v3987
    %v5540 = vpack.c.b16 %v3996, %v3988
    %v5541 = vpack.c.b16 %v3997, %v3989
    %v5542 = vpack.c.b16 %v3998, %v3990
    %v5543 = vpack.c.b16 %v3999, %v3991
    %v5544 = vpack.c.b16 %v4000, %v3992
    %v5545 = vpack.c.b16 %v4009, %v4001
    %v5546 = vpack.c.b16 %v4010, %v4002
    %v5547 = vpack.c.b16 %v4011, %v4003
    %v5548 = vpack.c.b16 %v4012, %v4004
    %v5549 = vpack.c.b16 %v4013, %v4005
    %v5550 = vpack.c.b16 %v4014, %v4006
    %v5551 = vpack.c.b16 %v4015, %v4007
    %v5552 = vpack.c.b16 %v4016, %v4008
    %v5553 = vpack.c.b16 %v4025, %v4017
    %v5554 = vpack.c.b16 %v4026, %v4018
    %v5555 = vpack.c.b16 %v4027, %v4019
    %v5556 = vpack.c.b16 %v4028, %v4020
    %v5557 = vpack.c.b16 %v4029, %v4021
    %v5558 = vpack.c.b16 %v4030, %v4022
    %v5559 = vpack.c.b16 %v4031, %v4023
    %v5560 = vpack.c.b16 %v4032, %v4024
    %v5561 = vpack.c.b16 %v4041, %v4033
    %v5562 = vpack.c.b16 %v4042, %v4034
    %v5563 = vpack.c.b16 %v4043, %v4035
    %v5564 = vpack.c.b16 %v4044, %v4036
    %v5565 = vpack.c.b16 %v4045, %v4037
    %v5566 = vpack.c.b16 %v4046, %v4038
    %v5567 = vpack.c.b16 %v4047, %v4039
    %v5568 = vpack.c.b16 %v4048, %v4040
    %v5569 = vpack.c.b16 %v4057, %v4049
    %v5570 = vpack.c.b16 %v4058, %v4050
    %v5571 = vpack.c.b16 %v4059, %v4051
    %v5572 = vpack.c.b16 %v4060, %v4052
    %v5573 = vpack.c.b16 %v4061, %v4053
    %v5574 = vpack.c.b16 %v4062, %v4054
    %v5575 = vpack.c.b16 %v4063, %v4055
    %v5576 = vpack.c.b16 %v4064, %v4056
    %v5577 = vpack.c.b16 %v4073, %v4065
    %v5578 = vpack.c.b16 %v4074, %v4066
    %v5579 = vpack.c.b16 %v4075, %v4067
    %v5580 = vpack.c.b16 %v4076, %v4068
    %v5581 = vpack.c.b16 %v4077, %v4069
    %v5582 = vpack.c.b16 %v4078, %v4070
    %v5583 = vpack.c.b16 %v4079, %v4071
    %v5584 = vpack.c.b16 %v4080, %v4072
    %v5585 = vpack.c.b16 %v4089, %v4081
    %v5586 = vpack.c.b16 %v4090, %v4082
    %v5587 = vpack.c.b16 %v4091, %v4083
    %v5588 = vpack.c.b16 %v4092, %v4084
    %v5589 = vpack.c.b16 %v4093, %v4085
    %v5590 = vpack.c.b16 %v4094, %v4086
    %v5591 = vpack.c.b16 %v4095, %v4087
    %v5592 = vpack.c.b16 %v4096, %v4088
    %v5593 = vpack.c.b16 %v4105, %v4097
    %v5594 = vpack.c.b16 %v4106, %v4098
    %v5595 = vpack.c.b16 %v4107, %v4099
    %v5596 = vpack.c.b16 %v4108, %v4100
    %v5597 = vpack.c.b16 %v4109, %v4101
    %v5598 = vpack.c.b16 %v4110, %v4102
    %v5599 = vpack.c.b16 %v4111, %v4103
    %v5600 = vpack.c.b16 %v4112, %v4104
    %v5601 = vpack.c.b16 %v4121, %v4113
    %v5602 = vpack.c.b16 %v4122, %v4114
    %v5603 = vpack.c.b16 %v4123, %v4115
    %v5604 = vpack.c.b16 %v4124, %v4116
    %v5605 = vpack.c.b16 %v4125, %v4117
    %v5606 = vpack.c.b16 %v4126, %v4118
    %v5607 = vpack.c.b16 %v4127, %v4119
    %v5608 = vpack.c.b16 %v4128, %v4120
    %v5609 = vpack.c.b16 %v4137, %v4129
    %v5610 = vpack.c.b16 %v4138, %v4130
    %v5611 = vpack.c.b16 %v4139, %v4131
    %v5612 = vpack.c.b16 %v4140, %v4132
    %v5613 = vpack.c.b16 %v4141, %v4133
    %v5614 = vpack.c.b16 %v4142, %v4134
    %v5615 = vpack.c.b16 %v4143, %v4135
    %v5616 = vpack.c.b16 %v4144, %v4136
    %v5617 = vpack.c.b16 %v4153, %v4145
    %v5618 = vpack.c.b16 %v4154, %v4146
    %v5619 = vpack.c.b16 %v4155, %v4147
    %v5620 = vpack.c.b16 %v4156, %v4148
    %v5621 = vpack.c.b16 %v4157, %v4149
    %v5622 = vpack.c.b16 %v4158, %v4150
    %v5623 = vpack.c.b16 %v4159, %v4151
    %v5624 = vpack.c.b16 %v4160, %v4152
    %v5625 = vpack.c.b16 %v4169, %v4161
    %v5626 = vpack.c.b16 %v4170, %v4162
    %v5627 = vpack.c.b16 %v4171, %v4163
    %v5628 = vpack.c.b16 %v4172, %v4164
    %v5629 = vpack.c.b16 %v4173, %v4165
    %v5630 = vpack.c.b16 %v4174, %v4166
    %v5631 = vpack.c.b16 %v4175, %v4167
    %v5632 = vpack.c.b16 %v4176, %v4168
    %v5633 = vpack.c.b16 %v4185, %v4177
    %v5634 = vpack.c.b16 %v4186, %v4178
    %v5635 = vpack.c.b16 %v4187, %v4179
    %v5636 = vpack.c.b16 %v4188, %v4180
    %v5637 = vpack.c.b16 %v4189, %v4181
    %v5638 = vpack.c.b16 %v4190, %v4182
    %v5639 = vpack.c.b16 %v4191, %v4183
    %v5640 = vpack.c.b16 %v4192, %v4184
    %v5641 = vpack.c.b16 %v4201, %v4193
    %v5642 = vpack.c.b16 %v4202, %v4194
    %v5643 = vpack.c.b16 %v4203, %v4195
    %v5644 = vpack.c.b16 %v4204, %v4196
    %v5645 = vpack.c.b16 %v4205, %v4197
    %v5646 = vpack.c.b16 %v4206, %v4198
    %v5647 = vpack.c.b16 %v4207, %v4199
    %v5648 = vpack.c.b16 %v4208, %v4200
    %v5649 = vpack.c.b16 %v4217, %v4209
    %v5650 = vpack.c.b16 %v4218, %v4210
    %v5651 = vpack.c.b16 %v4219, %v4211
    %v5652 = vpack.c.b16 %v4220, %v4212
    %v5653 = vpack.c.b16 %v4221, %v4213
    %v5654 = vpack.c.b16 %v4222, %v4214
    %v5655 = vpack.c.b16 %v4223, %v4215
    %v5656 = vpack.c.b16 %v4224, %v4216
    %v5657 = vpack.c.b16 %v4233, %v4225
    %v5658 = vpack.c.b16 %v4234, %v4226
    %v5659 = vpack.c.b16 %v4235, %v4227
    %v5660 = vpack.c.b16 %v4236, %v4228
    %v5661 = vpack.c.b16 %v4237, %v4229
    %v5662 = vpack.c.b16 %v4238, %v4230
    %v5663 = vpack.c.b16 %v4239, %v4231
    %v5664 = vpack.c.b16 %v4240, %v4232
    %v5665 = vpack.c.b16 %v4249, %v4241
    %v5666 = vpack.c.b16 %v4250, %v4242
    %v5667 = vpack.c.b16 %v4251, %v4243
    %v5668 = vpack.c.b16 %v4252, %v4244
    %v5669 = vpack.c.b16 %v4253, %v4245
    %v5670 = vpack.c.b16 %v4254, %v4246
    %v5671 = vpack.c.b16 %v4255, %v4247
    %v5672 = vpack.c.b16 %v4256, %v4248
    %v5673 = vpack.c.b16 %v4265, %v4257
    %v5674 = vpack.c.b16 %v4266, %v4258
    %v5675 = vpack.c.b16 %v4267, %v4259
    %v5676 = vpack.c.b16 %v4268, %v4260
    %v5677 = vpack.c.b16 %v4269, %v4261
    %v5678 = vpack.c.b16 %v4270, %v4262
    %v5679 = vpack.c.b16 %v4271, %v4263
    %v5680 = vpack.c.b16 %v4272, %v4264
    %v5681 = vpack.c.b16 %v4281, %v4273
    %v5682 = vpack.c.b16 %v4282, %v4274
    %v5683 = vpack.c.b16 %v4283, %v4275
    %v5684 = vpack.c.b16 %v4284, %v4276
    %v5685 = vpack.c.b16 %v4285, %v4277
    %v5686 = vpack.c.b16 %v4286, %v4278
    %v5687 = vpack.c.b16 %v4287, %v4279
    %v5688 = vpack.c.b16 %v4288, %v4280
    %v5689 = vpack.c.b16 %v4297, %v4289
    %v5690 = vpack.c.b16 %v4298, %v4290
    %v5691 = vpack.c.b16 %v4299, %v4291
    %v5692 = vpack.c.b16 %v4300, %v4292
    %v5693 = vpack.c.b16 %v4301, %v4293
    %v5694 = vpack.c.b16 %v4302, %v4294
    %v5695 = vpack.c.b16 %v4303, %v4295
    %v5696 = vpack.c.b16 %v4304, %v4296
    %v5697 = vpack.c.b16 %v4313, %v4305
    %v5698 = vpack.c.b16 %v4314, %v4306
    %v5699 = vpack.c.b16 %v4315, %v4307
    %v5700 = vpack.c.b16 %v4316, %v4308
    %v5701 = vpack.c.b16 %v4317, %v4309
    %v5702 = vpack.c.b16 %v4318, %v4310
    %v5703 = vpack.c.b16 %v4319, %v4311
    %v5704 = vpack.c.b16 %v4320, %v4312
    %v5705 = vpack.c.b16 %v4329, %v4321
    %v5706 = vpack.c.b16 %v4330, %v4322
    %v5707 = vpack.c.b16 %v4331, %v4323
    %v5708 = vpack.c.b16 %v4332, %v4324
    %v5709 = vpack.c.b16 %v4333, %v4325
    %v5710 = vpack.c.b16 %v4334, %v4326
    %v5711 = vpack.c.b16 %v4335, %v4327
    %v5712 = vpack.c.b16 %v4336, %v4328
    %v5713 = vpack.c.b16 %v4345, %v4337
    %v5714 = vpack.c.b16 %v4346, %v4338
    %v5715 = vpack.c.b16 %v4347, %v4339
    %v5716 = vpack.c.b16 %v4348, %v4340
    %v5717 = vpack.c.b16 %v4349, %v4341
    %v5718 = vpack.c.b16 %v4350, %v4342
    %v5719 = vpack.c.b16 %v4351, %v4343
    %v5720 = vpack.c.b16 %v4352, %v4344
    %v5721 = vpack.c.b16 %v4361, %v4353
    %v5722 = vpack.c.b16 %v4362, %v4354
    %v5723 = vpack.c.b16 %v4363, %v4355
    %v5724 = vpack.c.b16 %v4364, %v4356
    %v5725 = vpack.c.b16 %v4365, %v4357
    %v5726 = vpack.c.b16 %v4366, %v4358
    %v5727 = vpack.c.b16 %v4367, %v4359
    %v5728 = vpack.c.b16 %v4368, %v4360
    %v5729 = vpack.c.b16 %v4377, %v4369
    %v5730 = vpack.c.b16 %v4378, %v4370
    %v5731 = vpack.c.b16 %v4379, %v4371
    %v5732 = vpack.c.b16 %v4380, %v4372
    %v5733 = vpack.c.b16 %v4381, %v4373
    %v5734 = vpack.c.b16 %v4382, %v4374
    %v5735 = vpack.c.b16 %v4383, %v4375
    %v5736 = vpack.c.b16 %v4384, %v4376
    %v5737 = vpack.c.b16 %v4393, %v4385
    %v5738 = vpack.c.b16 %v4394, %v4386
    %v5739 = vpack.c.b16 %v4395, %v4387
    %v5740 = vpack.c.b16 %v4396, %v4388
    %v5741 = vpack.c.b16 %v4397, %v4389
    %v5742 = vpack.c.b16 %v4398, %v4390
    %v5743 = vpack.c.b16 %v4399, %v4391
    %v5744 = vpack.c.b16 %v4400, %v4392
    %v5745 = vpack.c.b16 %v4409, %v4401
    %v5746 = vpack.c.b16 %v4410, %v4402
    %v5747 = vpack.c.b16 %v4411, %v4403
    %v5748 = vpack.c.b16 %v4412, %v4404
    %v5749 = vpack.c.b16 %v4413, %v4405
    %v5750 = vpack.c.b16 %v4414, %v4406
    %v5751 = vpack.c.b16 %v4415, %v4407
    %v5752 = vpack.c.b16 %v4416, %v4408
    %v5753 = vpack.c.b16 %v4425, %v4417
    %v5754 = vpack.c.b16 %v4426, %v4418
    %v5755 = vpack.c.b16 %v4427, %v4419
    %v5756 = vpack.c.b16 %v4428, %v4420
    %v5757 = vpack.c.b16 %v4429, %v4421
    %v5758 = vpack.c.b16 %v4430, %v4422
    %v5759 = vpack.c.b16 %v4431, %v4423
    %v5760 = vpack.c.b16 %v4432, %v4424
    %v5761 = vpack.c.b16 %v4441, %v4433
    %v5762 = vpack.c.b16 %v4442, %v4434
    %v5763 = vpack.c.b16 %v4443, %v4435
    %v5764 = vpack.c.b16 %v4444, %v4436
    %v5765 = vpack.c.b16 %v4445, %v4437
    %v5766 = vpack.c.b16 %v4446, %v4438
    %v5767 = vpack.c.b16 %v4447, %v4439
    %v5768 = vpack.c.b16 %v4448, %v4440
    %v5769 = vpack.c.b16 %v4457, %v4449
    %v5770 = vpack.c.b16 %v4458, %v4450
    %v5771 = vpack.c.b16 %v4459, %v4451
    %v5772 = vpack.c.b16 %v4460, %v4452
    %v5773 = vpack.c.b16 %v4461, %v4453
    %v5774 = vpack.c.b16 %v4462, %v4454
    %v5775 = vpack.c.b16 %v4463, %v4455
    %v5776 = vpack.c.b16 %v4464, %v4456
    %v5777 = vpack.c.b16 %v4473, %v4465
    %v5778 = vpack.c.b16 %v4474, %v4466
    %v5779 = vpack.c.b16 %v4475, %v4467
    %v5780 = vpack.c.b16 %v4476, %v4468
    %v5781 = vpack.c.b16 %v4477, %v4469
    %v5782 = vpack.c.b16 %v4478, %v4470
    %v5783 = vpack.c.b16 %v4479, %v4471
    %v5784 = vpack.c.b16 %v4480, %v4472
    %v5785 = vpack.c.b16 %v4489, %v4481
    %v5786 = vpack.c.b16 %v4490, %v4482
    %v5787 = vpack.c.b16 %v4491, %v4483
    %v5788 = vpack.c.b16 %v4492, %v4484
    %v5789 = vpack.c.b16 %v4493, %v4485
    %v5790 = vpack.c.b16 %v4494, %v4486
    %v5791 = vpack.c.b16 %v4495, %v4487
    %v5792 = vpack.c.b16 %v4496, %v4488
    %v5793 = vpack.c.b16 %v4505, %v4497
    %v5794 = vpack.c.b16 %v4506, %v4498
    %v5795 = vpack.c.b16 %v4507, %v4499
    %v5796 = vpack.c.b16 %v4508, %v4500
    %v5797 = vpack.c.b16 %v4509, %v4501
    %v5798 = vpack.c.b16 %v4510, %v4502
    %v5799 = vpack.c.b16 %v4511, %v4503
    %v5800 = vpack.c.b16 %v4512, %v4504
    %v5801 = vpack.c.b16 %v4521, %v4513
    %v5802 = vpack.c.b16 %v4522, %v4514
    %v5803 = vpack.c.b16 %v4523, %v4515
    %v5804 = vpack.c.b16 %v4524, %v4516
    %v5805 = vpack.c.b16 %v4525, %v4517
    %v5806 = vpack.c.b16 %v4526, %v4518
    %v5807 = vpack.c.b16 %v4527, %v4519
    %v5808 = vpack.c.b16 %v4528, %v4520
    %v5809 = vpack.c.b16 %v4537, %v4529
    %v5810 = vpack.c.b16 %v4538, %v4530
    %v5811 = vpack.c.b16 %v4539, %v4531
    %v5812 = vpack.c.b16 %v4540, %v4532
    %v5813 = vpack.c.b16 %v4541, %v4533
    %v5814 = vpack.c.b16 %v4542, %v4534
    %v5815 = vpack.c.b16 %v4543, %v4535
    %v5816 = vpack.c.b16 %v4544, %v4536
    %v5817 = vpack.c.b16 %v4553, %v4545
    %v5818 = vpack.c.b16 %v4554, %v4546
    %v5819 = vpack.c.b16 %v4555, %v4547
    %v5820 = vpack.c.b16 %v4556, %v4548
    %v5821 = vpack.c.b16 %v4557, %v4549
    %v5822 = vpack.c.b16 %v4558, %v4550
    %v5823 = vpack.c.b16 %v4559, %v4551
    %v5824 = vpack.c.b16 %v4560, %v4552
    %v5825 = vpack.c.b16 %v4569, %v4561
    %v5826 = vpack.c.b16 %v4570, %v4562
    %v5827 = vpack.c.b16 %v4571, %v4563
    %v5828 = vpack.c.b16 %v4572, %v4564
    %v5829 = vpack.c.b16 %v4573, %v4565
    %v5830 = vpack.c.b16 %v4574, %v4566
    %v5831 = vpack.c.b16 %v4575, %v4567
    %v5832 = vpack.c.b16 %v4576, %v4568
    %v5833 = vpack.c.b16 %v4585, %v4577
    %v5834 = vpack.c.b16 %v4586, %v4578
    %v5835 = vpack.c.b16 %v4587, %v4579
    %v5836 = vpack.c.b16 %v4588, %v4580
    %v5837 = vpack.c.b16 %v4589, %v4581
    %v5838 = vpack.c.b16 %v4590, %v4582
    %v5839 = vpack.c.b16 %v4591, %v4583
    %v5840 = vpack.c.b16 %v4592, %v4584
    %v5841 = vpack.c.b16 %v4601, %v4593
    %v5842 = vpack.c.b16 %v4602, %v4594
    %v5843 = vpack.c.b16 %v4603, %v4595
    %v5844 = vpack.c.b16 %v4604, %v4596
    %v5845 = vpack.c.b16 %v4605, %v4597
    %v5846 = vpack.c.b16 %v4606, %v4598
    %v5847 = vpack.c.b16 %v4607, %v4599
    %v5848 = vpack.c.b16 %v4608, %v4600
    %v5849 = vpack.c.b16 %v4617, %v4609
    %v5850 = vpack.c.b16 %v4618, %v4610
    %v5851 = vpack.c.b16 %v4619, %v4611
    %v5852 = vpack.c.b16 %v4620, %v4612
    %v5853 = vpack.c.b16 %v4621, %v4613
    %v5854 = vpack.c.b16 %v4622, %v4614
    %v5855 = vpack.c.b16 %v4623, %v4615
    %v5856 = vpack.c.b16 %v4624, %v4616
    %v5857 = vpack.c.b16 %v4633, %v4625
    %v5858 = vpack.c.b16 %v4634, %v4626
    %v5859 = vpack.c.b16 %v4635, %v4627
    %v5860 = vpack.c.b16 %v4636, %v4628
    %v5861 = vpack.c.b16 %v4637, %v4629
    %v5862 = vpack.c.b16 %v4638, %v4630
    %v5863 = vpack.c.b16 %v4639, %v4631
    %v5864 = vpack.c.b16 %v4640, %v4632
    %v5865 = vpack.c.b16 %v4649, %v4641
    %v5866 = vpack.c.b16 %v4650, %v4642
    %v5867 = vpack.c.b16 %v4651, %v4643
    %v5868 = vpack.c.b16 %v4652, %v4644
    %v5869 = vpack.c.b16 %v4653, %v4645
    %v5870 = vpack.c.b16 %v4654, %v4646
    %v5871 = vpack.c.b16 %v4655, %v4647
    %v5872 = vpack.c.b16 %v4656, %v4648
    %v5873 = vpack.c.b16 %v4665, %v4657
    %v5874 = vpack.c.b16 %v4666, %v4658
    %v5875 = vpack.c.b16 %v4667, %v4659
    %v5876 = vpack.c.b16 %v4668, %v4660
    %v5877 = vpack.c.b16 %v4669, %v4661
    %v5878 = vpack.c.b16 %v4670, %v4662
    %v5879 = vpack.c.b16 %v4671, %v4663
    %v5880 = vpack.c.b16 %v4672, %v4664
    %v5881 = vpack.c.b16 %v4681, %v4673
    %v5882 = vpack.c.b16 %v4682, %v4674
    %v5883 = vpack.c.b16 %v4683, %v4675
    %v5884 = vpack.c.b16 %v4684, %v4676
    %v5885 = vpack.c.b16 %v4685, %v4677
    %v5886 = vpack.c.b16 %v4686, %v4678
    %v5887 = vpack.c.b16 %v4687, %v4679
    %v5888 = vpack.c.b16 %v4688, %v4680
    %v5889 = vpack.c.b16 %v4697, %v4689
    %v5890 = vpack.c.b16 %v4698, %v4690
    %v5891 = vpack.c.b16 %v4699, %v4691
    %v5892 = vpack.c.b16 %v4700, %v4692
    %v5893 = vpack.c.b16 %v4701, %v4693
    %v5894 = vpack.c.b16 %v4702, %v4694
    %v5895 = vpack.c.b16 %v4703, %v4695
    %v5896 = vpack.c.b16 %v4704, %v4696
    %v5897 = vpack.c.b16 %v4713, %v4705
    %v5898 = vpack.c.b16 %v4714, %v4706
    %v5899 = vpack.c.b16 %v4715, %v4707
    %v5900 = vpack.c.b16 %v4716, %v4708
    %v5901 = vpack.c.b16 %v4717, %v4709
    %v5902 = vpack.c.b16 %v4718, %v4710
    %v5903 = vpack.c.b16 %v4719, %v4711
    %v5904 = vpack.c.b16 %v4720, %v4712
    %v5905 = vpack.c.b16 %v4729, %v4721
    %v5906 = vpack.c.b16 %v4730, %v4722
    %v5907 = vpack.c.b16 %v4731, %v4723
    %v5908 = vpack.c.b16 %v4732, %v4724
    %v5909 = vpack.c.b16 %v4733, %v4725
    %v5910 = vpack.c.b16 %v4734, %v4726
    %v5911 = vpack.c.b16 %v4735, %v4727
    %v5912 = vpack.c.b16 %v4736, %v4728
    %v5913 = vpack.c.b16 %v4745, %v4737
    %v5914 = vpack.c.b16 %v4746, %v4738
    %v5915 = vpack.c.b16 %v4747, %v4739
    %v5916 = vpack.c.b16 %v4748, %v4740
    %v5917 = vpack.c.b16 %v4749, %v4741
    %v5918 = vpack.c.b16 %v4750, %v4742
    %v5919 = vpack.c.b16 %v4751, %v4743
    %v5920 = vpack.c.b16 %v4752, %v4744
    %v5921 = vpack.c.b16 %v4761, %v4753
    %v5922 = vpack.c.b16 %v4762, %v4754
    %v5923 = vpack.c.b16 %v4763, %v4755
    %v5924 = vpack.c.b16 %v4764, %v4756
    %v5925 = vpack.c.b16 %v4765, %v4757
    %v5926 = vpack.c.b16 %v4766, %v4758
    %v5927 = vpack.c.b16 %v4767, %v4759
    %v5928 = vpack.c.b16 %v4768, %v4760
    %v5929 = vpack.c.b16 %v4777, %v4769
    %v5930 = vpack.c.b16 %v4778, %v4770
    %v5931 = vpack.c.b16 %v4779, %v4771
    %v5932 = vpack.c.b16 %v4780, %v4772
    %v5933 = vpack.c.b16 %v4781, %v4773
    %v5934 = vpack.c.b16 %v4782, %v4774
    %v5935 = vpack.c.b16 %v4783, %v4775
    %v5936 = vpack.c.b16 %v4784, %v4776
    %v5937 = vpack.c.b16 %v4793, %v4785
    %v5938 = vpack.c.b16 %v4794, %v4786
    %v5939 = vpack.c.b16 %v4795, %v4787
    %v5940 = vpack.c.b16 %v4796, %v4788
    %v5941 = vpack.c.b16 %v4797, %v4789
    %v5942 = vpack.c.b16 %v4798, %v4790
    %v5943 = vpack.c.b16 %v4799, %v4791
    %v5944 = vpack.c.b16 %v4800, %v4792
    %v5945 = vpack.c.b16 %v4809, %v4801
    %v5946 = vpack.c.b16 %v4810, %v4802
    %v5947 = vpack.c.b16 %v4811, %v4803
    %v5948 = vpack.c.b16 %v4812, %v4804
    %v5949 = vpack.c.b16 %v4813, %v4805
    %v5950 = vpack.c.b16 %v4814, %v4806
    %v5951 = vpack.c.b16 %v4815, %v4807
    %v5952 = vpack.c.b16 %v4816, %v4808
    %v5953 = vpack.c.b16 %v4825, %v4817
    %v5954 = vpack.c.b16 %v4826, %v4818
    %v5955 = vpack.c.b16 %v4827, %v4819
    %v5956 = vpack.c.b16 %v4828, %v4820
    %v5957 = vpack.c.b16 %v4829, %v4821
    %v5958 = vpack.c.b16 %v4830, %v4822
    %v5959 = vpack.c.b16 %v4831, %v4823
    %v5960 = vpack.c.b16 %v4832, %v4824
    %v5961 = vpack.c.b16 %v4841, %v4833
    %v5962 = vpack.c.b16 %v4842, %v4834
    %v5963 = vpack.c.b16 %v4843, %v4835
    %v5964 = vpack.c.b16 %v4844, %v4836
    %v5965 = vpack.c.b16 %v4845, %v4837
    %v5966 = vpack.c.b16 %v4846, %v4838
    %v5967 = vpack.c.b16 %v4847, %v4839
    %v5968 = vpack.c.b16 %v4848, %v4840
    %v5969 = vpack.c.b16 %v4857, %v4849
    %v5970 = vpack.c.b16 %v4858, %v4850
    %v5971 = vpack.c.b16 %v4859, %v4851
    %v5972 = vpack.c.b16 %v4860, %v4852
    %v5973 = vpack.c.b16 %v4861, %v4853
    %v5974 = vpack.c.b16 %v4862, %v4854
    %v5975 = vpack.c.b16 %v4863, %v4855
    %v5976 = vpack.c.b16 %v4864, %v4856
    %v5977 = vpack.c.b16 %v4873, %v4865
    %v5978 = vpack.c.b16 %v4874, %v4866
    %v5979 = vpack.c.b16 %v4875, %v4867
    %v5980 = vpack.c.b16 %v4876, %v4868
    %v5981 = vpack.c.b16 %v4877, %v4869
    %v5982 = vpack.c.b16 %v4878, %v4870
    %v5983 = vpack.c.b16 %v4879, %v4871
    %v5984 = vpack.c.b16 %v4880, %v4872
    %v5985 = vpack.c.b16 %v4889, %v4881
    %v5986 = vpack.c.b16 %v4890, %v4882
    %v5987 = vpack.c.b16 %v4891, %v4883
    %v5988 = vpack.c.b16 %v4892, %v4884
    %v5989 = vpack.c.b16 %v4893, %v4885
    %v5990 = vpack.c.b16 %v4894, %v4886
    %v5991 = vpack.c.b16 %v4895, %v4887
    %v5992 = vpack.c.b16 %v4896, %v4888
    %v5993 = vpack.c.b16 %v4905, %v4897
    %v5994 = vpack.c.b16 %v4906, %v4898
    %v5995 = vpack.c.b16 %v4907, %v4899
    %v5996 = vpack.c.b16 %v4908, %v4900
    %v5997 = vpack.c.b16 %v4909, %v4901
    %v5998 = vpack.c.b16 %v4910, %v4902
    %v5999 = vpack.c.b16 %v4911, %v4903
    %v6000 = vpack.c.b16 %v4912, %v4904
    %v6001 = vpack.c.b16 %v4921, %v4913
    %v6002 = vpack.c.b16 %v4922, %v4914
    %v6003 = vpack.c.b16 %v4923, %v4915
    %v6004 = vpack.c.b16 %v4924, %v4916
    %v6005 = vpack.c.b16 %v4925, %v4917
    %v6006 = vpack.c.b16 %v4926, %v4918
    %v6007 = vpack.c.b16 %v4927, %v4919
    %v6008 = vpack.c.b16 %v4928, %v4920
    %v6009 = vpack.c.b16 %v4937, %v4929
    %v6010 = vpack.c.b16 %v4938, %v4930
    %v6011 = vpack.c.b16 %v4939, %v4931
    %v6012 = vpack.c.b16 %v4940, %v4932
    %v6013 = vpack.c.b16 %v4941, %v4933
    %v6014 = vpack.c.b16 %v4942, %v4934
    %v6015 = vpack.c.b16 %v4943, %v4935
    %v6016 = vpack.c.b16 %v4944, %v4936
    %v6017 = vpack.c.b16 %v4953, %v4945
    %v6018 = vpack.c.b16 %v4954, %v4946
    %v6019 = vpack.c.b16 %v4955, %v4947
    %v6020 = vpack.c.b16 %v4956, %v4948
    %v6021 = vpack.c.b16 %v4957, %v4949
    %v6022 = vpack.c.b16 %v4958, %v4950
    %v6023 = vpack.c.b16 %v4959, %v4951
    %v6024 = vpack.c.b16 %v4960, %v4952
    %v6025 = vpack.c.b16 %v4969, %v4961
    %v6026 = vpack.c.b16 %v4970, %v4962
    %v6027 = vpack.c.b16 %v4971, %v4963
    %v6028 = vpack.c.b16 %v4972, %v4964
    %v6029 = vpack.c.b16 %v4973, %v4965
    %v6030 = vpack.c.b16 %v4974, %v4966
    %v6031 = vpack.c.b16 %v4975, %v4967
    %v6032 = vpack.c.b16 %v4976, %v4968
    %v6033 = vpack.c.b16 %v4985, %v4977
    %v6034 = vpack.c.b16 %v4986, %v4978
    %v6035 = vpack.c.b16 %v4987, %v4979
    %v6036 = vpack.c.b16 %v4988, %v4980
    %v6037 = vpack.c.b16 %v4989, %v4981
    %v6038 = vpack.c.b16 %v4990, %v4982
    %v6039 = vpack.c.b16 %v4991, %v4983
    %v6040 = vpack.c.b16 %v4992, %v4984
    %v6041 = vpack.c.b16 %v5001, %v4993
    %v6042 = vpack.c.b16 %v5002, %v4994
    %v6043 = vpack.c.b16 %v5003, %v4995
    %v6044 = vpack.c.b16 %v5004, %v4996
    %v6045 = vpack.c.b16 %v5005, %v4997
    %v6046 = vpack.c.b16 %v5006, %v4998
    %v6047 = vpack.c.b16 %v5007, %v4999
    %v6048 = vpack.c.b16 %v5008, %v5000
    %v6049 = vpack.c.b16 %v5017, %v5009
    %v6050 = vpack.c.b16 %v5018, %v5010
    %v6051 = vpack.c.b16 %v5019, %v5011
    %v6052 = vpack.c.b16 %v5020, %v5012
    %v6053 = vpack.c.b16 %v5021, %v5013
    %v6054 = vpack.c.b16 %v5022, %v5014
    %v6055 = vpack.c.b16 %v5023, %v5015
    %v6056 = vpack.c.b16 %v5024, %v5016
    %v6057 = vpack.c.b16 %v5033, %v5025
    %v6058 = vpack.c.b16 %v5034, %v5026
    %v6059 = vpack.c.b16 %v5035, %v5027
    %v6060 = vpack.c.b16 %v5036, %v5028
    %v6061 = vpack.c.b16 %v5037, %v5029
    %v6062 = vpack.c.b16 %v5038, %v5030
    %v6063 = vpack.c.b16 %v5039, %v5031
    %v6064 = vpack.c.b16 %v5040, %v5032
    %7089 = vmatprep.subr.bf16.mxu0 %v5042
    %7090 = vmatpush1.bf16.msra.mxu0 %v5041
    %7091 = vmatprep.subr.bf16.mxu0 %v5050
    %7092 = vmatpush1.bf16.msra.mxu0 %v5049
    %7093 = vmatprep.subr.bf16.mxu0 %v5058
    %7094 = vmatpush1.bf16.msra.mxu0 %v5057
    %7095 = vmatprep.subr.bf16.mxu0 %v5066
    %7096 = vmatpush1.bf16.msra.mxu0 %v5065
    %7097 = vmatprep.subr.bf16.mxu0 %v5074
    %7098 = vmatpush1.bf16.msra.mxu0 %v5073
    %7099 = vmatprep.subr.bf16.mxu0 %v5082
    %7100 = vmatpush1.bf16.msra.mxu0 %v5081
    %7101 = vmatprep.subr.bf16.mxu0 %v5090
    %7102 = vmatpush1.bf16.msra.mxu0 %v5089
    %7103 = vmatprep.subr.bf16.mxu0 %v5098
    %7104 = vmatpush1.bf16.msra.mxu0 %v5097
    %7105 = vmatprep.subr.bf16.mxu0 %v5106
    %7106 = vmatpush1.bf16.msra.mxu0 %v5105
    %7107 = vmatprep.subr.bf16.mxu0 %v5114
    %7108 = vmatpush1.bf16.msra.mxu0 %v5113
    %7109 = vmatprep.subr.bf16.mxu0 %v5122
    %7110 = vmatpush1.bf16.msra.mxu0 %v5121
    %7111 = vmatprep.subr.bf16.mxu0 %v5130
    %7112 = vmatpush1.bf16.msra.mxu0 %v5129
    %7113 = vmatprep.subr.bf16.mxu0 %v5138
    %7114 = vmatpush1.bf16.msra.mxu0 %v5137
    %7115 = vmatprep.subr.bf16.mxu0 %v5146
    %7116 = vmatpush1.bf16.msra.mxu0 %v5145
    %7117 = vmatprep.subr.bf16.mxu0 %v5154
    %7118 = vmatpush1.bf16.msra.mxu0 %v5153
    %7119 = vmatprep.subr.bf16.mxu0 %v5162
    %7120 = vmatpush1.bf16.msra.mxu0 %v5161
    %7121 = vmatprep.mubr.bf16.mxu0 %v888
    %7122 = vmatmul.mubr.bf16.gmra.mrb[0].mxu0 %v887
    %v7123 = vpop.f32.mrb[0].mxu0
    %v7124 = vadd.f32 %v1932, %v7123
    %v7125 = vpop.f32.mrb[0].mxu0
    %v7126 = vadd.f32 %v1936, %v7125
    %v7127 = vpop.f32.mrb[0].mxu0
    %v7128 = vpop.f32.mrb[0].mxu0
    %7129 = vdwg.mxu0
    %7130 = vmatprep.subr.bf16.mxu0 %v5170
    %7131 = vmatpush1.bf16.msra.mxu0 %v5169
    %7132 = vmatprep.subr.bf16.mxu0 %v5178
    %7133 = vmatpush1.bf16.msra.mxu0 %v5177
    %7134 = vmatprep.subr.bf16.mxu0 %v5186
    %7135 = vmatpush1.bf16.msra.mxu0 %v5185
    %7136 = vmatprep.subr.bf16.mxu0 %v5194
    %7137 = vmatpush1.bf16.msra.mxu0 %v5193
    %7138 = vmatprep.subr.bf16.mxu0 %v5202
    %7139 = vmatpush1.bf16.msra.mxu0 %v5201
    %7140 = vmatprep.subr.bf16.mxu0 %v5210
    %7141 = vmatpush1.bf16.msra.mxu0 %v5209
    %7142 = vmatprep.subr.bf16.mxu0 %v5218
    %7143 = vmatpush1.bf16.msra.mxu0 %v5217
    %7144 = vmatprep.subr.bf16.mxu0 %v5226
    %7145 = vmatpush1.bf16.msra.mxu0 %v5225
    %7146 = vmatprep.subr.bf16.mxu0 %v5234
    %7147 = vmatpush1.bf16.msra.mxu0 %v5233
    %7148 = vmatprep.subr.bf16.mxu0 %v5242
    %7149 = vmatpush1.bf16.msra.mxu0 %v5241
    %7150 = vmatprep.subr.bf16.mxu0 %v5250
    %7151 = vmatpush1.bf16.msra.mxu0 %v5249
    %7152 = vmatprep.subr.bf16.mxu0 %v5258
    %7153 = vmatpush1.bf16.msra.mxu0 %v5257
    %7154 = vmatprep.subr.bf16.mxu0 %v5266
    %7155 = vmatpush1.bf16.msra.mxu0 %v5265
    %7156 = vmatprep.subr.bf16.mxu0 %v5274
    %7157 = vmatpush1.bf16.msra.mxu0 %v5273
    %7158 = vmatprep.subr.bf16.mxu0 %v5282
    %7159 = vmatpush1.bf16.msra.mxu0 %v5281
    %7160 = vmatprep.subr.bf16.mxu0 %v5290
    %7161 = vmatpush1.bf16.msra.mxu0 %v5289
    %7162 = vmatprep.mubr.bf16.mxu0 %v890
    %7163 = vmatmul.mubr.bf16.gmra.mrb[0].mxu0 %v889
    %v7164 = vpop.f32.mrb[0].mxu0
    %v7165 = vadd.f32 %v7124, %v7164
    %v7166 = vpop.f32.mrb[0].mxu0
    %v7167 = vadd.f32 %v7126, %v7166
    %v7168 = vpop.f32.mrb[0].mxu0
    %v7169 = vpop.f32.mrb[0].mxu0
    %7170 = vdwg.mxu0
    %7171 = vmatprep.subr.bf16.mxu0 %v5298
    %7172 = vmatpush1.bf16.msra.mxu0 %v5297
    %7173 = vmatprep.subr.bf16.mxu0 %v5306
    %7174 = vmatpush1.bf16.msra.mxu0 %v5305
    %7175 = vmatprep.subr.bf16.mxu0 %v5314
    %7176 = vmatpush1.bf16.msra.mxu0 %v5313
    %7177 = vmatprep.subr.bf16.mxu0 %v5322
    %7178 = vmatpush1.bf16.msra.mxu0 %v5321
    %7179 = vmatprep.subr.bf16.mxu0 %v5330
    %7180 = vmatpush1.bf16.msra.mxu0 %v5329
    %7181 = vmatprep.subr.bf16.mxu0 %v5338
    %7182 = vmatpush1.bf16.msra.mxu0 %v5337
    %7183 = vmatprep.subr.bf16.mxu0 %v5346
    %7184 = vmatpush1.bf16.msra.mxu0 %v5345
    %7185 = vmatprep.subr.bf16.mxu0 %v5354
    %7186 = vmatpush1.bf16.msra.mxu0 %v5353
    %7187 = vmatprep.subr.bf16.mxu0 %v5362
    %7188 = vmatpush1.bf16.msra.mxu0 %v5361
    %7189 = vmatprep.subr.bf16.mxu0 %v5370
    %7190 = vmatpush1.bf16.msra.mxu0 %v5369
    %7191 = vmatprep.subr.bf16.mxu0 %v5378
    %7192 = vmatpush1.bf16.msra.mxu0 %v5377
    %7193 = vmatprep.subr.bf16.mxu0 %v5386
    %7194 = vmatpush1.bf16.msra.mxu0 %v5385
    %7195 = vmatprep.subr.bf16.mxu0 %v5394
    %7196 = vmatpush1.bf16.msra.mxu0 %v5393
    %7197 = vmatprep.subr.bf16.mxu0 %v5402
    %7198 = vmatpush1.bf16.msra.mxu0 %v5401
    %7199 = vmatprep.subr.bf16.mxu0 %v5410
    %7200 = vmatpush1.bf16.msra.mxu0 %v5409
    %7201 = vmatprep.subr.bf16.mxu0 %v5418
    %7202 = vmatpush1.bf16.msra.mxu0 %v5417
    %7203 = vmatprep.mubr.bf16.mxu0 %v892
    %7204 = vmatmul.mubr.bf16.gmra.mrb[0].mxu0 %v891
    %v7205 = vpop.f32.mrb[0].mxu0
    %v7206 = vadd.f32 %v7165, %v7205
    %v7207 = vpop.f32.mrb[0].mxu0
    %v7208 = vadd.f32 %v7167, %v7207
    %v7209 = vpop.f32.mrb[0].mxu0
    %v7210 = vpop.f32.mrb[0].mxu0
    %7211 = vdwg.mxu0
    %7212 = vmatprep.subr.bf16.mxu0 %v5426
    %7213 = vmatpush1.bf16.msra.mxu0 %v5425
    %7214 = vmatprep.subr.bf16.mxu0 %v5434
    %7215 = vmatpush1.bf16.msra.mxu0 %v5433
    %7216 = vmatprep.subr.bf16.mxu0 %v5442
    %7217 = vmatpush1.bf16.msra.mxu0 %v5441
    %7218 = vmatprep.subr.bf16.mxu0 %v5450
    %7219 = vmatpush1.bf16.msra.mxu0 %v5449
    %7220 = vmatprep.subr.bf16.mxu0 %v5458
    %7221 = vmatpush1.bf16.msra.mxu0 %v5457
    %7222 = vmatprep.subr.bf16.mxu0 %v5466
    %7223 = vmatpush1.bf16.msra.mxu0 %v5465
    %7224 = vmatprep.subr.bf16.mxu0 %v5474
    %7225 = vmatpush1.bf16.msra.mxu0 %v5473
    %7226 = vmatprep.subr.bf16.mxu0 %v5482
    %7227 = vmatpush1.bf16.msra.mxu0 %v5481
    %7228 = vmatprep.subr.bf16.mxu0 %v5490
    %7229 = vmatpush1.bf16.msra.mxu0 %v5489
    %7230 = vmatprep.subr.bf16.mxu0 %v5498
    %7231 = vmatpush1.bf16.msra.mxu0 %v5497
    %7232 = vmatprep.subr.bf16.mxu0 %v5506
    %7233 = vmatpush1.bf16.msra.mxu0 %v5505
    %7234 = vmatprep.subr.bf16.mxu0 %v5514
    %7235 = vmatpush1.bf16.msra.mxu0 %v5513
    %7236 = vmatprep.subr.bf16.mxu0 %v5522
    %7237 = vmatpush1.bf16.msra.mxu0 %v5521
    %7238 = vmatprep.subr.bf16.mxu0 %v5530
    %7239 = vmatpush1.bf16.msra.mxu0 %v5529
    %7240 = vmatprep.subr.bf16.mxu0 %v5538
    %7241 = vmatpush1.bf16.msra.mxu0 %v5537
    %7242 = vmatprep.subr.bf16.mxu0 %v5546
    %7243 = vmatpush1.bf16.msra.mxu0 %v5545
    %7244 = vmatprep.mubr.bf16.mxu0 %v894
    %7245 = vmatmul.mubr.bf16.gmra.mrb[0].mxu0 %v893
    %v7246 = vpop.f32.mrb[0].mxu0
    %v7247 = vadd.f32 %v7206, %v7246
    %v7248 = vpop.f32.mrb[0].mxu0
    %v7249 = vadd.f32 %v7208, %v7248
    %v7250 = vpop.f32.mrb[0].mxu0
    %v7251 = vpop.f32.mrb[0].mxu0
    %7252 = vdwg.mxu0
    %7253 = vmatprep.subr.bf16.mxu0 %v5554
    %7254 = vmatpush1.bf16.msra.mxu0 %v5553
    %7255 = vmatprep.subr.bf16.mxu0 %v5562
    %7256 = vmatpush1.bf16.msra.mxu0 %v5561
    %7257 = vmatprep.subr.bf16.mxu0 %v5570
    %7258 = vmatpush1.bf16.msra.mxu0 %v5569
    %7259 = vmatprep.subr.bf16.mxu0 %v5578
    %7260 = vmatpush1.bf16.msra.mxu0 %v5577
    %7261 = vmatprep.subr.bf16.mxu0 %v5586
    %7262 = vmatpush1.bf16.msra.mxu0 %v5585
    %7263 = vmatprep.subr.bf16.mxu0 %v5594
    %7264 = vmatpush1.bf16.msra.mxu0 %v5593
    %7265 = vmatprep.subr.bf16.mxu0 %v5602
    %7266 = vmatpush1.bf16.msra.mxu0 %v5601
    %7267 = vmatprep.subr.bf16.mxu0 %v5610
    %7268 = vmatpush1.bf16.msra.mxu0 %v5609
    %7269 = vmatprep.subr.bf16.mxu0 %v5618
    %7270 = vmatpush1.bf16.msra.mxu0 %v5617
    %7271 = vmatprep.subr.bf16.mxu0 %v5626
    %7272 = vmatpush1.bf16.msra.mxu0 %v5625
    %7273 = vmatprep.subr.bf16.mxu0 %v5634
    %7274 = vmatpush1.bf16.msra.mxu0 %v5633
    %7275 = vmatprep.subr.bf16.mxu0 %v5642
    %7276 = vmatpush1.bf16.msra.mxu0 %v5641
    %7277 = vmatprep.subr.bf16.mxu0 %v5650
    %7278 = vmatpush1.bf16.msra.mxu0 %v5649
    %7279 = vmatprep.subr.bf16.mxu0 %v5658
    %7280 = vmatpush1.bf16.msra.mxu0 %v5657
    %7281 = vmatprep.subr.bf16.mxu0 %v5666
    %7282 = vmatpush1.bf16.msra.mxu0 %v5665
    %7283 = vmatprep.subr.bf16.mxu0 %v5674
    %7284 = vmatpush1.bf16.msra.mxu0 %v5673
    %7285 = vmatprep.mubr.bf16.mxu0 %v896
    %7286 = vmatmul.mubr.bf16.gmra.mrb[0].mxu0 %v895
    %v7287 = vpop.f32.mrb[0].mxu0
    %v7288 = vadd.f32 %v7247, %v7287
    %v7289 = vpop.f32.mrb[0].mxu0
    %v7290 = vadd.f32 %v7249, %v7289
    %v7291 = vpop.f32.mrb[0].mxu0
    %v7292 = vpop.f32.mrb[0].mxu0
    %7293 = vdwg.mxu0
    %7294 = vmatprep.subr.bf16.mxu0 %v5682
    %7295 = vmatpush1.bf16.msra.mxu0 %v5681
    %7296 = vmatprep.subr.bf16.mxu0 %v5690
    %7297 = vmatpush1.bf16.msra.mxu0 %v5689
    %7298 = vmatprep.subr.bf16.mxu0 %v5698
    %7299 = vmatpush1.bf16.msra.mxu0 %v5697
    %7300 = vmatprep.subr.bf16.mxu0 %v5706
    %7301 = vmatpush1.bf16.msra.mxu0 %v5705
    %7302 = vmatprep.subr.bf16.mxu0 %v5714
    %7303 = vmatpush1.bf16.msra.mxu0 %v5713
    %7304 = vmatprep.subr.bf16.mxu0 %v5722
    %7305 = vmatpush1.bf16.msra.mxu0 %v5721
    %7306 = vmatprep.subr.bf16.mxu0 %v5730
    %7307 = vmatpush1.bf16.msra.mxu0 %v5729
    %7308 = vmatprep.subr.bf16.mxu0 %v5738
    %7309 = vmatpush1.bf16.msra.mxu0 %v5737
    %7310 = vmatprep.subr.bf16.mxu0 %v5746
    %7311 = vmatpush1.bf16.msra.mxu0 %v5745
    %7312 = vmatprep.subr.bf16.mxu0 %v5754
    %7313 = vmatpush1.bf16.msra.mxu0 %v5753
    %7314 = vmatprep.subr.bf16.mxu0 %v5762
    %7315 = vmatpush1.bf16.msra.mxu0 %v5761
    %7316 = vmatprep.subr.bf16.mxu0 %v5770
    %7317 = vmatpush1.bf16.msra.mxu0 %v5769
    %7318 = vmatprep.subr.bf16.mxu0 %v5778
    %7319 = vmatpush1.bf16.msra.mxu0 %v5777
    %7320 = vmatprep.subr.bf16.mxu0 %v5786
    %7321 = vmatpush1.bf16.msra.mxu0 %v5785
    %7322 = vmatprep.subr.bf16.mxu0 %v5794
    %7323 = vmatpush1.bf16.msra.mxu0 %v5793
    %7324 = vmatprep.subr.bf16.mxu0 %v5802
    %7325 = vmatpush1.bf16.msra.mxu0 %v5801
    %7326 = vmatprep.mubr.bf16.mxu0 %v898
    %7327 = vmatmul.mubr.bf16.gmra.mrb[0].mxu0 %v897
    %v7328 = vpop.f32.mrb[0].mxu0
    %v7329 = vadd.f32 %v7288, %v7328
    %v7330 = vpop.f32.mrb[0].mxu0
    %v7331 = vadd.f32 %v7290, %v7330
    %v7332 = vpop.f32.mrb[0].mxu0
    %v7333 = vpop.f32.mrb[0].mxu0
    %7334 = vdwg.mxu0
    %7335 = vmatprep.subr.bf16.mxu0 %v5810
    %7336 = vmatpush1.bf16.msra.mxu0 %v5809
    %7337 = vmatprep.subr.bf16.mxu0 %v5818
    %7338 = vmatpush1.bf16.msra.mxu0 %v5817
    %7339 = vmatprep.subr.bf16.mxu0 %v5826
    %7340 = vmatpush1.bf16.msra.mxu0 %v5825
    %7341 = vmatprep.subr.bf16.mxu0 %v5834
    %7342 = vmatpush1.bf16.msra.mxu0 %v5833
    %7343 = vmatprep.subr.bf16.mxu0 %v5842
    %7344 = vmatpush1.bf16.msra.mxu0 %v5841
    %7345 = vmatprep.subr.bf16.mxu0 %v5850
    %7346 = vmatpush1.bf16.msra.mxu0 %v5849
    %7347 = vmatprep.subr.bf16.mxu0 %v5858
    %7348 = vmatpush1.bf16.msra.mxu0 %v5857
    %7349 = vmatprep.subr.bf16.mxu0 %v5866
    %7350 = vmatpush1.bf16.msra.mxu0 %v5865
    %7351 = vmatprep.subr.bf16.mxu0 %v5874
    %7352 = vmatpush1.bf16.msra.mxu0 %v5873
    %7353 = vmatprep.subr.bf16.mxu0 %v5882
    %7354 = vmatpush1.bf16.msra.mxu0 %v5881
    %7355 = vmatprep.subr.bf16.mxu0 %v5890
    %7356 = vmatpush1.bf16.msra.mxu0 %v5889
    %7357 = vmatprep.subr.bf16.mxu0 %v5898
    %7358 = vmatpush1.bf16.msra.mxu0 %v5897
    %7359 = vmatprep.subr.bf16.mxu0 %v5906
    %7360 = vmatpush1.bf16.msra.mxu0 %v5905
    %7361 = vmatprep.subr.bf16.mxu0 %v5914
    %7362 = vmatpush1.bf16.msra.mxu0 %v5913
    %7363 = vmatprep.subr.bf16.mxu0 %v5922
    %7364 = vmatpush1.bf16.msra.mxu0 %v5921
    %7365 = vmatprep.subr.bf16.mxu0 %v5930
    %7366 = vmatpush1.bf16.msra.mxu0 %v5929
    %7367 = vmatprep.mubr.bf16.mxu0 %v900
    %7368 = vmatmul.mubr.bf16.gmra.mrb[0].mxu0 %v899
    %v7369 = vpop.f32.mrb[0].mxu0
    %v7370 = vadd.f32 %v7329, %v7369
    %v7371 = vpop.f32.mrb[0].mxu0
    %v7372 = vadd.f32 %v7331, %v7371
    %v7373 = vpop.f32.mrb[0].mxu0
    %v7374 = vpop.f32.mrb[0].mxu0
    %7375 = vdwg.mxu0
    %7376 = vmatprep.subr.bf16.mxu0 %v5938
    %7377 = vmatpush1.bf16.msra.mxu0 %v5937
    %7378 = vmatprep.subr.bf16.mxu0 %v5946
    %7379 = vmatpush1.bf16.msra.mxu0 %v5945
    %7380 = vmatprep.subr.bf16.mxu0 %v5954
    %7381 = vmatpush1.bf16.msra.mxu0 %v5953
    %7382 = vmatprep.subr.bf16.mxu0 %v5962
    %7383 = vmatpush1.bf16.msra.mxu0 %v5961
    %7384 = vmatprep.subr.bf16.mxu0 %v5970
    %7385 = vmatpush1.bf16.msra.mxu0 %v5969
    %7386 = vmatprep.subr.bf16.mxu0 %v5978
    %7387 = vmatpush1.bf16.msra.mxu0 %v5977
    %7388 = vmatprep.subr.bf16.mxu0 %v5986
    %7389 = vmatpush1.bf16.msra.mxu0 %v5985
    %7390 = vmatprep.subr.bf16.mxu0 %v5994
    %7391 = vmatpush1.bf16.msra.mxu0 %v5993
    %7392 = vmatprep.subr.bf16.mxu0 %v6002
    %7393 = vmatpush1.bf16.msra.mxu0 %v6001
    %7394 = vmatprep.subr.bf16.mxu0 %v6010
    %7395 = vmatpush1.bf16.msra.mxu0 %v6009
    %7396 = vmatprep.subr.bf16.mxu0 %v6018
    %7397 = vmatpush1.bf16.msra.mxu0 %v6017
    %7398 = vmatprep.subr.bf16.mxu0 %v6026
    %7399 = vmatpush1.bf16.msra.mxu0 %v6025
    %7400 = vmatprep.subr.bf16.mxu0 %v6034
    %7401 = vmatpush1.bf16.msra.mxu0 %v6033
    %7402 = vmatprep.subr.bf16.mxu0 %v6042
    %7403 = vmatpush1.bf16.msra.mxu0 %v6041
    %7404 = vmatprep.subr.bf16.mxu0 %v6050
    %7405 = vmatpush1.bf16.msra.mxu0 %v6049
    %7406 = vmatprep.subr.bf16.mxu0 %v6058
    %7407 = vmatpush1.bf16.msra.mxu0 %v6057
    %7408 = vmatprep.mubr.bf16.mxu0 %v902
    %7409 = vmatmul.mubr.bf16.gmra.mrb[0].mxu0 %v901
    %v7410 = vpop.f32.mrb[0].mxu0
    %v7411 = vadd.f32 %v7370, %v7410
    %v7412 = vpop.f32.mrb[0].mxu0
    %v7413 = vadd.f32 %v7372, %v7412
    %v7414 = vpop.f32.mrb[0].mxu0
    %v7415 = vpop.f32.mrb[0].mxu0
    %7416 = vdwg.mxu0
    %7417 = vmatprep.subr.bf16.mxu0 %v5044
    %7418 = vmatpush1.bf16.msra.mxu0 %v5043
    %7419 = vmatprep.subr.bf16.mxu0 %v5052
    %7420 = vmatpush1.bf16.msra.mxu0 %v5051
    %7421 = vmatprep.subr.bf16.mxu0 %v5060
    %7422 = vmatpush1.bf16.msra.mxu0 %v5059
    %7423 = vmatprep.subr.bf16.mxu0 %v5068
    %7424 = vmatpush1.bf16.msra.mxu0 %v5067
    %7425 = vmatprep.subr.bf16.mxu0 %v5076
    %7426 = vmatpush1.bf16.msra.mxu0 %v5075
    %7427 = vmatprep.subr.bf16.mxu0 %v5084
    %7428 = vmatpush1.bf16.msra.mxu0 %v5083
    %7429 = vmatprep.subr.bf16.mxu0 %v5092
    %7430 = vmatpush1.bf16.msra.mxu0 %v5091
    %7431 = vmatprep.subr.bf16.mxu0 %v5100
    %7432 = vmatpush1.bf16.msra.mxu0 %v5099
    %7433 = vmatprep.subr.bf16.mxu0 %v5108
    %7434 = vmatpush1.bf16.msra.mxu0 %v5107
    %7435 = vmatprep.subr.bf16.mxu0 %v5116
    %7436 = vmatpush1.bf16.msra.mxu0 %v5115
    %7437 = vmatprep.subr.bf16.mxu0 %v5124
    %7438 = vmatpush1.bf16.msra.mxu0 %v5123
    %7439 = vmatprep.subr.bf16.mxu0 %v5132
    %7440 = vmatpush1.bf16.msra.mxu0 %v5131
    %7441 = vmatprep.subr.bf16.mxu0 %v5140
    %7442 = vmatpush1.bf16.msra.mxu0 %v5139
    %7443 = vmatprep.subr.bf16.mxu0 %v5148
    %7444 = vmatpush1.bf16.msra.mxu0 %v5147
    %7445 = vmatprep.subr.bf16.mxu0 %v5156
    %7446 = vmatpush1.bf16.msra.mxu0 %v5155
    %7447 = vmatprep.subr.bf16.mxu0 %v5164
    %7448 = vmatpush1.bf16.msra.mxu0 %v5163
    %7449 = vmatprep.mubr.bf16.mxu0 %v888
    %7450 = vmatmul.mubr.bf16.gmra.mrb[0].mxu0 %v887
    %v7451 = vpop.f32.mrb[0].mxu0
    %v7452 = vadd.f32 %v1940, %v7451
    %v7453 = vpop.f32.mrb[0].mxu0
    %v7454 = vadd.f32 %v1944, %v7453
    %v7455 = vpop.f32.mrb[0].mxu0
    %v7456 = vpop.f32.mrb[0].mxu0
    %7457 = vdwg.mxu0
    %7458 = vmatprep.subr.bf16.mxu0 %v5172
    %7459 = vmatpush1.bf16.msra.mxu0 %v5171
    %7460 = vmatprep.subr.bf16.mxu0 %v5180
    %7461 = vmatpush1.bf16.msra.mxu0 %v5179
    %7462 = vmatprep.subr.bf16.mxu0 %v5188
    %7463 = vmatpush1.bf16.msra.mxu0 %v5187
    %7464 = vmatprep.subr.bf16.mxu0 %v5196
    %7465 = vmatpush1.bf16.msra.mxu0 %v5195
    %7466 = vmatprep.subr.bf16.mxu0 %v5204
    %7467 = vmatpush1.bf16.msra.mxu0 %v5203
    %7468 = vmatprep.subr.bf16.mxu0 %v5212
    %7469 = vmatpush1.bf16.msra.mxu0 %v5211
    %7470 = vmatprep.subr.bf16.mxu0 %v5220
    %7471 = vmatpush1.bf16.msra.mxu0 %v5219
    %7472 = vmatprep.subr.bf16.mxu0 %v5228
    %7473 = vmatpush1.bf16.msra.mxu0 %v5227
    %7474 = vmatprep.subr.bf16.mxu0 %v5236
    %7475 = vmatpush1.bf16.msra.mxu0 %v5235
    %7476 = vmatprep.subr.bf16.mxu0 %v5244
    %7477 = vmatpush1.bf16.msra.mxu0 %v5243
    %7478 = vmatprep.subr.bf16.mxu0 %v5252
    %7479 = vmatpush1.bf16.msra.mxu0 %v5251
    %7480 = vmatprep.subr.bf16.mxu0 %v5260
    %7481 = vmatpush1.bf16.msra.mxu0 %v5259
    %7482 = vmatprep.subr.bf16.mxu0 %v5268
    %7483 = vmatpush1.bf16.msra.mxu0 %v5267
    %7484 = vmatprep.subr.bf16.mxu0 %v5276
    %7485 = vmatpush1.bf16.msra.mxu0 %v5275
    %7486 = vmatprep.subr.bf16.mxu0 %v5284
    %7487 = vmatpush1.bf16.msra.mxu0 %v5283
    %7488 = vmatprep.subr.bf16.mxu0 %v5292
    %7489 = vmatpush1.bf16.msra.mxu0 %v5291
    %7490 = vmatprep.mubr.bf16.mxu0 %v890
    %7491 = vmatmul.mubr.bf16.gmra.mrb[0].mxu0 %v889
    %v7492 = vpop.f32.mrb[0].mxu0
    %v7493 = vadd.f32 %v7452, %v7492
    %v7494 = vpop.f32.mrb[0].mxu0
    %v7495 = vadd.f32 %v7454, %v7494
    %v7496 = vpop.f32.mrb[0].mxu0
    %v7497 = vpop.f32.mrb[0].mxu0
    %7498 = vdwg.mxu0
    %7499 = vmatprep.subr.bf16.mxu0 %v5300
    %7500 = vmatpush1.bf16.msra.mxu0 %v5299
    %7501 = vmatprep.subr.bf16.mxu0 %v5308
    %7502 = vmatpush1.bf16.msra.mxu0 %v5307
    %7503 = vmatprep.subr.bf16.mxu0 %v5316
    %7504 = vmatpush1.bf16.msra.mxu0 %v5315
    %7505 = vmatprep.subr.bf16.mxu0 %v5324
    %7506 = vmatpush1.bf16.msra.mxu0 %v5323
    %7507 = vmatprep.subr.bf16.mxu0 %v5332
    %7508 = vmatpush1.bf16.msra.mxu0 %v5331
    %7509 = vmatprep.subr.bf16.mxu0 %v5340
    %7510 = vmatpush1.bf16.msra.mxu0 %v5339
    %7511 = vmatprep.subr.bf16.mxu0 %v5348
    %7512 = vmatpush1.bf16.msra.mxu0 %v5347
    %7513 = vmatprep.subr.bf16.mxu0 %v5356
    %7514 = vmatpush1.bf16.msra.mxu0 %v5355
    %7515 = vmatprep.subr.bf16.mxu0 %v5364
    %7516 = vmatpush1.bf16.msra.mxu0 %v5363
    %7517 = vmatprep.subr.bf16.mxu0 %v5372
    %7518 = vmatpush1.bf16.msra.mxu0 %v5371
    %7519 = vmatprep.subr.bf16.mxu0 %v5380
    %7520 = vmatpush1.bf16.msra.mxu0 %v5379
    %7521 = vmatprep.subr.bf16.mxu0 %v5388
    %7522 = vmatpush1.bf16.msra.mxu0 %v5387
    %7523 = vmatprep.subr.bf16.mxu0 %v5396
    %7524 = vmatpush1.bf16.msra.mxu0 %v5395
    %7525 = vmatprep.subr.bf16.mxu0 %v5404
    %7526 = vmatpush1.bf16.msra.mxu0 %v5403
    %7527 = vmatprep.subr.bf16.mxu0 %v5412
    %7528 = vmatpush1.bf16.msra.mxu0 %v5411
    %7529 = vmatprep.subr.bf16.mxu0 %v5420
    %7530 = vmatpush1.bf16.msra.mxu0 %v5419
    %7531 = vmatprep.mubr.bf16.mxu0 %v892
    %7532 = vmatmul.mubr.bf16.gmra.mrb[0].mxu0 %v891
    %v7533 = vpop.f32.mrb[0].mxu0
    %v7534 = vadd.f32 %v7493, %v7533
    %v7535 = vpop.f32.mrb[0].mxu0
    %v7536 = vadd.f32 %v7495, %v7535
    %v7537 = vpop.f32.mrb[0].mxu0
    %v7538 = vpop.f32.mrb[0].mxu0
    %7539 = vdwg.mxu0
    %7540 = vmatprep.subr.bf16.mxu0 %v5428
    %7541 = vmatpush1.bf16.msra.mxu0 %v5427
    %7542 = vmatprep.subr.bf16.mxu0 %v5436
    %7543 = vmatpush1.bf16.msra.mxu0 %v5435
    %7544 = vmatprep.subr.bf16.mxu0 %v5444
    %7545 = vmatpush1.bf16.msra.mxu0 %v5443
    %7546 = vmatprep.subr.bf16.mxu0 %v5452
    %7547 = vmatpush1.bf16.msra.mxu0 %v5451
    %7548 = vmatprep.subr.bf16.mxu0 %v5460
    %7549 = vmatpush1.bf16.msra.mxu0 %v5459
    %7550 = vmatprep.subr.bf16.mxu0 %v5468
    %7551 = vmatpush1.bf16.msra.mxu0 %v5467
    %7552 = vmatprep.subr.bf16.mxu0 %v5476
    %7553 = vmatpush1.bf16.msra.mxu0 %v5475
    %7554 = vmatprep.subr.bf16.mxu0 %v5484
    %7555 = vmatpush1.bf16.msra.mxu0 %v5483
    %7556 = vmatprep.subr.bf16.mxu0 %v5492
    %7557 = vmatpush1.bf16.msra.mxu0 %v5491
    %7558 = vmatprep.subr.bf16.mxu0 %v5500
    %7559 = vmatpush1.bf16.msra.mxu0 %v5499
    %7560 = vmatprep.subr.bf16.mxu0 %v5508
    %7561 = vmatpush1.bf16.msra.mxu0 %v5507
    %7562 = vmatprep.subr.bf16.mxu0 %v5516
    %7563 = vmatpush1.bf16.msra.mxu0 %v5515
    %7564 = vmatprep.subr.bf16.mxu0 %v5524
    %7565 = vmatpush1.bf16.msra.mxu0 %v5523
    %7566 = vmatprep.subr.bf16.mxu0 %v5532
    %7567 = vmatpush1.bf16.msra.mxu0 %v5531
    %7568 = vmatprep.subr.bf16.mxu0 %v5540
    %7569 = vmatpush1.bf16.msra.mxu0 %v5539
    %7570 = vmatprep.subr.bf16.mxu0 %v5548
    %7571 = vmatpush1.bf16.msra.mxu0 %v5547
    %7572 = vmatprep.mubr.bf16.mxu0 %v894
    %7573 = vmatmul.mubr.bf16.gmra.mrb[0].mxu0 %v893
    %v7574 = vpop.f32.mrb[0].mxu0
    %v7575 = vadd.f32 %v7534, %v7574
    %v7576 = vpop.f32.mrb[0].mxu0
    %v7577 = vadd.f32 %v7536, %v7576
    %v7578 = vpop.f32.mrb[0].mxu0
    %v7579 = vpop.f32.mrb[0].mxu0
    %7580 = vdwg.mxu0
    %7581 = vmatprep.subr.bf16.mxu0 %v5556
    %7582 = vmatpush1.bf16.msra.mxu0 %v5555
    %7583 = vmatprep.subr.bf16.mxu0 %v5564
    %7584 = vmatpush1.bf16.msra.mxu0 %v5563
    %7585 = vmatprep.subr.bf16.mxu0 %v5572
    %7586 = vmatpush1.bf16.msra.mxu0 %v5571
    %7587 = vmatprep.subr.bf16.mxu0 %v5580
    %7588 = vmatpush1.bf16.msra.mxu0 %v5579
    %7589 = vmatprep.subr.bf16.mxu0 %v5588
    %7590 = vmatpush1.bf16.msra.mxu0 %v5587
    %7591 = vmatprep.subr.bf16.mxu0 %v5596
    %7592 = vmatpush1.bf16.msra.mxu0 %v5595
    %7593 = vmatprep.subr.bf16.mxu0 %v5604
    %7594 = vmatpush1.bf16.msra.mxu0 %v5603
    %7595 = vmatprep.subr.bf16.mxu0 %v5612
    %7596 = vmatpush1.bf16.msra.mxu0 %v5611
    %7597 = vmatprep.subr.bf16.mxu0 %v5620
    %7598 = vmatpush1.bf16.msra.mxu0 %v5619
    %7599 = vmatprep.subr.bf16.mxu0 %v5628
    %7600 = vmatpush1.bf16.msra.mxu0 %v5627
    %7601 = vmatprep.subr.bf16.mxu0 %v5636
    %7602 = vmatpush1.bf16.msra.mxu0 %v5635
    %7603 = vmatprep.subr.bf16.mxu0 %v5644
    %7604 = vmatpush1.bf16.msra.mxu0 %v5643
    %7605 = vmatprep.subr.bf16.mxu0 %v5652
    %7606 = vmatpush1.bf16.msra.mxu0 %v5651
    %7607 = vmatprep.subr.bf16.mxu0 %v5660
    %7608 = vmatpush1.bf16.msra.mxu0 %v5659
    %7609 = vmatprep.subr.bf16.mxu0 %v5668
    %7610 = vmatpush1.bf16.msra.mxu0 %v5667
    %7611 = vmatprep.subr.bf16.mxu0 %v5676
    %7612 = vmatpush1.bf16.msra.mxu0 %v5675
    %7613 = vmatprep.mubr.bf16.mxu0 %v896
    %7614 = vmatmul.mubr.bf16.gmra.mrb[0].mxu0 %v895
    %v7615 = vpop.f32.mrb[0].mxu0
    %v7616 = vadd.f32 %v7575, %v7615
    %v7617 = vpop.f32.mrb[0].mxu0
    %v7618 = vadd.f32 %v7577, %v7617
    %v7619 = vpop.f32.mrb[0].mxu0
    %v7620 = vpop.f32.mrb[0].mxu0
    %7621 = vdwg.mxu0
    %7622 = vmatprep.subr.bf16.mxu0 %v5684
    %7623 = vmatpush1.bf16.msra.mxu0 %v5683
    %7624 = vmatprep.subr.bf16.mxu0 %v5692
    %7625 = vmatpush1.bf16.msra.mxu0 %v5691
    %7626 = vmatprep.subr.bf16.mxu0 %v5700
    %7627 = vmatpush1.bf16.msra.mxu0 %v5699
    %7628 = vmatprep.subr.bf16.mxu0 %v5708
    %7629 = vmatpush1.bf16.msra.mxu0 %v5707
    %7630 = vmatprep.subr.bf16.mxu0 %v5716
    %7631 = vmatpush1.bf16.msra.mxu0 %v5715
    %7632 = vmatprep.subr.bf16.mxu0 %v5724
    %7633 = vmatpush1.bf16.msra.mxu0 %v5723
    %7634 = vmatprep.subr.bf16.mxu0 %v5732
    %7635 = vmatpush1.bf16.msra.mxu0 %v5731
    %7636 = vmatprep.subr.bf16.mxu0 %v5740
    %7637 = vmatpush1.bf16.msra.mxu0 %v5739
    %7638 = vmatprep.subr.bf16.mxu0 %v5748
    %7639 = vmatpush1.bf16.msra.mxu0 %v5747
    %7640 = vmatprep.subr.bf16.mxu0 %v5756
    %7641 = vmatpush1.bf16.msra.mxu0 %v5755
    %7642 = vmatprep.subr.bf16.mxu0 %v5764
    %7643 = vmatpush1.bf16.msra.mxu0 %v5763
    %7644 = vmatprep.subr.bf16.mxu0 %v5772
    %7645 = vmatpush1.bf16.msra.mxu0 %v5771
    %7646 = vmatprep.subr.bf16.mxu0 %v5780
    %7647 = vmatpush1.bf16.msra.mxu0 %v5779
    %7648 = vmatprep.subr.bf16.mxu0 %v5788
    %7649 = vmatpush1.bf16.msra.mxu0 %v5787
    %7650 = vmatprep.subr.bf16.mxu0 %v5796
    %7651 = vmatpush1.bf16.msra.mxu0 %v5795
    %7652 = vmatprep.subr.bf16.mxu0 %v5804
    %7653 = vmatpush1.bf16.msra.mxu0 %v5803
    %7654 = vmatprep.mubr.bf16.mxu0 %v898
    %7655 = vmatmul.mubr.bf16.gmra.mrb[0].mxu0 %v897
    %v7656 = vpop.f32.mrb[0].mxu0
    %v7657 = vadd.f32 %v7616, %v7656
    %v7658 = vpop.f32.mrb[0].mxu0
    %v7659 = vadd.f32 %v7618, %v7658
    %v7660 = vpop.f32.mrb[0].mxu0
    %v7661 = vpop.f32.mrb[0].mxu0
    %7662 = vdwg.mxu0
    %7663 = vmatprep.subr.bf16.mxu0 %v5812
    %7664 = vmatpush1.bf16.msra.mxu0 %v5811
    %7665 = vmatprep.subr.bf16.mxu0 %v5820
    %7666 = vmatpush1.bf16.msra.mxu0 %v5819
    %7667 = vmatprep.subr.bf16.mxu0 %v5828
    %7668 = vmatpush1.bf16.msra.mxu0 %v5827
    %7669 = vmatprep.subr.bf16.mxu0 %v5836
    %7670 = vmatpush1.bf16.msra.mxu0 %v5835
    %7671 = vmatprep.subr.bf16.mxu0 %v5844
    %7672 = vmatpush1.bf16.msra.mxu0 %v5843
    %7673 = vmatprep.subr.bf16.mxu0 %v5852
    %7674 = vmatpush1.bf16.msra.mxu0 %v5851
    %7675 = vmatprep.subr.bf16.mxu0 %v5860
    %7676 = vmatpush1.bf16.msra.mxu0 %v5859
    %7677 = vmatprep.subr.bf16.mxu0 %v5868
    %7678 = vmatpush1.bf16.msra.mxu0 %v5867
    %7679 = vmatprep.subr.bf16.mxu0 %v5876
    %7680 = vmatpush1.bf16.msra.mxu0 %v5875
    %7681 = vmatprep.subr.bf16.mxu0 %v5884
    %7682 = vmatpush1.bf16.msra.mxu0 %v5883
    %7683 = vmatprep.subr.bf16.mxu0 %v5892
    %7684 = vmatpush1.bf16.msra.mxu0 %v5891
    %7685 = vmatprep.subr.bf16.mxu0 %v5900
    %7686 = vmatpush1.bf16.msra.mxu0 %v5899
    %7687 = vmatprep.subr.bf16.mxu0 %v5908
    %7688 = vmatpush1.bf16.msra.mxu0 %v5907
    %7689 = vmatprep.subr.bf16.mxu0 %v5916
    %7690 = vmatpush1.bf16.msra.mxu0 %v5915
    %7691 = vmatprep.subr.bf16.mxu0 %v5924
    %7692 = vmatpush1.bf16.msra.mxu0 %v5923
    %7693 = vmatprep.subr.bf16.mxu0 %v5932
    %7694 = vmatpush1.bf16.msra.mxu0 %v5931
    %7695 = vmatprep.mubr.bf16.mxu0 %v900
    %7696 = vmatmul.mubr.bf16.gmra.mrb[0].mxu0 %v899
    %v7697 = vpop.f32.mrb[0].mxu0
    %v7698 = vadd.f32 %v7657, %v7697
    %v7699 = vpop.f32.mrb[0].mxu0
    %v7700 = vadd.f32 %v7659, %v7699
    %v7701 = vpop.f32.mrb[0].mxu0
    %v7702 = vpop.f32.mrb[0].mxu0
    %7703 = vdwg.mxu0
    %7704 = vmatprep.subr.bf16.mxu0 %v5940
    %7705 = vmatpush1.bf16.msra.mxu0 %v5939
    %7706 = vmatprep.subr.bf16.mxu0 %v5948
    %7707 = vmatpush1.bf16.msra.mxu0 %v5947
    %7708 = vmatprep.subr.bf16.mxu0 %v5956
    %7709 = vmatpush1.bf16.msra.mxu0 %v5955
    %7710 = vmatprep.subr.bf16.mxu0 %v5964
    %7711 = vmatpush1.bf16.msra.mxu0 %v5963
    %7712 = vmatprep.subr.bf16.mxu0 %v5972
    %7713 = vmatpush1.bf16.msra.mxu0 %v5971
    %7714 = vmatprep.subr.bf16.mxu0 %v5980
    %7715 = vmatpush1.bf16.msra.mxu0 %v5979
    %7716 = vmatprep.subr.bf16.mxu0 %v5988
    %7717 = vmatpush1.bf16.msra.mxu0 %v5987
    %7718 = vmatprep.subr.bf16.mxu0 %v5996
    %7719 = vmatpush1.bf16.msra.mxu0 %v5995
    %7720 = vmatprep.subr.bf16.mxu0 %v6004
    %7721 = vmatpush1.bf16.msra.mxu0 %v6003
    %7722 = vmatprep.subr.bf16.mxu0 %v6012
    %7723 = vmatpush1.bf16.msra.mxu0 %v6011
    %7724 = vmatprep.subr.bf16.mxu0 %v6020
    %7725 = vmatpush1.bf16.msra.mxu0 %v6019
    %7726 = vmatprep.subr.bf16.mxu0 %v6028
    %7727 = vmatpush1.bf16.msra.mxu0 %v6027
    %7728 = vmatprep.subr.bf16.mxu0 %v6036
    %7729 = vmatpush1.bf16.msra.mxu0 %v6035
    %7730 = vmatprep.subr.bf16.mxu0 %v6044
    %7731 = vmatpush1.bf16.msra.mxu0 %v6043
    %7732 = vmatprep.subr.bf16.mxu0 %v6052
    %7733 = vmatpush1.bf16.msra.mxu0 %v6051
    %7734 = vmatprep.subr.bf16.mxu0 %v6060
    %7735 = vmatpush1.bf16.msra.mxu0 %v6059
    %7736 = vmatprep.mubr.bf16.mxu0 %v902
    %7737 = vmatmul.mubr.bf16.gmra.mrb[0].mxu0 %v901
    %v7738 = vpop.f32.mrb[0].mxu0
    %v7739 = vadd.f32 %v7698, %v7738
    %v7740 = vpop.f32.mrb[0].mxu0
    %v7741 = vadd.f32 %v7700, %v7740
    %v7742 = vpop.f32.mrb[0].mxu0
    %v7743 = vpop.f32.mrb[0].mxu0
    %7744 = vdwg.mxu0
    %7745 = vmatprep.subr.bf16.mxu0 %v5046
    %7746 = vmatpush1.bf16.msra.mxu0 %v5045
    %7747 = vmatprep.subr.bf16.mxu0 %v5054
    %7748 = vmatpush1.bf16.msra.mxu0 %v5053
    %7749 = vmatprep.subr.bf16.mxu0 %v5062
    %7750 = vmatpush1.bf16.msra.mxu0 %v5061
    %7751 = vmatprep.subr.bf16.mxu0 %v5070
    %7752 = vmatpush1.bf16.msra.mxu0 %v5069
    %7753 = vmatprep.subr.bf16.mxu0 %v5078
    %7754 = vmatpush1.bf16.msra.mxu0 %v5077
    %7755 = vmatprep.subr.bf16.mxu0 %v5086
    %7756 = vmatpush1.bf16.msra.mxu0 %v5085
    %7757 = vmatprep.subr.bf16.mxu0 %v5094
    %7758 = vmatpush1.bf16.msra.mxu0 %v5093
    %7759 = vmatprep.subr.bf16.mxu0 %v5102
    %7760 = vmatpush1.bf16.msra.mxu0 %v5101
    %7761 = vmatprep.subr.bf16.mxu0 %v5110
    %7762 = vmatpush1.bf16.msra.mxu0 %v5109
    %7763 = vmatprep.subr.bf16.mxu0 %v5118
    %7764 = vmatpush1.bf16.msra.mxu0 %v5117
    %7765 = vmatprep.subr.bf16.mxu0 %v5126
    %7766 = vmatpush1.bf16.msra.mxu0 %v5125
    %7767 = vmatprep.subr.bf16.mxu0 %v5134
    %7768 = vmatpush1.bf16.msra.mxu0 %v5133
    %7769 = vmatprep.subr.bf16.mxu0 %v5142
    %7770 = vmatpush1.bf16.msra.mxu0 %v5141
    %7771 = vmatprep.subr.bf16.mxu0 %v5150
    %7772 = vmatpush1.bf16.msra.mxu0 %v5149
    %7773 = vmatprep.subr.bf16.mxu0 %v5158
    %7774 = vmatpush1.bf16.msra.mxu0 %v5157
    %7775 = vmatprep.subr.bf16.mxu0 %v5166
    %7776 = vmatpush1.bf16.msra.mxu0 %v5165
    %7777 = vmatprep.mubr.bf16.mxu0 %v888
    %7778 = vmatmul.mubr.bf16.gmra.mrb[0].mxu0 %v887
    %v7779 = vpop.f32.mrb[0].mxu0
    %v7780 = vadd.f32 %v1948, %v7779
    %v7781 = vpop.f32.mrb[0].mxu0
    %v7782 = vadd.f32 %v1952, %v7781
    %v7783 = vpop.f32.mrb[0].mxu0
    %v7784 = vpop.f32.mrb[0].mxu0
    %7785 = vdwg.mxu0
    %7786 = vmatprep.subr.bf16.mxu0 %v5174
    %7787 = vmatpush1.bf16.msra.mxu0 %v5173
    %7788 = vmatprep.subr.bf16.mxu0 %v5182
    %7789 = vmatpush1.bf16.msra.mxu0 %v5181
    %7790 = vmatprep.subr.bf16.mxu0 %v5190
    %7791 = vmatpush1.bf16.msra.mxu0 %v5189
    %7792 = vmatprep.subr.bf16.mxu0 %v5198
    %7793 = vmatpush1.bf16.msra.mxu0 %v5197
    %7794 = vmatprep.subr.bf16.mxu0 %v5206
    %7795 = vmatpush1.bf16.msra.mxu0 %v5205
    %7796 = vmatprep.subr.bf16.mxu0 %v5214
    %7797 = vmatpush1.bf16.msra.mxu0 %v5213
    %7798 = vmatprep.subr.bf16.mxu0 %v5222
    %7799 = vmatpush1.bf16.msra.mxu0 %v5221
    %7800 = vmatprep.subr.bf16.mxu0 %v5230
    %7801 = vmatpush1.bf16.msra.mxu0 %v5229
    %7802 = vmatprep.subr.bf16.mxu0 %v5238
    %7803 = vmatpush1.bf16.msra.mxu0 %v5237
    %7804 = vmatprep.subr.bf16.mxu0 %v5246
    %7805 = vmatpush1.bf16.msra.mxu0 %v5245
    %7806 = vmatprep.subr.bf16.mxu0 %v5254
    %7807 = vmatpush1.bf16.msra.mxu0 %v5253
    %7808 = vmatprep.subr.bf16.mxu0 %v5262
    %7809 = vmatpush1.bf16.msra.mxu0 %v5261
    %7810 = vmatprep.subr.bf16.mxu0 %v5270
    %7811 = vmatpush1.bf16.msra.mxu0 %v5269
    %7812 = vmatprep.subr.bf16.mxu0 %v5278
    %7813 = vmatpush1.bf16.msra.mxu0 %v5277
    %7814 = vmatprep.subr.bf16.mxu0 %v5286
    %7815 = vmatpush1.bf16.msra.mxu0 %v5285
    %7816 = vmatprep.subr.bf16.mxu0 %v5294
    %7817 = vmatpush1.bf16.msra.mxu0 %v5293
    %7818 = vmatprep.mubr.bf16.mxu0 %v890
    %7819 = vmatmul.mubr.bf16.gmra.mrb[0].mxu0 %v889
    %v7820 = vpop.f32.mrb[0].mxu0
    %v7821 = vadd.f32 %v7780, %v7820
    %v7822 = vpop.f32.mrb[0].mxu0
    %v7823 = vadd.f32 %v7782, %v7822
    %v7824 = vpop.f32.mrb[0].mxu0
    %v7825 = vpop.f32.mrb[0].mxu0
    %7826 = vdwg.mxu0
    %7827 = vmatprep.subr.bf16.mxu0 %v5302
    %7828 = vmatpush1.bf16.msra.mxu0 %v5301
    %7829 = vmatprep.subr.bf16.mxu0 %v5310
    %7830 = vmatpush1.bf16.msra.mxu0 %v5309
    %7831 = vmatprep.subr.bf16.mxu0 %v5318
    %7832 = vmatpush1.bf16.msra.mxu0 %v5317
    %7833 = vmatprep.subr.bf16.mxu0 %v5326
    %7834 = vmatpush1.bf16.msra.mxu0 %v5325
    %7835 = vmatprep.subr.bf16.mxu0 %v5334
    %7836 = vmatpush1.bf16.msra.mxu0 %v5333
    %7837 = vmatprep.subr.bf16.mxu0 %v5342
    %7838 = vmatpush1.bf16.msra.mxu0 %v5341
    %7839 = vmatprep.subr.bf16.mxu0 %v5350
    %7840 = vmatpush1.bf16.msra.mxu0 %v5349
    %7841 = vmatprep.subr.bf16.mxu0 %v5358
    %7842 = vmatpush1.bf16.msra.mxu0 %v5357
    %7843 = vmatprep.subr.bf16.mxu0 %v5366
    %7844 = vmatpush1.bf16.msra.mxu0 %v5365
    %7845 = vmatprep.subr.bf16.mxu0 %v5374
    %7846 = vmatpush1.bf16.msra.mxu0 %v5373
    %7847 = vmatprep.subr.bf16.mxu0 %v5382
    %7848 = vmatpush1.bf16.msra.mxu0 %v5381
    %7849 = vmatprep.subr.bf16.mxu0 %v5390
    %7850 = vmatpush1.bf16.msra.mxu0 %v5389
    %7851 = vmatprep.subr.bf16.mxu0 %v5398
    %7852 = vmatpush1.bf16.msra.mxu0 %v5397
    %7853 = vmatprep.subr.bf16.mxu0 %v5406
    %7854 = vmatpush1.bf16.msra.mxu0 %v5405
    %7855 = vmatprep.subr.bf16.mxu0 %v5414
    %7856 = vmatpush1.bf16.msra.mxu0 %v5413
    %7857 = vmatprep.subr.bf16.mxu0 %v5422
    %7858 = vmatpush1.bf16.msra.mxu0 %v5421
    %7859 = vmatprep.mubr.bf16.mxu0 %v892
    %7860 = vmatmul.mubr.bf16.gmra.mrb[0].mxu0 %v891
    %v7861 = vpop.f32.mrb[0].mxu0
    %v7862 = vadd.f32 %v7821, %v7861
    %v7863 = vpop.f32.mrb[0].mxu0
    %v7864 = vadd.f32 %v7823, %v7863
    %v7865 = vpop.f32.mrb[0].mxu0
    %v7866 = vpop.f32.mrb[0].mxu0
    %7867 = vdwg.mxu0
    %7868 = vmatprep.subr.bf16.mxu0 %v5430
    %7869 = vmatpush1.bf16.msra.mxu0 %v5429
    %7870 = vmatprep.subr.bf16.mxu0 %v5438
    %7871 = vmatpush1.bf16.msra.mxu0 %v5437
    %7872 = vmatprep.subr.bf16.mxu0 %v5446
    %7873 = vmatpush1.bf16.msra.mxu0 %v5445
    %7874 = vmatprep.subr.bf16.mxu0 %v5454
    %7875 = vmatpush1.bf16.msra.mxu0 %v5453
    %7876 = vmatprep.subr.bf16.mxu0 %v5462
    %7877 = vmatpush1.bf16.msra.mxu0 %v5461
    %7878 = vmatprep.subr.bf16.mxu0 %v5470
    %7879 = vmatpush1.bf16.msra.mxu0 %v5469
    %7880 = vmatprep.subr.bf16.mxu0 %v5478
    %7881 = vmatpush1.bf16.msra.mxu0 %v5477
    %7882 = vmatprep.subr.bf16.mxu0 %v5486
    %7883 = vmatpush1.bf16.msra.mxu0 %v5485
    %7884 = vmatprep.subr.bf16.mxu0 %v5494
    %7885 = vmatpush1.bf16.msra.mxu0 %v5493
    %7886 = vmatprep.subr.bf16.mxu0 %v5502
    %7887 = vmatpush1.bf16.msra.mxu0 %v5501
    %7888 = vmatprep.subr.bf16.mxu0 %v5510
    %7889 = vmatpush1.bf16.msra.mxu0 %v5509
    %7890 = vmatprep.subr.bf16.mxu0 %v5518
    %7891 = vmatpush1.bf16.msra.mxu0 %v5517
    %7892 = vmatprep.subr.bf16.mxu0 %v5526
    %7893 = vmatpush1.bf16.msra.mxu0 %v5525
    %7894 = vmatprep.subr.bf16.mxu0 %v5534
    %7895 = vmatpush1.bf16.msra.mxu0 %v5533
    %7896 = vmatprep.subr.bf16.mxu0 %v5542
    %7897 = vmatpush1.bf16.msra.mxu0 %v5541
    %7898 = vmatprep.subr.bf16.mxu0 %v5550
    %7899 = vmatpush1.bf16.msra.mxu0 %v5549
    %7900 = vmatprep.mubr.bf16.mxu0 %v894
    %7901 = vmatmul.mubr.bf16.gmra.mrb[0].mxu0 %v893
    %v7902 = vpop.f32.mrb[0].mxu0
    %v7903 = vadd.f32 %v7862, %v7902
    %v7904 = vpop.f32.mrb[0].mxu0
    %v7905 = vadd.f32 %v7864, %v7904
    %v7906 = vpop.f32.mrb[0].mxu0
    %v7907 = vpop.f32.mrb[0].mxu0
    %7908 = vdwg.mxu0
    %7909 = vmatprep.subr.bf16.mxu0 %v5558
    %7910 = vmatpush1.bf16.msra.mxu0 %v5557
    %7911 = vmatprep.subr.bf16.mxu0 %v5566
    %7912 = vmatpush1.bf16.msra.mxu0 %v5565
    %7913 = vmatprep.subr.bf16.mxu0 %v5574
    %7914 = vmatpush1.bf16.msra.mxu0 %v5573
    %7915 = vmatprep.subr.bf16.mxu0 %v5582
    %7916 = vmatpush1.bf16.msra.mxu0 %v5581
    %7917 = vmatprep.subr.bf16.mxu0 %v5590
    %7918 = vmatpush1.bf16.msra.mxu0 %v5589
    %7919 = vmatprep.subr.bf16.mxu0 %v5598
    %7920 = vmatpush1.bf16.msra.mxu0 %v5597
    %7921 = vmatprep.subr.bf16.mxu0 %v5606
    %7922 = vmatpush1.bf16.msra.mxu0 %v5605
    %7923 = vmatprep.subr.bf16.mxu0 %v5614
    %7924 = vmatpush1.bf16.msra.mxu0 %v5613
    %7925 = vmatprep.subr.bf16.mxu0 %v5622
    %7926 = vmatpush1.bf16.msra.mxu0 %v5621
    %7927 = vmatprep.subr.bf16.mxu0 %v5630
    %7928 = vmatpush1.bf16.msra.mxu0 %v5629
    %7929 = vmatprep.subr.bf16.mxu0 %v5638
    %7930 = vmatpush1.bf16.msra.mxu0 %v5637
    %7931 = vmatprep.subr.bf16.mxu0 %v5646
    %7932 = vmatpush1.bf16.msra.mxu0 %v5645
    %7933 = vmatprep.subr.bf16.mxu0 %v5654
    %7934 = vmatpush1.bf16.msra.mxu0 %v5653
    %7935 = vmatprep.subr.bf16.mxu0 %v5662
    %7936 = vmatpush1.bf16.msra.mxu0 %v5661
    %7937 = vmatprep.subr.bf16.mxu0 %v5670
    %7938 = vmatpush1.bf16.msra.mxu0 %v5669
    %7939 = vmatprep.subr.bf16.mxu0 %v5678
    %7940 = vmatpush1.bf16.msra.mxu0 %v5677
    %7941 = vmatprep.mubr.bf16.mxu0 %v896
    %7942 = vmatmul.mubr.bf16.gmra.mrb[0].mxu0 %v895
    %v7943 = vpop.f32.mrb[0].mxu0
    %v7944 = vadd.f32 %v7903, %v7943
    %v7945 = vpop.f32.mrb[0].mxu0
    %v7946 = vadd.f32 %v7905, %v7945
    %v7947 = vpop.f32.mrb[0].mxu0
    %v7948 = vpop.f32.mrb[0].mxu0
    %7949 = vdwg.mxu0
    %7950 = vmatprep.subr.bf16.mxu0 %v5686
    %7951 = vmatpush1.bf16.msra.mxu0 %v5685
    %7952 = vmatprep.subr.bf16.mxu0 %v5694
    %7953 = vmatpush1.bf16.msra.mxu0 %v5693
    %7954 = vmatprep.subr.bf16.mxu0 %v5702
    %7955 = vmatpush1.bf16.msra.mxu0 %v5701
    %7956 = vmatprep.subr.bf16.mxu0 %v5710
    %7957 = vmatpush1.bf16.msra.mxu0 %v5709
    %7958 = vmatprep.subr.bf16.mxu0 %v5718
    %7959 = vmatpush1.bf16.msra.mxu0 %v5717
    %7960 = vmatprep.subr.bf16.mxu0 %v5726
    %7961 = vmatpush1.bf16.msra.mxu0 %v5725
    %7962 = vmatprep.subr.bf16.mxu0 %v5734
    %7963 = vmatpush1.bf16.msra.mxu0 %v5733
    %7964 = vmatprep.subr.bf16.mxu0 %v5742
    %7965 = vmatpush1.bf16.msra.mxu0 %v5741
    %7966 = vmatprep.subr.bf16.mxu0 %v5750
    %7967 = vmatpush1.bf16.msra.mxu0 %v5749
    %7968 = vmatprep.subr.bf16.mxu0 %v5758
    %7969 = vmatpush1.bf16.msra.mxu0 %v5757
    %7970 = vmatprep.subr.bf16.mxu0 %v5766
    %7971 = vmatpush1.bf16.msra.mxu0 %v5765
    %7972 = vmatprep.subr.bf16.mxu0 %v5774
    %7973 = vmatpush1.bf16.msra.mxu0 %v5773
    %7974 = vmatprep.subr.bf16.mxu0 %v5782
    %7975 = vmatpush1.bf16.msra.mxu0 %v5781
    %7976 = vmatprep.subr.bf16.mxu0 %v5790
    %7977 = vmatpush1.bf16.msra.mxu0 %v5789
    %7978 = vmatprep.subr.bf16.mxu0 %v5798
    %7979 = vmatpush1.bf16.msra.mxu0 %v5797
    %7980 = vmatprep.subr.bf16.mxu0 %v5806
    %7981 = vmatpush1.bf16.msra.mxu0 %v5805
    %7982 = vmatprep.mubr.bf16.mxu0 %v898
    %7983 = vmatmul.mubr.bf16.gmra.mrb[0].mxu0 %v897
    %v7984 = vpop.f32.mrb[0].mxu0
    %v7985 = vadd.f32 %v7944, %v7984
    %v7986 = vpop.f32.mrb[0].mxu0
    %v7987 = vadd.f32 %v7946, %v7986
    %v7988 = vpop.f32.mrb[0].mxu0
    %v7989 = vpop.f32.mrb[0].mxu0
    %7990 = vdwg.mxu0
    %7991 = vmatprep.subr.bf16.mxu0 %v5814
    %7992 = vmatpush1.bf16.msra.mxu0 %v5813
    %7993 = vmatprep.subr.bf16.mxu0 %v5822
    %7994 = vmatpush1.bf16.msra.mxu0 %v5821
    %7995 = vmatprep.subr.bf16.mxu0 %v5830
    %7996 = vmatpush1.bf16.msra.mxu0 %v5829
    %7997 = vmatprep.subr.bf16.mxu0 %v5838
    %7998 = vmatpush1.bf16.msra.mxu0 %v5837
    %7999 = vmatprep.subr.bf16.mxu0 %v5846
    %8000 = vmatpush1.bf16.msra.mxu0 %v5845
    %8001 = vmatprep.subr.bf16.mxu0 %v5854
    %8002 = vmatpush1.bf16.msra.mxu0 %v5853
    %8003 = vmatprep.subr.bf16.mxu0 %v5862
    %8004 = vmatpush1.bf16.msra.mxu0 %v5861
    %8005 = vmatprep.subr.bf16.mxu0 %v5870
    %8006 = vmatpush1.bf16.msra.mxu0 %v5869
    %8007 = vmatprep.subr.bf16.mxu0 %v5878
    %8008 = vmatpush1.bf16.msra.mxu0 %v5877
    %8009 = vmatprep.subr.bf16.mxu0 %v5886
    %8010 = vmatpush1.bf16.msra.mxu0 %v5885
    %8011 = vmatprep.subr.bf16.mxu0 %v5894
    %8012 = vmatpush1.bf16.msra.mxu0 %v5893
    %8013 = vmatprep.subr.bf16.mxu0 %v5902
    %8014 = vmatpush1.bf16.msra.mxu0 %v5901
    %8015 = vmatprep.subr.bf16.mxu0 %v5910
    %8016 = vmatpush1.bf16.msra.mxu0 %v5909
    %8017 = vmatprep.subr.bf16.mxu0 %v5918
    %8018 = vmatpush1.bf16.msra.mxu0 %v5917
    %8019 = vmatprep.subr.bf16.mxu0 %v5926
    %8020 = vmatpush1.bf16.msra.mxu0 %v5925
    %8021 = vmatprep.subr.bf16.mxu0 %v5934
    %8022 = vmatpush1.bf16.msra.mxu0 %v5933
    %8023 = vmatprep.mubr.bf16.mxu0 %v900
    %8024 = vmatmul.mubr.bf16.gmra.mrb[0].mxu0 %v899
    %v8025 = vpop.f32.mrb[0].mxu0
    %v8026 = vadd.f32 %v7985, %v8025
    %v8027 = vpop.f32.mrb[0].mxu0
    %v8028 = vadd.f32 %v7987, %v8027
    %v8029 = vpop.f32.mrb[0].mxu0
    %v8030 = vpop.f32.mrb[0].mxu0
    %8031 = vdwg.mxu0
    %8032 = vmatprep.subr.bf16.mxu0 %v5942
    %8033 = vmatpush1.bf16.msra.mxu0 %v5941
    %8034 = vmatprep.subr.bf16.mxu0 %v5950
    %8035 = vmatpush1.bf16.msra.mxu0 %v5949
    %8036 = vmatprep.subr.bf16.mxu0 %v5958
    %8037 = vmatpush1.bf16.msra.mxu0 %v5957
    %8038 = vmatprep.subr.bf16.mxu0 %v5966
    %8039 = vmatpush1.bf16.msra.mxu0 %v5965
    %8040 = vmatprep.subr.bf16.mxu0 %v5974
    %8041 = vmatpush1.bf16.msra.mxu0 %v5973
    %8042 = vmatprep.subr.bf16.mxu0 %v5982
    %8043 = vmatpush1.bf16.msra.mxu0 %v5981
    %8044 = vmatprep.subr.bf16.mxu0 %v5990
    %8045 = vmatpush1.bf16.msra.mxu0 %v5989
    %8046 = vmatprep.subr.bf16.mxu0 %v5998
    %8047 = vmatpush1.bf16.msra.mxu0 %v5997
    %8048 = vmatprep.subr.bf16.mxu0 %v6006
    %8049 = vmatpush1.bf16.msra.mxu0 %v6005
    %8050 = vmatprep.subr.bf16.mxu0 %v6014
    %8051 = vmatpush1.bf16.msra.mxu0 %v6013
    %8052 = vmatprep.subr.bf16.mxu0 %v6022
    %8053 = vmatpush1.bf16.msra.mxu0 %v6021
    %8054 = vmatprep.subr.bf16.mxu0 %v6030
    %8055 = vmatpush1.bf16.msra.mxu0 %v6029
    %8056 = vmatprep.subr.bf16.mxu0 %v6038
    %8057 = vmatpush1.bf16.msra.mxu0 %v6037
    %8058 = vmatprep.subr.bf16.mxu0 %v6046
    %8059 = vmatpush1.bf16.msra.mxu0 %v6045
    %8060 = vmatprep.subr.bf16.mxu0 %v6054
    %8061 = vmatpush1.bf16.msra.mxu0 %v6053
    %8062 = vmatprep.subr.bf16.mxu0 %v6062
    %8063 = vmatpush1.bf16.msra.mxu0 %v6061
    %8064 = vmatprep.mubr.bf16.mxu0 %v902
    %8065 = vmatmul.mubr.bf16.gmra.mrb[0].mxu0 %v901
    %v8066 = vpop.f32.mrb[0].mxu0
    %v8067 = vadd.f32 %v8026, %v8066
    %v8068 = vpop.f32.mrb[0].mxu0
    %v8069 = vadd.f32 %v8028, %v8068
    %v8070 = vpop.f32.mrb[0].mxu0
    %v8071 = vpop.f32.mrb[0].mxu0
    %8072 = vdwg.mxu0
    %8073 = vmatprep.subr.bf16.mxu0 %v5048
    %8074 = vmatpush1.bf16.msra.mxu0 %v5047
    %8075 = vmatprep.subr.bf16.mxu0 %v5056
    %8076 = vmatpush1.bf16.msra.mxu0 %v5055
    %8077 = vmatprep.subr.bf16.mxu0 %v5064
    %8078 = vmatpush1.bf16.msra.mxu0 %v5063
    %8079 = vmatprep.subr.bf16.mxu0 %v5072
    %8080 = vmatpush1.bf16.msra.mxu0 %v5071
    %8081 = vmatprep.subr.bf16.mxu0 %v5080
    %8082 = vmatpush1.bf16.msra.mxu0 %v5079
    %8083 = vmatprep.subr.bf16.mxu0 %v5088
    %8084 = vmatpush1.bf16.msra.mxu0 %v5087
    %8085 = vmatprep.subr.bf16.mxu0 %v5096
    %8086 = vmatpush1.bf16.msra.mxu0 %v5095
    %8087 = vmatprep.subr.bf16.mxu0 %v5104
    %8088 = vmatpush1.bf16.msra.mxu0 %v5103
    %8089 = vmatprep.subr.bf16.mxu0 %v5112
    %8090 = vmatpush1.bf16.msra.mxu0 %v5111
    %8091 = vmatprep.subr.bf16.mxu0 %v5120
    %8092 = vmatpush1.bf16.msra.mxu0 %v5119
    %8093 = vmatprep.subr.bf16.mxu0 %v5128
    %8094 = vmatpush1.bf16.msra.mxu0 %v5127
    %8095 = vmatprep.subr.bf16.mxu0 %v5136
    %8096 = vmatpush1.bf16.msra.mxu0 %v5135
    %8097 = vmatprep.subr.bf16.mxu0 %v5144
    %8098 = vmatpush1.bf16.msra.mxu0 %v5143
    %8099 = vmatprep.subr.bf16.mxu0 %v5152
    %8100 = vmatpush1.bf16.msra.mxu0 %v5151
    %8101 = vmatprep.subr.bf16.mxu0 %v5160
    %8102 = vmatpush1.bf16.msra.mxu0 %v5159
    %8103 = vmatprep.subr.bf16.mxu0 %v5168
    %8104 = vmatpush1.bf16.msra.mxu0 %v5167
    %8105 = vmatprep.mubr.bf16.mxu0 %v888
    %8106 = vmatmul.mubr.bf16.gmra.mrb[0].mxu0 %v887
    %v8107 = vpop.f32.mrb[0].mxu0
    %v8108 = vadd.f32 %v1956, %v8107
    %v8109 = vpop.f32.mrb[0].mxu0
    %v8110 = vadd.f32 %v1960, %v8109
    %v8111 = vpop.f32.mrb[0].mxu0
    %v8112 = vpop.f32.mrb[0].mxu0
    %8113 = vdwg.mxu0
    %8114 = vmatprep.subr.bf16.mxu0 %v5176
    %8115 = vmatpush1.bf16.msra.mxu0 %v5175
    %8116 = vmatprep.subr.bf16.mxu0 %v5184
    %8117 = vmatpush1.bf16.msra.mxu0 %v5183
    %8118 = vmatprep.subr.bf16.mxu0 %v5192
    %8119 = vmatpush1.bf16.msra.mxu0 %v5191
    %8120 = vmatprep.subr.bf16.mxu0 %v5200
    %8121 = vmatpush1.bf16.msra.mxu0 %v5199
    %8122 = vmatprep.subr.bf16.mxu0 %v5208
    %8123 = vmatpush1.bf16.msra.mxu0 %v5207
    %8124 = vmatprep.subr.bf16.mxu0 %v5216
    %8125 = vmatpush1.bf16.msra.mxu0 %v5215
    %8126 = vmatprep.subr.bf16.mxu0 %v5224
    %8127 = vmatpush1.bf16.msra.mxu0 %v5223
    %8128 = vmatprep.subr.bf16.mxu0 %v5232
    %8129 = vmatpush1.bf16.msra.mxu0 %v5231
    %8130 = vmatprep.subr.bf16.mxu0 %v5240
    %8131 = vmatpush1.bf16.msra.mxu0 %v5239
    %8132 = vmatprep.subr.bf16.mxu0 %v5248
    %8133 = vmatpush1.bf16.msra.mxu0 %v5247
    %8134 = vmatprep.subr.bf16.mxu0 %v5256
    %8135 = vmatpush1.bf16.msra.mxu0 %v5255
    %8136 = vmatprep.subr.bf16.mxu0 %v5264
    %8137 = vmatpush1.bf16.msra.mxu0 %v5263
    %8138 = vmatprep.subr.bf16.mxu0 %v5272
    %8139 = vmatpush1.bf16.msra.mxu0 %v5271
    %8140 = vmatprep.subr.bf16.mxu0 %v5280
    %8141 = vmatpush1.bf16.msra.mxu0 %v5279
    %8142 = vmatprep.subr.bf16.mxu0 %v5288
    %8143 = vmatpush1.bf16.msra.mxu0 %v5287
    %8144 = vmatprep.subr.bf16.mxu0 %v5296
    %8145 = vmatpush1.bf16.msra.mxu0 %v5295
    %8146 = vmatprep.mubr.bf16.mxu0 %v890
    %8147 = vmatmul.mubr.bf16.gmra.mrb[0].mxu0 %v889
    %v8148 = vpop.f32.mrb[0].mxu0
    %v8149 = vadd.f32 %v8108, %v8148
    %v8150 = vpop.f32.mrb[0].mxu0
    %v8151 = vadd.f32 %v8110, %v8150
    %v8152 = vpop.f32.mrb[0].mxu0
    %v8153 = vpop.f32.mrb[0].mxu0
    %8154 = vdwg.mxu0
    %8155 = vmatprep.subr.bf16.mxu0 %v5304
    %8156 = vmatpush1.bf16.msra.mxu0 %v5303
    %8157 = vmatprep.subr.bf16.mxu0 %v5312
    %8158 = vmatpush1.bf16.msra.mxu0 %v5311
    %8159 = vmatprep.subr.bf16.mxu0 %v5320
    %8160 = vmatpush1.bf16.msra.mxu0 %v5319
    %8161 = vmatprep.subr.bf16.mxu0 %v5328
    %8162 = vmatpush1.bf16.msra.mxu0 %v5327
    %8163 = vmatprep.subr.bf16.mxu0 %v5336
    %8164 = vmatpush1.bf16.msra.mxu0 %v5335
    %8165 = vmatprep.subr.bf16.mxu0 %v5344
    %8166 = vmatpush1.bf16.msra.mxu0 %v5343
    %8167 = vmatprep.subr.bf16.mxu0 %v5352
    %8168 = vmatpush1.bf16.msra.mxu0 %v5351
    %8169 = vmatprep.subr.bf16.mxu0 %v5360
    %8170 = vmatpush1.bf16.msra.mxu0 %v5359
    %8171 = vmatprep.subr.bf16.mxu0 %v5368
    %8172 = vmatpush1.bf16.msra.mxu0 %v5367
    %8173 = vmatprep.subr.bf16.mxu0 %v5376
    %8174 = vmatpush1.bf16.msra.mxu0 %v5375
    %8175 = vmatprep.subr.bf16.mxu0 %v5384
    %8176 = vmatpush1.bf16.msra.mxu0 %v5383
    %8177 = vmatprep.subr.bf16.mxu0 %v5392
    %8178 = vmatpush1.bf16.msra.mxu0 %v5391
    %8179 = vmatprep.subr.bf16.mxu0 %v5400
    %8180 = vmatpush1.bf16.msra.mxu0 %v5399
    %8181 = vmatprep.subr.bf16.mxu0 %v5408
    %8182 = vmatpush1.bf16.msra.mxu0 %v5407
    %8183 = vmatprep.subr.bf16.mxu0 %v5416
    %8184 = vmatpush1.bf16.msra.mxu0 %v5415
    %8185 = vmatprep.subr.bf16.mxu0 %v5424
    %8186 = vmatpush1.bf16.msra.mxu0 %v5423
    %8187 = vmatprep.mubr.bf16.mxu0 %v892
    %8188 = vmatmul.mubr.bf16.gmra.mrb[0].mxu0 %v891
    %v8189 = vpop.f32.mrb[0].mxu0
    %v8190 = vadd.f32 %v8149, %v8189
    %v8191 = vpop.f32.mrb[0].mxu0
    %v8192 = vadd.f32 %v8151, %v8191
    %v8193 = vpop.f32.mrb[0].mxu0
    %v8194 = vpop.f32.mrb[0].mxu0
    %8195 = vdwg.mxu0
    %8196 = vmatprep.subr.bf16.mxu0 %v5432
    %8197 = vmatpush1.bf16.msra.mxu0 %v5431
    %8198 = vmatprep.subr.bf16.mxu0 %v5440
    %8199 = vmatpush1.bf16.msra.mxu0 %v5439
    %8200 = vmatprep.subr.bf16.mxu0 %v5448
    %8201 = vmatpush1.bf16.msra.mxu0 %v5447
    %8202 = vmatprep.subr.bf16.mxu0 %v5456
    %8203 = vmatpush1.bf16.msra.mxu0 %v5455
    %8204 = vmatprep.subr.bf16.mxu0 %v5464
    %8205 = vmatpush1.bf16.msra.mxu0 %v5463
    %8206 = vmatprep.subr.bf16.mxu0 %v5472
    %8207 = vmatpush1.bf16.msra.mxu0 %v5471
    %8208 = vmatprep.subr.bf16.mxu0 %v5480
    %8209 = vmatpush1.bf16.msra.mxu0 %v5479
    %8210 = vmatprep.subr.bf16.mxu0 %v5488
    %8211 = vmatpush1.bf16.msra.mxu0 %v5487
    %8212 = vmatprep.subr.bf16.mxu0 %v5496
    %8213 = vmatpush1.bf16.msra.mxu0 %v5495
    %8214 = vmatprep.subr.bf16.mxu0 %v5504
    %8215 = vmatpush1.bf16.msra.mxu0 %v5503
    %8216 = vmatprep.subr.bf16.mxu0 %v5512
    %8217 = vmatpush1.bf16.msra.mxu0 %v5511
    %8218 = vmatprep.subr.bf16.mxu0 %v5520
    %8219 = vmatpush1.bf16.msra.mxu0 %v5519
    %8220 = vmatprep.subr.bf16.mxu0 %v5528
    %8221 = vmatpush1.bf16.msra.mxu0 %v5527
    %8222 = vmatprep.subr.bf16.mxu0 %v5536
    %8223 = vmatpush1.bf16.msra.mxu0 %v5535
    %8224 = vmatprep.subr.bf16.mxu0 %v5544
    %8225 = vmatpush1.bf16.msra.mxu0 %v5543
    %8226 = vmatprep.subr.bf16.mxu0 %v5552
    %8227 = vmatpush1.bf16.msra.mxu0 %v5551
    %8228 = vmatprep.mubr.bf16.mxu0 %v894
    %8229 = vmatmul.mubr.bf16.gmra.mrb[0].mxu0 %v893
    %v8230 = vpop.f32.mrb[0].mxu0
    %v8231 = vadd.f32 %v8190, %v8230
    %v8232 = vpop.f32.mrb[0].mxu0
    %v8233 = vadd.f32 %v8192, %v8232
    %v8234 = vpop.f32.mrb[0].mxu0
    %v8235 = vpop.f32.mrb[0].mxu0
    %8236 = vdwg.mxu0
    %8237 = vmatprep.subr.bf16.mxu0 %v5560
    %8238 = vmatpush1.bf16.msra.mxu0 %v5559
    %8239 = vmatprep.subr.bf16.mxu0 %v5568
    %8240 = vmatpush1.bf16.msra.mxu0 %v5567
    %8241 = vmatprep.subr.bf16.mxu0 %v5576
    %8242 = vmatpush1.bf16.msra.mxu0 %v5575
    %8243 = vmatprep.subr.bf16.mxu0 %v5584
    %8244 = vmatpush1.bf16.msra.mxu0 %v5583
    %8245 = vmatprep.subr.bf16.mxu0 %v5592
    %8246 = vmatpush1.bf16.msra.mxu0 %v5591
    %8247 = vmatprep.subr.bf16.mxu0 %v5600
    %8248 = vmatpush1.bf16.msra.mxu0 %v5599
    %8249 = vmatprep.subr.bf16.mxu0 %v5608
    %8250 = vmatpush1.bf16.msra.mxu0 %v5607
    %8251 = vmatprep.subr.bf16.mxu0 %v5616
    %8252 = vmatpush1.bf16.msra.mxu0 %v5615
    %8253 = vmatprep.subr.bf16.mxu0 %v5624
    %8254 = vmatpush1.bf16.msra.mxu0 %v5623
    %8255 = vmatprep.subr.bf16.mxu0 %v5632
    %8256 = vmatpush1.bf16.msra.mxu0 %v5631
    %8257 = vmatprep.subr.bf16.mxu0 %v5640
    %8258 = vmatpush1.bf16.msra.mxu0 %v5639
    %8259 = vmatprep.subr.bf16.mxu0 %v5648
    %8260 = vmatpush1.bf16.msra.mxu0 %v5647
    %8261 = vmatprep.subr.bf16.mxu0 %v5656
    %8262 = vmatpush1.bf16.msra.mxu0 %v5655
    %8263 = vmatprep.subr.bf16.mxu0 %v5664
    %8264 = vmatpush1.bf16.msra.mxu0 %v5663
    %8265 = vmatprep.subr.bf16.mxu0 %v5672
    %8266 = vmatpush1.bf16.msra.mxu0 %v5671
    %8267 = vmatprep.subr.bf16.mxu0 %v5680
    %8268 = vmatpush1.bf16.msra.mxu0 %v5679
    %8269 = vmatprep.mubr.bf16.mxu0 %v896
    %8270 = vmatmul.mubr.bf16.gmra.mrb[0].mxu0 %v895
    %v8271 = vpop.f32.mrb[0].mxu0
    %v8272 = vadd.f32 %v8231, %v8271
    %v8273 = vpop.f32.mrb[0].mxu0
    %v8274 = vadd.f32 %v8233, %v8273
    %v8275 = vpop.f32.mrb[0].mxu0
    %v8276 = vpop.f32.mrb[0].mxu0
    %8277 = vdwg.mxu0
    %8278 = vmatprep.subr.bf16.mxu0 %v5688
    %8279 = vmatpush1.bf16.msra.mxu0 %v5687
    %8280 = vmatprep.subr.bf16.mxu0 %v5696
    %8281 = vmatpush1.bf16.msra.mxu0 %v5695
    %8282 = vmatprep.subr.bf16.mxu0 %v5704
    %8283 = vmatpush1.bf16.msra.mxu0 %v5703
    %8284 = vmatprep.subr.bf16.mxu0 %v5712
    %8285 = vmatpush1.bf16.msra.mxu0 %v5711
    %8286 = vmatprep.subr.bf16.mxu0 %v5720
    %8287 = vmatpush1.bf16.msra.mxu0 %v5719
    %8288 = vmatprep.subr.bf16.mxu0 %v5728
    %8289 = vmatpush1.bf16.msra.mxu0 %v5727
    %8290 = vmatprep.subr.bf16.mxu0 %v5736
    %8291 = vmatpush1.bf16.msra.mxu0 %v5735
    %8292 = vmatprep.subr.bf16.mxu0 %v5744
    %8293 = vmatpush1.bf16.msra.mxu0 %v5743
    %8294 = vmatprep.subr.bf16.mxu0 %v5752
    %8295 = vmatpush1.bf16.msra.mxu0 %v5751
    %8296 = vmatprep.subr.bf16.mxu0 %v5760
    %8297 = vmatpush1.bf16.msra.mxu0 %v5759
    %8298 = vmatprep.subr.bf16.mxu0 %v5768
    %8299 = vmatpush1.bf16.msra.mxu0 %v5767
    %8300 = vmatprep.subr.bf16.mxu0 %v5776
    %8301 = vmatpush1.bf16.msra.mxu0 %v5775
    %8302 = vmatprep.subr.bf16.mxu0 %v5784
    %8303 = vmatpush1.bf16.msra.mxu0 %v5783
    %8304 = vmatprep.subr.bf16.mxu0 %v5792
    %8305 = vmatpush1.bf16.msra.mxu0 %v5791
    %8306 = vmatprep.subr.bf16.mxu0 %v5800
    %8307 = vmatpush1.bf16.msra.mxu0 %v5799
    %8308 = vmatprep.subr.bf16.mxu0 %v5808
    %8309 = vmatpush1.bf16.msra.mxu0 %v5807
    %8310 = vmatprep.mubr.bf16.mxu0 %v898
    %8311 = vmatmul.mubr.bf16.gmra.mrb[0].mxu0 %v897
    %v8312 = vpop.f32.mrb[0].mxu0
    %v8313 = vadd.f32 %v8272, %v8312
    %v8314 = vpop.f32.mrb[0].mxu0
    %v8315 = vadd.f32 %v8274, %v8314
    %v8316 = vpop.f32.mrb[0].mxu0
    %v8317 = vpop.f32.mrb[0].mxu0
    %8318 = vdwg.mxu0
    %8319 = vmatprep.subr.bf16.mxu0 %v5816
    %8320 = vmatpush1.bf16.msra.mxu0 %v5815
    %8321 = vmatprep.subr.bf16.mxu0 %v5824
    %8322 = vmatpush1.bf16.msra.mxu0 %v5823
    %8323 = vmatprep.subr.bf16.mxu0 %v5832
    %8324 = vmatpush1.bf16.msra.mxu0 %v5831
    %8325 = vmatprep.subr.bf16.mxu0 %v5840
    %8326 = vmatpush1.bf16.msra.mxu0 %v5839
    %8327 = vmatprep.subr.bf16.mxu0 %v5848
    %8328 = vmatpush1.bf16.msra.mxu0 %v5847
    %8329 = vmatprep.subr.bf16.mxu0 %v5856
    %8330 = vmatpush1.bf16.msra.mxu0 %v5855
    %8331 = vmatprep.subr.bf16.mxu0 %v5864
    %8332 = vmatpush1.bf16.msra.mxu0 %v5863
    %8333 = vmatprep.subr.bf16.mxu0 %v5872
    %8334 = vmatpush1.bf16.msra.mxu0 %v5871
    %8335 = vmatprep.subr.bf16.mxu0 %v5880
    %8336 = vmatpush1.bf16.msra.mxu0 %v5879
    %8337 = vmatprep.subr.bf16.mxu0 %v5888
    %8338 = vmatpush1.bf16.msra.mxu0 %v5887
    %8339 = vmatprep.subr.bf16.mxu0 %v5896
    %8340 = vmatpush1.bf16.msra.mxu0 %v5895
    %8341 = vmatprep.subr.bf16.mxu0 %v5904
    %8342 = vmatpush1.bf16.msra.mxu0 %v5903
    %8343 = vmatprep.subr.bf16.mxu0 %v5912
    %8344 = vmatpush1.bf16.msra.mxu0 %v5911
    %8345 = vmatprep.subr.bf16.mxu0 %v5920
    %8346 = vmatpush1.bf16.msra.mxu0 %v5919
    %8347 = vmatprep.subr.bf16.mxu0 %v5928
    %8348 = vmatpush1.bf16.msra.mxu0 %v5927
    %8349 = vmatprep.subr.bf16.mxu0 %v5936
    %8350 = vmatpush1.bf16.msra.mxu0 %v5935
    %8351 = vmatprep.mubr.bf16.mxu0 %v900
    %8352 = vmatmul.mubr.bf16.gmra.mrb[0].mxu0 %v899
    %v8353 = vpop.f32.mrb[0].mxu0
    %v8354 = vadd.f32 %v8313, %v8353
    %v8355 = vpop.f32.mrb[0].mxu0
    %v8356 = vadd.f32 %v8315, %v8355
    %v8357 = vpop.f32.mrb[0].mxu0
    %v8358 = vpop.f32.mrb[0].mxu0
    %8359 = vdwg.mxu0
    %8360 = vmatprep.subr.bf16.mxu0 %v5944
    %8361 = vmatpush1.bf16.msra.mxu0 %v5943
    %8362 = vmatprep.subr.bf16.mxu0 %v5952
    %8363 = vmatpush1.bf16.msra.mxu0 %v5951
    %8364 = vmatprep.subr.bf16.mxu0 %v5960
    %8365 = vmatpush1.bf16.msra.mxu0 %v5959
    %8366 = vmatprep.subr.bf16.mxu0 %v5968
    %8367 = vmatpush1.bf16.msra.mxu0 %v5967
    %8368 = vmatprep.subr.bf16.mxu0 %v5976
    %8369 = vmatpush1.bf16.msra.mxu0 %v5975
    %8370 = vmatprep.subr.bf16.mxu0 %v5984
    %8371 = vmatpush1.bf16.msra.mxu0 %v5983
    %8372 = vmatprep.subr.bf16.mxu0 %v5992
    %8373 = vmatpush1.bf16.msra.mxu0 %v5991
    %8374 = vmatprep.subr.bf16.mxu0 %v6000
    %8375 = vmatpush1.bf16.msra.mxu0 %v5999
    %8376 = vmatprep.subr.bf16.mxu0 %v6008
    %8377 = vmatpush1.bf16.msra.mxu0 %v6007
    %8378 = vmatprep.subr.bf16.mxu0 %v6016
    %8379 = vmatpush1.bf16.msra.mxu0 %v6015
    %8380 = vmatprep.subr.bf16.mxu0 %v6024
    %8381 = vmatpush1.bf16.msra.mxu0 %v6023
    %8382 = vmatprep.subr.bf16.mxu0 %v6032
    %8383 = vmatpush1.bf16.msra.mxu0 %v6031
    %8384 = vmatprep.subr.bf16.mxu0 %v6040
    %8385 = vmatpush1.bf16.msra.mxu0 %v6039
    %8386 = vmatprep.subr.bf16.mxu0 %v6048
    %8387 = vmatpush1.bf16.msra.mxu0 %v6047
    %8388 = vmatprep.subr.bf16.mxu0 %v6056
    %8389 = vmatpush1.bf16.msra.mxu0 %v6055
    %8390 = vmatprep.subr.bf16.mxu0 %v6064
    %8391 = vmatpush1.bf16.msra.mxu0 %v6063
    %8392 = vmatprep.mubr.bf16.mxu0 %v902
    %8393 = vmatmul.mubr.bf16.gmra.mrb[0].mxu0 %v901
    %v8394 = vpop.f32.mrb[0].mxu0
    %v8395 = vadd.f32 %v8354, %v8394
    %v8396 = vpop.f32.mrb[0].mxu0
    %v8397 = vadd.f32 %v8356, %v8396
    %v8398 = vpop.f32.mrb[0].mxu0
    %v8399 = vpop.f32.mrb[0].mxu0
    %8400 = vdwg.mxu0
    %v8401 = vmax.f32 %v7411, 0.0
    %v8402 = vmax.f32 %v7413, 0.0
    %v8403 = vmax.f32 %v7739, 0.0
    %v8404 = vmax.f32 %v7741, 0.0
    %v8405 = vmax.f32 %v8067, 0.0
    %v8406 = vmax.f32 %v8069, 0.0
    %v8407 = vmax.f32 %v8395, 0.0
    %v8408 = vmax.f32 %v8397, 0.0
    %v8409 = vpack.c.bf16 %v8401, %v8401
    %v8410 = vpack.c.bf16 %v8402, %v8402
    %v8411 = vpack.c.bf16 %v8403, %v8403
    %v8412 = vpack.c.bf16 %v8404, %v8404
    %v8413 = vpack.c.bf16 %v8405, %v8405
    %v8414 = vpack.c.bf16 %v8406, %v8406
    %v8415 = vpack.c.bf16 %v8407, %v8407
    %v8416 = vpack.c.bf16 %v8408, %v8408
    %v8417 = vld [vmem:[#allocation11] sm:$0xff]
    %v8418 = vld [vmem:[#allocation11 + $0x8] sm:$0xff]
    %v8419 = vld [vmem:[#allocation11 + $0x10] sm:$0xff]
    %v8420 = vld [vmem:[#allocation11 + $0x18] sm:$0xff]
    %v8421 = vld [vmem:[#allocation11 + $0x20] sm:$0xff]
    %v8422 = vld [vmem:[#allocation11 + $0x28] sm:$0xff]
    %v8423 = vld [vmem:[#allocation11 + $0x30] sm:$0xff]
    %v8424 = vld [vmem:[#allocation11 + $0x38] sm:$0xff]
    %v8425 = vld [vmem:[#allocation11 + $0x40] sm:$0xff]
    %v8426 = vld [vmem:[#allocation11 + $0x48] sm:$0xff]
    %v8427 = vld [vmem:[#allocation11 + $0x50] sm:$0xff]
    %v8428 = vld [vmem:[#allocation11 + $0x58] sm:$0xff]
    %v8429 = vld [vmem:[#allocation11 + $0x60] sm:$0xff]
    %v8430 = vld [vmem:[#allocation11 + $0x68] sm:$0xff]
    %v8431 = vld [vmem:[#allocation11 + $0x70] sm:$0xff]
    %v8432 = vld [vmem:[#allocation11 + $0x78] sm:$0xff]
    %v8433 = vld [vmem:[#allocation11 + $0x80] sm:$0xff]
    %v8434 = vld [vmem:[#allocation11 + $0x88] sm:$0xff]
    %v8435 = vld [vmem:[#allocation11 + $0x90] sm:$0xff]
    %v8436 = vld [vmem:[#allocation11 + $0x98] sm:$0xff]
    %v8437 = vld [vmem:[#allocation11 + $0xa0] sm:$0xff]
    %v8438 = vld [vmem:[#allocation11 + $0xa8] sm:$0xff]
    %v8439 = vld [vmem:[#allocation11 + $0xb0] sm:$0xff]
    %v8440 = vld [vmem:[#allocation11 + $0xb8] sm:$0xff]
    %v8441 = vld [vmem:[#allocation11 + $0xc0] sm:$0xff]
    %v8442 = vld [vmem:[#allocation11 + $0xc8] sm:$0xff]
    %v8443 = vld [vmem:[#allocation11 + $0xd0] sm:$0xff]
    %v8444 = vld [vmem:[#allocation11 + $0xd8] sm:$0xff]
    %v8445 = vld [vmem:[#allocation11 + $0xe0] sm:$0xff]
    %v8446 = vld [vmem:[#allocation11 + $0xe8] sm:$0xff]
    %v8447 = vld [vmem:[#allocation11 + $0xf0] sm:$0xff]
    %v8448 = vld [vmem:[#allocation11 + $0xf8] sm:$0xff]
    %v8449 = vld [vmem:[#allocation11 + $0x100] sm:$0xff]
    %v8450 = vld [vmem:[#allocation11 + $0x108] sm:$0xff]
    %v8451 = vld [vmem:[#allocation11 + $0x110] sm:$0xff]
    %v8452 = vld [vmem:[#allocation11 + $0x118] sm:$0xff]
    %v8453 = vld [vmem:[#allocation11 + $0x120] sm:$0xff]
    %v8454 = vld [vmem:[#allocation11 + $0x128] sm:$0xff]
    %v8455 = vld [vmem:[#allocation11 + $0x130] sm:$0xff]
    %v8456 = vld [vmem:[#allocation11 + $0x138] sm:$0xff]
    %v8457 = vld [vmem:[#allocation11 + $0x140] sm:$0xff]
    %v8458 = vld [vmem:[#allocation11 + $0x148] sm:$0xff]
    %v8459 = vld [vmem:[#allocation11 + $0x150] sm:$0xff]
    %v8460 = vld [vmem:[#allocation11 + $0x158] sm:$0xff]
    %v8461 = vld [vmem:[#allocation11 + $0x160] sm:$0xff]
    %v8462 = vld [vmem:[#allocation11 + $0x168] sm:$0xff]
    %v8463 = vld [vmem:[#allocation11 + $0x170] sm:$0xff]
    %v8464 = vld [vmem:[#allocation11 + $0x178] sm:$0xff]
    %v8465 = vld [vmem:[#allocation11 + $0x180] sm:$0xff]
    %v8466 = vld [vmem:[#allocation11 + $0x188] sm:$0xff]
    %v8467 = vld [vmem:[#allocation11 + $0x190] sm:$0xff]
    %v8468 = vld [vmem:[#allocation11 + $0x198] sm:$0xff]
    %v8469 = vld [vmem:[#allocation11 + $0x1a0] sm:$0xff]
    %v8470 = vld [vmem:[#allocation11 + $0x1a8] sm:$0xff]
    %v8471 = vld [vmem:[#allocation11 + $0x1b0] sm:$0xff]
    %v8472 = vld [vmem:[#allocation11 + $0x1b8] sm:$0xff]
    %v8473 = vld [vmem:[#allocation11 + $0x1c0] sm:$0xff]
    %v8474 = vld [vmem:[#allocation11 + $0x1c8] sm:$0xff]
    %v8475 = vld [vmem:[#allocation11 + $0x1d0] sm:$0xff]
    %v8476 = vld [vmem:[#allocation11 + $0x1d8] sm:$0xff]
    %v8477 = vld [vmem:[#allocation11 + $0x1e0] sm:$0xff]
    %v8478 = vld [vmem:[#allocation11 + $0x1e8] sm:$0xff]
    %v8479 = vld [vmem:[#allocation11 + $0x1f0] sm:$0xff]
    %v8480 = vld [vmem:[#allocation11 + $0x1f8] sm:$0xff]
    %v8481 = vld [vmem:[#allocation11 + $0x200] sm:$0xff]
    %v8482 = vld [vmem:[#allocation11 + $0x208] sm:$0xff]
    %v8483 = vld [vmem:[#allocation11 + $0x210] sm:$0xff]
    %v8484 = vld [vmem:[#allocation11 + $0x218] sm:$0xff]
    %v8485 = vld [vmem:[#allocation11 + $0x220] sm:$0xff]
    %v8486 = vld [vmem:[#allocation11 + $0x228] sm:$0xff]
    %v8487 = vld [vmem:[#allocation11 + $0x230] sm:$0xff]
    %v8488 = vld [vmem:[#allocation11 + $0x238] sm:$0xff]
    %v8489 = vld [vmem:[#allocation11 + $0x240] sm:$0xff]
    %v8490 = vld [vmem:[#allocation11 + $0x248] sm:$0xff]
    %v8491 = vld [vmem:[#allocation11 + $0x250] sm:$0xff]
    %v8492 = vld [vmem:[#allocation11 + $0x258] sm:$0xff]
    %v8493 = vld [vmem:[#allocation11 + $0x260] sm:$0xff]
    %v8494 = vld [vmem:[#allocation11 + $0x268] sm:$0xff]
    %v8495 = vld [vmem:[#allocation11 + $0x270] sm:$0xff]
    %v8496 = vld [vmem:[#allocation11 + $0x278] sm:$0xff]
    %v8497 = vld [vmem:[#allocation11 + $0x280] sm:$0xff]
    %v8498 = vld [vmem:[#allocation11 + $0x288] sm:$0xff]
    %v8499 = vld [vmem:[#allocation11 + $0x290] sm:$0xff]
    %v8500 = vld [vmem:[#allocation11 + $0x298] sm:$0xff]
    %v8501 = vld [vmem:[#allocation11 + $0x2a0] sm:$0xff]
    %v8502 = vld [vmem:[#allocation11 + $0x2a8] sm:$0xff]
    %v8503 = vld [vmem:[#allocation11 + $0x2b0] sm:$0xff]
    %v8504 = vld [vmem:[#allocation11 + $0x2b8] sm:$0xff]
    %v8505 = vld [vmem:[#allocation11 + $0x2c0] sm:$0xff]
    %v8506 = vld [vmem:[#allocation11 + $0x2c8] sm:$0xff]
    %v8507 = vld [vmem:[#allocation11 + $0x2d0] sm:$0xff]
    %v8508 = vld [vmem:[#allocation11 + $0x2d8] sm:$0xff]
    %v8509 = vld [vmem:[#allocation11 + $0x2e0] sm:$0xff]
    %v8510 = vld [vmem:[#allocation11 + $0x2e8] sm:$0xff]
    %v8511 = vld [vmem:[#allocation11 + $0x2f0] sm:$0xff]
    %v8512 = vld [vmem:[#allocation11 + $0x2f8] sm:$0xff]
    %v8513 = vld [vmem:[#allocation11 + $0x300] sm:$0xff]
    %v8514 = vld [vmem:[#allocation11 + $0x308] sm:$0xff]
    %v8515 = vld [vmem:[#allocation11 + $0x310] sm:$0xff]
    %v8516 = vld [vmem:[#allocation11 + $0x318] sm:$0xff]
    %v8517 = vld [vmem:[#allocation11 + $0x320] sm:$0xff]
    %v8518 = vld [vmem:[#allocation11 + $0x328] sm:$0xff]
    %v8519 = vld [vmem:[#allocation11 + $0x330] sm:$0xff]
    %v8520 = vld [vmem:[#allocation11 + $0x338] sm:$0xff]
    %v8521 = vld [vmem:[#allocation11 + $0x340] sm:$0xff]
    %v8522 = vld [vmem:[#allocation11 + $0x348] sm:$0xff]
    %v8523 = vld [vmem:[#allocation11 + $0x350] sm:$0xff]
    %v8524 = vld [vmem:[#allocation11 + $0x358] sm:$0xff]
    %v8525 = vld [vmem:[#allocation11 + $0x360] sm:$0xff]
    %v8526 = vld [vmem:[#allocation11 + $0x368] sm:$0xff]
    %v8527 = vld [vmem:[#allocation11 + $0x370] sm:$0xff]
    %v8528 = vld [vmem:[#allocation11 + $0x378] sm:$0xff]
    %v8529 = vld [vmem:[#allocation11 + $0x380] sm:$0xff]
    %v8530 = vld [vmem:[#allocation11 + $0x388] sm:$0xff]
    %v8531 = vld [vmem:[#allocation11 + $0x390] sm:$0xff]
    %v8532 = vld [vmem:[#allocation11 + $0x398] sm:$0xff]
    %v8533 = vld [vmem:[#allocation11 + $0x3a0] sm:$0xff]
    %v8534 = vld [vmem:[#allocation11 + $0x3a8] sm:$0xff]
    %v8535 = vld [vmem:[#allocation11 + $0x3b0] sm:$0xff]
    %v8536 = vld [vmem:[#allocation11 + $0x3b8] sm:$0xff]
    %v8537 = vld [vmem:[#allocation11 + $0x3c0] sm:$0xff]
    %v8538 = vld [vmem:[#allocation11 + $0x3c8] sm:$0xff]
    %v8539 = vld [vmem:[#allocation11 + $0x3d0] sm:$0xff]
    %v8540 = vld [vmem:[#allocation11 + $0x3d8] sm:$0xff]
    %v8541 = vld [vmem:[#allocation11 + $0x3e0] sm:$0xff]
    %v8542 = vld [vmem:[#allocation11 + $0x3e8] sm:$0xff]
    %v8543 = vld [vmem:[#allocation11 + $0x3f0] sm:$0xff]
    %v8544 = vld [vmem:[#allocation11 + $0x3f8] sm:$0xff]
    %v8545 = vld [vmem:[#allocation11 + $0x400] sm:$0xff]
    %v8546 = vld [vmem:[#allocation11 + $0x408] sm:$0xff]
    %v8547 = vld [vmem:[#allocation11 + $0x410] sm:$0xff]
    %v8548 = vld [vmem:[#allocation11 + $0x418] sm:$0xff]
    %v8549 = vld [vmem:[#allocation11 + $0x420] sm:$0xff]
    %v8550 = vld [vmem:[#allocation11 + $0x428] sm:$0xff]
    %v8551 = vld [vmem:[#allocation11 + $0x430] sm:$0xff]
    %v8552 = vld [vmem:[#allocation11 + $0x438] sm:$0xff]
    %v8553 = vld [vmem:[#allocation11 + $0x440] sm:$0xff]
    %v8554 = vld [vmem:[#allocation11 + $0x448] sm:$0xff]
    %v8555 = vld [vmem:[#allocation11 + $0x450] sm:$0xff]
    %v8556 = vld [vmem:[#allocation11 + $0x458] sm:$0xff]
    %v8557 = vld [vmem:[#allocation11 + $0x460] sm:$0xff]
    %v8558 = vld [vmem:[#allocation11 + $0x468] sm:$0xff]
    %v8559 = vld [vmem:[#allocation11 + $0x470] sm:$0xff]
    %v8560 = vld [vmem:[#allocation11 + $0x478] sm:$0xff]
    %v8561 = vld [vmem:[#allocation11 + $0x480] sm:$0xff]
    %v8562 = vld [vmem:[#allocation11 + $0x488] sm:$0xff]
    %v8563 = vld [vmem:[#allocation11 + $0x490] sm:$0xff]
    %v8564 = vld [vmem:[#allocation11 + $0x498] sm:$0xff]
    %v8565 = vld [vmem:[#allocation11 + $0x4a0] sm:$0xff]
    %v8566 = vld [vmem:[#allocation11 + $0x4a8] sm:$0xff]
    %v8567 = vld [vmem:[#allocation11 + $0x4b0] sm:$0xff]
    %v8568 = vld [vmem:[#allocation11 + $0x4b8] sm:$0xff]
    %v8569 = vld [vmem:[#allocation11 + $0x4c0] sm:$0xff]
    %v8570 = vld [vmem:[#allocation11 + $0x4c8] sm:$0xff]
    %v8571 = vld [vmem:[#allocation11 + $0x4d0] sm:$0xff]
    %v8572 = vld [vmem:[#allocation11 + $0x4d8] sm:$0xff]
    %v8573 = vld [vmem:[#allocation11 + $0x4e0] sm:$0xff]
    %v8574 = vld [vmem:[#allocation11 + $0x4e8] sm:$0xff]
    %v8575 = vld [vmem:[#allocation11 + $0x4f0] sm:$0xff]
    %v8576 = vld [vmem:[#allocation11 + $0x4f8] sm:$0xff]
    %v8577 = vld [vmem:[#allocation11 + $0x500] sm:$0xff]
    %v8578 = vld [vmem:[#allocation11 + $0x508] sm:$0xff]
    %v8579 = vld [vmem:[#allocation11 + $0x510] sm:$0xff]
    %v8580 = vld [vmem:[#allocation11 + $0x518] sm:$0xff]
    %v8581 = vld [vmem:[#allocation11 + $0x520] sm:$0xff]
    %v8582 = vld [vmem:[#allocation11 + $0x528] sm:$0xff]
    %v8583 = vld [vmem:[#allocation11 + $0x530] sm:$0xff]
    %v8584 = vld [vmem:[#allocation11 + $0x538] sm:$0xff]
    %v8585 = vld [vmem:[#allocation11 + $0x540] sm:$0xff]
    %v8586 = vld [vmem:[#allocation11 + $0x548] sm:$0xff]
    %v8587 = vld [vmem:[#allocation11 + $0x550] sm:$0xff]
    %v8588 = vld [vmem:[#allocation11 + $0x558] sm:$0xff]
    %v8589 = vld [vmem:[#allocation11 + $0x560] sm:$0xff]
    %v8590 = vld [vmem:[#allocation11 + $0x568] sm:$0xff]
    %v8591 = vld [vmem:[#allocation11 + $0x570] sm:$0xff]
    %v8592 = vld [vmem:[#allocation11 + $0x578] sm:$0xff]
    %v8593 = vld [vmem:[#allocation11 + $0x580] sm:$0xff]
    %v8594 = vld [vmem:[#allocation11 + $0x588] sm:$0xff]
    %v8595 = vld [vmem:[#allocation11 + $0x590] sm:$0xff]
    %v8596 = vld [vmem:[#allocation11 + $0x598] sm:$0xff]
    %v8597 = vld [vmem:[#allocation11 + $0x5a0] sm:$0xff]
    %v8598 = vld [vmem:[#allocation11 + $0x5a8] sm:$0xff]
    %v8599 = vld [vmem:[#allocation11 + $0x5b0] sm:$0xff]
    %v8600 = vld [vmem:[#allocation11 + $0x5b8] sm:$0xff]
    %v8601 = vld [vmem:[#allocation11 + $0x5c0] sm:$0xff]
    %v8602 = vld [vmem:[#allocation11 + $0x5c8] sm:$0xff]
    %v8603 = vld [vmem:[#allocation11 + $0x5d0] sm:$0xff]
    %v8604 = vld [vmem:[#allocation11 + $0x5d8] sm:$0xff]
    %v8605 = vld [vmem:[#allocation11 + $0x5e0] sm:$0xff]
    %v8606 = vld [vmem:[#allocation11 + $0x5e8] sm:$0xff]
    %v8607 = vld [vmem:[#allocation11 + $0x5f0] sm:$0xff]
    %v8608 = vld [vmem:[#allocation11 + $0x5f8] sm:$0xff]
    %v8609 = vld [vmem:[#allocation11 + $0x600] sm:$0xff]
    %v8610 = vld [vmem:[#allocation11 + $0x608] sm:$0xff]
    %v8611 = vld [vmem:[#allocation11 + $0x610] sm:$0xff]
    %v8612 = vld [vmem:[#allocation11 + $0x618] sm:$0xff]
    %v8613 = vld [vmem:[#allocation11 + $0x620] sm:$0xff]
    %v8614 = vld [vmem:[#allocation11 + $0x628] sm:$0xff]
    %v8615 = vld [vmem:[#allocation11 + $0x630] sm:$0xff]
    %v8616 = vld [vmem:[#allocation11 + $0x638] sm:$0xff]
    %v8617 = vld [vmem:[#allocation11 + $0x640] sm:$0xff]
    %v8618 = vld [vmem:[#allocation11 + $0x648] sm:$0xff]
    %v8619 = vld [vmem:[#allocation11 + $0x650] sm:$0xff]
    %v8620 = vld [vmem:[#allocation11 + $0x658] sm:$0xff]
    %v8621 = vld [vmem:[#allocation11 + $0x660] sm:$0xff]
    %v8622 = vld [vmem:[#allocation11 + $0x668] sm:$0xff]
    %v8623 = vld [vmem:[#allocation11 + $0x670] sm:$0xff]
    %v8624 = vld [vmem:[#allocation11 + $0x678] sm:$0xff]
    %v8625 = vld [vmem:[#allocation11 + $0x680] sm:$0xff]
    %v8626 = vld [vmem:[#allocation11 + $0x688] sm:$0xff]
    %v8627 = vld [vmem:[#allocation11 + $0x690] sm:$0xff]
    %v8628 = vld [vmem:[#allocation11 + $0x698] sm:$0xff]
    %v8629 = vld [vmem:[#allocation11 + $0x6a0] sm:$0xff]
    %v8630 = vld [vmem:[#allocation11 + $0x6a8] sm:$0xff]
    %v8631 = vld [vmem:[#allocation11 + $0x6b0] sm:$0xff]
    %v8632 = vld [vmem:[#allocation11 + $0x6b8] sm:$0xff]
    %v8633 = vld [vmem:[#allocation11 + $0x6c0] sm:$0xff]
    %v8634 = vld [vmem:[#allocation11 + $0x6c8] sm:$0xff]
    %v8635 = vld [vmem:[#allocation11 + $0x6d0] sm:$0xff]
    %v8636 = vld [vmem:[#allocation11 + $0x6d8] sm:$0xff]
    %v8637 = vld [vmem:[#allocation11 + $0x6e0] sm:$0xff]
    %v8638 = vld [vmem:[#allocation11 + $0x6e8] sm:$0xff]
    %v8639 = vld [vmem:[#allocation11 + $0x6f0] sm:$0xff]
    %v8640 = vld [vmem:[#allocation11 + $0x6f8] sm:$0xff]
    %v8641 = vld [vmem:[#allocation11 + $0x700] sm:$0xff]
    %v8642 = vld [vmem:[#allocation11 + $0x708] sm:$0xff]
    %v8643 = vld [vmem:[#allocation11 + $0x710] sm:$0xff]
    %v8644 = vld [vmem:[#allocation11 + $0x718] sm:$0xff]
    %v8645 = vld [vmem:[#allocation11 + $0x720] sm:$0xff]
    %v8646 = vld [vmem:[#allocation11 + $0x728] sm:$0xff]
    %v8647 = vld [vmem:[#allocation11 + $0x730] sm:$0xff]
    %v8648 = vld [vmem:[#allocation11 + $0x738] sm:$0xff]
    %v8649 = vld [vmem:[#allocation11 + $0x740] sm:$0xff]
    %v8650 = vld [vmem:[#allocation11 + $0x748] sm:$0xff]
    %v8651 = vld [vmem:[#allocation11 + $0x750] sm:$0xff]
    %v8652 = vld [vmem:[#allocation11 + $0x758] sm:$0xff]
    %v8653 = vld [vmem:[#allocation11 + $0x760] sm:$0xff]
    %v8654 = vld [vmem:[#allocation11 + $0x768] sm:$0xff]
    %v8655 = vld [vmem:[#allocation11 + $0x770] sm:$0xff]
    %v8656 = vld [vmem:[#allocation11 + $0x778] sm:$0xff]
    %v8657 = vld [vmem:[#allocation11 + $0x780] sm:$0xff]
    %v8658 = vld [vmem:[#allocation11 + $0x788] sm:$0xff]
    %v8659 = vld [vmem:[#allocation11 + $0x790] sm:$0xff]
    %v8660 = vld [vmem:[#allocation11 + $0x798] sm:$0xff]
    %v8661 = vld [vmem:[#allocation11 + $0x7a0] sm:$0xff]
    %v8662 = vld [vmem:[#allocation11 + $0x7a8] sm:$0xff]
    %v8663 = vld [vmem:[#allocation11 + $0x7b0] sm:$0xff]
    %v8664 = vld [vmem:[#allocation11 + $0x7b8] sm:$0xff]
    %v8665 = vld [vmem:[#allocation11 + $0x7c0] sm:$0xff]
    %v8666 = vld [vmem:[#allocation11 + $0x7c8] sm:$0xff]
    %v8667 = vld [vmem:[#allocation11 + $0x7d0] sm:$0xff]
    %v8668 = vld [vmem:[#allocation11 + $0x7d8] sm:$0xff]
    %v8669 = vld [vmem:[#allocation11 + $0x7e0] sm:$0xff]
    %v8670 = vld [vmem:[#allocation11 + $0x7e8] sm:$0xff]
    %v8671 = vld [vmem:[#allocation11 + $0x7f0] sm:$0xff]
    %v8672 = vld [vmem:[#allocation11 + $0x7f8] sm:$0xff]
    %v8673 = vld [vmem:[#allocation13] sm:$0xf]
    %v8675 = vlaneseq
    %v8676 = vshrl.u32 %v8675, 7
    %v8677 = vsub.s32 0, %v8676
    %v8678 = vrot.slane %v8673, %v8677
    %v8679 = vlaneseq
    %v8680 = vshrl.u32 %v8679, 7
    %v8681 = vsub.s32 1, %v8680
    %v8682 = vrot.slane %v8673, %v8681
    %v8683 = vlaneseq
    %v8684 = vshrl.u32 %v8683, 7
    %v8685 = vsub.s32 2, %v8684
    %v8686 = vrot.slane %v8673, %v8685
    %v8687 = vlaneseq
    %v8688 = vshrl.u32 %v8687, 7
    %v8689 = vsub.s32 3, %v8688
    %v8690 = vrot.slane %v8673, %v8689
    %v8951 = vunpack.c.l.b16 %v8417
    %v8952 = vunpack.c.h.b16 %v8417
    %v8953 = vunpack.c.l.b16 %v8418
    %v8954 = vunpack.c.h.b16 %v8418
    %v8955 = vunpack.c.l.b16 %v8419
    %v8956 = vunpack.c.h.b16 %v8419
    %v8957 = vunpack.c.l.b16 %v8420
    %v8958 = vunpack.c.h.b16 %v8420
    %v8959 = vunpack.c.l.b16 %v8421
    %v8960 = vunpack.c.h.b16 %v8421
    %v8961 = vunpack.c.l.b16 %v8422
    %v8962 = vunpack.c.h.b16 %v8422
    %v8963 = vunpack.c.l.b16 %v8423
    %v8964 = vunpack.c.h.b16 %v8423
    %v8965 = vunpack.c.l.b16 %v8424
    %v8966 = vunpack.c.h.b16 %v8424
    %v8967 = vunpack.c.l.b16 %v8425
    %v8968 = vunpack.c.h.b16 %v8425
    %v8969 = vunpack.c.l.b16 %v8426
    %v8970 = vunpack.c.h.b16 %v8426
    %v8971 = vunpack.c.l.b16 %v8427
    %v8972 = vunpack.c.h.b16 %v8427
    %v8973 = vunpack.c.l.b16 %v8428
    %v8974 = vunpack.c.h.b16 %v8428
    %v8975 = vunpack.c.l.b16 %v8429
    %v8976 = vunpack.c.h.b16 %v8429
    %v8977 = vunpack.c.l.b16 %v8430
    %v8978 = vunpack.c.h.b16 %v8430
    %v8979 = vunpack.c.l.b16 %v8431
    %v8980 = vunpack.c.h.b16 %v8431
    %v8981 = vunpack.c.l.b16 %v8432
    %v8982 = vunpack.c.h.b16 %v8432
    %v8983 = vunpack.c.l.b16 %v8433
    %v8984 = vunpack.c.h.b16 %v8433
    %v8985 = vunpack.c.l.b16 %v8434
    %v8986 = vunpack.c.h.b16 %v8434
    %v8987 = vunpack.c.l.b16 %v8435
    %v8988 = vunpack.c.h.b16 %v8435
    %v8989 = vunpack.c.l.b16 %v8436
    %v8990 = vunpack.c.h.b16 %v8436
    %v8991 = vunpack.c.l.b16 %v8437
    %v8992 = vunpack.c.h.b16 %v8437
    %v8993 = vunpack.c.l.b16 %v8438
    %v8994 = vunpack.c.h.b16 %v8438
    %v8995 = vunpack.c.l.b16 %v8439
    %v8996 = vunpack.c.h.b16 %v8439
    %v8997 = vunpack.c.l.b16 %v8440
    %v8998 = vunpack.c.h.b16 %v8440
    %v8999 = vunpack.c.l.b16 %v8441
    %v9000 = vunpack.c.h.b16 %v8441
    %v9001 = vunpack.c.l.b16 %v8442
    %v9002 = vunpack.c.h.b16 %v8442
    %v9003 = vunpack.c.l.b16 %v8443
    %v9004 = vunpack.c.h.b16 %v8443
    %v9005 = vunpack.c.l.b16 %v8444
    %v9006 = vunpack.c.h.b16 %v8444
    %v9007 = vunpack.c.l.b16 %v8445
    %v9008 = vunpack.c.h.b16 %v8445
    %v9009 = vunpack.c.l.b16 %v8446
    %v9010 = vunpack.c.h.b16 %v8446
    %v9011 = vunpack.c.l.b16 %v8447
    %v9012 = vunpack.c.h.b16 %v8447
    %v9013 = vunpack.c.l.b16 %v8448
    %v9014 = vunpack.c.h.b16 %v8448
    %v9015 = vunpack.c.l.b16 %v8449
    %v9016 = vunpack.c.h.b16 %v8449
    %v9017 = vunpack.c.l.b16 %v8450
    %v9018 = vunpack.c.h.b16 %v8450
    %v9019 = vunpack.c.l.b16 %v8451
    %v9020 = vunpack.c.h.b16 %v8451
    %v9021 = vunpack.c.l.b16 %v8452
    %v9022 = vunpack.c.h.b16 %v8452
    %v9023 = vunpack.c.l.b16 %v8453
    %v9024 = vunpack.c.h.b16 %v8453
    %v9025 = vunpack.c.l.b16 %v8454
    %v9026 = vunpack.c.h.b16 %v8454
    %v9027 = vunpack.c.l.b16 %v8455
    %v9028 = vunpack.c.h.b16 %v8455
    %v9029 = vunpack.c.l.b16 %v8456
    %v9030 = vunpack.c.h.b16 %v8456
    %v9031 = vunpack.c.l.b16 %v8457
    %v9032 = vunpack.c.h.b16 %v8457
    %v9033 = vunpack.c.l.b16 %v8458
    %v9034 = vunpack.c.h.b16 %v8458
    %v9035 = vunpack.c.l.b16 %v8459
    %v9036 = vunpack.c.h.b16 %v8459
    %v9037 = vunpack.c.l.b16 %v8460
    %v9038 = vunpack.c.h.b16 %v8460
    %v9039 = vunpack.c.l.b16 %v8461
    %v9040 = vunpack.c.h.b16 %v8461
    %v9041 = vunpack.c.l.b16 %v8462
    %v9042 = vunpack.c.h.b16 %v8462
    %v9043 = vunpack.c.l.b16 %v8463
    %v9044 = vunpack.c.h.b16 %v8463
    %v9045 = vunpack.c.l.b16 %v8464
    %v9046 = vunpack.c.h.b16 %v8464
    %v9047 = vunpack.c.l.b16 %v8465
    %v9048 = vunpack.c.h.b16 %v8465
    %v9049 = vunpack.c.l.b16 %v8466
    %v9050 = vunpack.c.h.b16 %v8466
    %v9051 = vunpack.c.l.b16 %v8467
    %v9052 = vunpack.c.h.b16 %v8467
    %v9053 = vunpack.c.l.b16 %v8468
    %v9054 = vunpack.c.h.b16 %v8468
    %v9055 = vunpack.c.l.b16 %v8469
    %v9056 = vunpack.c.h.b16 %v8469
    %v9057 = vunpack.c.l.b16 %v8470
    %v9058 = vunpack.c.h.b16 %v8470
    %v9059 = vunpack.c.l.b16 %v8471
    %v9060 = vunpack.c.h.b16 %v8471
    %v9061 = vunpack.c.l.b16 %v8472
    %v9062 = vunpack.c.h.b16 %v8472
    %v9063 = vunpack.c.l.b16 %v8473
    %v9064 = vunpack.c.h.b16 %v8473
    %v9065 = vunpack.c.l.b16 %v8474
    %v9066 = vunpack.c.h.b16 %v8474
    %v9067 = vunpack.c.l.b16 %v8475
    %v9068 = vunpack.c.h.b16 %v8475
    %v9069 = vunpack.c.l.b16 %v8476
    %v9070 = vunpack.c.h.b16 %v8476
    %v9071 = vunpack.c.l.b16 %v8477
    %v9072 = vunpack.c.h.b16 %v8477
    %v9073 = vunpack.c.l.b16 %v8478
    %v9074 = vunpack.c.h.b16 %v8478
    %v9075 = vunpack.c.l.b16 %v8479
    %v9076 = vunpack.c.h.b16 %v8479
    %v9077 = vunpack.c.l.b16 %v8480
    %v9078 = vunpack.c.h.b16 %v8480
    %v9079 = vunpack.c.l.b16 %v8481
    %v9080 = vunpack.c.h.b16 %v8481
    %v9081 = vunpack.c.l.b16 %v8482
    %v9082 = vunpack.c.h.b16 %v8482
    %v9083 = vunpack.c.l.b16 %v8483
    %v9084 = vunpack.c.h.b16 %v8483
    %v9085 = vunpack.c.l.b16 %v8484
    %v9086 = vunpack.c.h.b16 %v8484
    %v9087 = vunpack.c.l.b16 %v8485
    %v9088 = vunpack.c.h.b16 %v8485
    %v9089 = vunpack.c.l.b16 %v8486
    %v9090 = vunpack.c.h.b16 %v8486
    %v9091 = vunpack.c.l.b16 %v8487
    %v9092 = vunpack.c.h.b16 %v8487
    %v9093 = vunpack.c.l.b16 %v8488
    %v9094 = vunpack.c.h.b16 %v8488
    %v9095 = vunpack.c.l.b16 %v8489
    %v9096 = vunpack.c.h.b16 %v8489
    %v9097 = vunpack.c.l.b16 %v8490
    %v9098 = vunpack.c.h.b16 %v8490
    %v9099 = vunpack.c.l.b16 %v8491
    %v9100 = vunpack.c.h.b16 %v8491
    %v9101 = vunpack.c.l.b16 %v8492
    %v9102 = vunpack.c.h.b16 %v8492
    %v9103 = vunpack.c.l.b16 %v8493
    %v9104 = vunpack.c.h.b16 %v8493
    %v9105 = vunpack.c.l.b16 %v8494
    %v9106 = vunpack.c.h.b16 %v8494
    %v9107 = vunpack.c.l.b16 %v8495
    %v9108 = vunpack.c.h.b16 %v8495
    %v9109 = vunpack.c.l.b16 %v8496
    %v9110 = vunpack.c.h.b16 %v8496
    %v9111 = vunpack.c.l.b16 %v8497
    %v9112 = vunpack.c.h.b16 %v8497
    %v9113 = vunpack.c.l.b16 %v8498
    %v9114 = vunpack.c.h.b16 %v8498
    %v9115 = vunpack.c.l.b16 %v8499
    %v9116 = vunpack.c.h.b16 %v8499
    %v9117 = vunpack.c.l.b16 %v8500
    %v9118 = vunpack.c.h.b16 %v8500
    %v9119 = vunpack.c.l.b16 %v8501
    %v9120 = vunpack.c.h.b16 %v8501
    %v9121 = vunpack.c.l.b16 %v8502
    %v9122 = vunpack.c.h.b16 %v8502
    %v9123 = vunpack.c.l.b16 %v8503
    %v9124 = vunpack.c.h.b16 %v8503
    %v9125 = vunpack.c.l.b16 %v8504
    %v9126 = vunpack.c.h.b16 %v8504
    %v9127 = vunpack.c.l.b16 %v8505
    %v9128 = vunpack.c.h.b16 %v8505
    %v9129 = vunpack.c.l.b16 %v8506
    %v9130 = vunpack.c.h.b16 %v8506
    %v9131 = vunpack.c.l.b16 %v8507
    %v9132 = vunpack.c.h.b16 %v8507
    %v9133 = vunpack.c.l.b16 %v8508
    %v9134 = vunpack.c.h.b16 %v8508
    %v9135 = vunpack.c.l.b16 %v8509
    %v9136 = vunpack.c.h.b16 %v8509
    %v9137 = vunpack.c.l.b16 %v8510
    %v9138 = vunpack.c.h.b16 %v8510
    %v9139 = vunpack.c.l.b16 %v8511
    %v9140 = vunpack.c.h.b16 %v8511
    %v9141 = vunpack.c.l.b16 %v8512
    %v9142 = vunpack.c.h.b16 %v8512
    %v9143 = vunpack.c.l.b16 %v8513
    %v9144 = vunpack.c.h.b16 %v8513
    %v9145 = vunpack.c.l.b16 %v8514
    %v9146 = vunpack.c.h.b16 %v8514
    %v9147 = vunpack.c.l.b16 %v8515
    %v9148 = vunpack.c.h.b16 %v8515
    %v9149 = vunpack.c.l.b16 %v8516
    %v9150 = vunpack.c.h.b16 %v8516
    %v9151 = vunpack.c.l.b16 %v8517
    %v9152 = vunpack.c.h.b16 %v8517
    %v9153 = vunpack.c.l.b16 %v8518
    %v9154 = vunpack.c.h.b16 %v8518
    %v9155 = vunpack.c.l.b16 %v8519
    %v9156 = vunpack.c.h.b16 %v8519
    %v9157 = vunpack.c.l.b16 %v8520
    %v9158 = vunpack.c.h.b16 %v8520
    %v9159 = vunpack.c.l.b16 %v8521
    %v9160 = vunpack.c.h.b16 %v8521
    %v9161 = vunpack.c.l.b16 %v8522
    %v9162 = vunpack.c.h.b16 %v8522
    %v9163 = vunpack.c.l.b16 %v8523
    %v9164 = vunpack.c.h.b16 %v8523
    %v9165 = vunpack.c.l.b16 %v8524
    %v9166 = vunpack.c.h.b16 %v8524
    %v9167 = vunpack.c.l.b16 %v8525
    %v9168 = vunpack.c.h.b16 %v8525
    %v9169 = vunpack.c.l.b16 %v8526
    %v9170 = vunpack.c.h.b16 %v8526
    %v9171 = vunpack.c.l.b16 %v8527
    %v9172 = vunpack.c.h.b16 %v8527
    %v9173 = vunpack.c.l.b16 %v8528
    %v9174 = vunpack.c.h.b16 %v8528
    %v9175 = vunpack.c.l.b16 %v8529
    %v9176 = vunpack.c.h.b16 %v8529
    %v9177 = vunpack.c.l.b16 %v8530
    %v9178 = vunpack.c.h.b16 %v8530
    %v9179 = vunpack.c.l.b16 %v8531
    %v9180 = vunpack.c.h.b16 %v8531
    %v9181 = vunpack.c.l.b16 %v8532
    %v9182 = vunpack.c.h.b16 %v8532
    %v9183 = vunpack.c.l.b16 %v8533
    %v9184 = vunpack.c.h.b16 %v8533
    %v9185 = vunpack.c.l.b16 %v8534
    %v9186 = vunpack.c.h.b16 %v8534
    %v9187 = vunpack.c.l.b16 %v8535
    %v9188 = vunpack.c.h.b16 %v8535
    %v9189 = vunpack.c.l.b16 %v8536
    %v9190 = vunpack.c.h.b16 %v8536
    %v9191 = vunpack.c.l.b16 %v8537
    %v9192 = vunpack.c.h.b16 %v8537
    %v9193 = vunpack.c.l.b16 %v8538
    %v9194 = vunpack.c.h.b16 %v8538
    %v9195 = vunpack.c.l.b16 %v8539
    %v9196 = vunpack.c.h.b16 %v8539
    %v9197 = vunpack.c.l.b16 %v8540
    %v9198 = vunpack.c.h.b16 %v8540
    %v9199 = vunpack.c.l.b16 %v8541
    %v9200 = vunpack.c.h.b16 %v8541
    %v9201 = vunpack.c.l.b16 %v8542
    %v9202 = vunpack.c.h.b16 %v8542
    %v9203 = vunpack.c.l.b16 %v8543
    %v9204 = vunpack.c.h.b16 %v8543
    %v9205 = vunpack.c.l.b16 %v8544
    %v9206 = vunpack.c.h.b16 %v8544
    %v9207 = vunpack.c.l.b16 %v8545
    %v9208 = vunpack.c.h.b16 %v8545
    %v9209 = vunpack.c.l.b16 %v8546
    %v9210 = vunpack.c.h.b16 %v8546
    %v9211 = vunpack.c.l.b16 %v8547
    %v9212 = vunpack.c.h.b16 %v8547
    %v9213 = vunpack.c.l.b16 %v8548
    %v9214 = vunpack.c.h.b16 %v8548
    %v9215 = vunpack.c.l.b16 %v8549
    %v9216 = vunpack.c.h.b16 %v8549
    %v9217 = vunpack.c.l.b16 %v8550
    %v9218 = vunpack.c.h.b16 %v8550
    %v9219 = vunpack.c.l.b16 %v8551
    %v9220 = vunpack.c.h.b16 %v8551
    %v9221 = vunpack.c.l.b16 %v8552
    %v9222 = vunpack.c.h.b16 %v8552
    %v9223 = vunpack.c.l.b16 %v8553
    %v9224 = vunpack.c.h.b16 %v8553
    %v9225 = vunpack.c.l.b16 %v8554
    %v9226 = vunpack.c.h.b16 %v8554
    %v9227 = vunpack.c.l.b16 %v8555
    %v9228 = vunpack.c.h.b16 %v8555
    %v9229 = vunpack.c.l.b16 %v8556
    %v9230 = vunpack.c.h.b16 %v8556
    %v9231 = vunpack.c.l.b16 %v8557
    %v9232 = vunpack.c.h.b16 %v8557
    %v9233 = vunpack.c.l.b16 %v8558
    %v9234 = vunpack.c.h.b16 %v8558
    %v9235 = vunpack.c.l.b16 %v8559
    %v9236 = vunpack.c.h.b16 %v8559
    %v9237 = vunpack.c.l.b16 %v8560
    %v9238 = vunpack.c.h.b16 %v8560
    %v9239 = vunpack.c.l.b16 %v8561
    %v9240 = vunpack.c.h.b16 %v8561
    %v9241 = vunpack.c.l.b16 %v8562
    %v9242 = vunpack.c.h.b16 %v8562
    %v9243 = vunpack.c.l.b16 %v8563
    %v9244 = vunpack.c.h.b16 %v8563
    %v9245 = vunpack.c.l.b16 %v8564
    %v9246 = vunpack.c.h.b16 %v8564
    %v9247 = vunpack.c.l.b16 %v8565
    %v9248 = vunpack.c.h.b16 %v8565
    %v9249 = vunpack.c.l.b16 %v8566
    %v9250 = vunpack.c.h.b16 %v8566
    %v9251 = vunpack.c.l.b16 %v8567
    %v9252 = vunpack.c.h.b16 %v8567
    %v9253 = vunpack.c.l.b16 %v8568
    %v9254 = vunpack.c.h.b16 %v8568
    %v9255 = vunpack.c.l.b16 %v8569
    %v9256 = vunpack.c.h.b16 %v8569
    %v9257 = vunpack.c.l.b16 %v8570
    %v9258 = vunpack.c.h.b16 %v8570
    %v9259 = vunpack.c.l.b16 %v8571
    %v9260 = vunpack.c.h.b16 %v8571
    %v9261 = vunpack.c.l.b16 %v8572
    %v9262 = vunpack.c.h.b16 %v8572
    %v9263 = vunpack.c.l.b16 %v8573
    %v9264 = vunpack.c.h.b16 %v8573
    %v9265 = vunpack.c.l.b16 %v8574
    %v9266 = vunpack.c.h.b16 %v8574
    %v9267 = vunpack.c.l.b16 %v8575
    %v9268 = vunpack.c.h.b16 %v8575
    %v9269 = vunpack.c.l.b16 %v8576
    %v9270 = vunpack.c.h.b16 %v8576
    %v9271 = vunpack.c.l.b16 %v8577
    %v9272 = vunpack.c.h.b16 %v8577
    %v9273 = vunpack.c.l.b16 %v8578
    %v9274 = vunpack.c.h.b16 %v8578
    %v9275 = vunpack.c.l.b16 %v8579
    %v9276 = vunpack.c.h.b16 %v8579
    %v9277 = vunpack.c.l.b16 %v8580
    %v9278 = vunpack.c.h.b16 %v8580
    %v9279 = vunpack.c.l.b16 %v8581
    %v9280 = vunpack.c.h.b16 %v8581
    %v9281 = vunpack.c.l.b16 %v8582
    %v9282 = vunpack.c.h.b16 %v8582
    %v9283 = vunpack.c.l.b16 %v8583
    %v9284 = vunpack.c.h.b16 %v8583
    %v9285 = vunpack.c.l.b16 %v8584
    %v9286 = vunpack.c.h.b16 %v8584
    %v9287 = vunpack.c.l.b16 %v8585
    %v9288 = vunpack.c.h.b16 %v8585
    %v9289 = vunpack.c.l.b16 %v8586
    %v9290 = vunpack.c.h.b16 %v8586
    %v9291 = vunpack.c.l.b16 %v8587
    %v9292 = vunpack.c.h.b16 %v8587
    %v9293 = vunpack.c.l.b16 %v8588
    %v9294 = vunpack.c.h.b16 %v8588
    %v9295 = vunpack.c.l.b16 %v8589
    %v9296 = vunpack.c.h.b16 %v8589
    %v9297 = vunpack.c.l.b16 %v8590
    %v9298 = vunpack.c.h.b16 %v8590
    %v9299 = vunpack.c.l.b16 %v8591
    %v9300 = vunpack.c.h.b16 %v8591
    %v9301 = vunpack.c.l.b16 %v8592
    %v9302 = vunpack.c.h.b16 %v8592
    %v9303 = vunpack.c.l.b16 %v8593
    %v9304 = vunpack.c.h.b16 %v8593
    %v9305 = vunpack.c.l.b16 %v8594
    %v9306 = vunpack.c.h.b16 %v8594
    %v9307 = vunpack.c.l.b16 %v8595
    %v9308 = vunpack.c.h.b16 %v8595
    %v9309 = vunpack.c.l.b16 %v8596
    %v9310 = vunpack.c.h.b16 %v8596
    %v9311 = vunpack.c.l.b16 %v8597
    %v9312 = vunpack.c.h.b16 %v8597
    %v9313 = vunpack.c.l.b16 %v8598
    %v9314 = vunpack.c.h.b16 %v8598
    %v9315 = vunpack.c.l.b16 %v8599
    %v9316 = vunpack.c.h.b16 %v8599
    %v9317 = vunpack.c.l.b16 %v8600
    %v9318 = vunpack.c.h.b16 %v8600
    %v9319 = vunpack.c.l.b16 %v8601
    %v9320 = vunpack.c.h.b16 %v8601
    %v9321 = vunpack.c.l.b16 %v8602
    %v9322 = vunpack.c.h.b16 %v8602
    %v9323 = vunpack.c.l.b16 %v8603
    %v9324 = vunpack.c.h.b16 %v8603
    %v9325 = vunpack.c.l.b16 %v8604
    %v9326 = vunpack.c.h.b16 %v8604
    %v9327 = vunpack.c.l.b16 %v8605
    %v9328 = vunpack.c.h.b16 %v8605
    %v9329 = vunpack.c.l.b16 %v8606
    %v9330 = vunpack.c.h.b16 %v8606
    %v9331 = vunpack.c.l.b16 %v8607
    %v9332 = vunpack.c.h.b16 %v8607
    %v9333 = vunpack.c.l.b16 %v8608
    %v9334 = vunpack.c.h.b16 %v8608
    %v9335 = vunpack.c.l.b16 %v8609
    %v9336 = vunpack.c.h.b16 %v8609
    %v9337 = vunpack.c.l.b16 %v8610
    %v9338 = vunpack.c.h.b16 %v8610
    %v9339 = vunpack.c.l.b16 %v8611
    %v9340 = vunpack.c.h.b16 %v8611
    %v9341 = vunpack.c.l.b16 %v8612
    %v9342 = vunpack.c.h.b16 %v8612
    %v9343 = vunpack.c.l.b16 %v8613
    %v9344 = vunpack.c.h.b16 %v8613
    %v9345 = vunpack.c.l.b16 %v8614
    %v9346 = vunpack.c.h.b16 %v8614
    %v9347 = vunpack.c.l.b16 %v8615
    %v9348 = vunpack.c.h.b16 %v8615
    %v9349 = vunpack.c.l.b16 %v8616
    %v9350 = vunpack.c.h.b16 %v8616
    %v9351 = vunpack.c.l.b16 %v8617
    %v9352 = vunpack.c.h.b16 %v8617
    %v9353 = vunpack.c.l.b16 %v8618
    %v9354 = vunpack.c.h.b16 %v8618
    %v9355 = vunpack.c.l.b16 %v8619
    %v9356 = vunpack.c.h.b16 %v8619
    %v9357 = vunpack.c.l.b16 %v8620
    %v9358 = vunpack.c.h.b16 %v8620
    %v9359 = vunpack.c.l.b16 %v8621
    %v9360 = vunpack.c.h.b16 %v8621
    %v9361 = vunpack.c.l.b16 %v8622
    %v9362 = vunpack.c.h.b16 %v8622
    %v9363 = vunpack.c.l.b16 %v8623
    %v9364 = vunpack.c.h.b16 %v8623
    %v9365 = vunpack.c.l.b16 %v8624
    %v9366 = vunpack.c.h.b16 %v8624
    %v9367 = vunpack.c.l.b16 %v8625
    %v9368 = vunpack.c.h.b16 %v8625
    %v9369 = vunpack.c.l.b16 %v8626
    %v9370 = vunpack.c.h.b16 %v8626
    %v9371 = vunpack.c.l.b16 %v8627
    %v9372 = vunpack.c.h.b16 %v8627
    %v9373 = vunpack.c.l.b16 %v8628
    %v9374 = vunpack.c.h.b16 %v8628
    %v9375 = vunpack.c.l.b16 %v8629
    %v9376 = vunpack.c.h.b16 %v8629
    %v9377 = vunpack.c.l.b16 %v8630
    %v9378 = vunpack.c.h.b16 %v8630
    %v9379 = vunpack.c.l.b16 %v8631
    %v9380 = vunpack.c.h.b16 %v8631
    %v9381 = vunpack.c.l.b16 %v8632
    %v9382 = vunpack.c.h.b16 %v8632
    %v9383 = vunpack.c.l.b16 %v8633
    %v9384 = vunpack.c.h.b16 %v8633
    %v9385 = vunpack.c.l.b16 %v8634
    %v9386 = vunpack.c.h.b16 %v8634
    %v9387 = vunpack.c.l.b16 %v8635
    %v9388 = vunpack.c.h.b16 %v8635
    %v9389 = vunpack.c.l.b16 %v8636
    %v9390 = vunpack.c.h.b16 %v8636
    %v9391 = vunpack.c.l.b16 %v8637
    %v9392 = vunpack.c.h.b16 %v8637
    %v9393 = vunpack.c.l.b16 %v8638
    %v9394 = vunpack.c.h.b16 %v8638
    %v9395 = vunpack.c.l.b16 %v8639
    %v9396 = vunpack.c.h.b16 %v8639
    %v9397 = vunpack.c.l.b16 %v8640
    %v9398 = vunpack.c.h.b16 %v8640
    %v9399 = vunpack.c.l.b16 %v8641
    %v9400 = vunpack.c.h.b16 %v8641
    %v9401 = vunpack.c.l.b16 %v8642
    %v9402 = vunpack.c.h.b16 %v8642
    %v9403 = vunpack.c.l.b16 %v8643
    %v9404 = vunpack.c.h.b16 %v8643
    %v9405 = vunpack.c.l.b16 %v8644
    %v9406 = vunpack.c.h.b16 %v8644
    %v9407 = vunpack.c.l.b16 %v8645
    %v9408 = vunpack.c.h.b16 %v8645
    %v9409 = vunpack.c.l.b16 %v8646
    %v9410 = vunpack.c.h.b16 %v8646
    %v9411 = vunpack.c.l.b16 %v8647
    %v9412 = vunpack.c.h.b16 %v8647
    %v9413 = vunpack.c.l.b16 %v8648
    %v9414 = vunpack.c.h.b16 %v8648
    %v9415 = vunpack.c.l.b16 %v8649
    %v9416 = vunpack.c.h.b16 %v8649
    %v9417 = vunpack.c.l.b16 %v8650
    %v9418 = vunpack.c.h.b16 %v8650
    %v9419 = vunpack.c.l.b16 %v8651
    %v9420 = vunpack.c.h.b16 %v8651
    %v9421 = vunpack.c.l.b16 %v8652
    %v9422 = vunpack.c.h.b16 %v8652
    %v9423 = vunpack.c.l.b16 %v8653
    %v9424 = vunpack.c.h.b16 %v8653
    %v9425 = vunpack.c.l.b16 %v8654
    %v9426 = vunpack.c.h.b16 %v8654
    %v9427 = vunpack.c.l.b16 %v8655
    %v9428 = vunpack.c.h.b16 %v8655
    %v9429 = vunpack.c.l.b16 %v8656
    %v9430 = vunpack.c.h.b16 %v8656
    %v9431 = vunpack.c.l.b16 %v8657
    %v9432 = vunpack.c.h.b16 %v8657
    %v9433 = vunpack.c.l.b16 %v8658
    %v9434 = vunpack.c.h.b16 %v8658
    %v9435 = vunpack.c.l.b16 %v8659
    %v9436 = vunpack.c.h.b16 %v8659
    %v9437 = vunpack.c.l.b16 %v8660
    %v9438 = vunpack.c.h.b16 %v8660
    %v9439 = vunpack.c.l.b16 %v8661
    %v9440 = vunpack.c.h.b16 %v8661
    %v9441 = vunpack.c.l.b16 %v8662
    %v9442 = vunpack.c.h.b16 %v8662
    %v9443 = vunpack.c.l.b16 %v8663
    %v9444 = vunpack.c.h.b16 %v8663
    %v9445 = vunpack.c.l.b16 %v8664
    %v9446 = vunpack.c.h.b16 %v8664
    %v9447 = vunpack.c.l.b16 %v8665
    %v9448 = vunpack.c.h.b16 %v8665
    %v9449 = vunpack.c.l.b16 %v8666
    %v9450 = vunpack.c.h.b16 %v8666
    %v9451 = vunpack.c.l.b16 %v8667
    %v9452 = vunpack.c.h.b16 %v8667
    %v9453 = vunpack.c.l.b16 %v8668
    %v9454 = vunpack.c.h.b16 %v8668
    %v9455 = vunpack.c.l.b16 %v8669
    %v9456 = vunpack.c.h.b16 %v8669
    %v9457 = vunpack.c.l.b16 %v8670
    %v9458 = vunpack.c.h.b16 %v8670
    %v9459 = vunpack.c.l.b16 %v8671
    %v9460 = vunpack.c.h.b16 %v8671
    %v9461 = vunpack.c.l.b16 %v8672
    %v9462 = vunpack.c.h.b16 %v8672
    %v9463 = vpack.c.b16 %v8955, %v8951
    %v9464 = vpack.c.b16 %v8956, %v8952
    %v9465 = vpack.c.b16 %v8957, %v8953
    %v9466 = vpack.c.b16 %v8958, %v8954
    %v9467 = vpack.c.b16 %v8963, %v8959
    %v9468 = vpack.c.b16 %v8964, %v8960
    %v9469 = vpack.c.b16 %v8965, %v8961
    %v9470 = vpack.c.b16 %v8966, %v8962
    %v9471 = vpack.c.b16 %v8971, %v8967
    %v9472 = vpack.c.b16 %v8972, %v8968
    %v9473 = vpack.c.b16 %v8973, %v8969
    %v9474 = vpack.c.b16 %v8974, %v8970
    %v9475 = vpack.c.b16 %v8979, %v8975
    %v9476 = vpack.c.b16 %v8980, %v8976
    %v9477 = vpack.c.b16 %v8981, %v8977
    %v9478 = vpack.c.b16 %v8982, %v8978
    %v9479 = vpack.c.b16 %v8987, %v8983
    %v9480 = vpack.c.b16 %v8988, %v8984
    %v9481 = vpack.c.b16 %v8989, %v8985
    %v9482 = vpack.c.b16 %v8990, %v8986
    %v9483 = vpack.c.b16 %v8995, %v8991
    %v9484 = vpack.c.b16 %v8996, %v8992
    %v9485 = vpack.c.b16 %v8997, %v8993
    %v9486 = vpack.c.b16 %v8998, %v8994
    %v9487 = vpack.c.b16 %v9003, %v8999
    %v9488 = vpack.c.b16 %v9004, %v9000
    %v9489 = vpack.c.b16 %v9005, %v9001
    %v9490 = vpack.c.b16 %v9006, %v9002
    %v9491 = vpack.c.b16 %v9011, %v9007
    %v9492 = vpack.c.b16 %v9012, %v9008
    %v9493 = vpack.c.b16 %v9013, %v9009
    %v9494 = vpack.c.b16 %v9014, %v9010
    %v9495 = vpack.c.b16 %v9019, %v9015
    %v9496 = vpack.c.b16 %v9020, %v9016
    %v9497 = vpack.c.b16 %v9021, %v9017
    %v9498 = vpack.c.b16 %v9022, %v9018
    %v9499 = vpack.c.b16 %v9027, %v9023
    %v9500 = vpack.c.b16 %v9028, %v9024
    %v9501 = vpack.c.b16 %v9029, %v9025
    %v9502 = vpack.c.b16 %v9030, %v9026
    %v9503 = vpack.c.b16 %v9035, %v9031
    %v9504 = vpack.c.b16 %v9036, %v9032
    %v9505 = vpack.c.b16 %v9037, %v9033
    %v9506 = vpack.c.b16 %v9038, %v9034
    %v9507 = vpack.c.b16 %v9043, %v9039
    %v9508 = vpack.c.b16 %v9044, %v9040
    %v9509 = vpack.c.b16 %v9045, %v9041
    %v9510 = vpack.c.b16 %v9046, %v9042
    %v9511 = vpack.c.b16 %v9051, %v9047
    %v9512 = vpack.c.b16 %v9052, %v9048
    %v9513 = vpack.c.b16 %v9053, %v9049
    %v9514 = vpack.c.b16 %v9054, %v9050
    %v9515 = vpack.c.b16 %v9059, %v9055
    %v9516 = vpack.c.b16 %v9060, %v9056
    %v9517 = vpack.c.b16 %v9061, %v9057
    %v9518 = vpack.c.b16 %v9062, %v9058
    %v9519 = vpack.c.b16 %v9067, %v9063
    %v9520 = vpack.c.b16 %v9068, %v9064
    %v9521 = vpack.c.b16 %v9069, %v9065
    %v9522 = vpack.c.b16 %v9070, %v9066
    %v9523 = vpack.c.b16 %v9075, %v9071
    %v9524 = vpack.c.b16 %v9076, %v9072
    %v9525 = vpack.c.b16 %v9077, %v9073
    %v9526 = vpack.c.b16 %v9078, %v9074
    %v9527 = vpack.c.b16 %v9083, %v9079
    %v9528 = vpack.c.b16 %v9084, %v9080
    %v9529 = vpack.c.b16 %v9085, %v9081
    %v9530 = vpack.c.b16 %v9086, %v9082
    %v9531 = vpack.c.b16 %v9091, %v9087
    %v9532 = vpack.c.b16 %v9092, %v9088
    %v9533 = vpack.c.b16 %v9093, %v9089
    %v9534 = vpack.c.b16 %v9094, %v9090
    %v9535 = vpack.c.b16 %v9099, %v9095
    %v9536 = vpack.c.b16 %v9100, %v9096
    %v9537 = vpack.c.b16 %v9101, %v9097
    %v9538 = vpack.c.b16 %v9102, %v9098
    %v9539 = vpack.c.b16 %v9107, %v9103
    %v9540 = vpack.c.b16 %v9108, %v9104
    %v9541 = vpack.c.b16 %v9109, %v9105
    %v9542 = vpack.c.b16 %v9110, %v9106
    %v9543 = vpack.c.b16 %v9115, %v9111
    %v9544 = vpack.c.b16 %v9116, %v9112
    %v9545 = vpack.c.b16 %v9117, %v9113
    %v9546 = vpack.c.b16 %v9118, %v9114
    %v9547 = vpack.c.b16 %v9123, %v9119
    %v9548 = vpack.c.b16 %v9124, %v9120
    %v9549 = vpack.c.b16 %v9125, %v9121
    %v9550 = vpack.c.b16 %v9126, %v9122
    %v9551 = vpack.c.b16 %v9131, %v9127
    %v9552 = vpack.c.b16 %v9132, %v9128
    %v9553 = vpack.c.b16 %v9133, %v9129
    %v9554 = vpack.c.b16 %v9134, %v9130
    %v9555 = vpack.c.b16 %v9139, %v9135
    %v9556 = vpack.c.b16 %v9140, %v9136
    %v9557 = vpack.c.b16 %v9141, %v9137
    %v9558 = vpack.c.b16 %v9142, %v9138
    %v9559 = vpack.c.b16 %v9147, %v9143
    %v9560 = vpack.c.b16 %v9148, %v9144
    %v9561 = vpack.c.b16 %v9149, %v9145
    %v9562 = vpack.c.b16 %v9150, %v9146
    %v9563 = vpack.c.b16 %v9155, %v9151
    %v9564 = vpack.c.b16 %v9156, %v9152
    %v9565 = vpack.c.b16 %v9157, %v9153
    %v9566 = vpack.c.b16 %v9158, %v9154
    %v9567 = vpack.c.b16 %v9163, %v9159
    %v9568 = vpack.c.b16 %v9164, %v9160
    %v9569 = vpack.c.b16 %v9165, %v9161
    %v9570 = vpack.c.b16 %v9166, %v9162
    %v9571 = vpack.c.b16 %v9171, %v9167
    %v9572 = vpack.c.b16 %v9172, %v9168
    %v9573 = vpack.c.b16 %v9173, %v9169
    %v9574 = vpack.c.b16 %v9174, %v9170
    %v9575 = vpack.c.b16 %v9179, %v9175
    %v9576 = vpack.c.b16 %v9180, %v9176
    %v9577 = vpack.c.b16 %v9181, %v9177
    %v9578 = vpack.c.b16 %v9182, %v9178
    %v9579 = vpack.c.b16 %v9187, %v9183
    %v9580 = vpack.c.b16 %v9188, %v9184
    %v9581 = vpack.c.b16 %v9189, %v9185
    %v9582 = vpack.c.b16 %v9190, %v9186
    %v9583 = vpack.c.b16 %v9195, %v9191
    %v9584 = vpack.c.b16 %v9196, %v9192
    %v9585 = vpack.c.b16 %v9197, %v9193
    %v9586 = vpack.c.b16 %v9198, %v9194
    %v9587 = vpack.c.b16 %v9203, %v9199
    %v9588 = vpack.c.b16 %v9204, %v9200
    %v9589 = vpack.c.b16 %v9205, %v9201
    %v9590 = vpack.c.b16 %v9206, %v9202
    %v9591 = vpack.c.b16 %v9211, %v9207
    %v9592 = vpack.c.b16 %v9212, %v9208
    %v9593 = vpack.c.b16 %v9213, %v9209
    %v9594 = vpack.c.b16 %v9214, %v9210
    %v9595 = vpack.c.b16 %v9219, %v9215
    %v9596 = vpack.c.b16 %v9220, %v9216
    %v9597 = vpack.c.b16 %v9221, %v9217
    %v9598 = vpack.c.b16 %v9222, %v9218
    %v9599 = vpack.c.b16 %v9227, %v9223
    %v9600 = vpack.c.b16 %v9228, %v9224
    %v9601 = vpack.c.b16 %v9229, %v9225
    %v9602 = vpack.c.b16 %v9230, %v9226
    %v9603 = vpack.c.b16 %v9235, %v9231
    %v9604 = vpack.c.b16 %v9236, %v9232
    %v9605 = vpack.c.b16 %v9237, %v9233
    %v9606 = vpack.c.b16 %v9238, %v9234
    %v9607 = vpack.c.b16 %v9243, %v9239
    %v9608 = vpack.c.b16 %v9244, %v9240
    %v9609 = vpack.c.b16 %v9245, %v9241
    %v9610 = vpack.c.b16 %v9246, %v9242
    %v9611 = vpack.c.b16 %v9251, %v9247
    %v9612 = vpack.c.b16 %v9252, %v9248
    %v9613 = vpack.c.b16 %v9253, %v9249
    %v9614 = vpack.c.b16 %v9254, %v9250
    %v9615 = vpack.c.b16 %v9259, %v9255
    %v9616 = vpack.c.b16 %v9260, %v9256
    %v9617 = vpack.c.b16 %v9261, %v9257
    %v9618 = vpack.c.b16 %v9262, %v9258
    %v9619 = vpack.c.b16 %v9267, %v9263
    %v9620 = vpack.c.b16 %v9268, %v9264
    %v9621 = vpack.c.b16 %v9269, %v9265
    %v9622 = vpack.c.b16 %v9270, %v9266
    %v9623 = vpack.c.b16 %v9275, %v9271
    %v9624 = vpack.c.b16 %v9276, %v9272
    %v9625 = vpack.c.b16 %v9277, %v9273
    %v9626 = vpack.c.b16 %v9278, %v9274
    %v9627 = vpack.c.b16 %v9283, %v9279
    %v9628 = vpack.c.b16 %v9284, %v9280
    %v9629 = vpack.c.b16 %v9285, %v9281
    %v9630 = vpack.c.b16 %v9286, %v9282
    %v9631 = vpack.c.b16 %v9291, %v9287
    %v9632 = vpack.c.b16 %v9292, %v9288
    %v9633 = vpack.c.b16 %v9293, %v9289
    %v9634 = vpack.c.b16 %v9294, %v9290
    %v9635 = vpack.c.b16 %v9299, %v9295
    %v9636 = vpack.c.b16 %v9300, %v9296
    %v9637 = vpack.c.b16 %v9301, %v9297
    %v9638 = vpack.c.b16 %v9302, %v9298
    %v9639 = vpack.c.b16 %v9307, %v9303
    %v9640 = vpack.c.b16 %v9308, %v9304
    %v9641 = vpack.c.b16 %v9309, %v9305
    %v9642 = vpack.c.b16 %v9310, %v9306
    %v9643 = vpack.c.b16 %v9315, %v9311
    %v9644 = vpack.c.b16 %v9316, %v9312
    %v9645 = vpack.c.b16 %v9317, %v9313
    %v9646 = vpack.c.b16 %v9318, %v9314
    %v9647 = vpack.c.b16 %v9323, %v9319
    %v9648 = vpack.c.b16 %v9324, %v9320
    %v9649 = vpack.c.b16 %v9325, %v9321
    %v9650 = vpack.c.b16 %v9326, %v9322
    %v9651 = vpack.c.b16 %v9331, %v9327
    %v9652 = vpack.c.b16 %v9332, %v9328
    %v9653 = vpack.c.b16 %v9333, %v9329
    %v9654 = vpack.c.b16 %v9334, %v9330
    %v9655 = vpack.c.b16 %v9339, %v9335
    %v9656 = vpack.c.b16 %v9340, %v9336
    %v9657 = vpack.c.b16 %v9341, %v9337
    %v9658 = vpack.c.b16 %v9342, %v9338
    %v9659 = vpack.c.b16 %v9347, %v9343
    %v9660 = vpack.c.b16 %v9348, %v9344
    %v9661 = vpack.c.b16 %v9349, %v9345
    %v9662 = vpack.c.b16 %v9350, %v9346
    %v9663 = vpack.c.b16 %v9355, %v9351
    %v9664 = vpack.c.b16 %v9356, %v9352
    %v9665 = vpack.c.b16 %v9357, %v9353
    %v9666 = vpack.c.b16 %v9358, %v9354
    %v9667 = vpack.c.b16 %v9363, %v9359
    %v9668 = vpack.c.b16 %v9364, %v9360
    %v9669 = vpack.c.b16 %v9365, %v9361
    %v9670 = vpack.c.b16 %v9366, %v9362
    %v9671 = vpack.c.b16 %v9371, %v9367
    %v9672 = vpack.c.b16 %v9372, %v9368
    %v9673 = vpack.c.b16 %v9373, %v9369
    %v9674 = vpack.c.b16 %v9374, %v9370
    %v9675 = vpack.c.b16 %v9379, %v9375
    %v9676 = vpack.c.b16 %v9380, %v9376
    %v9677 = vpack.c.b16 %v9381, %v9377
    %v9678 = vpack.c.b16 %v9382, %v9378
    %v9679 = vpack.c.b16 %v9387, %v9383
    %v9680 = vpack.c.b16 %v9388, %v9384
    %v9681 = vpack.c.b16 %v9389, %v9385
    %v9682 = vpack.c.b16 %v9390, %v9386
    %v9683 = vpack.c.b16 %v9395, %v9391
    %v9684 = vpack.c.b16 %v9396, %v9392
    %v9685 = vpack.c.b16 %v9397, %v9393
    %v9686 = vpack.c.b16 %v9398, %v9394
    %v9687 = vpack.c.b16 %v9403, %v9399
    %v9688 = vpack.c.b16 %v9404, %v9400
    %v9689 = vpack.c.b16 %v9405, %v9401
    %v9690 = vpack.c.b16 %v9406, %v9402
    %v9691 = vpack.c.b16 %v9411, %v9407
    %v9692 = vpack.c.b16 %v9412, %v9408
    %v9693 = vpack.c.b16 %v9413, %v9409
    %v9694 = vpack.c.b16 %v9414, %v9410
    %v9695 = vpack.c.b16 %v9419, %v9415
    %v9696 = vpack.c.b16 %v9420, %v9416
    %v9697 = vpack.c.b16 %v9421, %v9417
    %v9698 = vpack.c.b16 %v9422, %v9418
    %v9699 = vpack.c.b16 %v9427, %v9423
    %v9700 = vpack.c.b16 %v9428, %v9424
    %v9701 = vpack.c.b16 %v9429, %v9425
    %v9702 = vpack.c.b16 %v9430, %v9426
    %v9703 = vpack.c.b16 %v9435, %v9431
    %v9704 = vpack.c.b16 %v9436, %v9432
    %v9705 = vpack.c.b16 %v9437, %v9433
    %v9706 = vpack.c.b16 %v9438, %v9434
    %v9707 = vpack.c.b16 %v9443, %v9439
    %v9708 = vpack.c.b16 %v9444, %v9440
    %v9709 = vpack.c.b16 %v9445, %v9441
    %v9710 = vpack.c.b16 %v9446, %v9442
    %v9711 = vpack.c.b16 %v9451, %v9447
    %v9712 = vpack.c.b16 %v9452, %v9448
    %v9713 = vpack.c.b16 %v9453, %v9449
    %v9714 = vpack.c.b16 %v9454, %v9450
    %v9715 = vpack.c.b16 %v9459, %v9455
    %v9716 = vpack.c.b16 %v9460, %v9456
    %v9717 = vpack.c.b16 %v9461, %v9457
    %v9718 = vpack.c.b16 %v9462, %v9458
    %9975 = vmatprep.subr.bf16.mxu0 %v9464
    %9976 = vmatpush1.bf16.msra.mxu0 %v9463
    %9977 = vmatprep.subr.bf16.mxu0 %v9468
    %9978 = vmatpush1.bf16.msra.mxu0 %v9467
    %9979 = vmatprep.subr.bf16.mxu0 %v9472
    %9980 = vmatpush1.bf16.msra.mxu0 %v9471
    %9981 = vmatprep.subr.bf16.mxu0 %v9476
    %9982 = vmatpush1.bf16.msra.mxu0 %v9475
    %9983 = vmatprep.subr.bf16.mxu0 %v9480
    %9984 = vmatpush1.bf16.msra.mxu0 %v9479
    %9985 = vmatprep.subr.bf16.mxu0 %v9484
    %9986 = vmatpush1.bf16.msra.mxu0 %v9483
    %9987 = vmatprep.subr.bf16.mxu0 %v9488
    %9988 = vmatpush1.bf16.msra.mxu0 %v9487
    %9989 = vmatprep.subr.bf16.mxu0 %v9492
    %9990 = vmatpush1.bf16.msra.mxu0 %v9491
    %9991 = vmatprep.subr.bf16.mxu0 %v9496
    %9992 = vmatpush1.bf16.msra.mxu0 %v9495
    %9993 = vmatprep.subr.bf16.mxu0 %v9500
    %9994 = vmatpush1.bf16.msra.mxu0 %v9499
    %9995 = vmatprep.subr.bf16.mxu0 %v9504
    %9996 = vmatpush1.bf16.msra.mxu0 %v9503
    %9997 = vmatprep.subr.bf16.mxu0 %v9508
    %9998 = vmatpush1.bf16.msra.mxu0 %v9507
    %9999 = vmatprep.subr.bf16.mxu0 %v9512
    %10000 = vmatpush1.bf16.msra.mxu0 %v9511
    %10001 = vmatprep.subr.bf16.mxu0 %v9516
    %10002 = vmatpush1.bf16.msra.mxu0 %v9515
    %10003 = vmatprep.subr.bf16.mxu0 %v9520
    %10004 = vmatpush1.bf16.msra.mxu0 %v9519
    %10005 = vmatprep.subr.bf16.mxu0 %v9524
    %10006 = vmatpush1.bf16.msra.mxu0 %v9523
    %10007 = vmatprep.mubr.bf16.mxu0 %v8410
    %10008 = vmatmul.mubr.bf16.gmra.mrb[0].mxu0 %v8409
    %v10009 = vpop.f32.mrb[0].mxu0
    %v10010 = vadd.f32 %v8678, %v10009
    %v10011 = vpop.f32.mrb[0].mxu0
    %v10012 = vadd.f32 %v8682, %v10011
    %v10013 = vpop.f32.mrb[0].mxu0
    %v10014 = vpop.f32.mrb[0].mxu0
    %10015 = vdwg.mxu0
    %10016 = vmatprep.subr.bf16.mxu0 %v9528
    %10017 = vmatpush1.bf16.msra.mxu0 %v9527
    %10018 = vmatprep.subr.bf16.mxu0 %v9532
    %10019 = vmatpush1.bf16.msra.mxu0 %v9531
    %10020 = vmatprep.subr.bf16.mxu0 %v9536
    %10021 = vmatpush1.bf16.msra.mxu0 %v9535
    %10022 = vmatprep.subr.bf16.mxu0 %v9540
    %10023 = vmatpush1.bf16.msra.mxu0 %v9539
    %10024 = vmatprep.subr.bf16.mxu0 %v9544
    %10025 = vmatpush1.bf16.msra.mxu0 %v9543
    %10026 = vmatprep.subr.bf16.mxu0 %v9548
    %10027 = vmatpush1.bf16.msra.mxu0 %v9547
    %10028 = vmatprep.subr.bf16.mxu0 %v9552
    %10029 = vmatpush1.bf16.msra.mxu0 %v9551
    %10030 = vmatprep.subr.bf16.mxu0 %v9556
    %10031 = vmatpush1.bf16.msra.mxu0 %v9555
    %10032 = vmatprep.subr.bf16.mxu0 %v9560
    %10033 = vmatpush1.bf16.msra.mxu0 %v9559
    %10034 = vmatprep.subr.bf16.mxu0 %v9564
    %10035 = vmatpush1.bf16.msra.mxu0 %v9563
    %10036 = vmatprep.subr.bf16.mxu0 %v9568
    %10037 = vmatpush1.bf16.msra.mxu0 %v9567
    %10038 = vmatprep.subr.bf16.mxu0 %v9572
    %10039 = vmatpush1.bf16.msra.mxu0 %v9571
    %10040 = vmatprep.subr.bf16.mxu0 %v9576
    %10041 = vmatpush1.bf16.msra.mxu0 %v9575
    %10042 = vmatprep.subr.bf16.mxu0 %v9580
    %10043 = vmatpush1.bf16.msra.mxu0 %v9579
    %10044 = vmatprep.subr.bf16.mxu0 %v9584
    %10045 = vmatpush1.bf16.msra.mxu0 %v9583
    %10046 = vmatprep.subr.bf16.mxu0 %v9588
    %10047 = vmatpush1.bf16.msra.mxu0 %v9587
    %10048 = vmatprep.mubr.bf16.mxu0 %v8412
    %10049 = vmatmul.mubr.bf16.gmra.mrb[0].mxu0 %v8411
    %v10050 = vpop.f32.mrb[0].mxu0
    %v10051 = vadd.f32 %v10010, %v10050
    %v10052 = vpop.f32.mrb[0].mxu0
    %v10053 = vadd.f32 %v10012, %v10052
    %v10054 = vpop.f32.mrb[0].mxu0
    %v10055 = vpop.f32.mrb[0].mxu0
    %10056 = vdwg.mxu0
    %10057 = vmatprep.subr.bf16.mxu0 %v9592
    %10058 = vmatpush1.bf16.msra.mxu0 %v9591
    %10059 = vmatprep.subr.bf16.mxu0 %v9596
    %10060 = vmatpush1.bf16.msra.mxu0 %v9595
    %10061 = vmatprep.subr.bf16.mxu0 %v9600
    %10062 = vmatpush1.bf16.msra.mxu0 %v9599
    %10063 = vmatprep.subr.bf16.mxu0 %v9604
    %10064 = vmatpush1.bf16.msra.mxu0 %v9603
    %10065 = vmatprep.subr.bf16.mxu0 %v9608
    %10066 = vmatpush1.bf16.msra.mxu0 %v9607
    %10067 = vmatprep.subr.bf16.mxu0 %v9612
    %10068 = vmatpush1.bf16.msra.mxu0 %v9611
    %10069 = vmatprep.subr.bf16.mxu0 %v9616
    %10070 = vmatpush1.bf16.msra.mxu0 %v9615
    %10071 = vmatprep.subr.bf16.mxu0 %v9620
    %10072 = vmatpush1.bf16.msra.mxu0 %v9619
    %10073 = vmatprep.subr.bf16.mxu0 %v9624
    %10074 = vmatpush1.bf16.msra.mxu0 %v9623
    %10075 = vmatprep.subr.bf16.mxu0 %v9628
    %10076 = vmatpush1.bf16.msra.mxu0 %v9627
    %10077 = vmatprep.subr.bf16.mxu0 %v9632
    %10078 = vmatpush1.bf16.msra.mxu0 %v9631
    %10079 = vmatprep.subr.bf16.mxu0 %v9636
    %10080 = vmatpush1.bf16.msra.mxu0 %v9635
    %10081 = vmatprep.subr.bf16.mxu0 %v9640
    %10082 = vmatpush1.bf16.msra.mxu0 %v9639
    %10083 = vmatprep.subr.bf16.mxu0 %v9644
    %10084 = vmatpush1.bf16.msra.mxu0 %v9643
    %10085 = vmatprep.subr.bf16.mxu0 %v9648
    %10086 = vmatpush1.bf16.msra.mxu0 %v9647
    %10087 = vmatprep.subr.bf16.mxu0 %v9652
    %10088 = vmatpush1.bf16.msra.mxu0 %v9651
    %10089 = vmatprep.mubr.bf16.mxu0 %v8414
    %10090 = vmatmul.mubr.bf16.gmra.mrb[0].mxu0 %v8413
    %v10091 = vpop.f32.mrb[0].mxu0
    %v10092 = vadd.f32 %v10051, %v10091
    %v10093 = vpop.f32.mrb[0].mxu0
    %v10094 = vadd.f32 %v10053, %v10093
    %v10095 = vpop.f32.mrb[0].mxu0
    %v10096 = vpop.f32.mrb[0].mxu0
    %10097 = vdwg.mxu0
    %10098 = vmatprep.subr.bf16.mxu0 %v9656
    %10099 = vmatpush1.bf16.msra.mxu0 %v9655
    %10100 = vmatprep.subr.bf16.mxu0 %v9660
    %10101 = vmatpush1.bf16.msra.mxu0 %v9659
    %10102 = vmatprep.subr.bf16.mxu0 %v9664
    %10103 = vmatpush1.bf16.msra.mxu0 %v9663
    %10104 = vmatprep.subr.bf16.mxu0 %v9668
    %10105 = vmatpush1.bf16.msra.mxu0 %v9667
    %10106 = vmatprep.subr.bf16.mxu0 %v9672
    %10107 = vmatpush1.bf16.msra.mxu0 %v9671
    %10108 = vmatprep.subr.bf16.mxu0 %v9676
    %10109 = vmatpush1.bf16.msra.mxu0 %v9675
    %10110 = vmatprep.subr.bf16.mxu0 %v9680
    %10111 = vmatpush1.bf16.msra.mxu0 %v9679
    %10112 = vmatprep.subr.bf16.mxu0 %v9684
    %10113 = vmatpush1.bf16.msra.mxu0 %v9683
    %10114 = vmatprep.subr.bf16.mxu0 %v9688
    %10115 = vmatpush1.bf16.msra.mxu0 %v9687
    %10116 = vmatprep.subr.bf16.mxu0 %v9692
    %10117 = vmatpush1.bf16.msra.mxu0 %v9691
    %10118 = vmatprep.subr.bf16.mxu0 %v9696
    %10119 = vmatpush1.bf16.msra.mxu0 %v9695
    %10120 = vmatprep.subr.bf16.mxu0 %v9700
    %10121 = vmatpush1.bf16.msra.mxu0 %v9699
    %10122 = vmatprep.subr.bf16.mxu0 %v9704
    %10123 = vmatpush1.bf16.msra.mxu0 %v9703
    %10124 = vmatprep.subr.bf16.mxu0 %v9708
    %10125 = vmatpush1.bf16.msra.mxu0 %v9707
    %10126 = vmatprep.subr.bf16.mxu0 %v9712
    %10127 = vmatpush1.bf16.msra.mxu0 %v9711
    %10128 = vmatprep.subr.bf16.mxu0 %v9716
    %10129 = vmatpush1.bf16.msra.mxu0 %v9715
    %10130 = vmatprep.mubr.bf16.mxu0 %v8416
    %10131 = vmatmul.mubr.bf16.gmra.mrb[0].mxu0 %v8415
    %v10132 = vpop.f32.mrb[0].mxu0
    %v10133 = vadd.f32 %v10092, %v10132
    %v10134 = vpop.f32.mrb[0].mxu0
    %v10135 = vadd.f32 %v10094, %v10134
    %v10136 = vpop.f32.mrb[0].mxu0
    %v10137 = vpop.f32.mrb[0].mxu0
    %10138 = vdwg.mxu0
    %10139 = vmatprep.subr.bf16.mxu0 %v9466
    %10140 = vmatpush1.bf16.msra.mxu0 %v9465
    %10141 = vmatprep.subr.bf16.mxu0 %v9470
    %10142 = vmatpush1.bf16.msra.mxu0 %v9469
    %10143 = vmatprep.subr.bf16.mxu0 %v9474
    %10144 = vmatpush1.bf16.msra.mxu0 %v9473
    %10145 = vmatprep.subr.bf16.mxu0 %v9478
    %10146 = vmatpush1.bf16.msra.mxu0 %v9477
    %10147 = vmatprep.subr.bf16.mxu0 %v9482
    %10148 = vmatpush1.bf16.msra.mxu0 %v9481
    %10149 = vmatprep.subr.bf16.mxu0 %v9486
    %10150 = vmatpush1.bf16.msra.mxu0 %v9485
    %10151 = vmatprep.subr.bf16.mxu0 %v9490
    %10152 = vmatpush1.bf16.msra.mxu0 %v9489
    %10153 = vmatprep.subr.bf16.mxu0 %v9494
    %10154 = vmatpush1.bf16.msra.mxu0 %v9493
    %10155 = vmatprep.subr.bf16.mxu0 %v9498
    %10156 = vmatpush1.bf16.msra.mxu0 %v9497
    %10157 = vmatprep.subr.bf16.mxu0 %v9502
    %10158 = vmatpush1.bf16.msra.mxu0 %v9501
    %10159 = vmatprep.subr.bf16.mxu0 %v9506
    %10160 = vmatpush1.bf16.msra.mxu0 %v9505
    %10161 = vmatprep.subr.bf16.mxu0 %v9510
    %10162 = vmatpush1.bf16.msra.mxu0 %v9509
    %10163 = vmatprep.subr.bf16.mxu0 %v9514
    %10164 = vmatpush1.bf16.msra.mxu0 %v9513
    %10165 = vmatprep.subr.bf16.mxu0 %v9518
    %10166 = vmatpush1.bf16.msra.mxu0 %v9517
    %10167 = vmatprep.subr.bf16.mxu0 %v9522
    %10168 = vmatpush1.bf16.msra.mxu0 %v9521
    %10169 = vmatprep.subr.bf16.mxu0 %v9526
    %10170 = vmatpush1.bf16.msra.mxu0 %v9525
    %10171 = vmatprep.mubr.bf16.mxu0 %v8410
    %10172 = vmatmul.mubr.bf16.gmra.mrb[0].mxu0 %v8409
    %v10173 = vpop.f32.mrb[0].mxu0
    %v10174 = vadd.f32 %v8686, %v10173
    %v10175 = vpop.f32.mrb[0].mxu0
    %v10176 = vadd.f32 %v8690, %v10175
    %v10177 = vpop.f32.mrb[0].mxu0
    %v10178 = vpop.f32.mrb[0].mxu0
    %10179 = vdwg.mxu0
    %10180 = vmatprep.subr.bf16.mxu0 %v9530
    %10181 = vmatpush1.bf16.msra.mxu0 %v9529
    %10182 = vmatprep.subr.bf16.mxu0 %v9534
    %10183 = vmatpush1.bf16.msra.mxu0 %v9533
    %10184 = vmatprep.subr.bf16.mxu0 %v9538
    %10185 = vmatpush1.bf16.msra.mxu0 %v9537
    %10186 = vmatprep.subr.bf16.mxu0 %v9542
    %10187 = vmatpush1.bf16.msra.mxu0 %v9541
    %10188 = vmatprep.subr.bf16.mxu0 %v9546
    %10189 = vmatpush1.bf16.msra.mxu0 %v9545
    %10190 = vmatprep.subr.bf16.mxu0 %v9550
    %10191 = vmatpush1.bf16.msra.mxu0 %v9549
    %10192 = vmatprep.subr.bf16.mxu0 %v9554
    %10193 = vmatpush1.bf16.msra.mxu0 %v9553
    %10194 = vmatprep.subr.bf16.mxu0 %v9558
    %10195 = vmatpush1.bf16.msra.mxu0 %v9557
    %10196 = vmatprep.subr.bf16.mxu0 %v9562
    %10197 = vmatpush1.bf16.msra.mxu0 %v9561
    %10198 = vmatprep.subr.bf16.mxu0 %v9566
    %10199 = vmatpush1.bf16.msra.mxu0 %v9565
    %10200 = vmatprep.subr.bf16.mxu0 %v9570
    %10201 = vmatpush1.bf16.msra.mxu0 %v9569
    %10202 = vmatprep.subr.bf16.mxu0 %v9574
    %10203 = vmatpush1.bf16.msra.mxu0 %v9573
    %10204 = vmatprep.subr.bf16.mxu0 %v9578
    %10205 = vmatpush1.bf16.msra.mxu0 %v9577
    %10206 = vmatprep.subr.bf16.mxu0 %v9582
    %10207 = vmatpush1.bf16.msra.mxu0 %v9581
    %10208 = vmatprep.subr.bf16.mxu0 %v9586
    %10209 = vmatpush1.bf16.msra.mxu0 %v9585
    %10210 = vmatprep.subr.bf16.mxu0 %v9590
    %10211 = vmatpush1.bf16.msra.mxu0 %v9589
    %10212 = vmatprep.mubr.bf16.mxu0 %v8412
    %10213 = vmatmul.mubr.bf16.gmra.mrb[0].mxu0 %v8411
    %v10214 = vpop.f32.mrb[0].mxu0
    %v10215 = vadd.f32 %v10174, %v10214
    %v10216 = vpop.f32.mrb[0].mxu0
    %v10217 = vadd.f32 %v10176, %v10216
    %v10218 = vpop.f32.mrb[0].mxu0
    %v10219 = vpop.f32.mrb[0].mxu0
    %10220 = vdwg.mxu0
    %10221 = vmatprep.subr.bf16.mxu0 %v9594
    %10222 = vmatpush1.bf16.msra.mxu0 %v9593
    %10223 = vmatprep.subr.bf16.mxu0 %v9598
    %10224 = vmatpush1.bf16.msra.mxu0 %v9597
    %10225 = vmatprep.subr.bf16.mxu0 %v9602
    %10226 = vmatpush1.bf16.msra.mxu0 %v9601
    %10227 = vmatprep.subr.bf16.mxu0 %v9606
    %10228 = vmatpush1.bf16.msra.mxu0 %v9605
    %10229 = vmatprep.subr.bf16.mxu0 %v9610
    %10230 = vmatpush1.bf16.msra.mxu0 %v9609
    %10231 = vmatprep.subr.bf16.mxu0 %v9614
    %10232 = vmatpush1.bf16.msra.mxu0 %v9613
    %10233 = vmatprep.subr.bf16.mxu0 %v9618
    %10234 = vmatpush1.bf16.msra.mxu0 %v9617
    %10235 = vmatprep.subr.bf16.mxu0 %v9622
    %10236 = vmatpush1.bf16.msra.mxu0 %v9621
    %10237 = vmatprep.subr.bf16.mxu0 %v9626
    %10238 = vmatpush1.bf16.msra.mxu0 %v9625
    %10239 = vmatprep.subr.bf16.mxu0 %v9630
    %10240 = vmatpush1.bf16.msra.mxu0 %v9629
    %10241 = vmatprep.subr.bf16.mxu0 %v9634
    %10242 = vmatpush1.bf16.msra.mxu0 %v9633
    %10243 = vmatprep.subr.bf16.mxu0 %v9638
    %10244 = vmatpush1.bf16.msra.mxu0 %v9637
    %10245 = vmatprep.subr.bf16.mxu0 %v9642
    %10246 = vmatpush1.bf16.msra.mxu0 %v9641
    %10247 = vmatprep.subr.bf16.mxu0 %v9646
    %10248 = vmatpush1.bf16.msra.mxu0 %v9645
    %10249 = vmatprep.subr.bf16.mxu0 %v9650
    %10250 = vmatpush1.bf16.msra.mxu0 %v9649
    %10251 = vmatprep.subr.bf16.mxu0 %v9654
    %10252 = vmatpush1.bf16.msra.mxu0 %v9653
    %10253 = vmatprep.mubr.bf16.mxu0 %v8414
    %10254 = vmatmul.mubr.bf16.gmra.mrb[0].mxu0 %v8413
    %v10255 = vpop.f32.mrb[0].mxu0
    %v10256 = vadd.f32 %v10215, %v10255
    %v10257 = vpop.f32.mrb[0].mxu0
    %v10258 = vadd.f32 %v10217, %v10257
    %v10259 = vpop.f32.mrb[0].mxu0
    %v10260 = vpop.f32.mrb[0].mxu0
    %10261 = vdwg.mxu0
    %10262 = vmatprep.subr.bf16.mxu0 %v9658
    %10263 = vmatpush1.bf16.msra.mxu0 %v9657
    %10264 = vmatprep.subr.bf16.mxu0 %v9662
    %10265 = vmatpush1.bf16.msra.mxu0 %v9661
    %10266 = vmatprep.subr.bf16.mxu0 %v9666
    %10267 = vmatpush1.bf16.msra.mxu0 %v9665
    %10268 = vmatprep.subr.bf16.mxu0 %v9670
    %10269 = vmatpush1.bf16.msra.mxu0 %v9669
    %10270 = vmatprep.subr.bf16.mxu0 %v9674
    %10271 = vmatpush1.bf16.msra.mxu0 %v9673
    %10272 = vmatprep.subr.bf16.mxu0 %v9678
    %10273 = vmatpush1.bf16.msra.mxu0 %v9677
    %10274 = vmatprep.subr.bf16.mxu0 %v9682
    %10275 = vmatpush1.bf16.msra.mxu0 %v9681
    %10276 = vmatprep.subr.bf16.mxu0 %v9686
    %10277 = vmatpush1.bf16.msra.mxu0 %v9685
    %10278 = vmatprep.subr.bf16.mxu0 %v9690
    %10279 = vmatpush1.bf16.msra.mxu0 %v9689
    %10280 = vmatprep.subr.bf16.mxu0 %v9694
    %10281 = vmatpush1.bf16.msra.mxu0 %v9693
    %10282 = vmatprep.subr.bf16.mxu0 %v9698
    %10283 = vmatpush1.bf16.msra.mxu0 %v9697
    %10284 = vmatprep.subr.bf16.mxu0 %v9702
    %10285 = vmatpush1.bf16.msra.mxu0 %v9701
    %10286 = vmatprep.subr.bf16.mxu0 %v9706
    %10287 = vmatpush1.bf16.msra.mxu0 %v9705
    %10288 = vmatprep.subr.bf16.mxu0 %v9710
    %10289 = vmatpush1.bf16.msra.mxu0 %v9709
    %10290 = vmatprep.subr.bf16.mxu0 %v9714
    %10291 = vmatpush1.bf16.msra.mxu0 %v9713
    %10292 = vmatprep.subr.bf16.mxu0 %v9718
    %10293 = vmatpush1.bf16.msra.mxu0 %v9717
    %10294 = vmatprep.mubr.bf16.mxu0 %v8416
    %10295 = vmatmul.mubr.bf16.gmra.mrb[0].mxu0 %v8415
    %v10296 = vpop.f32.mrb[0].mxu0
    %v10297 = vadd.f32 %v10256, %v10296
    %v10298 = vpop.f32.mrb[0].mxu0
    %v10299 = vadd.f32 %v10258, %v10298
    %v10300 = vpop.f32.mrb[0].mxu0
    %v10301 = vpop.f32.mrb[0].mxu0
    %10302 = vdwg.mxu0
    %v10303 = vmax.f32 %v10133, 0.0
    %v10304 = vmax.f32 %v10135, 0.0
    %v10305 = vmax.f32 %v10297, 0.0
    %v10306 = vmax.f32 %v10299, 0.0
    %v10307 = vpack.c.bf16 %v10303, %v10303
    %v10308 = vpack.c.bf16 %v10304, %v10304
    %v10309 = vpack.c.bf16 %v10305, %v10305
    %v10310 = vpack.c.bf16 %v10306, %v10306
    %v10311 = vld [vmem:[#allocation14] sm:$0xff]
    %v10312 = vld [vmem:[#allocation14 + $0x8] sm:$0xff]
    %v10313 = vld [vmem:[#allocation14 + $0x10] sm:$0xff]
    %v10314 = vld [vmem:[#allocation14 + $0x18] sm:$0xff]
    %v10315 = vld [vmem:[#allocation14 + $0x20] sm:$0xff]
    %v10316 = vld [vmem:[#allocation14 + $0x28] sm:$0xff]
    %v10317 = vld [vmem:[#allocation14 + $0x30] sm:$0xff]
    %v10318 = vld [vmem:[#allocation14 + $0x38] sm:$0xff]
    %v10319 = vld [vmem:[#allocation14 + $0x40] sm:$0xff]
    %v10320 = vld [vmem:[#allocation14 + $0x48] sm:$0xff]
    %v10321 = vld [vmem:[#allocation14 + $0x50] sm:$0xff]
    %v10322 = vld [vmem:[#allocation14 + $0x58] sm:$0xff]
    %v10323 = vld [vmem:[#allocation14 + $0x60] sm:$0xff]
    %v10324 = vld [vmem:[#allocation14 + $0x68] sm:$0xff]
    %v10325 = vld [vmem:[#allocation14 + $0x70] sm:$0xff]
    %v10326 = vld [vmem:[#allocation14 + $0x78] sm:$0xff]
    %v10327 = vld [vmem:[#allocation14 + $0x80] sm:$0xff]
    %v10328 = vld [vmem:[#allocation14 + $0x88] sm:$0xff]
    %v10329 = vld [vmem:[#allocation14 + $0x90] sm:$0xff]
    %v10330 = vld [vmem:[#allocation14 + $0x98] sm:$0xff]
    %v10331 = vld [vmem:[#allocation14 + $0xa0] sm:$0xff]
    %v10332 = vld [vmem:[#allocation14 + $0xa8] sm:$0xff]
    %v10333 = vld [vmem:[#allocation14 + $0xb0] sm:$0xff]
    %v10334 = vld [vmem:[#allocation14 + $0xb8] sm:$0xff]
    %v10335 = vld [vmem:[#allocation14 + $0xc0] sm:$0xff]
    %v10336 = vld [vmem:[#allocation14 + $0xc8] sm:$0xff]
    %v10337 = vld [vmem:[#allocation14 + $0xd0] sm:$0xff]
    %v10338 = vld [vmem:[#allocation14 + $0xd8] sm:$0xff]
    %v10339 = vld [vmem:[#allocation14 + $0xe0] sm:$0xff]
    %v10340 = vld [vmem:[#allocation14 + $0xe8] sm:$0xff]
    %v10341 = vld [vmem:[#allocation14 + $0xf0] sm:$0xff]
    %v10342 = vld [vmem:[#allocation14 + $0xf8] sm:$0xff]
    %v10343 = vld [vmem:[#allocation14 + $0x100] sm:$0xff]
    %v10344 = vld [vmem:[#allocation14 + $0x108] sm:$0xff]
    %v10345 = vld [vmem:[#allocation14 + $0x110] sm:$0xff]
    %v10346 = vld [vmem:[#allocation14 + $0x118] sm:$0xff]
    %v10347 = vld [vmem:[#allocation14 + $0x120] sm:$0xff]
    %v10348 = vld [vmem:[#allocation14 + $0x128] sm:$0xff]
    %v10349 = vld [vmem:[#allocation14 + $0x130] sm:$0xff]
    %v10350 = vld [vmem:[#allocation14 + $0x138] sm:$0xff]
    %v10351 = vld [vmem:[#allocation14 + $0x140] sm:$0xff]
    %v10352 = vld [vmem:[#allocation14 + $0x148] sm:$0xff]
    %v10353 = vld [vmem:[#allocation14 + $0x150] sm:$0xff]
    %v10354 = vld [vmem:[#allocation14 + $0x158] sm:$0xff]
    %v10355 = vld [vmem:[#allocation14 + $0x160] sm:$0xff]
    %v10356 = vld [vmem:[#allocation14 + $0x168] sm:$0xff]
    %v10357 = vld [vmem:[#allocation14 + $0x170] sm:$0xff]
    %v10358 = vld [vmem:[#allocation14 + $0x178] sm:$0xff]
    %v10359 = vld [vmem:[#allocation14 + $0x180] sm:$0xff]
    %v10360 = vld [vmem:[#allocation14 + $0x188] sm:$0xff]
    %v10361 = vld [vmem:[#allocation14 + $0x190] sm:$0xff]
    %v10362 = vld [vmem:[#allocation14 + $0x198] sm:$0xff]
    %v10363 = vld [vmem:[#allocation14 + $0x1a0] sm:$0xff]
    %v10364 = vld [vmem:[#allocation14 + $0x1a8] sm:$0xff]
    %v10365 = vld [vmem:[#allocation14 + $0x1b0] sm:$0xff]
    %v10366 = vld [vmem:[#allocation14 + $0x1b8] sm:$0xff]
    %v10367 = vld [vmem:[#allocation14 + $0x1c0] sm:$0xff]
    %v10368 = vld [vmem:[#allocation14 + $0x1c8] sm:$0xff]
    %v10369 = vld [vmem:[#allocation14 + $0x1d0] sm:$0xff]
    %v10370 = vld [vmem:[#allocation14 + $0x1d8] sm:$0xff]
    %v10371 = vld [vmem:[#allocation14 + $0x1e0] sm:$0xff]
    %v10372 = vld [vmem:[#allocation14 + $0x1e8] sm:$0xff]
    %v10373 = vld [vmem:[#allocation14 + $0x1f0] sm:$0xff]
    %v10374 = vld [vmem:[#allocation14 + $0x1f8] sm:$0xff]
    %v10375 = vld [vmem:[#allocation16] sm:$0x3]
    %v10377 = vlaneseq
    %v10378 = vshrl.u32 %v10377, 7
    %v10379 = vsub.s32 0, %v10378
    %v10380 = vrot.slane %v10375, %v10379
    %v10381 = vlaneseq
    %v10382 = vshrl.u32 %v10381, 7
    %v10383 = vsub.s32 1, %v10382
    %v10384 = vrot.slane %v10375, %v10383
    %v10451 = vunpack.c.l.b16 %v10311
    %v10452 = vunpack.c.h.b16 %v10311
    %v10453 = vunpack.c.l.b16 %v10312
    %v10454 = vunpack.c.h.b16 %v10312
    %v10455 = vunpack.c.l.b16 %v10313
    %v10456 = vunpack.c.h.b16 %v10313
    %v10457 = vunpack.c.l.b16 %v10314
    %v10458 = vunpack.c.h.b16 %v10314
    %v10459 = vunpack.c.l.b16 %v10315
    %v10460 = vunpack.c.h.b16 %v10315
    %v10461 = vunpack.c.l.b16 %v10316
    %v10462 = vunpack.c.h.b16 %v10316
    %v10463 = vunpack.c.l.b16 %v10317
    %v10464 = vunpack.c.h.b16 %v10317
    %v10465 = vunpack.c.l.b16 %v10318
    %v10466 = vunpack.c.h.b16 %v10318
    %v10467 = vunpack.c.l.b16 %v10319
    %v10468 = vunpack.c.h.b16 %v10319
    %v10469 = vunpack.c.l.b16 %v10320
    %v10470 = vunpack.c.h.b16 %v10320
    %v10471 = vunpack.c.l.b16 %v10321
    %v10472 = vunpack.c.h.b16 %v10321
    %v10473 = vunpack.c.l.b16 %v10322
    %v10474 = vunpack.c.h.b16 %v10322
    %v10475 = vunpack.c.l.b16 %v10323
    %v10476 = vunpack.c.h.b16 %v10323
    %v10477 = vunpack.c.l.b16 %v10324
    %v10478 = vunpack.c.h.b16 %v10324
    %v10479 = vunpack.c.l.b16 %v10325
    %v10480 = vunpack.c.h.b16 %v10325
    %v10481 = vunpack.c.l.b16 %v10326
    %v10482 = vunpack.c.h.b16 %v10326
    %v10483 = vunpack.c.l.b16 %v10327
    %v10484 = vunpack.c.h.b16 %v10327
    %v10485 = vunpack.c.l.b16 %v10328
    %v10486 = vunpack.c.h.b16 %v10328
    %v10487 = vunpack.c.l.b16 %v10329
    %v10488 = vunpack.c.h.b16 %v10329
    %v10489 = vunpack.c.l.b16 %v10330
    %v10490 = vunpack.c.h.b16 %v10330
    %v10491 = vunpack.c.l.b16 %v10331
    %v10492 = vunpack.c.h.b16 %v10331
    %v10493 = vunpack.c.l.b16 %v10332
    %v10494 = vunpack.c.h.b16 %v10332
    %v10495 = vunpack.c.l.b16 %v10333
    %v10496 = vunpack.c.h.b16 %v10333
    %v10497 = vunpack.c.l.b16 %v10334
    %v10498 = vunpack.c.h.b16 %v10334
    %v10499 = vunpack.c.l.b16 %v10335
    %v10500 = vunpack.c.h.b16 %v10335
    %v10501 = vunpack.c.l.b16 %v10336
    %v10502 = vunpack.c.h.b16 %v10336
    %v10503 = vunpack.c.l.b16 %v10337
    %v10504 = vunpack.c.h.b16 %v10337
    %v10505 = vunpack.c.l.b16 %v10338
    %v10506 = vunpack.c.h.b16 %v10338
    %v10507 = vunpack.c.l.b16 %v10339
    %v10508 = vunpack.c.h.b16 %v10339
    %v10509 = vunpack.c.l.b16 %v10340
    %v10510 = vunpack.c.h.b16 %v10340
    %v10511 = vunpack.c.l.b16 %v10341
    %v10512 = vunpack.c.h.b16 %v10341
    %v10513 = vunpack.c.l.b16 %v10342
    %v10514 = vunpack.c.h.b16 %v10342
    %v10515 = vunpack.c.l.b16 %v10343
    %v10516 = vunpack.c.h.b16 %v10343
    %v10517 = vunpack.c.l.b16 %v10344
    %v10518 = vunpack.c.h.b16 %v10344
    %v10519 = vunpack.c.l.b16 %v10345
    %v10520 = vunpack.c.h.b16 %v10345
    %v10521 = vunpack.c.l.b16 %v10346
    %v10522 = vunpack.c.h.b16 %v10346
    %v10523 = vunpack.c.l.b16 %v10347
    %v10524 = vunpack.c.h.b16 %v10347
    %v10525 = vunpack.c.l.b16 %v10348
    %v10526 = vunpack.c.h.b16 %v10348
    %v10527 = vunpack.c.l.b16 %v10349
    %v10528 = vunpack.c.h.b16 %v10349
    %v10529 = vunpack.c.l.b16 %v10350
    %v10530 = vunpack.c.h.b16 %v10350
    %v10531 = vunpack.c.l.b16 %v10351
    %v10532 = vunpack.c.h.b16 %v10351
    %v10533 = vunpack.c.l.b16 %v10352
    %v10534 = vunpack.c.h.b16 %v10352
    %v10535 = vunpack.c.l.b16 %v10353
    %v10536 = vunpack.c.h.b16 %v10353
    %v10537 = vunpack.c.l.b16 %v10354
    %v10538 = vunpack.c.h.b16 %v10354
    %v10539 = vunpack.c.l.b16 %v10355
    %v10540 = vunpack.c.h.b16 %v10355
    %v10541 = vunpack.c.l.b16 %v10356
    %v10542 = vunpack.c.h.b16 %v10356
    %v10543 = vunpack.c.l.b16 %v10357
    %v10544 = vunpack.c.h.b16 %v10357
    %v10545 = vunpack.c.l.b16 %v10358
    %v10546 = vunpack.c.h.b16 %v10358
    %v10547 = vunpack.c.l.b16 %v10359
    %v10548 = vunpack.c.h.b16 %v10359
    %v10549 = vunpack.c.l.b16 %v10360
    %v10550 = vunpack.c.h.b16 %v10360
    %v10551 = vunpack.c.l.b16 %v10361
    %v10552 = vunpack.c.h.b16 %v10361
    %v10553 = vunpack.c.l.b16 %v10362
    %v10554 = vunpack.c.h.b16 %v10362
    %v10555 = vunpack.c.l.b16 %v10363
    %v10556 = vunpack.c.h.b16 %v10363
    %v10557 = vunpack.c.l.b16 %v10364
    %v10558 = vunpack.c.h.b16 %v10364
    %v10559 = vunpack.c.l.b16 %v10365
    %v10560 = vunpack.c.h.b16 %v10365
    %v10561 = vunpack.c.l.b16 %v10366
    %v10562 = vunpack.c.h.b16 %v10366
    %v10563 = vunpack.c.l.b16 %v10367
    %v10564 = vunpack.c.h.b16 %v10367
    %v10565 = vunpack.c.l.b16 %v10368
    %v10566 = vunpack.c.h.b16 %v10368
    %v10567 = vunpack.c.l.b16 %v10369
    %v10568 = vunpack.c.h.b16 %v10369
    %v10569 = vunpack.c.l.b16 %v10370
    %v10570 = vunpack.c.h.b16 %v10370
    %v10571 = vunpack.c.l.b16 %v10371
    %v10572 = vunpack.c.h.b16 %v10371
    %v10573 = vunpack.c.l.b16 %v10372
    %v10574 = vunpack.c.h.b16 %v10372
    %v10575 = vunpack.c.l.b16 %v10373
    %v10576 = vunpack.c.h.b16 %v10373
    %v10577 = vunpack.c.l.b16 %v10374
    %v10578 = vunpack.c.h.b16 %v10374
    %v10579 = vpack.c.b16 %v10453, %v10451
    %v10580 = vpack.c.b16 %v10454, %v10452
    %v10581 = vpack.c.b16 %v10457, %v10455
    %v10582 = vpack.c.b16 %v10458, %v10456
    %v10583 = vpack.c.b16 %v10461, %v10459
    %v10584 = vpack.c.b16 %v10462, %v10460
    %v10585 = vpack.c.b16 %v10465, %v10463
    %v10586 = vpack.c.b16 %v10466, %v10464
    %v10587 = vpack.c.b16 %v10469, %v10467
    %v10588 = vpack.c.b16 %v10470, %v10468
    %v10589 = vpack.c.b16 %v10473, %v10471
    %v10590 = vpack.c.b16 %v10474, %v10472
    %v10591 = vpack.c.b16 %v10477, %v10475
    %v10592 = vpack.c.b16 %v10478, %v10476
    %v10593 = vpack.c.b16 %v10481, %v10479
    %v10594 = vpack.c.b16 %v10482, %v10480
    %v10595 = vpack.c.b16 %v10485, %v10483
    %v10596 = vpack.c.b16 %v10486, %v10484
    %v10597 = vpack.c.b16 %v10489, %v10487
    %v10598 = vpack.c.b16 %v10490, %v10488
    %v10599 = vpack.c.b16 %v10493, %v10491
    %v10600 = vpack.c.b16 %v10494, %v10492
    %v10601 = vpack.c.b16 %v10497, %v10495
    %v10602 = vpack.c.b16 %v10498, %v10496
    %v10603 = vpack.c.b16 %v10501, %v10499
    %v10604 = vpack.c.b16 %v10502, %v10500
    %v10605 = vpack.c.b16 %v10505, %v10503
    %v10606 = vpack.c.b16 %v10506, %v10504
    %v10607 = vpack.c.b16 %v10509, %v10507
    %v10608 = vpack.c.b16 %v10510, %v10508
    %v10609 = vpack.c.b16 %v10513, %v10511
    %v10610 = vpack.c.b16 %v10514, %v10512
    %v10611 = vpack.c.b16 %v10517, %v10515
    %v10612 = vpack.c.b16 %v10518, %v10516
    %v10613 = vpack.c.b16 %v10521, %v10519
    %v10614 = vpack.c.b16 %v10522, %v10520
    %v10615 = vpack.c.b16 %v10525, %v10523
    %v10616 = vpack.c.b16 %v10526, %v10524
    %v10617 = vpack.c.b16 %v10529, %v10527
    %v10618 = vpack.c.b16 %v10530, %v10528
    %v10619 = vpack.c.b16 %v10533, %v10531
    %v10620 = vpack.c.b16 %v10534, %v10532
    %v10621 = vpack.c.b16 %v10537, %v10535
    %v10622 = vpack.c.b16 %v10538, %v10536
    %v10623 = vpack.c.b16 %v10541, %v10539
    %v10624 = vpack.c.b16 %v10542, %v10540
    %v10625 = vpack.c.b16 %v10545, %v10543
    %v10626 = vpack.c.b16 %v10546, %v10544
    %v10627 = vpack.c.b16 %v10549, %v10547
    %v10628 = vpack.c.b16 %v10550, %v10548
    %v10629 = vpack.c.b16 %v10553, %v10551
    %v10630 = vpack.c.b16 %v10554, %v10552
    %v10631 = vpack.c.b16 %v10557, %v10555
    %v10632 = vpack.c.b16 %v10558, %v10556
    %v10633 = vpack.c.b16 %v10561, %v10559
    %v10634 = vpack.c.b16 %v10562, %v10560
    %v10635 = vpack.c.b16 %v10565, %v10563
    %v10636 = vpack.c.b16 %v10566, %v10564
    %v10637 = vpack.c.b16 %v10569, %v10567
    %v10638 = vpack.c.b16 %v10570, %v10568
    %v10639 = vpack.c.b16 %v10573, %v10571
    %v10640 = vpack.c.b16 %v10574, %v10572
    %v10641 = vpack.c.b16 %v10577, %v10575
    %v10642 = vpack.c.b16 %v10578, %v10576
    %10707 = vmatprep.subr.bf16.mxu0 %v10580
    %10708 = vmatpush1.bf16.msra.mxu0 %v10579
    %10709 = vmatprep.subr.bf16.mxu0 %v10582
    %10710 = vmatpush1.bf16.msra.mxu0 %v10581
    %10711 = vmatprep.subr.bf16.mxu0 %v10584
    %10712 = vmatpush1.bf16.msra.mxu0 %v10583
    %10713 = vmatprep.subr.bf16.mxu0 %v10586
    %10714 = vmatpush1.bf16.msra.mxu0 %v10585
    %10715 = vmatprep.subr.bf16.mxu0 %v10588
    %10716 = vmatpush1.bf16.msra.mxu0 %v10587
    %10717 = vmatprep.subr.bf16.mxu0 %v10590
    %10718 = vmatpush1.bf16.msra.mxu0 %v10589
    %10719 = vmatprep.subr.bf16.mxu0 %v10592
    %10720 = vmatpush1.bf16.msra.mxu0 %v10591
    %10721 = vmatprep.subr.bf16.mxu0 %v10594
    %10722 = vmatpush1.bf16.msra.mxu0 %v10593
    %10723 = vmatprep.subr.bf16.mxu0 %v10596
    %10724 = vmatpush1.bf16.msra.mxu0 %v10595
    %10725 = vmatprep.subr.bf16.mxu0 %v10598
    %10726 = vmatpush1.bf16.msra.mxu0 %v10597
    %10727 = vmatprep.subr.bf16.mxu0 %v10600
    %10728 = vmatpush1.bf16.msra.mxu0 %v10599
    %10729 = vmatprep.subr.bf16.mxu0 %v10602
    %10730 = vmatpush1.bf16.msra.mxu0 %v10601
    %10731 = vmatprep.subr.bf16.mxu0 %v10604
    %10732 = vmatpush1.bf16.msra.mxu0 %v10603
    %10733 = vmatprep.subr.bf16.mxu0 %v10606
    %10734 = vmatpush1.bf16.msra.mxu0 %v10605
    %10735 = vmatprep.subr.bf16.mxu0 %v10608
    %10736 = vmatpush1.bf16.msra.mxu0 %v10607
    %10737 = vmatprep.subr.bf16.mxu0 %v10610
    %10738 = vmatpush1.bf16.msra.mxu0 %v10609
    %10739 = vmatprep.mubr.bf16.mxu0 %v10308
    %10740 = vmatmul.mubr.bf16.gmra.mrb[0].mxu0 %v10307
    %v10741 = vpop.f32.mrb[0].mxu0
    %v10742 = vadd.f32 %v10380, %v10741
    %v10743 = vpop.f32.mrb[0].mxu0
    %v10744 = vadd.f32 %v10384, %v10743
    %v10745 = vpop.f32.mrb[0].mxu0
    %v10746 = vpop.f32.mrb[0].mxu0
    %10747 = vdwg.mxu0
    %10748 = vmatprep.subr.bf16.mxu0 %v10612
    %10749 = vmatpush1.bf16.msra.mxu0 %v10611
    %10750 = vmatprep.subr.bf16.mxu0 %v10614
    %10751 = vmatpush1.bf16.msra.mxu0 %v10613
    %10752 = vmatprep.subr.bf16.mxu0 %v10616
    %10753 = vmatpush1.bf16.msra.mxu0 %v10615
    %10754 = vmatprep.subr.bf16.mxu0 %v10618
    %10755 = vmatpush1.bf16.msra.mxu0 %v10617
    %10756 = vmatprep.subr.bf16.mxu0 %v10620
    %10757 = vmatpush1.bf16.msra.mxu0 %v10619
    %10758 = vmatprep.subr.bf16.mxu0 %v10622
    %10759 = vmatpush1.bf16.msra.mxu0 %v10621
    %10760 = vmatprep.subr.bf16.mxu0 %v10624
    %10761 = vmatpush1.bf16.msra.mxu0 %v10623
    %10762 = vmatprep.subr.bf16.mxu0 %v10626
    %10763 = vmatpush1.bf16.msra.mxu0 %v10625
    %10764 = vmatprep.subr.bf16.mxu0 %v10628
    %10765 = vmatpush1.bf16.msra.mxu0 %v10627
    %10766 = vmatprep.subr.bf16.mxu0 %v10630
    %10767 = vmatpush1.bf16.msra.mxu0 %v10629
    %10768 = vmatprep.subr.bf16.mxu0 %v10632
    %10769 = vmatpush1.bf16.msra.mxu0 %v10631
    %10770 = vmatprep.subr.bf16.mxu0 %v10634
    %10771 = vmatpush1.bf16.msra.mxu0 %v10633
    %10772 = vmatprep.subr.bf16.mxu0 %v10636
    %10773 = vmatpush1.bf16.msra.mxu0 %v10635
    %10774 = vmatprep.subr.bf16.mxu0 %v10638
    %10775 = vmatpush1.bf16.msra.mxu0 %v10637
    %10776 = vmatprep.subr.bf16.mxu0 %v10640
    %10777 = vmatpush1.bf16.msra.mxu0 %v10639
    %10778 = vmatprep.subr.bf16.mxu0 %v10642
    %10779 = vmatpush1.bf16.msra.mxu0 %v10641
    %10780 = vmatprep.mubr.bf16.mxu0 %v10310
    %10781 = vmatmul.mubr.bf16.gmra.mrb[0].mxu0 %v10309
    %v10782 = vpop.f32.mrb[0].mxu0
    %v10783 = vadd.f32 %v10742, %v10782
    %v10784 = vpop.f32.mrb[0].mxu0
    %v10785 = vadd.f32 %v10744, %v10784
    %v10786 = vpop.f32.mrb[0].mxu0
    %v10787 = vpop.f32.mrb[0].mxu0
    %10788 = vdwg.mxu0
    %v10789 = vmax.f32 %v10783, 0.0
    %v10790 = vmax.f32 %v10785, 0.0
    %v10791 = vpack.c.bf16 %v10789, %v10789
    %v10792 = vpack.c.bf16 %v10790, %v10790
    %v10793 = vld [vmem:[#allocation17] sm:$0xf]
    %v10794 = vld [vmem:[#allocation17 + $0x4] sm:$0xf]
    %v10795 = vld [vmem:[#allocation17 + $0x8] sm:$0xf]
    %v10796 = vld [vmem:[#allocation17 + $0xc] sm:$0xf]
    %v10797 = vld [vmem:[#allocation17 + $0x10] sm:$0xf]
    %v10798 = vld [vmem:[#allocation17 + $0x14] sm:$0xf]
    %v10799 = vld [vmem:[#allocation17 + $0x18] sm:$0xf]
    %v10800 = vld [vmem:[#allocation17 + $0x1c] sm:$0xf]
    %v10801 = vld [vmem:[#allocation17 + $0x20] sm:$0xf]
    %v10802 = vld [vmem:[#allocation17 + $0x24] sm:$0xf]
    %v10803 = vld [vmem:[#allocation17 + $0x28] sm:$0xf]
    %v10804 = vld [vmem:[#allocation17 + $0x2c] sm:$0xf]
    %v10805 = vld [vmem:[#allocation17 + $0x30] sm:$0xf]
    %v10806 = vld [vmem:[#allocation17 + $0x34] sm:$0xf]
    %v10807 = vld [vmem:[#allocation17 + $0x38] sm:$0xf]
    %v10808 = vld [vmem:[#allocation17 + $0x3c] sm:$0xf]
    %v10809 = vld [vmem:[#allocation17 + $0x40] sm:$0xf]
    %v10810 = vld [vmem:[#allocation17 + $0x44] sm:$0xf]
    %v10811 = vld [vmem:[#allocation17 + $0x48] sm:$0xf]
    %v10812 = vld [vmem:[#allocation17 + $0x4c] sm:$0xf]
    %v10813 = vld [vmem:[#allocation17 + $0x50] sm:$0xf]
    %v10814 = vld [vmem:[#allocation17 + $0x54] sm:$0xf]
    %v10815 = vld [vmem:[#allocation17 + $0x58] sm:$0xf]
    %v10816 = vld [vmem:[#allocation17 + $0x5c] sm:$0xf]
    %v10817 = vld [vmem:[#allocation17 + $0x60] sm:$0xf]
    %v10818 = vld [vmem:[#allocation17 + $0x64] sm:$0xf]
    %v10819 = vld [vmem:[#allocation17 + $0x68] sm:$0xf]
    %v10820 = vld [vmem:[#allocation17 + $0x6c] sm:$0xf]
    %v10821 = vld [vmem:[#allocation17 + $0x70] sm:$0xf]
    %v10822 = vld [vmem:[#allocation17 + $0x74] sm:$0xf]
    %v10823 = vld [vmem:[#allocation17 + $0x78] sm:$0xf]
    %v10824 = vld [vmem:[#allocation17 + $0x7c] sm:$0xf]
    %v10825 = vld [vmem:[#allocation19] sm:$0x1]
    %v10827 = vlaneseq
    %v10828 = vshrl.u32 %v10827, 7
    %v10829 = vsub.s32 0, %v10828
    %v10830 = vrot.slane %v10825, %v10829
    %v10864 = vunpack.c.l.b16 %v10793
    %v10865 = vunpack.c.l.b16 %v10794
    %v10866 = vunpack.c.l.b16 %v10795
    %v10867 = vunpack.c.l.b16 %v10796
    %v10868 = vunpack.c.l.b16 %v10797
    %v10869 = vunpack.c.l.b16 %v10798
    %v10870 = vunpack.c.l.b16 %v10799
    %v10871 = vunpack.c.l.b16 %v10800
    %v10872 = vunpack.c.l.b16 %v10801
    %v10873 = vunpack.c.l.b16 %v10802
    %v10874 = vunpack.c.l.b16 %v10803
    %v10875 = vunpack.c.l.b16 %v10804
    %v10876 = vunpack.c.l.b16 %v10805
    %v10877 = vunpack.c.l.b16 %v10806
    %v10878 = vunpack.c.l.b16 %v10807
    %v10879 = vunpack.c.l.b16 %v10808
    %v10880 = vunpack.c.l.b16 %v10809
    %v10881 = vunpack.c.l.b16 %v10810
    %v10882 = vunpack.c.l.b16 %v10811
    %v10883 = vunpack.c.l.b16 %v10812
    %v10884 = vunpack.c.l.b16 %v10813
    %v10885 = vunpack.c.l.b16 %v10814
    %v10886 = vunpack.c.l.b16 %v10815
    %v10887 = vunpack.c.l.b16 %v10816
    %v10888 = vunpack.c.l.b16 %v10817
    %v10889 = vunpack.c.l.b16 %v10818
    %v10890 = vunpack.c.l.b16 %v10819
    %v10891 = vunpack.c.l.b16 %v10820
    %v10892 = vunpack.c.l.b16 %v10821
    %v10893 = vunpack.c.l.b16 %v10822
    %v10894 = vunpack.c.l.b16 %v10823
    %v10895 = vunpack.c.l.b16 %v10824
    %v10896 = vpack.c.b16 %v10865, %v10864
    %v10897 = vpack.c.b16 %v10867, %v10866
    %v10898 = vpack.c.b16 %v10869, %v10868
    %v10899 = vpack.c.b16 %v10871, %v10870
    %v10900 = vpack.c.b16 %v10873, %v10872
    %v10901 = vpack.c.b16 %v10875, %v10874
    %v10902 = vpack.c.b16 %v10877, %v10876
    %v10903 = vpack.c.b16 %v10879, %v10878
    %v10904 = vpack.c.b16 %v10881, %v10880
    %v10905 = vpack.c.b16 %v10883, %v10882
    %v10906 = vpack.c.b16 %v10885, %v10884
    %v10907 = vpack.c.b16 %v10887, %v10886
    %v10908 = vpack.c.b16 %v10889, %v10888
    %v10909 = vpack.c.b16 %v10891, %v10890
    %v10910 = vpack.c.b16 %v10893, %v10892
    %v10911 = vpack.c.b16 %v10895, %v10894
    %10928 = vmatprep.subr.bf16.mxu0 0
    %10929 = vmatpush1.bf16.msra.mxu0 %v10896
    %10930 = vmatprep.subr.bf16.mxu0 0
    %10931 = vmatpush1.bf16.msra.mxu0 %v10897
    %10932 = vmatprep.subr.bf16.mxu0 0
    %10933 = vmatpush1.bf16.msra.mxu0 %v10898
    %10934 = vmatprep.subr.bf16.mxu0 0
    %10935 = vmatpush1.bf16.msra.mxu0 %v10899
    %10936 = vmatprep.subr.bf16.mxu0 0
    %10937 = vmatpush1.bf16.msra.mxu0 %v10900
    %10938 = vmatprep.subr.bf16.mxu0 0
    %10939 = vmatpush1.bf16.msra.mxu0 %v10901
    %10940 = vmatprep.subr.bf16.mxu0 0
    %10941 = vmatpush1.bf16.msra.mxu0 %v10902
    %10942 = vmatprep.subr.bf16.mxu0 0
    %10943 = vmatpush1.bf16.msra.mxu0 %v10903
    %10944 = vmatprep.subr.bf16.mxu0 0
    %10945 = vmatpush1.bf16.msra.mxu0 %v10904
    %10946 = vmatprep.subr.bf16.mxu0 0
    %10947 = vmatpush1.bf16.msra.mxu0 %v10905
    %10948 = vmatprep.subr.bf16.mxu0 0
    %10949 = vmatpush1.bf16.msra.mxu0 %v10906
    %10950 = vmatprep.subr.bf16.mxu0 0
    %10951 = vmatpush1.bf16.msra.mxu0 %v10907
    %10952 = vmatprep.subr.bf16.mxu0 0
    %10953 = vmatpush1.bf16.msra.mxu0 %v10908
    %10954 = vmatprep.subr.bf16.mxu0 0
    %10955 = vmatpush1.bf16.msra.mxu0 %v10909
    %10956 = vmatprep.subr.bf16.mxu0 0
    %10957 = vmatpush1.bf16.msra.mxu0 %v10910
    %10958 = vmatprep.subr.bf16.mxu0 0
    %10959 = vmatpush1.bf16.msra.mxu0 %v10911
    %10960 = vmatprep.mubr.bf16.mxu0 %v10792
    %10961 = vmatmul.mubr.bf16.gmra.mrb[0].mxu0 %v10791
    %v10962 = vpop.f32.mrb[0].mxu0
    %v10963 = vadd.f32 %v10830, %v10962
    %v10964 = vpop.f32.mrb[0].mxu0
    %v10965 = vpop.f32.mrb[0].mxu0
    %v10966 = vpop.f32.mrb[0].mxu0
    %10967 = vdwg.mxu0
    %v10968 = vmax.f32 %v10963, 0.0
    %v10969 = vpack.c.bf16 %v10968, %v10968
    %v10970 = vld [vmem:[%s11] sm:$0xf]
    %v10971 = vld [vmem:[%s11 + $0x4] sm:$0xf]
    %v10972 = vld [vmem:[%s11 + $0x8] sm:$0xf]
    %v10973 = vld [vmem:[%s11 + $0xc] sm:$0xf]
    %v10974 = vld [vmem:[%s11 + $0x10] sm:$0xf]
    %v10975 = vld [vmem:[%s11 + $0x14] sm:$0xf]
    %v10976 = vld [vmem:[%s11 + $0x18] sm:$0xf]
    %v10977 = vld [vmem:[%s11 + $0x1c] sm:$0xf]
    %v10978 = vld [vmem:[%s11 + $0x20] sm:$0xf]
    %v10979 = vld [vmem:[%s11 + $0x24] sm:$0xf]
    %v10980 = vld [vmem:[%s11 + $0x28] sm:$0xf]
    %v10981 = vld [vmem:[%s11 + $0x2c] sm:$0xf]
    %v10982 = vld [vmem:[%s11 + $0x30] sm:$0xf]
    %v10983 = vld [vmem:[%s11 + $0x34] sm:$0xf]
    %v10984 = vld [vmem:[%s11 + $0x38] sm:$0xf]
    %v10985 = vld [vmem:[%s11 + $0x3c] sm:$0xf]
    %v10986 = vld [vmem:[#allocation20] sm:$0x1]
    %v10988 = vlaneseq
    %v10989 = vshrl.u32 %v10988, 7
    %v10990 = vsub.s32 0, %v10989
    %v10991 = vrot.slane %v10986, %v10990
    %v11009 = vunpack.c.l.b16 %v10970
    %v11010 = vunpack.c.l.b16 %v10971
    %v11011 = vunpack.c.l.b16 %v10972
    %v11012 = vunpack.c.l.b16 %v10973
    %v11013 = vunpack.c.l.b16 %v10974
    %v11014 = vunpack.c.l.b16 %v10975
    %v11015 = vunpack.c.l.b16 %v10976
    %v11016 = vunpack.c.l.b16 %v10977
    %v11017 = vunpack.c.l.b16 %v10978
    %v11018 = vunpack.c.l.b16 %v10979
    %v11019 = vunpack.c.l.b16 %v10980
    %v11020 = vunpack.c.l.b16 %v10981
    %v11021 = vunpack.c.l.b16 %v10982
    %v11022 = vunpack.c.l.b16 %v10983
    %v11023 = vunpack.c.l.b16 %v10984
    %v11024 = vunpack.c.l.b16 %v10985
    %v11025 = vpack.c.b16 %v11010, %v11009
    %v11026 = vpack.c.b16 %v11012, %v11011
    %v11027 = vpack.c.b16 %v11014, %v11013
    %v11028 = vpack.c.b16 %v11016, %v11015
    %v11029 = vpack.c.b16 %v11018, %v11017
    %v11030 = vpack.c.b16 %v11020, %v11019
    %v11031 = vpack.c.b16 %v11022, %v11021
    %v11032 = vpack.c.b16 %v11024, %v11023
    %11041 = vmatprep.subr.bf16.mxu0 0
    %11042 = vmatpush1.bf16.msra.mxu0 %v11025
    %11043 = vmatprep.subr.bf16.mxu0 0
    %11044 = vmatpush1.bf16.msra.mxu0 %v11026
    %11045 = vmatprep.subr.bf16.mxu0 0
    %11046 = vmatpush1.bf16.msra.mxu0 %v11027
    %11047 = vmatprep.subr.bf16.mxu0 0
    %11048 = vmatpush1.bf16.msra.mxu0 %v11028
    %11049 = vmatprep.subr.bf16.mxu0 0
    %11050 = vmatpush1.bf16.msra.mxu0 %v11029
    %11051 = vmatprep.subr.bf16.mxu0 0
    %11052 = vmatpush1.bf16.msra.mxu0 %v11030
    %11053 = vmatprep.subr.bf16.mxu0 0
    %11054 = vmatpush1.bf16.msra.mxu0 %v11031
    %11055 = vmatprep.subr.bf16.mxu0 0
    %11056 = vmatpush1.bf16.msra.mxu0 %v11032
    %11057 = vmatprep.subr.bf16.mxu0 0
    %11058 = vmatpush1.bf16.msra.mxu0 0
    %11059 = vmatprep.subr.bf16.mxu0 0
    %11060 = vmatpush1.bf16.msra.mxu0 0
    %11061 = vmatprep.subr.bf16.mxu0 0
    %11062 = vmatpush1.bf16.msra.mxu0 0
    %11063 = vmatprep.subr.bf16.mxu0 0
    %11064 = vmatpush1.bf16.msra.mxu0 0
    %11065 = vmatprep.subr.bf16.mxu0 0
    %11066 = vmatpush1.bf16.msra.mxu0 0
    %11067 = vmatprep.subr.bf16.mxu0 0
    %11068 = vmatpush1.bf16.msra.mxu0 0
    %11069 = vmatprep.subr.bf16.mxu0 0
    %11070 = vmatpush1.bf16.msra.mxu0 0
    %11071 = vmatprep.subr.bf16.mxu0 0
    %11072 = vmatpush1.bf16.msra.mxu0 0
    %11073 = vmatprep.mubr.bf16.mxu0 0
    %11074 = vmatmul.mubr.bf16.gmra.mrb[0].mxu0 %v10969
    %v11075 = vpop.f32.mrb[0].mxu0
    %v11076 = vadd.f32 %v10991, %v11075
    %v11077 = vpop.f32.mrb[0].mxu0
    %v11078 = vpop.f32.mrb[0].mxu0
    %v11079 = vpop.f32.mrb[0].mxu0
    %11080 = vdwg.mxu0
    %v11081 = vmax.f32 %v11076, 0.0
    %v11082 = vpack.c.bf16 %v11081, %v11081
    %v11083 = vld [vmem:[%s13] sm:$0xf]
    %v11084 = vld [vmem:[%s13 + $0x4] sm:$0xf]
    %v11085 = vld [vmem:[%s13 + $0x8] sm:$0xf]
    %v11086 = vld [vmem:[%s13 + $0xc] sm:$0xf]
    %v11087 = vld [vmem:[%s13 + $0x10] sm:$0xf]
    %v11088 = vld [vmem:[%s13 + $0x14] sm:$0xf]
    %v11089 = vld [vmem:[%s13 + $0x18] sm:$0xf]
    %v11090 = vld [vmem:[%s13 + $0x1c] sm:$0xf]
    %v11091 = vld [vmem:[#allocation22] sm:$0x1]
    %v11093 = vlaneseq
    %v11094 = vshrl.u32 %v11093, 7
    %v11095 = vsub.s32 0, %v11094
    %v11096 = vrot.slane %v11091, %v11095
    %v11106 = vunpack.c.l.b16 %v11083
    %v11107 = vunpack.c.l.b16 %v11084
    %v11108 = vunpack.c.l.b16 %v11085
    %v11109 = vunpack.c.l.b16 %v11086
    %v11110 = vunpack.c.l.b16 %v11087
    %v11111 = vunpack.c.l.b16 %v11088
    %v11112 = vunpack.c.l.b16 %v11089
    %v11113 = vunpack.c.l.b16 %v11090
    %v11114 = vpack.c.b16 %v11107, %v11106
    %v11115 = vpack.c.b16 %v11109, %v11108
    %v11116 = vpack.c.b16 %v11111, %v11110
    %v11117 = vpack.c.b16 %v11113, %v11112
    %vm11122 = vcmask 523264
    %v11124 = vsel %vm11122, %v11082, 0
    %11126 = vmatprep.subr.bf16.mxu0 0
    %11127 = vmatpush1.bf16.msra.mxu0 %v11114
    %11128 = vmatprep.subr.bf16.mxu0 0
    %11129 = vmatpush1.bf16.msra.mxu0 %v11115
    %11130 = vmatprep.subr.bf16.mxu0 0
    %11131 = vmatpush1.bf16.msra.mxu0 %v11116
    %11132 = vmatprep.subr.bf16.mxu0 0
    %11133 = vmatpush1.bf16.msra.mxu0 %v11117
    %11134 = vmatprep.subr.bf16.mxu0 0
    %11135 = vmatpush1.bf16.msra.mxu0 0
    %11136 = vmatprep.subr.bf16.mxu0 0
    %11137 = vmatpush1.bf16.msra.mxu0 0
    %11138 = vmatprep.subr.bf16.mxu0 0
    %11139 = vmatpush1.bf16.msra.mxu0 0
    %11140 = vmatprep.subr.bf16.mxu0 0
    %11141 = vmatpush1.bf16.msra.mxu0 0
    %11142 = vmatprep.subr.bf16.mxu0 0
    %11143 = vmatpush1.bf16.msra.mxu0 0
    %11144 = vmatprep.subr.bf16.mxu0 0
    %11145 = vmatpush1.bf16.msra.mxu0 0
    %11146 = vmatprep.subr.bf16.mxu0 0
    %11147 = vmatpush1.bf16.msra.mxu0 0
    %11148 = vmatprep.subr.bf16.mxu0 0
    %11149 = vmatpush1.bf16.msra.mxu0 0
    %11150 = vmatprep.subr.bf16.mxu0 0
    %11151 = vmatpush1.bf16.msra.mxu0 0
    %11152 = vmatprep.subr.bf16.mxu0 0
    %11153 = vmatpush1.bf16.msra.mxu0 0
    %11154 = vmatprep.subr.bf16.mxu0 0
    %11155 = vmatpush1.bf16.msra.mxu0 0
    %11156 = vmatprep.subr.bf16.mxu0 0
    %11157 = vmatpush1.bf16.msra.mxu0 0
    %11158 = vmatprep.mubr.bf16.mxu0 0
    %11159 = vmatmul.mubr.bf16.gmra.mrb[0].mxu0 %v11124
    %v11160 = vpop.f32.mrb[0].mxu0
    %v11161 = vadd.f32 %v11096, %v11160
    %v11162 = vpop.f32.mrb[0].mxu0
    %v11163 = vpop.f32.mrb[0].mxu0
    %v11164 = vpop.f32.mrb[0].mxu0
    %11165 = vdwg.mxu0
    %v11166 = vmax.f32 %v11161, 0.0
    %v11167 = vpack.c.bf16 %v11166, %v11166
    %v11168 = vld [vmem:[%s15] sm:$0xf]
    %v11169 = vld [vmem:[%s15 + $0x4] sm:$0xf]
    %v11170 = vld [vmem:[%s15 + $0x8] sm:$0xf]
    %v11171 = vld [vmem:[%s15 + $0xc] sm:$0xf]
    %v11172 = vld [vmem:[#allocation23] sm:$0x1]
    %v11174 = vlaneseq
    %v11175 = vshrl.u32 %v11174, 7
    %v11176 = vsub.s32 0, %v11175
    %v11177 = vrot.slane %v11172, %v11176
    %v11183 = vunpack.c.l.b16 %v11168
    %v11184 = vunpack.c.l.b16 %v11169
    %v11185 = vunpack.c.l.b16 %v11170
    %v11186 = vunpack.c.l.b16 %v11171
    %v11187 = vpack.c.b16 %v11184, %v11183
    %v11188 = vpack.c.b16 %v11186, %v11185
    %v11192 = vsel %vm539, %v11167, 0
    %11194 = vmatprep.subr.bf16.mxu0 0
    %11195 = vmatpush1.bf16.msra.mxu0 %v11187
    %11196 = vmatprep.subr.bf16.mxu0 0
    %11197 = vmatpush1.bf16.msra.mxu0 %v11188
    %11198 = vmatprep.subr.bf16.mxu0 0
    %11199 = vmatpush1.bf16.msra.mxu0 0
    %11200 = vmatprep.subr.bf16.mxu0 0
    %11201 = vmatpush1.bf16.msra.mxu0 0
    %11202 = vmatprep.subr.bf16.mxu0 0
    %11203 = vmatpush1.bf16.msra.mxu0 0
    %11204 = vmatprep.subr.bf16.mxu0 0
    %11205 = vmatpush1.bf16.msra.mxu0 0
    %11206 = vmatprep.subr.bf16.mxu0 0
    %11207 = vmatpush1.bf16.msra.mxu0 0
    %11208 = vmatprep.subr.bf16.mxu0 0
    %11209 = vmatpush1.bf16.msra.mxu0 0
    %11210 = vmatprep.subr.bf16.mxu0 0
    %11211 = vmatpush1.bf16.msra.mxu0 0
    %11212 = vmatprep.subr.bf16.mxu0 0
    %11213 = vmatpush1.bf16.msra.mxu0 0
    %11214 = vmatprep.subr.bf16.mxu0 0
    %11215 = vmatpush1.bf16.msra.mxu0 0
    %11216 = vmatprep.subr.bf16.mxu0 0
    %11217 = vmatpush1.bf16.msra.mxu0 0
    %11218 = vmatprep.subr.bf16.mxu0 0
    %11219 = vmatpush1.bf16.msra.mxu0 0
    %11220 = vmatprep.subr.bf16.mxu0 0
    %11221 = vmatpush1.bf16.msra.mxu0 0
    %11222 = vmatprep.subr.bf16.mxu0 0
    %11223 = vmatpush1.bf16.msra.mxu0 0
    %11224 = vmatprep.subr.bf16.mxu0 0
    %11225 = vmatpush1.bf16.msra.mxu0 0
    %11226 = vmatprep.mubr.bf16.mxu0 0
    %11227 = vmatmul.mubr.bf16.gmra.mrb[0].mxu0 %v11192
    %v11228 = vpop.f32.mrb[0].mxu0
    %v11229 = vadd.f32 %v11177, %v11228
    %v11230 = vpop.f32.mrb[0].mxu0
    %v11231 = vpop.f32.mrb[0].mxu0
    %v11232 = vpop.f32.mrb[0].mxu0
    %11233 = vdwg.mxu0
    %v11234 = vmax.f32 %v11229, 0.0
    %v11235 = vpack.c.bf16 %v11234, %v11234
    %v11236 = vld [vmem:[#allocation25] sm:$0xf]
    %v11237 = vld [vmem:[#allocation25 + $0x4] sm:$0xf]
    %v11238 = vld [vmem:[#allocation26] sm:$0x1]
    %v11240 = vlaneseq
    %v11241 = vshrl.u32 %v11240, 7
    %v11242 = vsub.s32 0, %v11241
    %v11243 = vrot.slane %v11238, %v11242
    %v11247 = vunpack.c.l.b16 %v11236
    %v11248 = vunpack.c.l.b16 %v11237
    %v11249 = vpack.c.b16 %v11248, %v11247
    %vm11251 = vcmask 130048
    %v11253 = vsel %vm11251, %v11235, 0
    %11255 = vmatprep.subr.bf16.mxu0 0
    %11256 = vmatpush1.bf16.msra.mxu0 %v11249
    %11257 = vmatprep.subr.bf16.mxu0 0
    %11258 = vmatpush1.bf16.msra.mxu0 0
    %11259 = vmatprep.subr.bf16.mxu0 0
    %11260 = vmatpush1.bf16.msra.mxu0 0
    %11261 = vmatprep.subr.bf16.mxu0 0
    %11262 = vmatpush1.bf16.msra.mxu0 0
    %11263 = vmatprep.subr.bf16.mxu0 0
    %11264 = vmatpush1.bf16.msra.mxu0 0
    %11265 = vmatprep.subr.bf16.mxu0 0
    %11266 = vmatpush1.bf16.msra.mxu0 0
    %11267 = vmatprep.subr.bf16.mxu0 0
    %11268 = vmatpush1.bf16.msra.mxu0 0
    %11269 = vmatprep.subr.bf16.mxu0 0
    %11270 = vmatpush1.bf16.msra.mxu0 0
    %11271 = vmatprep.subr.bf16.mxu0 0
    %11272 = vmatpush1.bf16.msra.mxu0 0
    %11273 = vmatprep.subr.bf16.mxu0 0
    %11274 = vmatpush1.bf16.msra.mxu0 0
    %11275 = vmatprep.subr.bf16.mxu0 0
    %11276 = vmatpush1.bf16.msra.mxu0 0
    %11277 = vmatprep.subr.bf16.mxu0 0
    %11278 = vmatpush1.bf16.msra.mxu0 0
    %11279 = vmatprep.subr.bf16.mxu0 0
    %11280 = vmatpush1.bf16.msra.mxu0 0
    %11281 = vmatprep.subr.bf16.mxu0 0
    %11282 = vmatpush1.bf16.msra.mxu0 0
    %11283 = vmatprep.subr.bf16.mxu0 0
    %11284 = vmatpush1.bf16.msra.mxu0 0
    %11285 = vmatprep.subr.bf16.mxu0 0
    %11286 = vmatpush1.bf16.msra.mxu0 0
    %11287 = vmatprep.mubr.bf16.mxu0 0
    %11288 = vmatmul.mubr.bf16.gmra.mrb[0].mxu0 %v11253
    %v11289 = vpop.f32.mrb[0].mxu0
    %v11290 = vadd.f32 %v11243, %v11289
    %v11291 = vpop.f32.mrb[0].mxu0
    %v11292 = vpop.f32.mrb[0].mxu0
    %v11293 = vpop.f32.mrb[0].mxu0
    %11294 = vdwg.mxu0
    %v11295 = vsel %vm11251, %v11290, -inf
    %11296 = vmax.xlane.f32.xlu0 %v11295
    %v11297 = vpop.xlane.xlu0 %11296
    %v11298 = vsub.f32 %v11290, %v11297
    %v11299 = vmul.f32 %v11298, 1.442695
    %v11300 = vpow.pop %v11299
    %v11301 = vsel %vm11251, %v11300, 0.0
    %11302 = vadd.xlane.f32.xlu0 %v11301
    %v11303 = vpop.xlane.xlu0 %11302
    %v11304 = vrcp.pop %v11303
    %v11305 = vmul.f32 %v11300, %v11304
    %11306 = vst.msk [vmem:[#allocation28] sm:$0xff] %vm11251, %v11305
    // Predicated region
    $region142: #{tpu_custom_call.1} parent=1 // pred_check
      _
    $region143: #{tpu_custom_call.1} parent=1 // pred_check_branch
      %11308 = sbr.rel (0) target = $region145
    $region144: #{tpu_custom_call.1} parent=1 // pred_region
      %s11310 = ssub.s32 128, 128
      %11311 = vsyncadd [#allocation4], %s11310
      %s11313 = sshll.u32 [#allocation28], 4
      %s11314 = int_to_ptr.vmem [resolvable:$true] %s11313
      %11316 = dma.vmem_to_hbm [thread:$0]  %s11314, 128, %s19, [#allocation4]
    $region145: #{tpu_custom_call.1} parent=1 // pred_fallthru
      _
    // Predicated region
    $region146: #{tpu_custom_call.1} parent=1 // pred_check
      _
    $region147: #{tpu_custom_call.1} parent=1 // pred_check_branch
      %11318 = sbr.rel (0) target = $region149
    $region148: #{tpu_custom_call.1} parent=1 // pred_region
      %11319 = dma.done [#allocation4], 128
    $region149: #{tpu_custom_call.1} parent=1 // pred_fallthru
      _
    %11320 = vsyncpa [#allocation3], 1
    %11321 = vsyncpa [#allocation6], 1
    %11322 = vsyncpa [#allocation9], 1
    %11323 = vsyncpa [#allocation12], 1
    %11324 = vsyncpa [#allocation15], 1
    %11325 = vsyncpa [#allocation18], 1
    %11326 = vsyncpa [#allocation21], 1
    %11327 = vsyncpa [#allocation24], 1
    %11328 = vsyncpa [#allocation27], 1
    %11329 = vsyncpa [#allocation4], 1

</llo_original>
